<compile_context>
chip_gen: v7x
topology: tpu7x:2x2x1
jax: 0.10.0
libtpu: 0.0.40
codegen_flags: <defaults>
</compile_context>

<pallas_src>
import jax
import jax.numpy as jnp
from jax import lax
from jax.experimental import pallas as pl
from jax.experimental.pallas import tpu as pltpu


_BT = 32   # images per grid step
_H = 28
_W = 28


# --------------------------------- kernel ------------------------------------

def convnet_kernel(x_ref, w1_ref, b1_ref, w2_ref, b2_ref, selr_ref,
                   wfc_ref, bfc_ref, out_ref):
    """Fused Conv1+ReLU+Pool1 + Conv2+ReLU+Pool2 + Linear for one batch block.

    Lane order of every activation is (x, image): col = x*Bt + b.

    x_ref   : (1, 28, 28*Bt)   input block
    w1_ref  : (3, 224, 28)     per-dx banded conv1 weights (dy + row pad folded)
    b1_ref  : (224, 1)
    w2_ref  : (3, 224, 112)    per-dx banded conv2 weights
    b2_ref  : (224, 1)
    selr_ref: (112, 224)       even-row compactor for pool1
    wfc_ref : (7, 10, 224)     FC weights per x3 block (pool2 row compaction folded)
    bfc_ref : (10, 1)
    out_ref : (1, 10, Bt)      logits (transposed)
    """
    f32 = jnp.float32
    bt = out_ref.shape[2]
    n = x_ref.shape[-1]                                   # 28 * Bt lanes

    def dot(a, b):
        return jnp.dot(a, b, preferred_element_type=f32)

    col = lax.broadcasted_iota(jnp.int32, (1, n), 1)

    def conv3x3(a, w_ref, b_ref, step):
        # a: (K, n).  Horizontal taps = lane rolls by `step` with boundary masks;
        # vertical taps + zero padding live in the banded weights w_ref[dx].
        keep_m = (col >= step).astype(f32)                # dx = -1 reads col-step
        keep_p = (col < n - step).astype(f32)             # dx = +1 reads col+step
        a_m = pltpu.roll(a, step, axis=1) * keep_m
        a_p = pltpu.roll(a, n - step, axis=1) * keep_p
        acc = dot(w_ref[0], a_m) + dot(w_ref[1], a) + dot(w_ref[2], a_p)
        return jnp.maximum(acc + b_ref[...], 0.0)

    def pair_rows(a):
        # max(a[r], a[r+1]); only even rows are consumed downstream.
        return jnp.maximum(a, pltpu.roll(a, a.shape[0] - 1, axis=0))

    def pair_cols(a, step):
        # max(a[x], a[x+1]) in units of `step` lanes; only even x consumed.
        return jnp.maximum(a, pltpu.roll(a, n - step, axis=1))

    x0 = x_ref[0].astype(f32)                             # (28, 28*Bt)

    # conv1 (1 -> 8) + ReLU
    c1 = conv3x3(x0, w1_ref, b1_ref, bt)                  # (224, 28*Bt)
    # pool1: pair rows, compact even rows (small MXU dot), pair cols.
    p1 = pair_cols(dot(selr_ref[...], pair_rows(c1)), bt)  # (112, 28*Bt), valid @ even x
    # conv2 (8 -> 16) + ReLU; lane shifts stride 2 over the uncompacted x axis.
    c2 = conv3x3(p1, w2_ref, b2_ref, 2 * bt)              # (224, 28*Bt), valid @ even x
    # pool2: pair rows (row compaction folded into FC weights), pair cols.
    p2 = pair_cols(pair_rows(c2), 2 * bt)                 # valid @ rows c*14+2*y3, x = 4*x3

    # fused Linear(784, 10): 7 accumulated dots over the x3 lane blocks.
    acc = dot(wfc_ref[0], p2[:, 0:bt])
    for x3 in range(1, 7):
        off = 4 * x3 * bt
        acc = acc + dot(wfc_ref[x3], p2[:, off:off + bt])
    out_ref[0] = acc + bfc_ref[...]                       # (10, Bt)


# ------------------------------ host-side prep --------------------------------

def _band(h, dy):
    i = jnp.arange(h)
    return ((i[None, :] - i[:, None]) == dy).astype(jnp.float32)   # [y, y'] = d(y'-y, dy)


def _prep_params(w1, b1, w2, b2, wfc, bfc):
    """One-time layout prep of the weights (plain XLA, outside the kernel)."""
    f32 = jnp.float32
    band28 = jnp.stack([_band(_H, d) for d in (-1, 0, 1)])          # (3,28,28)
    band14 = jnp.stack([_band(_H // 2, d) for d in (-1, 0, 1)])     # (3,14,14)

    # conv1: W1[dx][co*28+y, y'] = w1[co,0,(y'-y)+1,dx+1]  (banded, SAME pad built in)
    w1e = jnp.einsum('okx,kyz->xoyz', w1[:, 0].astype(f32), band28).reshape(3, 8 * _H, _H)
    b1e = jnp.repeat(b1.astype(f32), _H).reshape(8 * _H, 1)

    # conv2: W2[dx][co*14+y, ci*14+y'] = w2[co,ci,(y'-y)+1,dx+1]
    w2e = jnp.einsum('ockx,kyz->xoycz', w2.astype(f32), band14).reshape(3, 16 * 14, 8 * 14)
    b2e = jnp.repeat(b2.astype(f32), 14).reshape(16 * 14, 1)

    # pool-1 even-row compactor (112, 224): out[r] = in[2r]
    selr = (jnp.arange(8 * _H)[None, :] == 2 * jnp.arange(4 * _H)[:, None]).astype(f32)

    # FC weights per x3 block: rows c*14 + 2*y3 hold wfc[c*49 + y3*7 + x3, o];
    # odd rows are zero (pool-2 row compaction folded in).
    wr = wfc.astype(f32).reshape(16, 7, 7, 10)                      # (c, y3, x3, o)
    wfc3 = jnp.zeros((7, 10, 16, 14), f32)
    wfc3 = wfc3.at[:, :, :, 0::2].set(jnp.transpose(wr, (2, 3, 0, 1)))
    wfc3 = wfc3.reshape(7, 10, 16 * 14)
    bfc2 = bfc.astype(f32).reshape(10, 1)
    return w1e, b1e, w2e, b2e, selr, wfc3, bfc2


# --------------------------------- wrapper -----------------------------------

@jax.jit
def model_forward(x, w1, b1, w2, b2, wfc, bfc):
    """x: (B, 1, 28, 28) float32 -> (B, 10) float32."""
    bt = _BT
    B = x.shape[0]
    nb = pl.cdiv(B, bt)
    bpad = nb * bt
    n = _W * bt

    xs = x[:, 0].astype(jnp.float32)                       # (B, 28, 28), C_in == 1
    if bpad != B:
        xs = jnp.pad(xs, ((0, bpad - B), (0, 0), (0, 0)))
    # Per-block layout: rows = y, lanes = x*Bt + b.
    x_blk = xs.reshape(nb, bt, _H, _W).transpose(0, 2, 3, 1).reshape(nb, _H, n)

    w1e, b1e, w2e, b2e, selr, wfc3, bfc2 = _prep_params(w1, b1, w2, b2, wfc, bfc)

    macs = nb * (3 * 224 * 28 * n + 112 * 224 * n + 3 * 224 * 112 * n
                 + 7 * 10 * 224 * bt)
    bytes_accessed = 4 * (x_blk.size + w1e.size + w2e.size + selr.size
                          + wfc3.size + b1e.size + b2e.size + bfc2.size
                          + bpad * 10)

    out3 = pl.pallas_call(
        convnet_kernel,
        out_shape=jax.ShapeDtypeStruct((nb, 10, bt), jnp.float32),
        grid=(nb,),
        in_specs=[
            pl.BlockSpec((1, _H, n), lambda i: (i, 0, 0)),          # x block
            pl.BlockSpec((3, 8 * _H, _H), lambda i: (0, 0, 0)),     # w1e
            pl.BlockSpec((8 * _H, 1), lambda i: (0, 0)),            # b1e
            pl.BlockSpec((3, 224, 112), lambda i: (0, 0, 0)),       # w2e
            pl.BlockSpec((224, 1), lambda i: (0, 0)),               # b2e
            pl.BlockSpec((112, 224), lambda i: (0, 0)),             # selr
            pl.BlockSpec((7, 10, 224), lambda i: (0, 0, 0)),        # wfc3
            pl.BlockSpec((10, 1), lambda i: (0, 0)),                # bfc
        ],
        out_specs=pl.BlockSpec((1, 10, bt), lambda i: (i, 0, 0)),
        compiler_params=pltpu.CompilerParams(
            dimension_semantics=("parallel",)),
        cost_estimate=pl.CostEstimate(
            flops=int(2 * macs), transcendentals=0,
            bytes_accessed=int(bytes_accessed)),
    )(x_blk, w1e, b1e, w2e, b2e, selr, wfc3, bfc2)

    return out3.transpose(0, 2, 1).reshape(bpad, 10)[:B]


# ------------------------------ pure-JAX reference ----------------------------

def reference_forward(x, w1, b1, w2, b2, wfc, bfc):
    dn = ("NCHW", "OIHW", "NCHW")
    y = lax.conv_general_dilated(x, w1, (1, 1), "SAME", dimension_numbers=dn)
    y = jnp.maximum(y + b1[None, :, None, None], 0.0)
    y = lax.reduce_window(y, -jnp.inf, lax.max, (1, 1, 2, 2), (1, 1, 2, 2), "VALID")
    y = lax.conv_general_dilated(y, w2, (1, 1), "SAME", dimension_numbers=dn)
    y = jnp.maximum(y + b2[None, :, None, None], 0.0)
    y = lax.reduce_window(y, -jnp.inf, lax.max, (1, 1, 2, 2), (1, 1, 2, 2), "VALID")
    flat = y.reshape(x.shape[0], -1)
    return flat @ wfc + bfc[None, :]


# ----------------------------------- main -------------------------------------

if __name__ == "__main__":
    key = jax.random.PRNGKey(0)
    kx, k1, k2, k3, k4, k5, k6 = jax.random.split(key, 7)

    B = 2
    x = jax.random.normal(kx, (B, 1, 28, 28), dtype=jnp.float32)

    # Deterministic synthetic parameters (shapes from the PyTorch module).
    w1 = 0.1 * jax.random.normal(k1, (8, 1, 3, 3), dtype=jnp.float32)
    b1 = 0.1 * jax.random.normal(k2, (8,), dtype=jnp.float32)
    w2 = 0.1 * jax.random.normal(k3, (16, 8, 3, 3), dtype=jnp.float32)
    b2 = 0.1 * jax.random.normal(k4, (16,), dtype=jnp.float32)
    # torch Linear(784, 10) computes x @ W.T + b; we store W already transposed.
    wfc = 0.05 * jax.random.normal(k5, (16 * 7 * 7, 10), dtype=jnp.float32)
    bfc = 0.05 * jax.random.normal(k6, (10,), dtype=jnp.float32)

    out = jax.block_until_ready(model_forward(x, w1, b1, w2, b2, wfc, bfc))
    ref = reference_forward(x, w1, b1, w2, b2, wfc, bfc)

    assert out.shape == (B, 10)
    err = jnp.max(jnp.abs(out - ref))
    assert jnp.allclose(out, ref, atol=2e-3, rtol=2e-3), f"mismatch: max abs err {err}"
    print("KERNEL_OK")
</pallas_src>

<mosaic_0001>
module attributes {stable_mosaic.version = 11 : i64} {
  func.func @convnet_kernel(%arg0: i32, %arg1: memref<1x28x896xf32, #tpu.memory_space<vmem>>, %arg2: memref<3x224x28xf32, #tpu.memory_space<vmem>>, %arg3: memref<224x1xf32, #tpu.memory_space<vmem>>, %arg4: memref<3x224x112xf32, #tpu.memory_space<vmem>>, %arg5: memref<224x1xf32, #tpu.memory_space<vmem>>, %arg6: memref<112x224xf32, #tpu.memory_space<vmem>>, %arg7: memref<7x10x224xf32, #tpu.memory_space<vmem>>, %arg8: memref<10x1xf32, #tpu.memory_space<vmem>>, %arg9: memref<1x10x32xf32, #tpu.memory_space<vmem>>) attributes {dimension_semantics = [#tpu.dimension_semantics<parallel>], iteration_bounds = array<i64: 1>, scalar_prefetch = 0 : i64, scratch_operands = 0 : i64, tpu.core_type = #tpu.core_type<tc>, window_params = [{transform_indices = @transform_0, window_bounds = array<i64: 1, 28, 896>}, {pipeline_mode = #tpu.pipeline_mode<synchronous>, transform_indices = @transform_1, window_bounds = array<i64: 3, 224, 28>}, {pipeline_mode = #tpu.pipeline_mode<synchronous>, transform_indices = @transform_2, window_bounds = array<i64: 224, 1>}, {pipeline_mode = #tpu.pipeline_mode<synchronous>, transform_indices = @transform_3, window_bounds = array<i64: 3, 224, 112>}, {pipeline_mode = #tpu.pipeline_mode<synchronous>, transform_indices = @transform_4, window_bounds = array<i64: 224, 1>}, {pipeline_mode = #tpu.pipeline_mode<synchronous>, transform_indices = @transform_5, window_bounds = array<i64: 112, 224>}, {pipeline_mode = #tpu.pipeline_mode<synchronous>, transform_indices = @transform_6, window_bounds = array<i64: 7, 10, 224>}, {pipeline_mode = #tpu.pipeline_mode<synchronous>, transform_indices = @transform_7, window_bounds = array<i64: 10, 1>}, {transform_indices = @transform_8, window_bounds = array<i64: 1, 10, 32>}]} {
    %0 = tpu.iota {dimensions = array<i32: 1>} : vector<1x896xi32>
    %c0 = arith.constant 0 : index
    %c0_0 = arith.constant 0 : index
    %c0_1 = arith.constant 0 : index
    %1 = vector.load %arg1[%c0, %c0_0, %c0_1] : memref<1x28x896xf32, #tpu.memory_space<vmem>>, vector<1x28x896xf32>
    %2 = vector.shape_cast %1 : vector<1x28x896xf32> to vector<28x896xf32>
    %c32_i32 = arith.constant 32 : i32
    %3 = vector.broadcast %c32_i32 : i32 to vector<1x896xi32>
    %4 = arith.cmpi sge, %0, %3 : vector<1x896xi32>
    %5 = arith.extui %4 : vector<1x896xi1> to vector<1x896xi32>
    %6 = arith.sitofp %5 : vector<1x896xi32> to vector<1x896xf32>
    %c864_i32 = arith.constant 864 : i32
    %7 = vector.broadcast %c864_i32 : i32 to vector<1x896xi32>
    %8 = arith.cmpi slt, %0, %7 : vector<1x896xi32>
    %9 = arith.extui %8 : vector<1x896xi1> to vector<1x896xi32>
    %10 = arith.sitofp %9 : vector<1x896xi32> to vector<1x896xf32>
    %c32_i32_2 = arith.constant 32 : i32
    %11 = tpu.dynamic_rotate %2 by %c32_i32_2 dim 1 : vector<28x896xf32>, i32 -> vector<28x896xf32>
    %12 = vector.broadcast %6 : vector<1x896xf32> to vector<28x896xf32>
    %13 = arith.mulf %11, %12 : vector<28x896xf32>
    %c864_i32_3 = arith.constant 864 : i32
    %14 = tpu.dynamic_rotate %2 by %c864_i32_3 dim 1 : vector<28x896xf32>, i32 -> vector<28x896xf32>
    %15 = vector.broadcast %10 : vector<1x896xf32> to vector<28x896xf32>
    %16 = arith.mulf %14, %15 : vector<28x896xf32>
    %c0_4 = arith.constant 0 : index
    %c0_5 = arith.constant 0 : index
    %c0_6 = arith.constant 0 : index
    %17 = vector.load %arg2[%c0_4, %c0_5, %c0_6] : memref<3x224x28xf32, #tpu.memory_space<vmem>>, vector<1x224x28xf32>
    %18 = vector.shape_cast %17 : vector<1x224x28xf32> to vector<224x28xf32>
    %cst = arith.constant dense<0.000000e+00> : vector<224x896xf32>
    %19 = tpu.matmul %18, %13, %cst {dimension_numbers = #tpu.dot_dimension_numbers<[1], [0], [0], [1], [0, 0, 1, 1], [], []>} : vector<224x28xf32>, vector<28x896xf32>, vector<224x896xf32> -> vector<224x896xf32>
    %c1 = arith.constant 1 : index
    %c0_7 = arith.constant 0 : index
    %c0_8 = arith.constant 0 : index
    %20 = vector.load %arg2[%c1, %c0_7, %c0_8] : memref<3x224x28xf32, #tpu.memory_space<vmem>>, vector<1x224x28xf32>
    %21 = vector.shape_cast %20 : vector<1x224x28xf32> to vector<224x28xf32>
    %cst_9 = arith.constant dense<0.000000e+00> : vector<224x896xf32>
    %22 = tpu.matmul %21, %2, %cst_9 {dimension_numbers = #tpu.dot_dimension_numbers<[1], [0], [0], [1], [0, 0, 1, 1], [], []>} : vector<224x28xf32>, vector<28x896xf32>, vector<224x896xf32> -> vector<224x896xf32>
    %23 = arith.addf %19, %22 : vector<224x896xf32>
    %c2 = arith.constant 2 : index
    %c0_10 = arith.constant 0 : index
    %c0_11 = arith.constant 0 : index
    %24 = vector.load %arg2[%c2, %c0_10, %c0_11] : memref<3x224x28xf32, #tpu.memory_space<vmem>>, vector<1x224x28xf32>
    %25 = vector.shape_cast %24 : vector<1x224x28xf32> to vector<224x28xf32>
    %cst_12 = arith.constant dense<0.000000e+00> : vector<224x896xf32>
    %26 = tpu.matmul %25, %16, %cst_12 {dimension_numbers = #tpu.dot_dimension_numbers<[1], [0], [0], [1], [0, 0, 1, 1], [], []>} : vector<224x28xf32>, vector<28x896xf32>, vector<224x896xf32> -> vector<224x896xf32>
    %27 = arith.addf %23, %26 : vector<224x896xf32>
    %c0_13 = arith.constant 0 : index
    %c0_14 = arith.constant 0 : index
    %28 = vector.load %arg3[%c0_13, %c0_14] : memref<224x1xf32, #tpu.memory_space<vmem>>, vector<224x1xf32>
    %29 = vector.broadcast %28 : vector<224x1xf32> to vector<224x896xf32>
    %30 = arith.addf %27, %29 : vector<224x896xf32>
    %cst_15 = arith.constant 0.000000e+00 : f32
    %31 = vector.broadcast %cst_15 : f32 to vector<224x896xf32>
    %32 = arith.maximumf %30, %31 : vector<224x896xf32>
    %c0_16 = arith.constant 0 : index
    %c0_17 = arith.constant 0 : index
    %33 = vector.load %arg6[%c0_16, %c0_17] : memref<112x224xf32, #tpu.memory_space<vmem>>, vector<112x224xf32>
    %c223_i32 = arith.constant 223 : i32
    %34 = tpu.dynamic_rotate %32 by %c223_i32 dim 0 : vector<224x896xf32>, i32 -> vector<224x896xf32>
    %35 = arith.maximumf %32, %34 : vector<224x896xf32>
    %cst_18 = arith.constant dense<0.000000e+00> : vector<112x896xf32>
    %36 = tpu.matmul %33, %35, %cst_18 {dimension_numbers = #tpu.dot_dimension_numbers<[1], [0], [0], [1], [0, 0, 1, 1], [], []>} : vector<112x224xf32>, vector<224x896xf32>, vector<112x896xf32> -> vector<112x896xf32>
    %c864_i32_19 = arith.constant 864 : i32
    %37 = tpu.dynamic_rotate %36 by %c864_i32_19 dim 1 : vector<112x896xf32>, i32 -> vector<112x896xf32>
    %38 = arith.maximumf %36, %37 : vector<112x896xf32>
    %c64_i32 = arith.constant 64 : i32
    %39 = vector.broadcast %c64_i32 : i32 to vector<1x896xi32>
    %40 = arith.cmpi sge, %0, %39 : vector<1x896xi32>
    %41 = arith.extui %40 : vector<1x896xi1> to vector<1x896xi32>
    %42 = arith.sitofp %41 : vector<1x896xi32> to vector<1x896xf32>
    %c832_i32 = arith.constant 832 : i32
    %43 = vector.broadcast %c832_i32 : i32 to vector<1x896xi32>
    %44 = arith.cmpi slt, %0, %43 : vector<1x896xi32>
    %45 = arith.extui %44 : vector<1x896xi1> to vector<1x896xi32>
    %46 = arith.sitofp %45 : vector<1x896xi32> to vector<1x896xf32>
    %c64_i32_20 = arith.constant 64 : i32
    %47 = tpu.dynamic_rotate %38 by %c64_i32_20 dim 1 : vector<112x896xf32>, i32 -> vector<112x896xf32>
    %48 = vector.broadcast %42 : vector<1x896xf32> to vector<112x896xf32>
    %49 = arith.mulf %47, %48 : vector<112x896xf32>
    %c832_i32_21 = arith.constant 832 : i32
    %50 = tpu.dynamic_rotate %38 by %c832_i32_21 dim 1 : vector<112x896xf32>, i32 -> vector<112x896xf32>
    %51 = vector.broadcast %46 : vector<1x896xf32> to vector<112x896xf32>
    %52 = arith.mulf %50, %51 : vector<112x896xf32>
    %c0_22 = arith.constant 0 : index
    %c0_23 = arith.constant 0 : index
    %c0_24 = arith.constant 0 : index
    %53 = vector.load %arg4[%c0_22, %c0_23, %c0_24] : memref<3x224x112xf32, #tpu.memory_space<vmem>>, vector<1x224x112xf32>
    %54 = vector.shape_cast %53 : vector<1x224x112xf32> to vector<224x112xf32>
    %cst_25 = arith.constant dense<0.000000e+00> : vector<224x896xf32>
    %55 = tpu.matmul %54, %49, %cst_25 {dimension_numbers = #tpu.dot_dimension_numbers<[1], [0], [0], [1], [0, 0, 1, 1], [], []>} : vector<224x112xf32>, vector<112x896xf32>, vector<224x896xf32> -> vector<224x896xf32>
    %c1_26 = arith.constant 1 : index
    %c0_27 = arith.constant 0 : index
    %c0_28 = arith.constant 0 : index
    %56 = vector.load %arg4[%c1_26, %c0_27, %c0_28] : memref<3x224x112xf32, #tpu.memory_space<vmem>>, vector<1x224x112xf32>
    %57 = vector.shape_cast %56 : vector<1x224x112xf32> to vector<224x112xf32>
    %cst_29 = arith.constant dense<0.000000e+00> : vector<224x896xf32>
    %58 = tpu.matmul %57, %38, %cst_29 {dimension_numbers = #tpu.dot_dimension_numbers<[1], [0], [0], [1], [0, 0, 1, 1], [], []>} : vector<224x112xf32>, vector<112x896xf32>, vector<224x896xf32> -> vector<224x896xf32>
    %59 = arith.addf %55, %58 : vector<224x896xf32>
    %c2_30 = arith.constant 2 : index
    %c0_31 = arith.constant 0 : index
    %c0_32 = arith.constant 0 : index
    %60 = vector.load %arg4[%c2_30, %c0_31, %c0_32] : memref<3x224x112xf32, #tpu.memory_space<vmem>>, vector<1x224x112xf32>
    %61 = vector.shape_cast %60 : vector<1x224x112xf32> to vector<224x112xf32>
    %cst_33 = arith.constant dense<0.000000e+00> : vector<224x896xf32>
    %62 = tpu.matmul %61, %52, %cst_33 {dimension_numbers = #tpu.dot_dimension_numbers<[1], [0], [0], [1], [0, 0, 1, 1], [], []>} : vector<224x112xf32>, vector<112x896xf32>, vector<224x896xf32> -> vector<224x896xf32>
    %63 = arith.addf %59, %62 : vector<224x896xf32>
    %c0_34 = arith.constant 0 : index
    %c0_35 = arith.constant 0 : index
    %64 = vector.load %arg5[%c0_34, %c0_35] : memref<224x1xf32, #tpu.memory_space<vmem>>, vector<224x1xf32>
    %65 = vector.broadcast %64 : vector<224x1xf32> to vector<224x896xf32>
    %66 = arith.addf %63, %65 : vector<224x896xf32>
    %cst_36 = arith.constant 0.000000e+00 : f32
    %67 = vector.broadcast %cst_36 : f32 to vector<224x896xf32>
    %68 = arith.maximumf %66, %67 : vector<224x896xf32>
    %c223_i32_37 = arith.constant 223 : i32
    %69 = tpu.dynamic_rotate %68 by %c223_i32_37 dim 0 : vector<224x896xf32>, i32 -> vector<224x896xf32>
    %70 = arith.maximumf %68, %69 : vector<224x896xf32>
    %c832_i32_38 = arith.constant 832 : i32
    %71 = tpu.dynamic_rotate %70 by %c832_i32_38 dim 1 : vector<224x896xf32>, i32 -> vector<224x896xf32>
    %72 = arith.maximumf %70, %71 : vector<224x896xf32>
    %c0_39 = arith.constant 0 : index
    %c0_40 = arith.constant 0 : index
    %c0_41 = arith.constant 0 : index
    %73 = vector.load %arg7[%c0_39, %c0_40, %c0_41] : memref<7x10x224xf32, #tpu.memory_space<vmem>>, vector<1x10x224xf32>
    %74 = vector.shape_cast %73 : vector<1x10x224xf32> to vector<10x224xf32>
    %75 = vector.extract_strided_slice %72 {offsets = [0, 0], sizes = [224, 32], strides = [1, 1]} : vector<224x896xf32> to vector<224x32xf32>
    %cst_42 = arith.constant dense<0.000000e+00> : vector<10x32xf32>
    %76 = tpu.matmul %74, %75, %cst_42 {dimension_numbers = #tpu.dot_dimension_numbers<[1], [0], [0], [1], [0, 0, 1, 1], [], []>} : vector<10x224xf32>, vector<224x32xf32>, vector<10x32xf32> -> vector<10x32xf32>
    %c1_43 = arith.constant 1 : index
    %c0_44 = arith.constant 0 : index
    %c0_45 = arith.constant 0 : index
    %77 = vector.load %arg7[%c1_43, %c0_44, %c0_45] : memref<7x10x224xf32, #tpu.memory_space<vmem>>, vector<1x10x224xf32>
    %78 = vector.shape_cast %77 : vector<1x10x224xf32> to vector<10x224xf32>
    %79 = vector.extract_strided_slice %72 {offsets = [0, 128], sizes = [224, 32], strides = [1, 1]} : vector<224x896xf32> to vector<224x32xf32>
    %cst_46 = arith.constant dense<0.000000e+00> : vector<10x32xf32>
    %80 = tpu.matmul %78, %79, %cst_46 {dimension_numbers = #tpu.dot_dimension_numbers<[1], [0], [0], [1], [0, 0, 1, 1], [], []>} : vector<10x224xf32>, vector<224x32xf32>, vector<10x32xf32> -> vector<10x32xf32>
    %81 = arith.addf %76, %80 : vector<10x32xf32>
    %c2_47 = arith.constant 2 : index
    %c0_48 = arith.constant 0 : index
    %c0_49 = arith.constant 0 : index
    %82 = vector.load %arg7[%c2_47, %c0_48, %c0_49] : memref<7x10x224xf32, #tpu.memory_space<vmem>>, vector<1x10x224xf32>
    %83 = vector.shape_cast %82 : vector<1x10x224xf32> to vector<10x224xf32>
    %84 = vector.extract_strided_slice %72 {offsets = [0, 256], sizes = [224, 32], strides = [1, 1]} : vector<224x896xf32> to vector<224x32xf32>
    %cst_50 = arith.constant dense<0.000000e+00> : vector<10x32xf32>
    %85 = tpu.matmul %83, %84, %cst_50 {dimension_numbers = #tpu.dot_dimension_numbers<[1], [0], [0], [1], [0, 0, 1, 1], [], []>} : vector<10x224xf32>, vector<224x32xf32>, vector<10x32xf32> -> vector<10x32xf32>
    %86 = arith.addf %81, %85 : vector<10x32xf32>
    %c3 = arith.constant 3 : index
    %c0_51 = arith.constant 0 : index
    %c0_52 = arith.constant 0 : index
    %87 = vector.load %arg7[%c3, %c0_51, %c0_52] : memref<7x10x224xf32, #tpu.memory_space<vmem>>, vector<1x10x224xf32>
    %88 = vector.shape_cast %87 : vector<1x10x224xf32> to vector<10x224xf32>
    %89 = vector.extract_strided_slice %72 {offsets = [0, 384], sizes = [224, 32], strides = [1, 1]} : vector<224x896xf32> to vector<224x32xf32>
    %cst_53 = arith.constant dense<0.000000e+00> : vector<10x32xf32>
    %90 = tpu.matmul %88, %89, %cst_53 {dimension_numbers = #tpu.dot_dimension_numbers<[1], [0], [0], [1], [0, 0, 1, 1], [], []>} : vector<10x224xf32>, vector<224x32xf32>, vector<10x32xf32> -> vector<10x32xf32>
    %91 = arith.addf %86, %90 : vector<10x32xf32>
    %c4 = arith.constant 4 : index
    %c0_54 = arith.constant 0 : index
    %c0_55 = arith.constant 0 : index
    %92 = vector.load %arg7[%c4, %c0_54, %c0_55] : memref<7x10x224xf32, #tpu.memory_space<vmem>>, vector<1x10x224xf32>
    %93 = vector.shape_cast %92 : vector<1x10x224xf32> to vector<10x224xf32>
    %94 = vector.extract_strided_slice %72 {offsets = [0, 512], sizes = [224, 32], strides = [1, 1]} : vector<224x896xf32> to vector<224x32xf32>
    %cst_56 = arith.constant dense<0.000000e+00> : vector<10x32xf32>
    %95 = tpu.matmul %93, %94, %cst_56 {dimension_numbers = #tpu.dot_dimension_numbers<[1], [0], [0], [1], [0, 0, 1, 1], [], []>} : vector<10x224xf32>, vector<224x32xf32>, vector<10x32xf32> -> vector<10x32xf32>
    %96 = arith.addf %91, %95 : vector<10x32xf32>
    %c5 = arith.constant 5 : index
    %c0_57 = arith.constant 0 : index
    %c0_58 = arith.constant 0 : index
    %97 = vector.load %arg7[%c5, %c0_57, %c0_58] : memref<7x10x224xf32, #tpu.memory_space<vmem>>, vector<1x10x224xf32>
    %98 = vector.shape_cast %97 : vector<1x10x224xf32> to vector<10x224xf32>
    %99 = vector.extract_strided_slice %72 {offsets = [0, 640], sizes = [224, 32], strides = [1, 1]} : vector<224x896xf32> to vector<224x32xf32>
    %cst_59 = arith.constant dense<0.000000e+00> : vector<10x32xf32>
    %100 = tpu.matmul %98, %99, %cst_59 {dimension_numbers = #tpu.dot_dimension_numbers<[1], [0], [0], [1], [0, 0, 1, 1], [], []>} : vector<10x224xf32>, vector<224x32xf32>, vector<10x32xf32> -> vector<10x32xf32>
    %101 = arith.addf %96, %100 : vector<10x32xf32>
    %c6 = arith.constant 6 : index
    %c0_60 = arith.constant 0 : index
    %c0_61 = arith.constant 0 : index
    %102 = vector.load %arg7[%c6, %c0_60, %c0_61] : memref<7x10x224xf32, #tpu.memory_space<vmem>>, vector<1x10x224xf32>
    %103 = vector.shape_cast %102 : vector<1x10x224xf32> to vector<10x224xf32>
    %104 = vector.extract_strided_slice %72 {offsets = [0, 768], sizes = [224, 32], strides = [1, 1]} : vector<224x896xf32> to vector<224x32xf32>
    %cst_62 = arith.constant dense<0.000000e+00> : vector<10x32xf32>
    %105 = tpu.matmul %103, %104, %cst_62 {dimension_numbers = #tpu.dot_dimension_numbers<[1], [0], [0], [1], [0, 0, 1, 1], [], []>} : vector<10x224xf32>, vector<224x32xf32>, vector<10x32xf32> -> vector<10x32xf32>
    %106 = arith.addf %101, %105 : vector<10x32xf32>
    %c0_63 = arith.constant 0 : index
    %c0_64 = arith.constant 0 : index
    %107 = vector.load %arg8[%c0_63, %c0_64] : memref<10x1xf32, #tpu.memory_space<vmem>>, vector<10x1xf32>
    %108 = vector.broadcast %107 : vector<10x1xf32> to vector<10x32xf32>
    %109 = arith.addf %106, %108 : vector<10x32xf32>
    %c0_65 = arith.constant 0 : index
    %c0_66 = arith.constant 0 : index
    %c0_67 = arith.constant 0 : index
    %110 = vector.load %arg9[%c0_65, %c0_66, %c0_67] : memref<1x10x32xf32, #tpu.memory_space<vmem>>, vector<1x10x32xf32>
    %111 = vector.shape_cast %110 : vector<1x10x32xf32> to vector<10x32xf32>
    %112 = vector.shape_cast %109 : vector<10x32xf32> to vector<1x10x32xf32>
    tpu.vector_store %arg9[%c0_65, %c0_66, %c0_67], %112 {strides = array<i32>} : memref<1x10x32xf32, #tpu.memory_space<vmem>>, vector<1x10x32xf32>,
    return
  }
  func.func @transform_0(%arg0: i32) -> (i32, i32, i32) {
    %c0_i32 = arith.constant 0 : i32
    %c0_i32_0 = arith.constant 0 : i32
    %c0_i32_1 = arith.constant 0 : i32
    return %arg0, %c0_i32, %c0_i32_0 : i32, i32, i32
  }
  func.func @transform_1(%arg0: i32) -> (i32, i32, i32) {
    %c0_i32 = arith.constant 0 : i32
    %c0_i32_0 = arith.constant 0 : i32
    %c0_i32_1 = arith.constant 0 : i32
    %c0_i32_2 = arith.constant 0 : i32
    return %c0_i32, %c0_i32_0, %c0_i32_1 : i32, i32, i32
  }
  func.func @transform_2(%arg0: i32) -> (i32, i32) {
    %c0_i32 = arith.constant 0 : i32
    %c0_i32_0 = arith.constant 0 : i32
    %c0_i32_1 = arith.constant 0 : i32
    return %c0_i32, %c0_i32_0 : i32, i32
  }
  func.func @transform_3(%arg0: i32) -> (i32, i32, i32) {
    %c0_i32 = arith.constant 0 : i32
    %c0_i32_0 = arith.constant 0 : i32
    %c0_i32_1 = arith.constant 0 : i32
    %c0_i32_2 = arith.constant 0 : i32
    return %c0_i32, %c0_i32_0, %c0_i32_1 : i32, i32, i32
  }
  func.func @transform_4(%arg0: i32) -> (i32, i32) {
    %c0_i32 = arith.constant 0 : i32
    %c0_i32_0 = arith.constant 0 : i32
    %c0_i32_1 = arith.constant 0 : i32
    return %c0_i32, %c0_i32_0 : i32, i32
  }
  func.func @transform_5(%arg0: i32) -> (i32, i32) {
    %c0_i32 = arith.constant 0 : i32
    %c0_i32_0 = arith.constant 0 : i32
    %c0_i32_1 = arith.constant 0 : i32
    return %c0_i32, %c0_i32_0 : i32, i32
  }
  func.func @transform_6(%arg0: i32) -> (i32, i32, i32) {
    %c0_i32 = arith.constant 0 : i32
    %c0_i32_0 = arith.constant 0 : i32
    %c0_i32_1 = arith.constant 0 : i32
    %c0_i32_2 = arith.constant 0 : i32
    return %c0_i32, %c0_i32_0, %c0_i32_1 : i32, i32, i32
  }
  func.func @transform_7(%arg0: i32) -> (i32, i32) {
    %c0_i32 = arith.constant 0 : i32
    %c0_i32_0 = arith.constant 0 : i32
    %c0_i32_1 = arith.constant 0 : i32
    return %c0_i32, %c0_i32_0 : i32, i32
  }
  func.func @transform_8(%arg0: i32) -> (i32, i32, i32) {
    %c0_i32 = arith.constant 0 : i32
    %c0_i32_0 = arith.constant 0 : i32
    %c0_i32_1 = arith.constant 0 : i32
    return %arg0, %c0_i32, %c0_i32_0 : i32, i32, i32
  }
}

</mosaic_0001>

<llo_original>
// kernel: model_forward.1
$region0: #{model_forward.1}
  #allocation0 [shape = 'u32[]', space=smem, size = 0x4, offset = 0x4, fixed_abs, tag = 'smem constant byte address 0x4 - core index']
  #allocation1 [shape = 'u32[144,128]{1,0:T(1,128)}', space=vmem, size = 0x12000, scoped, tag = 'internal scratch']
  %s0 = inlined_call_operand.vmem [shape: f32[1,28,896], index: 0, kind: input, shape index: {}]
  %s1 = inlined_call_operand.vmem [shape: f32[3,224,28], index: 1, kind: input, shape index: {}]
  %s2 = inlined_call_operand.vmem [shape: f32[224,1], index: 2, kind: input, shape index: {}]
  %s3 = inlined_call_operand.vmem [shape: f32[3,224,112], index: 3, kind: input, shape index: {}]
  %s4 = inlined_call_operand.vmem [shape: f32[224,1], index: 4, kind: input, shape index: {}]
  %s5 = inlined_call_operand.vmem [shape: f32[112,224], index: 5, kind: input, shape index: {}]
  %s6 = inlined_call_operand.vmem [shape: f32[7,10,224], index: 6, kind: input, shape index: {}]
  %s7 = inlined_call_operand.vmem [shape: f32[10,1], index: 7, kind: input, shape index: {}]
  %s8 = inlined_call_operand.vmem [shape: f32[1,10,32], index: 8, kind: output, shape index: {}]
  %s9 = sld [smem:[#allocation0]]
  $region42: #{model_forward.1} parent=0
    _
  %s11 = ssub.s32 1, %s9
  %s12 = scalar_select 0, %s11, %s9
  // Predicated region
  $region2: #{model_forward.1} parent=0 // pred_check
    _
  $region3: #{model_forward.1} parent=0 // pred_check_branch
    %14 = sbr.rel (0) target = $region5
  $region4: #{model_forward.1} parent=0 // pred_region
    _
  $region5: #{model_forward.1} parent=0 // pred_fallthru
    _
  // Predicated region
  $region6: #{model_forward.1} parent=0 // pred_check
    _
  $region7: #{model_forward.1} parent=0 // pred_check_branch
    %16 = sbr.rel (0) target = $region9
  $region8: #{model_forward.1} parent=0 // pred_region
    _
  $region9: #{model_forward.1} parent=0 // pred_fallthru
    _
  // Predicated region
  $region10: #{model_forward.1} parent=0 // pred_check
    _
  $region11: #{model_forward.1} parent=0 // pred_check_branch
    %18 = sbr.rel (0) target = $region13
  $region12: #{model_forward.1} parent=0 // pred_region
    _
  $region13: #{model_forward.1} parent=0 // pred_fallthru
    _
  // Predicated region
  $region14: #{model_forward.1} parent=0 // pred_check
    _
  $region15: #{model_forward.1} parent=0 // pred_check_branch
    %20 = sbr.rel (0) target = $region17
  $region16: #{model_forward.1} parent=0 // pred_region
    _
  $region17: #{model_forward.1} parent=0 // pred_fallthru
    _
  // Predicated region
  $region18: #{model_forward.1} parent=0 // pred_check
    _
  $region19: #{model_forward.1} parent=0 // pred_check_branch
    %22 = sbr.rel (0) target = $region21
  $region20: #{model_forward.1} parent=0 // pred_region
    _
  $region21: #{model_forward.1} parent=0 // pred_fallthru
    _
  // Predicated region
  $region22: #{model_forward.1} parent=0 // pred_check
    _
  $region23: #{model_forward.1} parent=0 // pred_check_branch
    %24 = sbr.rel (0) target = $region25
  $region24: #{model_forward.1} parent=0 // pred_region
    _
  $region25: #{model_forward.1} parent=0 // pred_fallthru
    _
  // Predicated region
  $region26: #{model_forward.1} parent=0 // pred_check
    _
  $region27: #{model_forward.1} parent=0 // pred_check_branch
    %26 = sbr.rel (0) target = $region29
  $region28: #{model_forward.1} parent=0 // pred_region
    _
  $region29: #{model_forward.1} parent=0 // pred_fallthru
    _
  // Predicated region
  $region30: #{model_forward.1} parent=0 // pred_check
    _
  $region31: #{model_forward.1} parent=0 // pred_check_branch
    %28 = sbr.rel (0) target = $region33
  $region32: #{model_forward.1} parent=0 // pred_region
    _
  $region33: #{model_forward.1} parent=0 // pred_fallthru
    _
  %v29 = vlaneseq
  %v30 = vand.u32 %v29, 127
  %v31 = vadd.s32 %v30, 128
  %v32 = vadd.s32 %v30, 256
  %v33 = vadd.s32 %v30, 384
  %v34 = vadd.s32 %v30, 512
  %v35 = vadd.s32 %v30, 640
  %v36 = vadd.s32 %v30, 768
  %v37 = vld [vmem:[%s0] sm:$0xff]
  %v38 = vld [vmem:[%s0 + $0x8] sm:$0xff]
  %v39 = vld [vmem:[%s0 + $0x10] sm:$0xff]
  %v40 = vld [vmem:[%s0 + $0x18] sm:$0xff]
  %v41 = vld [vmem:[%s0 + $0x20] sm:$0xff]
  %v42 = vld [vmem:[%s0 + $0x28] sm:$0xff]
  %v43 = vld [vmem:[%s0 + $0x30] sm:$0xff]
  %v44 = vld [vmem:[%s0 + $0x38] sm:$0xff]
  %v45 = vld [vmem:[%s0 + $0x40] sm:$0xff]
  %v46 = vld [vmem:[%s0 + $0x48] sm:$0xff]
  %v47 = vld [vmem:[%s0 + $0x50] sm:$0xff]
  %v48 = vld [vmem:[%s0 + $0x58] sm:$0xff]
  %v49 = vld [vmem:[%s0 + $0x60] sm:$0xff]
  %v50 = vld [vmem:[%s0 + $0x68] sm:$0xff]
  %v51 = vld [vmem:[%s0 + $0x70] sm:$0xff]
  %v52 = vld [vmem:[%s0 + $0x78] sm:$0xff]
  %v53 = vld [vmem:[%s0 + $0x80] sm:$0xff]
  %v54 = vld [vmem:[%s0 + $0x88] sm:$0xff]
  %v55 = vld [vmem:[%s0 + $0x90] sm:$0xff]
  %v56 = vld [vmem:[%s0 + $0x98] sm:$0xff]
  %v57 = vld [vmem:[%s0 + $0xa0] sm:$0xff]
  %v58 = vld [vmem:[%s0 + $0xa8] sm:$0xf]
  %v59 = vld [vmem:[%s0 + $0xb0] sm:$0xf]
  %v60 = vld [vmem:[%s0 + $0xb8] sm:$0xf]
  %v61 = vld [vmem:[%s0 + $0xc0] sm:$0xf]
  %v62 = vld [vmem:[%s0 + $0xc8] sm:$0xf]
  %v63 = vld [vmem:[%s0 + $0xd0] sm:$0xf]
  %v64 = vld [vmem:[%s0 + $0xd8] sm:$0xf]
  %vm65 = vcmp.ge.s32.totalorder %v30, 32
  %vm66 = vcmp.ge.s32.totalorder %v31, 32
  %vm67 = vcmp.ge.s32.totalorder %v32, 32
  %vm68 = vcmp.ge.s32.totalorder %v33, 32
  %vm69 = vcmp.ge.s32.totalorder %v34, 32
  %vm70 = vcmp.ge.s32.totalorder %v35, 32
  %vm71 = vcmp.ge.s32.totalorder %v36, 32
  %v72 = vsel %vm65, 1, 0
  %v73 = vsel %vm66, 1, 0
  %v74 = vsel %vm67, 1, 0
  %v75 = vsel %vm68, 1, 0
  %v76 = vsel %vm69, 1, 0
  %v77 = vsel %vm70, 1, 0
  %v78 = vsel %vm71, 1, 0
  %v79 = vcvt.s32.f32 %v72
  %v80 = vcvt.s32.f32 %v73
  %v81 = vcvt.s32.f32 %v74
  %v82 = vcvt.s32.f32 %v75
  %v83 = vcvt.s32.f32 %v76
  %v84 = vcvt.s32.f32 %v77
  %v85 = vcvt.s32.f32 %v78
  %vm86 = vcmp.lt.s32.totalorder %v30, 864
  %vm87 = vcmp.lt.s32.totalorder %v31, 864
  %vm88 = vcmp.lt.s32.totalorder %v32, 864
  %vm89 = vcmp.lt.s32.totalorder %v33, 864
  %vm90 = vcmp.lt.s32.totalorder %v34, 864
  %vm91 = vcmp.lt.s32.totalorder %v35, 864
  %vm92 = vcmp.lt.s32.totalorder %v36, 864
  %v93 = vsel %vm86, 1, 0
  %v94 = vsel %vm87, 1, 0
  %v95 = vsel %vm88, 1, 0
  %v96 = vsel %vm89, 1, 0
  %v97 = vsel %vm90, 1, 0
  %v98 = vsel %vm91, 1, 0
  %v99 = vsel %vm92, 1, 0
  %v100 = vcvt.s32.f32 %v93
  %v101 = vcvt.s32.f32 %v94
  %v102 = vcvt.s32.f32 %v95
  %v103 = vcvt.s32.f32 %v96
  %v104 = vcvt.s32.f32 %v97
  %v105 = vcvt.s32.f32 %v98
  %v106 = vcvt.s32.f32 %v99
  %107 = vrot.lane.b32.xlu0 %v37, 32
  %v108 = vpop.permute.xlu0 %107
  %109 = vrot.lane.b32.xlu0 %v44, 32
  %v110 = vpop.permute.xlu0 %109
  %111 = vrot.lane.b32.xlu0 %v51, 32
  %v112 = vpop.permute.xlu0 %111
  %113 = vrot.lane.b32.xlu0 %v58, 32
  %v114 = vpop.permute.xlu0 %113
  %115 = vrot.lane.b32.xlu0 %v38, 32
  %v116 = vpop.permute.xlu0 %115
  %117 = vrot.lane.b32.xlu0 %v45, 32
  %v118 = vpop.permute.xlu0 %117
  %119 = vrot.lane.b32.xlu0 %v52, 32
  %v120 = vpop.permute.xlu0 %119
  %121 = vrot.lane.b32.xlu0 %v59, 32
  %v122 = vpop.permute.xlu0 %121
  %123 = vrot.lane.b32.xlu0 %v39, 32
  %v124 = vpop.permute.xlu0 %123
  %125 = vrot.lane.b32.xlu0 %v46, 32
  %v126 = vpop.permute.xlu0 %125
  %127 = vrot.lane.b32.xlu0 %v53, 32
  %v128 = vpop.permute.xlu0 %127
  %129 = vrot.lane.b32.xlu0 %v60, 32
  %v130 = vpop.permute.xlu0 %129
  %131 = vrot.lane.b32.xlu0 %v40, 32
  %v132 = vpop.permute.xlu0 %131
  %133 = vrot.lane.b32.xlu0 %v47, 32
  %v134 = vpop.permute.xlu0 %133
  %135 = vrot.lane.b32.xlu0 %v54, 32
  %v136 = vpop.permute.xlu0 %135
  %137 = vrot.lane.b32.xlu0 %v61, 32
  %v138 = vpop.permute.xlu0 %137
  %139 = vrot.lane.b32.xlu0 %v41, 32
  %v140 = vpop.permute.xlu0 %139
  %141 = vrot.lane.b32.xlu0 %v48, 32
  %v142 = vpop.permute.xlu0 %141
  %143 = vrot.lane.b32.xlu0 %v55, 32
  %v144 = vpop.permute.xlu0 %143
  %145 = vrot.lane.b32.xlu0 %v62, 32
  %v146 = vpop.permute.xlu0 %145
  %147 = vrot.lane.b32.xlu0 %v42, 32
  %v148 = vpop.permute.xlu0 %147
  %149 = vrot.lane.b32.xlu0 %v49, 32
  %v150 = vpop.permute.xlu0 %149
  %151 = vrot.lane.b32.xlu0 %v56, 32
  %v152 = vpop.permute.xlu0 %151
  %153 = vrot.lane.b32.xlu0 %v63, 32
  %v154 = vpop.permute.xlu0 %153
  %155 = vrot.lane.b32.xlu0 %v43, 32
  %v156 = vpop.permute.xlu0 %155
  %157 = vrot.lane.b32.xlu0 %v50, 32
  %v158 = vpop.permute.xlu0 %157
  %159 = vrot.lane.b32.xlu0 %v57, 32
  %v160 = vpop.permute.xlu0 %159
  %161 = vrot.lane.b32.xlu0 %v64, 32
  %v162 = vpop.permute.xlu0 %161
  %vm163 = vcmp.lt.s32.totalorder %v30, 32
  %v164 = vsel %vm163, %v148, %v156
  %v165 = vsel %vm163, %v150, %v158
  %v166 = vsel %vm163, %v152, %v160
  %v167 = vsel %vm163, %v154, %v162
  %v168 = vsel %vm163, %v140, %v148
  %v169 = vsel %vm163, %v142, %v150
  %v170 = vsel %vm163, %v144, %v152
  %v171 = vsel %vm163, %v146, %v154
  %v172 = vsel %vm163, %v132, %v140
  %v173 = vsel %vm163, %v134, %v142
  %v174 = vsel %vm163, %v136, %v144
  %v175 = vsel %vm163, %v138, %v146
  %v176 = vsel %vm163, %v124, %v132
  %v177 = vsel %vm163, %v126, %v134
  %v178 = vsel %vm163, %v128, %v136
  %v179 = vsel %vm163, %v130, %v138
  %v180 = vsel %vm163, %v116, %v124
  %v181 = vsel %vm163, %v118, %v126
  %v182 = vsel %vm163, %v120, %v128
  %v183 = vsel %vm163, %v122, %v130
  %v184 = vsel %vm163, %v108, %v116
  %v185 = vsel %vm163, %v110, %v118
  %v186 = vsel %vm163, %v112, %v120
  %v187 = vsel %vm163, %v114, %v122
  %v188 = vsel %vm163, %v156, %v108
  %v189 = vsel %vm163, %v158, %v110
  %v190 = vsel %vm163, %v160, %v112
  %v191 = vsel %vm163, %v162, %v114
  %v192 = vmul.f32 %v188, %v79
  %v193 = vmul.f32 %v184, %v80
  %v194 = vmul.f32 %v180, %v81
  %v195 = vmul.f32 %v176, %v82
  %v196 = vmul.f32 %v172, %v83
  %v197 = vmul.f32 %v168, %v84
  %v198 = vmul.f32 %v164, %v85
  %v199 = vmul.f32 %v189, %v79
  %v200 = vmul.f32 %v185, %v80
  %v201 = vmul.f32 %v181, %v81
  %v202 = vmul.f32 %v177, %v82
  %v203 = vmul.f32 %v173, %v83
  %v204 = vmul.f32 %v169, %v84
  %v205 = vmul.f32 %v165, %v85
  %v206 = vmul.f32 %v190, %v79
  %v207 = vmul.f32 %v186, %v80
  %v208 = vmul.f32 %v182, %v81
  %v209 = vmul.f32 %v178, %v82
  %v210 = vmul.f32 %v174, %v83
  %v211 = vmul.f32 %v170, %v84
  %v212 = vmul.f32 %v166, %v85
  %v213 = vmul.f32 %v191, %v79
  %v214 = vmul.f32 %v187, %v80
  %v215 = vmul.f32 %v183, %v81
  %v216 = vmul.f32 %v179, %v82
  %v217 = vmul.f32 %v175, %v83
  %v218 = vmul.f32 %v171, %v84
  %v219 = vmul.f32 %v167, %v85
  %220 = vrot.lane.b32.xlu0 %v37, 96
  %v221 = vpop.permute.xlu0 %220
  %222 = vrot.lane.b32.xlu0 %v44, 96
  %v223 = vpop.permute.xlu0 %222
  %224 = vrot.lane.b32.xlu0 %v51, 96
  %v225 = vpop.permute.xlu0 %224
  %226 = vrot.lane.b32.xlu0 %v58, 96
  %v227 = vpop.permute.xlu0 %226
  %228 = vrot.lane.b32.xlu0 %v38, 96
  %v229 = vpop.permute.xlu0 %228
  %230 = vrot.lane.b32.xlu0 %v45, 96
  %v231 = vpop.permute.xlu0 %230
  %232 = vrot.lane.b32.xlu0 %v52, 96
  %v233 = vpop.permute.xlu0 %232
  %234 = vrot.lane.b32.xlu0 %v59, 96
  %v235 = vpop.permute.xlu0 %234
  %236 = vrot.lane.b32.xlu0 %v39, 96
  %v237 = vpop.permute.xlu0 %236
  %238 = vrot.lane.b32.xlu0 %v46, 96
  %v239 = vpop.permute.xlu0 %238
  %240 = vrot.lane.b32.xlu0 %v53, 96
  %v241 = vpop.permute.xlu0 %240
  %242 = vrot.lane.b32.xlu0 %v60, 96
  %v243 = vpop.permute.xlu0 %242
  %244 = vrot.lane.b32.xlu0 %v40, 96
  %v245 = vpop.permute.xlu0 %244
  %246 = vrot.lane.b32.xlu0 %v47, 96
  %v247 = vpop.permute.xlu0 %246
  %248 = vrot.lane.b32.xlu0 %v54, 96
  %v249 = vpop.permute.xlu0 %248
  %250 = vrot.lane.b32.xlu0 %v61, 96
  %v251 = vpop.permute.xlu0 %250
  %252 = vrot.lane.b32.xlu0 %v41, 96
  %v253 = vpop.permute.xlu0 %252
  %254 = vrot.lane.b32.xlu0 %v48, 96
  %v255 = vpop.permute.xlu0 %254
  %256 = vrot.lane.b32.xlu0 %v55, 96
  %v257 = vpop.permute.xlu0 %256
  %258 = vrot.lane.b32.xlu0 %v62, 96
  %v259 = vpop.permute.xlu0 %258
  %260 = vrot.lane.b32.xlu0 %v42, 96
  %v261 = vpop.permute.xlu0 %260
  %262 = vrot.lane.b32.xlu0 %v49, 96
  %v263 = vpop.permute.xlu0 %262
  %264 = vrot.lane.b32.xlu0 %v56, 96
  %v265 = vpop.permute.xlu0 %264
  %266 = vrot.lane.b32.xlu0 %v63, 96
  %v267 = vpop.permute.xlu0 %266
  %268 = vrot.lane.b32.xlu0 %v43, 96
  %v269 = vpop.permute.xlu0 %268
  %270 = vrot.lane.b32.xlu0 %v50, 96
  %v271 = vpop.permute.xlu0 %270
  %272 = vrot.lane.b32.xlu0 %v57, 96
  %v273 = vpop.permute.xlu0 %272
  %274 = vrot.lane.b32.xlu0 %v64, 96
  %v275 = vpop.permute.xlu0 %274
  %vm276 = vcmp.lt.s32.totalorder %v30, 96
  %v277 = vsel %vm276, %v261, %v269
  %v278 = vsel %vm276, %v263, %v271
  %v279 = vsel %vm276, %v265, %v273
  %v280 = vsel %vm276, %v267, %v275
  %v281 = vsel %vm276, %v253, %v261
  %v282 = vsel %vm276, %v255, %v263
  %v283 = vsel %vm276, %v257, %v265
  %v284 = vsel %vm276, %v259, %v267
  %v285 = vsel %vm276, %v245, %v253
  %v286 = vsel %vm276, %v247, %v255
  %v287 = vsel %vm276, %v249, %v257
  %v288 = vsel %vm276, %v251, %v259
  %v289 = vsel %vm276, %v237, %v245
  %v290 = vsel %vm276, %v239, %v247
  %v291 = vsel %vm276, %v241, %v249
  %v292 = vsel %vm276, %v243, %v251
  %v293 = vsel %vm276, %v229, %v237
  %v294 = vsel %vm276, %v231, %v239
  %v295 = vsel %vm276, %v233, %v241
  %v296 = vsel %vm276, %v235, %v243
  %v297 = vsel %vm276, %v221, %v229
  %v298 = vsel %vm276, %v223, %v231
  %v299 = vsel %vm276, %v225, %v233
  %v300 = vsel %vm276, %v227, %v235
  %v301 = vsel %vm276, %v269, %v221
  %v302 = vsel %vm276, %v271, %v223
  %v303 = vsel %vm276, %v273, %v225
  %v304 = vsel %vm276, %v275, %v227
  %v305 = vmul.f32 %v297, %v100
  %v306 = vmul.f32 %v293, %v101
  %v307 = vmul.f32 %v289, %v102
  %v308 = vmul.f32 %v285, %v103
  %v309 = vmul.f32 %v281, %v104
  %v310 = vmul.f32 %v277, %v105
  %v311 = vmul.f32 %v301, %v106
  %v312 = vmul.f32 %v298, %v100
  %v313 = vmul.f32 %v294, %v101
  %v314 = vmul.f32 %v290, %v102
  %v315 = vmul.f32 %v286, %v103
  %v316 = vmul.f32 %v282, %v104
  %v317 = vmul.f32 %v278, %v105
  %v318 = vmul.f32 %v302, %v106
  %v319 = vmul.f32 %v299, %v100
  %v320 = vmul.f32 %v295, %v101
  %v321 = vmul.f32 %v291, %v102
  %v322 = vmul.f32 %v287, %v103
  %v323 = vmul.f32 %v283, %v104
  %v324 = vmul.f32 %v279, %v105
  %v325 = vmul.f32 %v303, %v106
  %v326 = vmul.f32 %v300, %v100
  %v327 = vmul.f32 %v296, %v101
  %v328 = vmul.f32 %v292, %v102
  %v329 = vmul.f32 %v288, %v103
  %v330 = vmul.f32 %v284, %v104
  %v331 = vmul.f32 %v280, %v105
  %v332 = vmul.f32 %v304, %v106
  %v333 = vld [vmem:[%s1] sm:$0xff]
  %v334 = vld [vmem:[%s1 + $0x8] sm:$0xff]
  %v335 = vld [vmem:[%s1 + $0x10] sm:$0xff]
  %v336 = vld [vmem:[%s1 + $0x18] sm:$0xff]
  %v337 = vld [vmem:[%s1 + $0x20] sm:$0xff]
  %v338 = vld [vmem:[%s1 + $0x28] sm:$0xff]
  %v339 = vld [vmem:[%s1 + $0x30] sm:$0xff]
  %v340 = vld [vmem:[%s1 + $0x38] sm:$0xff]
  %v341 = vld [vmem:[%s1 + $0x40] sm:$0xff]
  %v342 = vld [vmem:[%s1 + $0x48] sm:$0xff]
  %v343 = vld [vmem:[%s1 + $0x50] sm:$0xff]
  %v344 = vld [vmem:[%s1 + $0x58] sm:$0xff]
  %v345 = vld [vmem:[%s1 + $0x60] sm:$0xff]
  %v346 = vld [vmem:[%s1 + $0x68] sm:$0xff]
  %v347 = vld [vmem:[%s1 + $0x70] sm:$0xff]
  %v348 = vld [vmem:[%s1 + $0x78] sm:$0xff]
  %v349 = vld [vmem:[%s1 + $0x80] sm:$0xff]
  %v350 = vld [vmem:[%s1 + $0x88] sm:$0xff]
  %v351 = vld [vmem:[%s1 + $0x90] sm:$0xff]
  %v352 = vld [vmem:[%s1 + $0x98] sm:$0xff]
  %v353 = vld [vmem:[%s1 + $0xa0] sm:$0xff]
  %v354 = vld [vmem:[%s1 + $0xa8] sm:$0xff]
  %v355 = vld [vmem:[%s1 + $0xb0] sm:$0xff]
  %v356 = vld [vmem:[%s1 + $0xb8] sm:$0xff]
  %v357 = vld [vmem:[%s1 + $0xc0] sm:$0xff]
  %v358 = vld [vmem:[%s1 + $0xc8] sm:$0xff]
  %v359 = vld [vmem:[%s1 + $0xd0] sm:$0xff]
  %v360 = vld [vmem:[%s1 + $0xd8] sm:$0xff]
  %s361 = scalar_lea.vmem %s1, 224
  %v362 = vld [vmem:[%s361] sm:$0xff]
  %v363 = vld [vmem:[%s361 + $0x8] sm:$0xff]
  %v364 = vld [vmem:[%s361 + $0x10] sm:$0xff]
  %v365 = vld [vmem:[%s361 + $0x18] sm:$0xff]
  %v366 = vld [vmem:[%s361 + $0x20] sm:$0xff]
  %v367 = vld [vmem:[%s361 + $0x28] sm:$0xff]
  %v368 = vld [vmem:[%s361 + $0x30] sm:$0xff]
  %v369 = vld [vmem:[%s361 + $0x38] sm:$0xff]
  %v370 = vld [vmem:[%s361 + $0x40] sm:$0xff]
  %v371 = vld [vmem:[%s361 + $0x48] sm:$0xff]
  %v372 = vld [vmem:[%s361 + $0x50] sm:$0xff]
  %v373 = vld [vmem:[%s361 + $0x58] sm:$0xff]
  %v374 = vld [vmem:[%s361 + $0x60] sm:$0xff]
  %v375 = vld [vmem:[%s361 + $0x68] sm:$0xff]
  %v376 = vld [vmem:[%s361 + $0x70] sm:$0xff]
  %v377 = vld [vmem:[%s361 + $0x78] sm:$0xff]
  %v378 = vld [vmem:[%s361 + $0x80] sm:$0xff]
  %v379 = vld [vmem:[%s361 + $0x88] sm:$0xff]
  %v380 = vld [vmem:[%s361 + $0x90] sm:$0xff]
  %v381 = vld [vmem:[%s361 + $0x98] sm:$0xff]
  %v382 = vld [vmem:[%s361 + $0xa0] sm:$0xff]
  %v383 = vld [vmem:[%s361 + $0xa8] sm:$0xff]
  %v384 = vld [vmem:[%s361 + $0xb0] sm:$0xff]
  %v385 = vld [vmem:[%s361 + $0xb8] sm:$0xff]
  %v386 = vld [vmem:[%s361 + $0xc0] sm:$0xff]
  %v387 = vld [vmem:[%s361 + $0xc8] sm:$0xff]
  %v388 = vld [vmem:[%s361 + $0xd0] sm:$0xff]
  %v389 = vld [vmem:[%s361 + $0xd8] sm:$0xff]
  %vm390 = vcmask 228352
  %v392 = vsel %vm390, %v362, 0
  %v395 = vsel %vm390, %v363, 0
  %v398 = vsel %vm390, %v364, 0
  %v401 = vsel %vm390, %v365, 0
  %v404 = vsel %vm390, %v366, 0
  %v407 = vsel %vm390, %v367, 0
  %v410 = vsel %vm390, %v368, 0
  %v413 = vsel %vm390, %v369, 0
  %v416 = vsel %vm390, %v370, 0
  %v419 = vsel %vm390, %v371, 0
  %v422 = vsel %vm390, %v372, 0
  %v425 = vsel %vm390, %v373, 0
  %v428 = vsel %vm390, %v374, 0
  %v431 = vsel %vm390, %v375, 0
  %v434 = vsel %vm390, %v376, 0
  %v437 = vsel %vm390, %v377, 0
  %v440 = vsel %vm390, %v378, 0
  %v443 = vsel %vm390, %v379, 0
  %v446 = vsel %vm390, %v380, 0
  %v449 = vsel %vm390, %v381, 0
  %v452 = vsel %vm390, %v382, 0
  %v455 = vsel %vm390, %v383, 0
  %v458 = vsel %vm390, %v384, 0
  %v461 = vsel %vm390, %v385, 0
  %v464 = vsel %vm390, %v386, 0
  %v467 = vsel %vm390, %v387, 0
  %v470 = vsel %vm390, %v388, 0
  %v473 = vsel %vm390, %v389, 0
  %vm475 = vcmask 1043456
  %v477 = vsel %vm475, %v58, 0
  %v480 = vsel %vm475, %v59, 0
  %v483 = vsel %vm475, %v60, 0
  %v486 = vsel %vm475, %v61, 0
  %v489 = vsel %vm475, %v62, 0
  %v492 = vsel %vm475, %v63, 0
  %v495 = vsel %vm475, %v64, 0
  %497 = vmatprep.subr.mxu0 %v38
  %498 = vmatpush1.msra.mxu0 %v37
  %499 = vmatprep.subr.mxu0 %v45
  %500 = vmatpush1.msra.mxu0 %v44
  %501 = vmatprep.subr.mxu0 %v52
  %502 = vmatpush1.msra.mxu0 %v51
  %503 = vmatprep.subr.mxu0 %v480
  %504 = vmatpush1.msra.mxu0 %v477
  %505 = vmatprep.subr.mxu0 0.0
  %506 = vmatpush1.msra.mxu0 0.0
  %507 = vmatprep.subr.mxu0 0.0
  %508 = vmatpush1.msra.mxu0 0.0
  %509 = vmatprep.subr.mxu0 0.0
  %510 = vmatpush1.msra.mxu0 0.0
  %511 = vmatprep.subr.mxu0 0.0
  %512 = vmatpush1.msra.mxu0 0.0
  %513 = vmatprep.subr.mxu0 0.0
  %514 = vmatpush1.msra.mxu0 0.0
  %515 = vmatprep.subr.mxu0 0.0
  %516 = vmatpush1.msra.mxu0 0.0
  %517 = vmatprep.subr.mxu0 0.0
  %518 = vmatpush1.msra.mxu0 0.0
  %519 = vmatprep.subr.mxu0 0.0
  %520 = vmatpush1.msra.mxu0 0.0
  %521 = vmatprep.subr.mxu0 0.0
  %522 = vmatpush1.msra.mxu0 0.0
  %523 = vmatprep.subr.mxu0 0.0
  %524 = vmatpush1.msra.mxu0 0.0
  %525 = vmatprep.subr.mxu0 0.0
  %526 = vmatpush1.msra.mxu0 0.0
  %527 = vmatprep.subr.mxu0 0.0
  %528 = vmatpush1.msra.mxu0 0.0
  %529 = vmatprep.subr.mxu0 0.0
  %530 = vmatpush1.msra.mxu0 0.0
  %531 = vmatprep.subr.mxu0 0.0
  %532 = vmatpush1.msra.mxu0 0.0
  %533 = vmatprep.subr.mxu0 0.0
  %534 = vmatpush1.msra.mxu0 0.0
  %535 = vmatprep.subr.mxu0 0.0
  %536 = vmatpush1.msra.mxu0 0.0
  %537 = vmatprep.subr.mxu0 0.0
  %538 = vmatpush1.msra.mxu0 0.0
  %539 = vmatprep.subr.mxu0 0.0
  %540 = vmatpush1.msra.mxu0 0.0
  %541 = vmatprep.subr.mxu0 0.0
  %542 = vmatpush1.msra.mxu0 0.0
  %543 = vmatprep.subr.mxu0 0.0
  %544 = vmatpush1.msra.mxu0 0.0
  %545 = vmatprep.subr.mxu0 0.0
  %546 = vmatpush1.msra.mxu0 0.0
  %547 = vmatprep.subr.mxu0 0.0
  %548 = vmatpush1.msra.mxu0 0.0
  %549 = vmatprep.subr.mxu0 0.0
  %550 = vmatpush1.msra.mxu0 0.0
  %551 = vmatprep.subr.mxu0 0.0
  %552 = vmatpush1.msra.mxu0 0.0
  %553 = vmatprep.subr.mxu0 0.0
  %554 = vmatpush1.msra.mxu0 0.0
  %555 = vmatprep.subr.mxu0 0.0
  %556 = vmatpush1.msra.mxu0 0.0
  %557 = vmatprep.subr.mxu0 0.0
  %558 = vmatpush1.msra.mxu0 0.0
  %559 = vmatprep.subr.mxu0 0.0
  %560 = vmatpush1.msra.mxu0 0.0
  %561 = vmatprep.mubr.f32.mxu0 0.0
  %562 = vmatmul.mubr.f32.gmra.mrb[0].mxu0 %v392
  %v563 = vpop.f32.mrb[0].mxu0
  %v564 = vadd.f32 0.0, %v563
  %v565 = vpop.f32.mrb[0].mxu0
  %v566 = vadd.f32 0.0, %v565
  %567 = vmatprep.mubr.f32.mxu0 0.0
  %568 = vmatmul.mubr.f32.gmra.mrb[0].mxu0 %v395
  %v569 = vpop.f32.mrb[0].mxu0
  %v570 = vadd.f32 0.0, %v569
  %v571 = vpop.f32.mrb[0].mxu0
  %v572 = vadd.f32 0.0, %v571
  %573 = vmatprep.mubr.f32.mxu0 0.0
  %574 = vmatmul.mubr.f32.gmra.mrb[0].mxu0 %v398
  %v575 = vpop.f32.mrb[0].mxu0
  %v576 = vadd.f32 0.0, %v575
  %v577 = vpop.f32.mrb[0].mxu0
  %v578 = vadd.f32 0.0, %v577
  %579 = vmatprep.mubr.f32.mxu0 0.0
  %580 = vmatmul.mubr.f32.gmra.mrb[0].mxu0 %v401
  %v581 = vpop.f32.mrb[0].mxu0
  %v582 = vadd.f32 0.0, %v581
  %v583 = vpop.f32.mrb[0].mxu0
  %v584 = vadd.f32 0.0, %v583
  %585 = vmatprep.mubr.f32.mxu0 0.0
  %586 = vmatmul.mubr.f32.gmra.mrb[0].mxu0 %v404
  %v587 = vpop.f32.mrb[0].mxu0
  %v588 = vadd.f32 0.0, %v587
  %v589 = vpop.f32.mrb[0].mxu0
  %v590 = vadd.f32 0.0, %v589
  %591 = vmatprep.mubr.f32.mxu0 0.0
  %592 = vmatmul.mubr.f32.gmra.mrb[0].mxu0 %v407
  %v593 = vpop.f32.mrb[0].mxu0
  %v594 = vadd.f32 0.0, %v593
  %v595 = vpop.f32.mrb[0].mxu0
  %v596 = vadd.f32 0.0, %v595
  %597 = vmatprep.mubr.f32.mxu0 0.0
  %598 = vmatmul.mubr.f32.gmra.mrb[0].mxu0 %v410
  %v599 = vpop.f32.mrb[0].mxu0
  %v600 = vadd.f32 0.0, %v599
  %v601 = vpop.f32.mrb[0].mxu0
  %v602 = vadd.f32 0.0, %v601
  %603 = vmatprep.mubr.f32.mxu0 0.0
  %604 = vmatmul.mubr.f32.gmra.mrb[0].mxu0 %v413
  %v605 = vpop.f32.mrb[0].mxu0
  %v606 = vadd.f32 0.0, %v605
  %v607 = vpop.f32.mrb[0].mxu0
  %v608 = vadd.f32 0.0, %v607
  %609 = vmatprep.mubr.f32.mxu0 0.0
  %610 = vmatmul.mubr.f32.gmra.mrb[0].mxu0 %v416
  %v611 = vpop.f32.mrb[0].mxu0
  %v612 = vadd.f32 0.0, %v611
  %v613 = vpop.f32.mrb[0].mxu0
  %v614 = vadd.f32 0.0, %v613
  %615 = vmatprep.mubr.f32.mxu0 0.0
  %616 = vmatmul.mubr.f32.gmra.mrb[0].mxu0 %v419
  %v617 = vpop.f32.mrb[0].mxu0
  %v618 = vadd.f32 0.0, %v617
  %v619 = vpop.f32.mrb[0].mxu0
  %v620 = vadd.f32 0.0, %v619
  %621 = vmatprep.mubr.f32.mxu0 0.0
  %622 = vmatmul.mubr.f32.gmra.mrb[0].mxu0 %v422
  %v623 = vpop.f32.mrb[0].mxu0
  %v624 = vadd.f32 0.0, %v623
  %v625 = vpop.f32.mrb[0].mxu0
  %v626 = vadd.f32 0.0, %v625
  %627 = vmatprep.mubr.f32.mxu0 0.0
  %628 = vmatmul.mubr.f32.gmra.mrb[0].mxu0 %v425
  %v629 = vpop.f32.mrb[0].mxu0
  %v630 = vadd.f32 0.0, %v629
  %v631 = vpop.f32.mrb[0].mxu0
  %v632 = vadd.f32 0.0, %v631
  %633 = vmatprep.mubr.f32.mxu0 0.0
  %634 = vmatmul.mubr.f32.gmra.mrb[0].mxu0 %v428
  %v635 = vpop.f32.mrb[0].mxu0
  %v636 = vadd.f32 0.0, %v635
  %v637 = vpop.f32.mrb[0].mxu0
  %v638 = vadd.f32 0.0, %v637
  %639 = vmatprep.mubr.f32.mxu0 0.0
  %640 = vmatmul.mubr.f32.gmra.mrb[0].mxu0 %v431
  %v641 = vpop.f32.mrb[0].mxu0
  %v642 = vadd.f32 0.0, %v641
  %v643 = vpop.f32.mrb[0].mxu0
  %v644 = vadd.f32 0.0, %v643
  %645 = vmatprep.mubr.f32.mxu0 0.0
  %646 = vmatmul.mubr.f32.gmra.mrb[0].mxu0 %v434
  %v647 = vpop.f32.mrb[0].mxu0
  %v648 = vadd.f32 0.0, %v647
  %v649 = vpop.f32.mrb[0].mxu0
  %v650 = vadd.f32 0.0, %v649
  %651 = vmatprep.mubr.f32.mxu0 0.0
  %652 = vmatmul.mubr.f32.gmra.mrb[0].mxu0 %v437
  %v653 = vpop.f32.mrb[0].mxu0
  %v654 = vadd.f32 0.0, %v653
  %v655 = vpop.f32.mrb[0].mxu0
  %v656 = vadd.f32 0.0, %v655
  %657 = vmatprep.mubr.f32.mxu0 0.0
  %658 = vmatmul.mubr.f32.gmra.mrb[0].mxu0 %v440
  %v659 = vpop.f32.mrb[0].mxu0
  %v660 = vadd.f32 0.0, %v659
  %v661 = vpop.f32.mrb[0].mxu0
  %v662 = vadd.f32 0.0, %v661
  %663 = vmatprep.mubr.f32.mxu0 0.0
  %664 = vmatmul.mubr.f32.gmra.mrb[0].mxu0 %v443
  %v665 = vpop.f32.mrb[0].mxu0
  %v666 = vadd.f32 0.0, %v665
  %v667 = vpop.f32.mrb[0].mxu0
  %v668 = vadd.f32 0.0, %v667
  %669 = vmatprep.mubr.f32.mxu0 0.0
  %670 = vmatmul.mubr.f32.gmra.mrb[0].mxu0 %v446
  %v671 = vpop.f32.mrb[0].mxu0
  %v672 = vadd.f32 0.0, %v671
  %v673 = vpop.f32.mrb[0].mxu0
  %v674 = vadd.f32 0.0, %v673
  %675 = vmatprep.mubr.f32.mxu0 0.0
  %676 = vmatmul.mubr.f32.gmra.mrb[0].mxu0 %v449
  %v677 = vpop.f32.mrb[0].mxu0
  %v678 = vadd.f32 0.0, %v677
  %v679 = vpop.f32.mrb[0].mxu0
  %v680 = vadd.f32 0.0, %v679
  %681 = vmatprep.mubr.f32.mxu0 0.0
  %682 = vmatmul.mubr.f32.gmra.mrb[0].mxu0 %v452
  %v683 = vpop.f32.mrb[0].mxu0
  %v684 = vadd.f32 0.0, %v683
  %v685 = vpop.f32.mrb[0].mxu0
  %v686 = vadd.f32 0.0, %v685
  %687 = vmatprep.mubr.f32.mxu0 0.0
  %688 = vmatmul.mubr.f32.gmra.mrb[0].mxu0 %v455
  %v689 = vpop.f32.mrb[0].mxu0
  %v690 = vadd.f32 0.0, %v689
  %v691 = vpop.f32.mrb[0].mxu0
  %v692 = vadd.f32 0.0, %v691
  %693 = vmatprep.mubr.f32.mxu0 0.0
  %694 = vmatmul.mubr.f32.gmra.mrb[0].mxu0 %v458
  %v695 = vpop.f32.mrb[0].mxu0
  %v696 = vadd.f32 0.0, %v695
  %v697 = vpop.f32.mrb[0].mxu0
  %v698 = vadd.f32 0.0, %v697
  %699 = vmatprep.mubr.f32.mxu0 0.0
  %700 = vmatmul.mubr.f32.gmra.mrb[0].mxu0 %v461
  %v701 = vpop.f32.mrb[0].mxu0
  %v702 = vadd.f32 0.0, %v701
  %v703 = vpop.f32.mrb[0].mxu0
  %v704 = vadd.f32 0.0, %v703
  %705 = vmatprep.mubr.f32.mxu0 0.0
  %706 = vmatmul.mubr.f32.gmra.mrb[0].mxu0 %v464
  %v707 = vpop.f32.mrb[0].mxu0
  %v708 = vadd.f32 0.0, %v707
  %v709 = vpop.f32.mrb[0].mxu0
  %v710 = vadd.f32 0.0, %v709
  %711 = vmatprep.mubr.f32.mxu0 0.0
  %712 = vmatmul.mubr.f32.gmra.mrb[0].mxu0 %v467
  %v713 = vpop.f32.mrb[0].mxu0
  %v714 = vadd.f32 0.0, %v713
  %v715 = vpop.f32.mrb[0].mxu0
  %v716 = vadd.f32 0.0, %v715
  %717 = vmatprep.mubr.f32.mxu0 0.0
  %718 = vmatmul.mubr.f32.gmra.mrb[0].mxu0 %v470
  %v719 = vpop.f32.mrb[0].mxu0
  %v720 = vadd.f32 0.0, %v719
  %v721 = vpop.f32.mrb[0].mxu0
  %v722 = vadd.f32 0.0, %v721
  %723 = vmatprep.mubr.f32.mxu0 0.0
  %724 = vmatmul.mubr.f32.gmra.mrb[0].mxu0 %v473
  %v725 = vpop.f32.mrb[0].mxu0
  %v726 = vadd.f32 0.0, %v725
  %v727 = vpop.f32.mrb[0].mxu0
  %v728 = vadd.f32 0.0, %v727
  %729 = vdwg.mxu0
  %730 = vmatprep.subr.mxu0 %v40
  %731 = vmatpush1.msra.mxu0 %v39
  %732 = vmatprep.subr.mxu0 %v47
  %733 = vmatpush1.msra.mxu0 %v46
  %734 = vmatprep.subr.mxu0 %v54
  %735 = vmatpush1.msra.mxu0 %v53
  %736 = vmatprep.subr.mxu0 %v486
  %737 = vmatpush1.msra.mxu0 %v483
  %738 = vmatprep.subr.mxu0 0.0
  %739 = vmatpush1.msra.mxu0 0.0
  %740 = vmatprep.subr.mxu0 0.0
  %741 = vmatpush1.msra.mxu0 0.0
  %742 = vmatprep.subr.mxu0 0.0
  %743 = vmatpush1.msra.mxu0 0.0
  %744 = vmatprep.subr.mxu0 0.0
  %745 = vmatpush1.msra.mxu0 0.0
  %746 = vmatprep.subr.mxu0 0.0
  %747 = vmatpush1.msra.mxu0 0.0
  %748 = vmatprep.subr.mxu0 0.0
  %749 = vmatpush1.msra.mxu0 0.0
  %750 = vmatprep.subr.mxu0 0.0
  %751 = vmatpush1.msra.mxu0 0.0
  %752 = vmatprep.subr.mxu0 0.0
  %753 = vmatpush1.msra.mxu0 0.0
  %754 = vmatprep.subr.mxu0 0.0
  %755 = vmatpush1.msra.mxu0 0.0
  %756 = vmatprep.subr.mxu0 0.0
  %757 = vmatpush1.msra.mxu0 0.0
  %758 = vmatprep.subr.mxu0 0.0
  %759 = vmatpush1.msra.mxu0 0.0
  %760 = vmatprep.subr.mxu0 0.0
  %761 = vmatpush1.msra.mxu0 0.0
  %762 = vmatprep.subr.mxu0 0.0
  %763 = vmatpush1.msra.mxu0 0.0
  %764 = vmatprep.subr.mxu0 0.0
  %765 = vmatpush1.msra.mxu0 0.0
  %766 = vmatprep.subr.mxu0 0.0
  %767 = vmatpush1.msra.mxu0 0.0
  %768 = vmatprep.subr.mxu0 0.0
  %769 = vmatpush1.msra.mxu0 0.0
  %770 = vmatprep.subr.mxu0 0.0
  %771 = vmatpush1.msra.mxu0 0.0
  %772 = vmatprep.subr.mxu0 0.0
  %773 = vmatpush1.msra.mxu0 0.0
  %774 = vmatprep.subr.mxu0 0.0
  %775 = vmatpush1.msra.mxu0 0.0
  %776 = vmatprep.subr.mxu0 0.0
  %777 = vmatpush1.msra.mxu0 0.0
  %778 = vmatprep.subr.mxu0 0.0
  %779 = vmatpush1.msra.mxu0 0.0
  %780 = vmatprep.subr.mxu0 0.0
  %781 = vmatpush1.msra.mxu0 0.0
  %782 = vmatprep.subr.mxu0 0.0
  %783 = vmatpush1.msra.mxu0 0.0
  %784 = vmatprep.subr.mxu0 0.0
  %785 = vmatpush1.msra.mxu0 0.0
  %786 = vmatprep.subr.mxu0 0.0
  %787 = vmatpush1.msra.mxu0 0.0
  %788 = vmatprep.subr.mxu0 0.0
  %789 = vmatpush1.msra.mxu0 0.0
  %790 = vmatprep.subr.mxu0 0.0
  %791 = vmatpush1.msra.mxu0 0.0
  %792 = vmatprep.subr.mxu0 0.0
  %793 = vmatpush1.msra.mxu0 0.0
  %794 = vmatprep.mubr.f32.mxu0 0.0
  %795 = vmatmul.mubr.f32.gmra.mrb[0].mxu0 %v392
  %v796 = vpop.f32.mrb[0].mxu0
  %v797 = vadd.f32 0.0, %v796
  %v798 = vpop.f32.mrb[0].mxu0
  %v799 = vadd.f32 0.0, %v798
  %800 = vmatprep.mubr.f32.mxu0 0.0
  %801 = vmatmul.mubr.f32.gmra.mrb[0].mxu0 %v395
  %v802 = vpop.f32.mrb[0].mxu0
  %v803 = vadd.f32 0.0, %v802
  %v804 = vpop.f32.mrb[0].mxu0
  %v805 = vadd.f32 0.0, %v804
  %806 = vmatprep.mubr.f32.mxu0 0.0
  %807 = vmatmul.mubr.f32.gmra.mrb[0].mxu0 %v398
  %v808 = vpop.f32.mrb[0].mxu0
  %v809 = vadd.f32 0.0, %v808
  %v810 = vpop.f32.mrb[0].mxu0
  %v811 = vadd.f32 0.0, %v810
  %812 = vmatprep.mubr.f32.mxu0 0.0
  %813 = vmatmul.mubr.f32.gmra.mrb[0].mxu0 %v401
  %v814 = vpop.f32.mrb[0].mxu0
  %v815 = vadd.f32 0.0, %v814
  %v816 = vpop.f32.mrb[0].mxu0
  %v817 = vadd.f32 0.0, %v816
  %818 = vmatprep.mubr.f32.mxu0 0.0
  %819 = vmatmul.mubr.f32.gmra.mrb[0].mxu0 %v404
  %v820 = vpop.f32.mrb[0].mxu0
  %v821 = vadd.f32 0.0, %v820
  %v822 = vpop.f32.mrb[0].mxu0
  %v823 = vadd.f32 0.0, %v822
  %824 = vmatprep.mubr.f32.mxu0 0.0
  %825 = vmatmul.mubr.f32.gmra.mrb[0].mxu0 %v407
  %v826 = vpop.f32.mrb[0].mxu0
  %v827 = vadd.f32 0.0, %v826
  %v828 = vpop.f32.mrb[0].mxu0
  %v829 = vadd.f32 0.0, %v828
  %830 = vmatprep.mubr.f32.mxu0 0.0
  %831 = vmatmul.mubr.f32.gmra.mrb[0].mxu0 %v410
  %v832 = vpop.f32.mrb[0].mxu0
  %v833 = vadd.f32 0.0, %v832
  %v834 = vpop.f32.mrb[0].mxu0
  %v835 = vadd.f32 0.0, %v834
  %836 = vmatprep.mubr.f32.mxu0 0.0
  %837 = vmatmul.mubr.f32.gmra.mrb[0].mxu0 %v413
  %v838 = vpop.f32.mrb[0].mxu0
  %v839 = vadd.f32 0.0, %v838
  %v840 = vpop.f32.mrb[0].mxu0
  %v841 = vadd.f32 0.0, %v840
  %842 = vmatprep.mubr.f32.mxu0 0.0
  %843 = vmatmul.mubr.f32.gmra.mrb[0].mxu0 %v416
  %v844 = vpop.f32.mrb[0].mxu0
  %v845 = vadd.f32 0.0, %v844
  %v846 = vpop.f32.mrb[0].mxu0
  %v847 = vadd.f32 0.0, %v846
  %848 = vmatprep.mubr.f32.mxu0 0.0
  %849 = vmatmul.mubr.f32.gmra.mrb[0].mxu0 %v419
  %v850 = vpop.f32.mrb[0].mxu0
  %v851 = vadd.f32 0.0, %v850
  %v852 = vpop.f32.mrb[0].mxu0
  %v853 = vadd.f32 0.0, %v852
  %854 = vmatprep.mubr.f32.mxu0 0.0
  %855 = vmatmul.mubr.f32.gmra.mrb[0].mxu0 %v422
  %v856 = vpop.f32.mrb[0].mxu0
  %v857 = vadd.f32 0.0, %v856
  %v858 = vpop.f32.mrb[0].mxu0
  %v859 = vadd.f32 0.0, %v858
  %860 = vmatprep.mubr.f32.mxu0 0.0
  %861 = vmatmul.mubr.f32.gmra.mrb[0].mxu0 %v425
  %v862 = vpop.f32.mrb[0].mxu0
  %v863 = vadd.f32 0.0, %v862
  %v864 = vpop.f32.mrb[0].mxu0
  %v865 = vadd.f32 0.0, %v864
  %866 = vmatprep.mubr.f32.mxu0 0.0
  %867 = vmatmul.mubr.f32.gmra.mrb[0].mxu0 %v428
  %v868 = vpop.f32.mrb[0].mxu0
  %v869 = vadd.f32 0.0, %v868
  %v870 = vpop.f32.mrb[0].mxu0
  %v871 = vadd.f32 0.0, %v870
  %872 = vmatprep.mubr.f32.mxu0 0.0
  %873 = vmatmul.mubr.f32.gmra.mrb[0].mxu0 %v431
  %v874 = vpop.f32.mrb[0].mxu0
  %v875 = vadd.f32 0.0, %v874
  %v876 = vpop.f32.mrb[0].mxu0
  %v877 = vadd.f32 0.0, %v876
  %878 = vmatprep.mubr.f32.mxu0 0.0
  %879 = vmatmul.mubr.f32.gmra.mrb[0].mxu0 %v434
  %v880 = vpop.f32.mrb[0].mxu0
  %v881 = vadd.f32 0.0, %v880
  %v882 = vpop.f32.mrb[0].mxu0
  %v883 = vadd.f32 0.0, %v882
  %884 = vmatprep.mubr.f32.mxu0 0.0
  %885 = vmatmul.mubr.f32.gmra.mrb[0].mxu0 %v437
  %v886 = vpop.f32.mrb[0].mxu0
  %v887 = vadd.f32 0.0, %v886
  %v888 = vpop.f32.mrb[0].mxu0
  %v889 = vadd.f32 0.0, %v888
  %890 = vmatprep.mubr.f32.mxu0 0.0
  %891 = vmatmul.mubr.f32.gmra.mrb[0].mxu0 %v440
  %v892 = vpop.f32.mrb[0].mxu0
  %v893 = vadd.f32 0.0, %v892
  %v894 = vpop.f32.mrb[0].mxu0
  %v895 = vadd.f32 0.0, %v894
  %896 = vmatprep.mubr.f32.mxu0 0.0
  %897 = vmatmul.mubr.f32.gmra.mrb[0].mxu0 %v443
  %v898 = vpop.f32.mrb[0].mxu0
  %v899 = vadd.f32 0.0, %v898
  %v900 = vpop.f32.mrb[0].mxu0
  %v901 = vadd.f32 0.0, %v900
  %902 = vmatprep.mubr.f32.mxu0 0.0
  %903 = vmatmul.mubr.f32.gmra.mrb[0].mxu0 %v446
  %v904 = vpop.f32.mrb[0].mxu0
  %v905 = vadd.f32 0.0, %v904
  %v906 = vpop.f32.mrb[0].mxu0
  %v907 = vadd.f32 0.0, %v906
  %908 = vmatprep.mubr.f32.mxu0 0.0
  %909 = vmatmul.mubr.f32.gmra.mrb[0].mxu0 %v449
  %v910 = vpop.f32.mrb[0].mxu0
  %v911 = vadd.f32 0.0, %v910
  %v912 = vpop.f32.mrb[0].mxu0
  %v913 = vadd.f32 0.0, %v912
  %914 = vmatprep.mubr.f32.mxu0 0.0
  %915 = vmatmul.mubr.f32.gmra.mrb[0].mxu0 %v452
  %v916 = vpop.f32.mrb[0].mxu0
  %v917 = vadd.f32 0.0, %v916
  %v918 = vpop.f32.mrb[0].mxu0
  %v919 = vadd.f32 0.0, %v918
  %920 = vmatprep.mubr.f32.mxu0 0.0
  %921 = vmatmul.mubr.f32.gmra.mrb[0].mxu0 %v455
  %v922 = vpop.f32.mrb[0].mxu0
  %v923 = vadd.f32 0.0, %v922
  %v924 = vpop.f32.mrb[0].mxu0
  %v925 = vadd.f32 0.0, %v924
  %926 = vmatprep.mubr.f32.mxu0 0.0
  %927 = vmatmul.mubr.f32.gmra.mrb[0].mxu0 %v458
  %v928 = vpop.f32.mrb[0].mxu0
  %v929 = vadd.f32 0.0, %v928
  %v930 = vpop.f32.mrb[0].mxu0
  %v931 = vadd.f32 0.0, %v930
  %932 = vmatprep.mubr.f32.mxu0 0.0
  %933 = vmatmul.mubr.f32.gmra.mrb[0].mxu0 %v461
  %v934 = vpop.f32.mrb[0].mxu0
  %v935 = vadd.f32 0.0, %v934
  %v936 = vpop.f32.mrb[0].mxu0
  %v937 = vadd.f32 0.0, %v936
  %938 = vmatprep.mubr.f32.mxu0 0.0
  %939 = vmatmul.mubr.f32.gmra.mrb[0].mxu0 %v464
  %v940 = vpop.f32.mrb[0].mxu0
  %v941 = vadd.f32 0.0, %v940
  %v942 = vpop.f32.mrb[0].mxu0
  %v943 = vadd.f32 0.0, %v942
  %944 = vmatprep.mubr.f32.mxu0 0.0
  %945 = vmatmul.mubr.f32.gmra.mrb[0].mxu0 %v467
  %v946 = vpop.f32.mrb[0].mxu0
  %v947 = vadd.f32 0.0, %v946
  %v948 = vpop.f32.mrb[0].mxu0
  %v949 = vadd.f32 0.0, %v948
  %950 = vmatprep.mubr.f32.mxu0 0.0
  %951 = vmatmul.mubr.f32.gmra.mrb[0].mxu0 %v470
  %v952 = vpop.f32.mrb[0].mxu0
  %v953 = vadd.f32 0.0, %v952
  %v954 = vpop.f32.mrb[0].mxu0
  %v955 = vadd.f32 0.0, %v954
  %956 = vmatprep.mubr.f32.mxu0 0.0
  %957 = vmatmul.mubr.f32.gmra.mrb[0].mxu0 %v473
  %v958 = vpop.f32.mrb[0].mxu0
  %v959 = vadd.f32 0.0, %v958
  %v960 = vpop.f32.mrb[0].mxu0
  %v961 = vadd.f32 0.0, %v960
  %962 = vdwg.mxu0
  %963 = vmatprep.subr.mxu0 %v42
  %964 = vmatpush1.msra.mxu0 %v41
  %965 = vmatprep.subr.mxu0 %v49
  %966 = vmatpush1.msra.mxu0 %v48
  %967 = vmatprep.subr.mxu0 %v56
  %968 = vmatpush1.msra.mxu0 %v55
  %969 = vmatprep.subr.mxu0 %v492
  %970 = vmatpush1.msra.mxu0 %v489
  %971 = vmatprep.subr.mxu0 0.0
  %972 = vmatpush1.msra.mxu0 0.0
  %973 = vmatprep.subr.mxu0 0.0
  %974 = vmatpush1.msra.mxu0 0.0
  %975 = vmatprep.subr.mxu0 0.0
  %976 = vmatpush1.msra.mxu0 0.0
  %977 = vmatprep.subr.mxu0 0.0
  %978 = vmatpush1.msra.mxu0 0.0
  %979 = vmatprep.subr.mxu0 0.0
  %980 = vmatpush1.msra.mxu0 0.0
  %981 = vmatprep.subr.mxu0 0.0
  %982 = vmatpush1.msra.mxu0 0.0
  %983 = vmatprep.subr.mxu0 0.0
  %984 = vmatpush1.msra.mxu0 0.0
  %985 = vmatprep.subr.mxu0 0.0
  %986 = vmatpush1.msra.mxu0 0.0
  %987 = vmatprep.subr.mxu0 0.0
  %988 = vmatpush1.msra.mxu0 0.0
  %989 = vmatprep.subr.mxu0 0.0
  %990 = vmatpush1.msra.mxu0 0.0
  %991 = vmatprep.subr.mxu0 0.0
  %992 = vmatpush1.msra.mxu0 0.0
  %993 = vmatprep.subr.mxu0 0.0
  %994 = vmatpush1.msra.mxu0 0.0
  %995 = vmatprep.subr.mxu0 0.0
  %996 = vmatpush1.msra.mxu0 0.0
  %997 = vmatprep.subr.mxu0 0.0
  %998 = vmatpush1.msra.mxu0 0.0
  %999 = vmatprep.subr.mxu0 0.0
  %1000 = vmatpush1.msra.mxu0 0.0
  %1001 = vmatprep.subr.mxu0 0.0
  %1002 = vmatpush1.msra.mxu0 0.0
  %1003 = vmatprep.subr.mxu0 0.0
  %1004 = vmatpush1.msra.mxu0 0.0
  %1005 = vmatprep.subr.mxu0 0.0
  %1006 = vmatpush1.msra.mxu0 0.0
  %1007 = vmatprep.subr.mxu0 0.0
  %1008 = vmatpush1.msra.mxu0 0.0
  %1009 = vmatprep.subr.mxu0 0.0
  %1010 = vmatpush1.msra.mxu0 0.0
  %1011 = vmatprep.subr.mxu0 0.0
  %1012 = vmatpush1.msra.mxu0 0.0
  %1013 = vmatprep.subr.mxu0 0.0
  %1014 = vmatpush1.msra.mxu0 0.0
  %1015 = vmatprep.subr.mxu0 0.0
  %1016 = vmatpush1.msra.mxu0 0.0
  %1017 = vmatprep.subr.mxu0 0.0
  %1018 = vmatpush1.msra.mxu0 0.0
  %1019 = vmatprep.subr.mxu0 0.0
  %1020 = vmatpush1.msra.mxu0 0.0
  %1021 = vmatprep.subr.mxu0 0.0
  %1022 = vmatpush1.msra.mxu0 0.0
  %1023 = vmatprep.subr.mxu0 0.0
  %1024 = vmatpush1.msra.mxu0 0.0
  %1025 = vmatprep.subr.mxu0 0.0
  %1026 = vmatpush1.msra.mxu0 0.0
  %1027 = vmatprep.mubr.f32.mxu0 0.0
  %1028 = vmatmul.mubr.f32.gmra.mrb[0].mxu0 %v392
  %v1029 = vpop.f32.mrb[0].mxu0
  %v1030 = vadd.f32 0.0, %v1029
  %v1031 = vpop.f32.mrb[0].mxu0
  %v1032 = vadd.f32 0.0, %v1031
  %1033 = vmatprep.mubr.f32.mxu0 0.0
  %1034 = vmatmul.mubr.f32.gmra.mrb[0].mxu0 %v395
  %v1035 = vpop.f32.mrb[0].mxu0
  %v1036 = vadd.f32 0.0, %v1035
  %v1037 = vpop.f32.mrb[0].mxu0
  %v1038 = vadd.f32 0.0, %v1037
  %1039 = vmatprep.mubr.f32.mxu0 0.0
  %1040 = vmatmul.mubr.f32.gmra.mrb[0].mxu0 %v398
  %v1041 = vpop.f32.mrb[0].mxu0
  %v1042 = vadd.f32 0.0, %v1041
  %v1043 = vpop.f32.mrb[0].mxu0
  %v1044 = vadd.f32 0.0, %v1043
  %1045 = vmatprep.mubr.f32.mxu0 0.0
  %1046 = vmatmul.mubr.f32.gmra.mrb[0].mxu0 %v401
  %v1047 = vpop.f32.mrb[0].mxu0
  %v1048 = vadd.f32 0.0, %v1047
  %v1049 = vpop.f32.mrb[0].mxu0
  %v1050 = vadd.f32 0.0, %v1049
  %1051 = vmatprep.mubr.f32.mxu0 0.0
  %1052 = vmatmul.mubr.f32.gmra.mrb[0].mxu0 %v404
  %v1053 = vpop.f32.mrb[0].mxu0
  %v1054 = vadd.f32 0.0, %v1053
  %v1055 = vpop.f32.mrb[0].mxu0
  %v1056 = vadd.f32 0.0, %v1055
  %1057 = vmatprep.mubr.f32.mxu0 0.0
  %1058 = vmatmul.mubr.f32.gmra.mrb[0].mxu0 %v407
  %v1059 = vpop.f32.mrb[0].mxu0
  %v1060 = vadd.f32 0.0, %v1059
  %v1061 = vpop.f32.mrb[0].mxu0
  %v1062 = vadd.f32 0.0, %v1061
  %1063 = vmatprep.mubr.f32.mxu0 0.0
  %1064 = vmatmul.mubr.f32.gmra.mrb[0].mxu0 %v410
  %v1065 = vpop.f32.mrb[0].mxu0
  %v1066 = vadd.f32 0.0, %v1065
  %v1067 = vpop.f32.mrb[0].mxu0
  %v1068 = vadd.f32 0.0, %v1067
  %1069 = vmatprep.mubr.f32.mxu0 0.0
  %1070 = vmatmul.mubr.f32.gmra.mrb[0].mxu0 %v413
  %v1071 = vpop.f32.mrb[0].mxu0
  %v1072 = vadd.f32 0.0, %v1071
  %v1073 = vpop.f32.mrb[0].mxu0
  %v1074 = vadd.f32 0.0, %v1073
  %1075 = vmatprep.mubr.f32.mxu0 0.0
  %1076 = vmatmul.mubr.f32.gmra.mrb[0].mxu0 %v416
  %v1077 = vpop.f32.mrb[0].mxu0
  %v1078 = vadd.f32 0.0, %v1077
  %v1079 = vpop.f32.mrb[0].mxu0
  %v1080 = vadd.f32 0.0, %v1079
  %1081 = vmatprep.mubr.f32.mxu0 0.0
  %1082 = vmatmul.mubr.f32.gmra.mrb[0].mxu0 %v419
  %v1083 = vpop.f32.mrb[0].mxu0
  %v1084 = vadd.f32 0.0, %v1083
  %v1085 = vpop.f32.mrb[0].mxu0
  %v1086 = vadd.f32 0.0, %v1085
  %1087 = vmatprep.mubr.f32.mxu0 0.0
  %1088 = vmatmul.mubr.f32.gmra.mrb[0].mxu0 %v422
  %v1089 = vpop.f32.mrb[0].mxu0
  %v1090 = vadd.f32 0.0, %v1089
  %v1091 = vpop.f32.mrb[0].mxu0
  %v1092 = vadd.f32 0.0, %v1091
  %1093 = vmatprep.mubr.f32.mxu0 0.0
  %1094 = vmatmul.mubr.f32.gmra.mrb[0].mxu0 %v425
  %v1095 = vpop.f32.mrb[0].mxu0
  %v1096 = vadd.f32 0.0, %v1095
  %v1097 = vpop.f32.mrb[0].mxu0
  %v1098 = vadd.f32 0.0, %v1097
  %1099 = vmatprep.mubr.f32.mxu0 0.0
  %1100 = vmatmul.mubr.f32.gmra.mrb[0].mxu0 %v428
  %v1101 = vpop.f32.mrb[0].mxu0
  %v1102 = vadd.f32 0.0, %v1101
  %v1103 = vpop.f32.mrb[0].mxu0
  %v1104 = vadd.f32 0.0, %v1103
  %1105 = vmatprep.mubr.f32.mxu0 0.0
  %1106 = vmatmul.mubr.f32.gmra.mrb[0].mxu0 %v431
  %v1107 = vpop.f32.mrb[0].mxu0
  %v1108 = vadd.f32 0.0, %v1107
  %v1109 = vpop.f32.mrb[0].mxu0
  %v1110 = vadd.f32 0.0, %v1109
  %1111 = vmatprep.mubr.f32.mxu0 0.0
  %1112 = vmatmul.mubr.f32.gmra.mrb[0].mxu0 %v434
  %v1113 = vpop.f32.mrb[0].mxu0
  %v1114 = vadd.f32 0.0, %v1113
  %v1115 = vpop.f32.mrb[0].mxu0
  %v1116 = vadd.f32 0.0, %v1115
  %1117 = vmatprep.mubr.f32.mxu0 0.0
  %1118 = vmatmul.mubr.f32.gmra.mrb[0].mxu0 %v437
  %v1119 = vpop.f32.mrb[0].mxu0
  %v1120 = vadd.f32 0.0, %v1119
  %v1121 = vpop.f32.mrb[0].mxu0
  %v1122 = vadd.f32 0.0, %v1121
  %1123 = vmatprep.mubr.f32.mxu0 0.0
  %1124 = vmatmul.mubr.f32.gmra.mrb[0].mxu0 %v440
  %v1125 = vpop.f32.mrb[0].mxu0
  %v1126 = vadd.f32 0.0, %v1125
  %v1127 = vpop.f32.mrb[0].mxu0
  %v1128 = vadd.f32 0.0, %v1127
  %1129 = vmatprep.mubr.f32.mxu0 0.0
  %1130 = vmatmul.mubr.f32.gmra.mrb[0].mxu0 %v443
  %v1131 = vpop.f32.mrb[0].mxu0
  %v1132 = vadd.f32 0.0, %v1131
  %v1133 = vpop.f32.mrb[0].mxu0
  %v1134 = vadd.f32 0.0, %v1133
  %1135 = vmatprep.mubr.f32.mxu0 0.0
  %1136 = vmatmul.mubr.f32.gmra.mrb[0].mxu0 %v446
  %v1137 = vpop.f32.mrb[0].mxu0
  %v1138 = vadd.f32 0.0, %v1137
  %v1139 = vpop.f32.mrb[0].mxu0
  %v1140 = vadd.f32 0.0, %v1139
  %1141 = vmatprep.mubr.f32.mxu0 0.0
  %1142 = vmatmul.mubr.f32.gmra.mrb[0].mxu0 %v449
  %v1143 = vpop.f32.mrb[0].mxu0
  %v1144 = vadd.f32 0.0, %v1143
  %v1145 = vpop.f32.mrb[0].mxu0
  %v1146 = vadd.f32 0.0, %v1145
  %1147 = vmatprep.mubr.f32.mxu0 0.0
  %1148 = vmatmul.mubr.f32.gmra.mrb[0].mxu0 %v452
  %v1149 = vpop.f32.mrb[0].mxu0
  %v1150 = vadd.f32 0.0, %v1149
  %v1151 = vpop.f32.mrb[0].mxu0
  %v1152 = vadd.f32 0.0, %v1151
  %1153 = vmatprep.mubr.f32.mxu0 0.0
  %1154 = vmatmul.mubr.f32.gmra.mrb[0].mxu0 %v455
  %v1155 = vpop.f32.mrb[0].mxu0
  %v1156 = vadd.f32 0.0, %v1155
  %v1157 = vpop.f32.mrb[0].mxu0
  %v1158 = vadd.f32 0.0, %v1157
  %1159 = vmatprep.mubr.f32.mxu0 0.0
  %1160 = vmatmul.mubr.f32.gmra.mrb[0].mxu0 %v458
  %v1161 = vpop.f32.mrb[0].mxu0
  %v1162 = vadd.f32 0.0, %v1161
  %v1163 = vpop.f32.mrb[0].mxu0
  %v1164 = vadd.f32 0.0, %v1163
  %1165 = vmatprep.mubr.f32.mxu0 0.0
  %1166 = vmatmul.mubr.f32.gmra.mrb[0].mxu0 %v461
  %v1167 = vpop.f32.mrb[0].mxu0
  %v1168 = vadd.f32 0.0, %v1167
  %v1169 = vpop.f32.mrb[0].mxu0
  %v1170 = vadd.f32 0.0, %v1169
  %1171 = vmatprep.mubr.f32.mxu0 0.0
  %1172 = vmatmul.mubr.f32.gmra.mrb[0].mxu0 %v464
  %v1173 = vpop.f32.mrb[0].mxu0
  %v1174 = vadd.f32 0.0, %v1173
  %v1175 = vpop.f32.mrb[0].mxu0
  %v1176 = vadd.f32 0.0, %v1175
  %1177 = vmatprep.mubr.f32.mxu0 0.0
  %1178 = vmatmul.mubr.f32.gmra.mrb[0].mxu0 %v467
  %v1179 = vpop.f32.mrb[0].mxu0
  %v1180 = vadd.f32 0.0, %v1179
  %v1181 = vpop.f32.mrb[0].mxu0
  %v1182 = vadd.f32 0.0, %v1181
  %1183 = vmatprep.mubr.f32.mxu0 0.0
  %1184 = vmatmul.mubr.f32.gmra.mrb[0].mxu0 %v470
  %v1185 = vpop.f32.mrb[0].mxu0
  %v1186 = vadd.f32 0.0, %v1185
  %v1187 = vpop.f32.mrb[0].mxu0
  %v1188 = vadd.f32 0.0, %v1187
  %1189 = vmatprep.mubr.f32.mxu0 0.0
  %1190 = vmatmul.mubr.f32.gmra.mrb[0].mxu0 %v473
  %v1191 = vpop.f32.mrb[0].mxu0
  %v1192 = vadd.f32 0.0, %v1191
  %v1193 = vpop.f32.mrb[0].mxu0
  %v1194 = vadd.f32 0.0, %v1193
  %1195 = vdwg.mxu0
  %1196 = vmatprep.subr.mxu0 0.0
  %1197 = vmatpush1.msra.mxu0 %v43
  %1198 = vmatprep.subr.mxu0 0.0
  %1199 = vmatpush1.msra.mxu0 %v50
  %1200 = vmatprep.subr.mxu0 0.0
  %1201 = vmatpush1.msra.mxu0 %v57
  %1202 = vmatprep.subr.mxu0 0.0
  %1203 = vmatpush1.msra.mxu0 %v495
  %1204 = vmatprep.subr.mxu0 0.0
  %1205 = vmatpush1.msra.mxu0 0.0
  %1206 = vmatprep.subr.mxu0 0.0
  %1207 = vmatpush1.msra.mxu0 0.0
  %1208 = vmatprep.subr.mxu0 0.0
  %1209 = vmatpush1.msra.mxu0 0.0
  %1210 = vmatprep.subr.mxu0 0.0
  %1211 = vmatpush1.msra.mxu0 0.0
  %1212 = vmatprep.subr.mxu0 0.0
  %1213 = vmatpush1.msra.mxu0 0.0
  %1214 = vmatprep.subr.mxu0 0.0
  %1215 = vmatpush1.msra.mxu0 0.0
  %1216 = vmatprep.subr.mxu0 0.0
  %1217 = vmatpush1.msra.mxu0 0.0
  %1218 = vmatprep.subr.mxu0 0.0
  %1219 = vmatpush1.msra.mxu0 0.0
  %1220 = vmatprep.subr.mxu0 0.0
  %1221 = vmatpush1.msra.mxu0 0.0
  %1222 = vmatprep.subr.mxu0 0.0
  %1223 = vmatpush1.msra.mxu0 0.0
  %1224 = vmatprep.subr.mxu0 0.0
  %1225 = vmatpush1.msra.mxu0 0.0
  %1226 = vmatprep.subr.mxu0 0.0
  %1227 = vmatpush1.msra.mxu0 0.0
  %1228 = vmatprep.subr.mxu0 0.0
  %1229 = vmatpush1.msra.mxu0 0.0
  %1230 = vmatprep.subr.mxu0 0.0
  %1231 = vmatpush1.msra.mxu0 0.0
  %1232 = vmatprep.subr.mxu0 0.0
  %1233 = vmatpush1.msra.mxu0 0.0
  %1234 = vmatprep.subr.mxu0 0.0
  %1235 = vmatpush1.msra.mxu0 0.0
  %1236 = vmatprep.subr.mxu0 0.0
  %1237 = vmatpush1.msra.mxu0 0.0
  %1238 = vmatprep.subr.mxu0 0.0
  %1239 = vmatpush1.msra.mxu0 0.0
  %1240 = vmatprep.subr.mxu0 0.0
  %1241 = vmatpush1.msra.mxu0 0.0
  %1242 = vmatprep.subr.mxu0 0.0
  %1243 = vmatpush1.msra.mxu0 0.0
  %1244 = vmatprep.subr.mxu0 0.0
  %1245 = vmatpush1.msra.mxu0 0.0
  %1246 = vmatprep.subr.mxu0 0.0
  %1247 = vmatpush1.msra.mxu0 0.0
  %1248 = vmatprep.subr.mxu0 0.0
  %1249 = vmatpush1.msra.mxu0 0.0
  %1250 = vmatprep.subr.mxu0 0.0
  %1251 = vmatpush1.msra.mxu0 0.0
  %1252 = vmatprep.subr.mxu0 0.0
  %1253 = vmatpush1.msra.mxu0 0.0
  %1254 = vmatprep.subr.mxu0 0.0
  %1255 = vmatpush1.msra.mxu0 0.0
  %1256 = vmatprep.subr.mxu0 0.0
  %1257 = vmatpush1.msra.mxu0 0.0
  %1258 = vmatprep.subr.mxu0 0.0
  %1259 = vmatpush1.msra.mxu0 0.0
  %1260 = vmatprep.mubr.f32.mxu0 0.0
  %1261 = vmatmul.mubr.f32.gmra.mrb[0].mxu0 %v392
  %v1262 = vpop.f32.mrb[0].mxu0
  %v1263 = vadd.f32 0.0, %v1262
  %v1264 = vpop.f32.mrb[0].mxu0
  %1265 = vmatprep.mubr.f32.mxu0 0.0
  %1266 = vmatmul.mubr.f32.gmra.mrb[0].mxu0 %v395
  %v1267 = vpop.f32.mrb[0].mxu0
  %v1268 = vadd.f32 0.0, %v1267
  %v1269 = vpop.f32.mrb[0].mxu0
  %1270 = vmatprep.mubr.f32.mxu0 0.0
  %1271 = vmatmul.mubr.f32.gmra.mrb[0].mxu0 %v398
  %v1272 = vpop.f32.mrb[0].mxu0
  %v1273 = vadd.f32 0.0, %v1272
  %v1274 = vpop.f32.mrb[0].mxu0
  %1275 = vmatprep.mubr.f32.mxu0 0.0
  %1276 = vmatmul.mubr.f32.gmra.mrb[0].mxu0 %v401
  %v1277 = vpop.f32.mrb[0].mxu0
  %v1278 = vadd.f32 0.0, %v1277
  %v1279 = vpop.f32.mrb[0].mxu0
  %1280 = vmatprep.mubr.f32.mxu0 0.0
  %1281 = vmatmul.mubr.f32.gmra.mrb[0].mxu0 %v404
  %v1282 = vpop.f32.mrb[0].mxu0
  %v1283 = vadd.f32 0.0, %v1282
  %v1284 = vpop.f32.mrb[0].mxu0
  %1285 = vmatprep.mubr.f32.mxu0 0.0
  %1286 = vmatmul.mubr.f32.gmra.mrb[0].mxu0 %v407
  %v1287 = vpop.f32.mrb[0].mxu0
  %v1288 = vadd.f32 0.0, %v1287
  %v1289 = vpop.f32.mrb[0].mxu0
  %1290 = vmatprep.mubr.f32.mxu0 0.0
  %1291 = vmatmul.mubr.f32.gmra.mrb[0].mxu0 %v410
  %v1292 = vpop.f32.mrb[0].mxu0
  %v1293 = vadd.f32 0.0, %v1292
  %v1294 = vpop.f32.mrb[0].mxu0
  %1295 = vmatprep.mubr.f32.mxu0 0.0
  %1296 = vmatmul.mubr.f32.gmra.mrb[0].mxu0 %v413
  %v1297 = vpop.f32.mrb[0].mxu0
  %v1298 = vadd.f32 0.0, %v1297
  %v1299 = vpop.f32.mrb[0].mxu0
  %1300 = vmatprep.mubr.f32.mxu0 0.0
  %1301 = vmatmul.mubr.f32.gmra.mrb[0].mxu0 %v416
  %v1302 = vpop.f32.mrb[0].mxu0
  %v1303 = vadd.f32 0.0, %v1302
  %v1304 = vpop.f32.mrb[0].mxu0
  %1305 = vmatprep.mubr.f32.mxu0 0.0
  %1306 = vmatmul.mubr.f32.gmra.mrb[0].mxu0 %v419
  %v1307 = vpop.f32.mrb[0].mxu0
  %v1308 = vadd.f32 0.0, %v1307
  %v1309 = vpop.f32.mrb[0].mxu0
  %1310 = vmatprep.mubr.f32.mxu0 0.0
  %1311 = vmatmul.mubr.f32.gmra.mrb[0].mxu0 %v422
  %v1312 = vpop.f32.mrb[0].mxu0
  %v1313 = vadd.f32 0.0, %v1312
  %v1314 = vpop.f32.mrb[0].mxu0
  %1315 = vmatprep.mubr.f32.mxu0 0.0
  %1316 = vmatmul.mubr.f32.gmra.mrb[0].mxu0 %v425
  %v1317 = vpop.f32.mrb[0].mxu0
  %v1318 = vadd.f32 0.0, %v1317
  %v1319 = vpop.f32.mrb[0].mxu0
  %1320 = vmatprep.mubr.f32.mxu0 0.0
  %1321 = vmatmul.mubr.f32.gmra.mrb[0].mxu0 %v428
  %v1322 = vpop.f32.mrb[0].mxu0
  %v1323 = vadd.f32 0.0, %v1322
  %v1324 = vpop.f32.mrb[0].mxu0
  %1325 = vmatprep.mubr.f32.mxu0 0.0
  %1326 = vmatmul.mubr.f32.gmra.mrb[0].mxu0 %v431
  %v1327 = vpop.f32.mrb[0].mxu0
  %v1328 = vadd.f32 0.0, %v1327
  %v1329 = vpop.f32.mrb[0].mxu0
  %1330 = vmatprep.mubr.f32.mxu0 0.0
  %1331 = vmatmul.mubr.f32.gmra.mrb[0].mxu0 %v434
  %v1332 = vpop.f32.mrb[0].mxu0
  %v1333 = vadd.f32 0.0, %v1332
  %v1334 = vpop.f32.mrb[0].mxu0
  %1335 = vmatprep.mubr.f32.mxu0 0.0
  %1336 = vmatmul.mubr.f32.gmra.mrb[0].mxu0 %v437
  %v1337 = vpop.f32.mrb[0].mxu0
  %v1338 = vadd.f32 0.0, %v1337
  %v1339 = vpop.f32.mrb[0].mxu0
  %1340 = vmatprep.mubr.f32.mxu0 0.0
  %1341 = vmatmul.mubr.f32.gmra.mrb[0].mxu0 %v440
  %v1342 = vpop.f32.mrb[0].mxu0
  %v1343 = vadd.f32 0.0, %v1342
  %v1344 = vpop.f32.mrb[0].mxu0
  %1345 = vmatprep.mubr.f32.mxu0 0.0
  %1346 = vmatmul.mubr.f32.gmra.mrb[0].mxu0 %v443
  %v1347 = vpop.f32.mrb[0].mxu0
  %v1348 = vadd.f32 0.0, %v1347
  %v1349 = vpop.f32.mrb[0].mxu0
  %1350 = vmatprep.mubr.f32.mxu0 0.0
  %1351 = vmatmul.mubr.f32.gmra.mrb[0].mxu0 %v446
  %v1352 = vpop.f32.mrb[0].mxu0
  %v1353 = vadd.f32 0.0, %v1352
  %v1354 = vpop.f32.mrb[0].mxu0
  %1355 = vmatprep.mubr.f32.mxu0 0.0
  %1356 = vmatmul.mubr.f32.gmra.mrb[0].mxu0 %v449
  %v1357 = vpop.f32.mrb[0].mxu0
  %v1358 = vadd.f32 0.0, %v1357
  %v1359 = vpop.f32.mrb[0].mxu0
  %1360 = vmatprep.mubr.f32.mxu0 0.0
  %1361 = vmatmul.mubr.f32.gmra.mrb[0].mxu0 %v452
  %v1362 = vpop.f32.mrb[0].mxu0
  %v1363 = vadd.f32 0.0, %v1362
  %v1364 = vpop.f32.mrb[0].mxu0
  %1365 = vmatprep.mubr.f32.mxu0 0.0
  %1366 = vmatmul.mubr.f32.gmra.mrb[0].mxu0 %v455
  %v1367 = vpop.f32.mrb[0].mxu0
  %v1368 = vadd.f32 0.0, %v1367
  %v1369 = vpop.f32.mrb[0].mxu0
  %1370 = vmatprep.mubr.f32.mxu0 0.0
  %1371 = vmatmul.mubr.f32.gmra.mrb[0].mxu0 %v458
  %v1372 = vpop.f32.mrb[0].mxu0
  %v1373 = vadd.f32 0.0, %v1372
  %v1374 = vpop.f32.mrb[0].mxu0
  %1375 = vmatprep.mubr.f32.mxu0 0.0
  %1376 = vmatmul.mubr.f32.gmra.mrb[0].mxu0 %v461
  %v1377 = vpop.f32.mrb[0].mxu0
  %v1378 = vadd.f32 0.0, %v1377
  %v1379 = vpop.f32.mrb[0].mxu0
  %1380 = vmatprep.mubr.f32.mxu0 0.0
  %1381 = vmatmul.mubr.f32.gmra.mrb[0].mxu0 %v464
  %v1382 = vpop.f32.mrb[0].mxu0
  %v1383 = vadd.f32 0.0, %v1382
  %v1384 = vpop.f32.mrb[0].mxu0
  %1385 = vmatprep.mubr.f32.mxu0 0.0
  %1386 = vmatmul.mubr.f32.gmra.mrb[0].mxu0 %v467
  %v1387 = vpop.f32.mrb[0].mxu0
  %v1388 = vadd.f32 0.0, %v1387
  %v1389 = vpop.f32.mrb[0].mxu0
  %1390 = vmatprep.mubr.f32.mxu0 0.0
  %1391 = vmatmul.mubr.f32.gmra.mrb[0].mxu0 %v470
  %v1392 = vpop.f32.mrb[0].mxu0
  %v1393 = vadd.f32 0.0, %v1392
  %v1394 = vpop.f32.mrb[0].mxu0
  %1395 = vmatprep.mubr.f32.mxu0 0.0
  %1396 = vmatmul.mubr.f32.gmra.mrb[0].mxu0 %v473
  %v1397 = vpop.f32.mrb[0].mxu0
  %v1398 = vadd.f32 0.0, %v1397
  %v1399 = vpop.f32.mrb[0].mxu0
  %1400 = vdwg.mxu0
  %v1402 = vsel %vm390, %v333, 0
  %v1405 = vsel %vm390, %v334, 0
  %v1408 = vsel %vm390, %v335, 0
  %v1411 = vsel %vm390, %v336, 0
  %v1414 = vsel %vm390, %v337, 0
  %v1417 = vsel %vm390, %v338, 0
  %v1420 = vsel %vm390, %v339, 0
  %v1423 = vsel %vm390, %v340, 0
  %v1426 = vsel %vm390, %v341, 0
  %v1429 = vsel %vm390, %v342, 0
  %v1432 = vsel %vm390, %v343, 0
  %v1435 = vsel %vm390, %v344, 0
  %v1438 = vsel %vm390, %v345, 0
  %v1441 = vsel %vm390, %v346, 0
  %v1444 = vsel %vm390, %v347, 0
  %v1447 = vsel %vm390, %v348, 0
  %v1450 = vsel %vm390, %v349, 0
  %v1453 = vsel %vm390, %v350, 0
  %v1456 = vsel %vm390, %v351, 0
  %v1459 = vsel %vm390, %v352, 0
  %v1462 = vsel %vm390, %v353, 0
  %v1465 = vsel %vm390, %v354, 0
  %v1468 = vsel %vm390, %v355, 0
  %v1471 = vsel %vm390, %v356, 0
  %v1474 = vsel %vm390, %v357, 0
  %v1477 = vsel %vm390, %v358, 0
  %v1480 = vsel %vm390, %v359, 0
  %v1483 = vsel %vm390, %v360, 0
  %v1486 = vsel %vm475, %v213, 0
  %v1489 = vsel %vm475, %v214, 0
  %v1492 = vsel %vm475, %v215, 0
  %v1495 = vsel %vm475, %v216, 0
  %v1498 = vsel %vm475, %v217, 0
  %v1501 = vsel %vm475, %v218, 0
  %v1504 = vsel %vm475, %v219, 0
  %1506 = vmatprep.subr.mxu0 %v193
  %1507 = vmatpush1.msra.mxu0 %v192
  %1508 = vmatprep.subr.mxu0 %v200
  %1509 = vmatpush1.msra.mxu0 %v199
  %1510 = vmatprep.subr.mxu0 %v207
  %1511 = vmatpush1.msra.mxu0 %v206
  %1512 = vmatprep.subr.mxu0 %v1489
  %1513 = vmatpush1.msra.mxu0 %v1486
  %1514 = vmatprep.subr.mxu0 0.0
  %1515 = vmatpush1.msra.mxu0 0.0
  %1516 = vmatprep.subr.mxu0 0.0
  %1517 = vmatpush1.msra.mxu0 0.0
  %1518 = vmatprep.subr.mxu0 0.0
  %1519 = vmatpush1.msra.mxu0 0.0
  %1520 = vmatprep.subr.mxu0 0.0
  %1521 = vmatpush1.msra.mxu0 0.0
  %1522 = vmatprep.subr.mxu0 0.0
  %1523 = vmatpush1.msra.mxu0 0.0
  %1524 = vmatprep.subr.mxu0 0.0
  %1525 = vmatpush1.msra.mxu0 0.0
  %1526 = vmatprep.subr.mxu0 0.0
  %1527 = vmatpush1.msra.mxu0 0.0
  %1528 = vmatprep.subr.mxu0 0.0
  %1529 = vmatpush1.msra.mxu0 0.0
  %1530 = vmatprep.subr.mxu0 0.0
  %1531 = vmatpush1.msra.mxu0 0.0
  %1532 = vmatprep.subr.mxu0 0.0
  %1533 = vmatpush1.msra.mxu0 0.0
  %1534 = vmatprep.subr.mxu0 0.0
  %1535 = vmatpush1.msra.mxu0 0.0
  %1536 = vmatprep.subr.mxu0 0.0
  %1537 = vmatpush1.msra.mxu0 0.0
  %1538 = vmatprep.subr.mxu0 0.0
  %1539 = vmatpush1.msra.mxu0 0.0
  %1540 = vmatprep.subr.mxu0 0.0
  %1541 = vmatpush1.msra.mxu0 0.0
  %1542 = vmatprep.subr.mxu0 0.0
  %1543 = vmatpush1.msra.mxu0 0.0
  %1544 = vmatprep.subr.mxu0 0.0
  %1545 = vmatpush1.msra.mxu0 0.0
  %1546 = vmatprep.subr.mxu0 0.0
  %1547 = vmatpush1.msra.mxu0 0.0
  %1548 = vmatprep.subr.mxu0 0.0
  %1549 = vmatpush1.msra.mxu0 0.0
  %1550 = vmatprep.subr.mxu0 0.0
  %1551 = vmatpush1.msra.mxu0 0.0
  %1552 = vmatprep.subr.mxu0 0.0
  %1553 = vmatpush1.msra.mxu0 0.0
  %1554 = vmatprep.subr.mxu0 0.0
  %1555 = vmatpush1.msra.mxu0 0.0
  %1556 = vmatprep.subr.mxu0 0.0
  %1557 = vmatpush1.msra.mxu0 0.0
  %1558 = vmatprep.subr.mxu0 0.0
  %1559 = vmatpush1.msra.mxu0 0.0
  %1560 = vmatprep.subr.mxu0 0.0
  %1561 = vmatpush1.msra.mxu0 0.0
  %1562 = vmatprep.subr.mxu0 0.0
  %1563 = vmatpush1.msra.mxu0 0.0
  %1564 = vmatprep.subr.mxu0 0.0
  %1565 = vmatpush1.msra.mxu0 0.0
  %1566 = vmatprep.subr.mxu0 0.0
  %1567 = vmatpush1.msra.mxu0 0.0
  %1568 = vmatprep.subr.mxu0 0.0
  %1569 = vmatpush1.msra.mxu0 0.0
  %1570 = vmatprep.mubr.f32.mxu0 0.0
  %1571 = vmatmul.mubr.f32.gmra.mrb[0].mxu0 %v1402
  %v1572 = vpop.f32.mrb[0].mxu0
  %v1573 = vadd.f32 %v564, %v1572
  %v1574 = vpop.f32.mrb[0].mxu0
  %v1575 = vadd.f32 %v566, %v1574
  %1576 = vmatprep.mubr.f32.mxu0 0.0
  %1577 = vmatmul.mubr.f32.gmra.mrb[0].mxu0 %v1405
  %v1578 = vpop.f32.mrb[0].mxu0
  %v1579 = vadd.f32 %v570, %v1578
  %v1580 = vpop.f32.mrb[0].mxu0
  %v1581 = vadd.f32 %v572, %v1580
  %1582 = vmatprep.mubr.f32.mxu0 0.0
  %1583 = vmatmul.mubr.f32.gmra.mrb[0].mxu0 %v1408
  %v1584 = vpop.f32.mrb[0].mxu0
  %v1585 = vadd.f32 %v576, %v1584
  %v1586 = vpop.f32.mrb[0].mxu0
  %v1587 = vadd.f32 %v578, %v1586
  %1588 = vmatprep.mubr.f32.mxu0 0.0
  %1589 = vmatmul.mubr.f32.gmra.mrb[0].mxu0 %v1411
  %v1590 = vpop.f32.mrb[0].mxu0
  %v1591 = vadd.f32 %v582, %v1590
  %v1592 = vpop.f32.mrb[0].mxu0
  %v1593 = vadd.f32 %v584, %v1592
  %1594 = vmatprep.mubr.f32.mxu0 0.0
  %1595 = vmatmul.mubr.f32.gmra.mrb[0].mxu0 %v1414
  %v1596 = vpop.f32.mrb[0].mxu0
  %v1597 = vadd.f32 %v588, %v1596
  %v1598 = vpop.f32.mrb[0].mxu0
  %v1599 = vadd.f32 %v590, %v1598
  %1600 = vmatprep.mubr.f32.mxu0 0.0
  %1601 = vmatmul.mubr.f32.gmra.mrb[0].mxu0 %v1417
  %v1602 = vpop.f32.mrb[0].mxu0
  %v1603 = vadd.f32 %v594, %v1602
  %v1604 = vpop.f32.mrb[0].mxu0
  %v1605 = vadd.f32 %v596, %v1604
  %1606 = vmatprep.mubr.f32.mxu0 0.0
  %1607 = vmatmul.mubr.f32.gmra.mrb[0].mxu0 %v1420
  %v1608 = vpop.f32.mrb[0].mxu0
  %v1609 = vadd.f32 %v600, %v1608
  %v1610 = vpop.f32.mrb[0].mxu0
  %v1611 = vadd.f32 %v602, %v1610
  %1612 = vmatprep.mubr.f32.mxu0 0.0
  %1613 = vmatmul.mubr.f32.gmra.mrb[0].mxu0 %v1423
  %v1614 = vpop.f32.mrb[0].mxu0
  %v1615 = vadd.f32 %v606, %v1614
  %v1616 = vpop.f32.mrb[0].mxu0
  %v1617 = vadd.f32 %v608, %v1616
  %1618 = vmatprep.mubr.f32.mxu0 0.0
  %1619 = vmatmul.mubr.f32.gmra.mrb[0].mxu0 %v1426
  %v1620 = vpop.f32.mrb[0].mxu0
  %v1621 = vadd.f32 %v612, %v1620
  %v1622 = vpop.f32.mrb[0].mxu0
  %v1623 = vadd.f32 %v614, %v1622
  %1624 = vmatprep.mubr.f32.mxu0 0.0
  %1625 = vmatmul.mubr.f32.gmra.mrb[0].mxu0 %v1429
  %v1626 = vpop.f32.mrb[0].mxu0
  %v1627 = vadd.f32 %v618, %v1626
  %v1628 = vpop.f32.mrb[0].mxu0
  %v1629 = vadd.f32 %v620, %v1628
  %1630 = vmatprep.mubr.f32.mxu0 0.0
  %1631 = vmatmul.mubr.f32.gmra.mrb[0].mxu0 %v1432
  %v1632 = vpop.f32.mrb[0].mxu0
  %v1633 = vadd.f32 %v624, %v1632
  %v1634 = vpop.f32.mrb[0].mxu0
  %v1635 = vadd.f32 %v626, %v1634
  %1636 = vmatprep.mubr.f32.mxu0 0.0
  %1637 = vmatmul.mubr.f32.gmra.mrb[0].mxu0 %v1435
  %v1638 = vpop.f32.mrb[0].mxu0
  %v1639 = vadd.f32 %v630, %v1638
  %v1640 = vpop.f32.mrb[0].mxu0
  %v1641 = vadd.f32 %v632, %v1640
  %1642 = vmatprep.mubr.f32.mxu0 0.0
  %1643 = vmatmul.mubr.f32.gmra.mrb[0].mxu0 %v1438
  %v1644 = vpop.f32.mrb[0].mxu0
  %v1645 = vadd.f32 %v636, %v1644
  %v1646 = vpop.f32.mrb[0].mxu0
  %v1647 = vadd.f32 %v638, %v1646
  %1648 = vmatprep.mubr.f32.mxu0 0.0
  %1649 = vmatmul.mubr.f32.gmra.mrb[0].mxu0 %v1441
  %v1650 = vpop.f32.mrb[0].mxu0
  %v1651 = vadd.f32 %v642, %v1650
  %v1652 = vpop.f32.mrb[0].mxu0
  %v1653 = vadd.f32 %v644, %v1652
  %1654 = vmatprep.mubr.f32.mxu0 0.0
  %1655 = vmatmul.mubr.f32.gmra.mrb[0].mxu0 %v1444
  %v1656 = vpop.f32.mrb[0].mxu0
  %v1657 = vadd.f32 %v648, %v1656
  %v1658 = vpop.f32.mrb[0].mxu0
  %v1659 = vadd.f32 %v650, %v1658
  %1660 = vmatprep.mubr.f32.mxu0 0.0
  %1661 = vmatmul.mubr.f32.gmra.mrb[0].mxu0 %v1447
  %v1662 = vpop.f32.mrb[0].mxu0
  %v1663 = vadd.f32 %v654, %v1662
  %v1664 = vpop.f32.mrb[0].mxu0
  %v1665 = vadd.f32 %v656, %v1664
  %1666 = vmatprep.mubr.f32.mxu0 0.0
  %1667 = vmatmul.mubr.f32.gmra.mrb[0].mxu0 %v1450
  %v1668 = vpop.f32.mrb[0].mxu0
  %v1669 = vadd.f32 %v660, %v1668
  %v1670 = vpop.f32.mrb[0].mxu0
  %v1671 = vadd.f32 %v662, %v1670
  %1672 = vmatprep.mubr.f32.mxu0 0.0
  %1673 = vmatmul.mubr.f32.gmra.mrb[0].mxu0 %v1453
  %v1674 = vpop.f32.mrb[0].mxu0
  %v1675 = vadd.f32 %v666, %v1674
  %v1676 = vpop.f32.mrb[0].mxu0
  %v1677 = vadd.f32 %v668, %v1676
  %1678 = vmatprep.mubr.f32.mxu0 0.0
  %1679 = vmatmul.mubr.f32.gmra.mrb[0].mxu0 %v1456
  %v1680 = vpop.f32.mrb[0].mxu0
  %v1681 = vadd.f32 %v672, %v1680
  %v1682 = vpop.f32.mrb[0].mxu0
  %v1683 = vadd.f32 %v674, %v1682
  %1684 = vmatprep.mubr.f32.mxu0 0.0
  %1685 = vmatmul.mubr.f32.gmra.mrb[0].mxu0 %v1459
  %v1686 = vpop.f32.mrb[0].mxu0
  %v1687 = vadd.f32 %v678, %v1686
  %v1688 = vpop.f32.mrb[0].mxu0
  %v1689 = vadd.f32 %v680, %v1688
  %1690 = vmatprep.mubr.f32.mxu0 0.0
  %1691 = vmatmul.mubr.f32.gmra.mrb[0].mxu0 %v1462
  %v1692 = vpop.f32.mrb[0].mxu0
  %v1693 = vadd.f32 %v684, %v1692
  %v1694 = vpop.f32.mrb[0].mxu0
  %v1695 = vadd.f32 %v686, %v1694
  %1696 = vmatprep.mubr.f32.mxu0 0.0
  %1697 = vmatmul.mubr.f32.gmra.mrb[0].mxu0 %v1465
  %v1698 = vpop.f32.mrb[0].mxu0
  %v1699 = vadd.f32 %v690, %v1698
  %v1700 = vpop.f32.mrb[0].mxu0
  %v1701 = vadd.f32 %v692, %v1700
  %1702 = vmatprep.mubr.f32.mxu0 0.0
  %1703 = vmatmul.mubr.f32.gmra.mrb[0].mxu0 %v1468
  %v1704 = vpop.f32.mrb[0].mxu0
  %v1705 = vadd.f32 %v696, %v1704
  %v1706 = vpop.f32.mrb[0].mxu0
  %v1707 = vadd.f32 %v698, %v1706
  %1708 = vmatprep.mubr.f32.mxu0 0.0
  %1709 = vmatmul.mubr.f32.gmra.mrb[0].mxu0 %v1471
  %v1710 = vpop.f32.mrb[0].mxu0
  %v1711 = vadd.f32 %v702, %v1710
  %v1712 = vpop.f32.mrb[0].mxu0
  %v1713 = vadd.f32 %v704, %v1712
  %1714 = vmatprep.mubr.f32.mxu0 0.0
  %1715 = vmatmul.mubr.f32.gmra.mrb[0].mxu0 %v1474
  %v1716 = vpop.f32.mrb[0].mxu0
  %v1717 = vadd.f32 %v708, %v1716
  %v1718 = vpop.f32.mrb[0].mxu0
  %v1719 = vadd.f32 %v710, %v1718
  %1720 = vmatprep.mubr.f32.mxu0 0.0
  %1721 = vmatmul.mubr.f32.gmra.mrb[0].mxu0 %v1477
  %v1722 = vpop.f32.mrb[0].mxu0
  %v1723 = vadd.f32 %v714, %v1722
  %v1724 = vpop.f32.mrb[0].mxu0
  %v1725 = vadd.f32 %v716, %v1724
  %1726 = vmatprep.mubr.f32.mxu0 0.0
  %1727 = vmatmul.mubr.f32.gmra.mrb[0].mxu0 %v1480
  %v1728 = vpop.f32.mrb[0].mxu0
  %v1729 = vadd.f32 %v720, %v1728
  %v1730 = vpop.f32.mrb[0].mxu0
  %v1731 = vadd.f32 %v722, %v1730
  %1732 = vmatprep.mubr.f32.mxu0 0.0
  %1733 = vmatmul.mubr.f32.gmra.mrb[0].mxu0 %v1483
  %v1734 = vpop.f32.mrb[0].mxu0
  %v1735 = vadd.f32 %v726, %v1734
  %v1736 = vpop.f32.mrb[0].mxu0
  %v1737 = vadd.f32 %v728, %v1736
  %1738 = vdwg.mxu0
  %1739 = vmatprep.subr.mxu0 %v195
  %1740 = vmatpush1.msra.mxu0 %v194
  %1741 = vmatprep.subr.mxu0 %v202
  %1742 = vmatpush1.msra.mxu0 %v201
  %1743 = vmatprep.subr.mxu0 %v209
  %1744 = vmatpush1.msra.mxu0 %v208
  %1745 = vmatprep.subr.mxu0 %v1495
  %1746 = vmatpush1.msra.mxu0 %v1492
  %1747 = vmatprep.subr.mxu0 0.0
  %1748 = vmatpush1.msra.mxu0 0.0
  %1749 = vmatprep.subr.mxu0 0.0
  %1750 = vmatpush1.msra.mxu0 0.0
  %1751 = vmatprep.subr.mxu0 0.0
  %1752 = vmatpush1.msra.mxu0 0.0
  %1753 = vmatprep.subr.mxu0 0.0
  %1754 = vmatpush1.msra.mxu0 0.0
  %1755 = vmatprep.subr.mxu0 0.0
  %1756 = vmatpush1.msra.mxu0 0.0
  %1757 = vmatprep.subr.mxu0 0.0
  %1758 = vmatpush1.msra.mxu0 0.0
  %1759 = vmatprep.subr.mxu0 0.0
  %1760 = vmatpush1.msra.mxu0 0.0
  %1761 = vmatprep.subr.mxu0 0.0
  %1762 = vmatpush1.msra.mxu0 0.0
  %1763 = vmatprep.subr.mxu0 0.0
  %1764 = vmatpush1.msra.mxu0 0.0
  %1765 = vmatprep.subr.mxu0 0.0
  %1766 = vmatpush1.msra.mxu0 0.0
  %1767 = vmatprep.subr.mxu0 0.0
  %1768 = vmatpush1.msra.mxu0 0.0
  %1769 = vmatprep.subr.mxu0 0.0
  %1770 = vmatpush1.msra.mxu0 0.0
  %1771 = vmatprep.subr.mxu0 0.0
  %1772 = vmatpush1.msra.mxu0 0.0
  %1773 = vmatprep.subr.mxu0 0.0
  %1774 = vmatpush1.msra.mxu0 0.0
  %1775 = vmatprep.subr.mxu0 0.0
  %1776 = vmatpush1.msra.mxu0 0.0
  %1777 = vmatprep.subr.mxu0 0.0
  %1778 = vmatpush1.msra.mxu0 0.0
  %1779 = vmatprep.subr.mxu0 0.0
  %1780 = vmatpush1.msra.mxu0 0.0
  %1781 = vmatprep.subr.mxu0 0.0
  %1782 = vmatpush1.msra.mxu0 0.0
  %1783 = vmatprep.subr.mxu0 0.0
  %1784 = vmatpush1.msra.mxu0 0.0
  %1785 = vmatprep.subr.mxu0 0.0
  %1786 = vmatpush1.msra.mxu0 0.0
  %1787 = vmatprep.subr.mxu0 0.0
  %1788 = vmatpush1.msra.mxu0 0.0
  %1789 = vmatprep.subr.mxu0 0.0
  %1790 = vmatpush1.msra.mxu0 0.0
  %1791 = vmatprep.subr.mxu0 0.0
  %1792 = vmatpush1.msra.mxu0 0.0
  %1793 = vmatprep.subr.mxu0 0.0
  %1794 = vmatpush1.msra.mxu0 0.0
  %1795 = vmatprep.subr.mxu0 0.0
  %1796 = vmatpush1.msra.mxu0 0.0
  %1797 = vmatprep.subr.mxu0 0.0
  %1798 = vmatpush1.msra.mxu0 0.0
  %1799 = vmatprep.subr.mxu0 0.0
  %1800 = vmatpush1.msra.mxu0 0.0
  %1801 = vmatprep.subr.mxu0 0.0
  %1802 = vmatpush1.msra.mxu0 0.0
  %1803 = vmatprep.mubr.f32.mxu0 0.0
  %1804 = vmatmul.mubr.f32.gmra.mrb[0].mxu0 %v1402
  %v1805 = vpop.f32.mrb[0].mxu0
  %v1806 = vadd.f32 %v797, %v1805
  %v1807 = vpop.f32.mrb[0].mxu0
  %v1808 = vadd.f32 %v799, %v1807
  %1809 = vmatprep.mubr.f32.mxu0 0.0
  %1810 = vmatmul.mubr.f32.gmra.mrb[0].mxu0 %v1405
  %v1811 = vpop.f32.mrb[0].mxu0
  %v1812 = vadd.f32 %v803, %v1811
  %v1813 = vpop.f32.mrb[0].mxu0
  %v1814 = vadd.f32 %v805, %v1813
  %1815 = vmatprep.mubr.f32.mxu0 0.0
  %1816 = vmatmul.mubr.f32.gmra.mrb[0].mxu0 %v1408
  %v1817 = vpop.f32.mrb[0].mxu0
  %v1818 = vadd.f32 %v809, %v1817
  %v1819 = vpop.f32.mrb[0].mxu0
  %v1820 = vadd.f32 %v811, %v1819
  %1821 = vmatprep.mubr.f32.mxu0 0.0
  %1822 = vmatmul.mubr.f32.gmra.mrb[0].mxu0 %v1411
  %v1823 = vpop.f32.mrb[0].mxu0
  %v1824 = vadd.f32 %v815, %v1823
  %v1825 = vpop.f32.mrb[0].mxu0
  %v1826 = vadd.f32 %v817, %v1825
  %1827 = vmatprep.mubr.f32.mxu0 0.0
  %1828 = vmatmul.mubr.f32.gmra.mrb[0].mxu0 %v1414
  %v1829 = vpop.f32.mrb[0].mxu0
  %v1830 = vadd.f32 %v821, %v1829
  %v1831 = vpop.f32.mrb[0].mxu0
  %v1832 = vadd.f32 %v823, %v1831
  %1833 = vmatprep.mubr.f32.mxu0 0.0
  %1834 = vmatmul.mubr.f32.gmra.mrb[0].mxu0 %v1417
  %v1835 = vpop.f32.mrb[0].mxu0
  %v1836 = vadd.f32 %v827, %v1835
  %v1837 = vpop.f32.mrb[0].mxu0
  %v1838 = vadd.f32 %v829, %v1837
  %1839 = vmatprep.mubr.f32.mxu0 0.0
  %1840 = vmatmul.mubr.f32.gmra.mrb[0].mxu0 %v1420
  %v1841 = vpop.f32.mrb[0].mxu0
  %v1842 = vadd.f32 %v833, %v1841
  %v1843 = vpop.f32.mrb[0].mxu0
  %v1844 = vadd.f32 %v835, %v1843
  %1845 = vmatprep.mubr.f32.mxu0 0.0
  %1846 = vmatmul.mubr.f32.gmra.mrb[0].mxu0 %v1423
  %v1847 = vpop.f32.mrb[0].mxu0
  %v1848 = vadd.f32 %v839, %v1847
  %v1849 = vpop.f32.mrb[0].mxu0
  %v1850 = vadd.f32 %v841, %v1849
  %1851 = vmatprep.mubr.f32.mxu0 0.0
  %1852 = vmatmul.mubr.f32.gmra.mrb[0].mxu0 %v1426
  %v1853 = vpop.f32.mrb[0].mxu0
  %v1854 = vadd.f32 %v845, %v1853
  %v1855 = vpop.f32.mrb[0].mxu0
  %v1856 = vadd.f32 %v847, %v1855
  %1857 = vmatprep.mubr.f32.mxu0 0.0
  %1858 = vmatmul.mubr.f32.gmra.mrb[0].mxu0 %v1429
  %v1859 = vpop.f32.mrb[0].mxu0
  %v1860 = vadd.f32 %v851, %v1859
  %v1861 = vpop.f32.mrb[0].mxu0
  %v1862 = vadd.f32 %v853, %v1861
  %1863 = vmatprep.mubr.f32.mxu0 0.0
  %1864 = vmatmul.mubr.f32.gmra.mrb[0].mxu0 %v1432
  %v1865 = vpop.f32.mrb[0].mxu0
  %v1866 = vadd.f32 %v857, %v1865
  %v1867 = vpop.f32.mrb[0].mxu0
  %v1868 = vadd.f32 %v859, %v1867
  %1869 = vmatprep.mubr.f32.mxu0 0.0
  %1870 = vmatmul.mubr.f32.gmra.mrb[0].mxu0 %v1435
  %v1871 = vpop.f32.mrb[0].mxu0
  %v1872 = vadd.f32 %v863, %v1871
  %v1873 = vpop.f32.mrb[0].mxu0
  %v1874 = vadd.f32 %v865, %v1873
  %1875 = vmatprep.mubr.f32.mxu0 0.0
  %1876 = vmatmul.mubr.f32.gmra.mrb[0].mxu0 %v1438
  %v1877 = vpop.f32.mrb[0].mxu0
  %v1878 = vadd.f32 %v869, %v1877
  %v1879 = vpop.f32.mrb[0].mxu0
  %v1880 = vadd.f32 %v871, %v1879
  %1881 = vmatprep.mubr.f32.mxu0 0.0
  %1882 = vmatmul.mubr.f32.gmra.mrb[0].mxu0 %v1441
  %v1883 = vpop.f32.mrb[0].mxu0
  %v1884 = vadd.f32 %v875, %v1883
  %v1885 = vpop.f32.mrb[0].mxu0
  %v1886 = vadd.f32 %v877, %v1885
  %1887 = vmatprep.mubr.f32.mxu0 0.0
  %1888 = vmatmul.mubr.f32.gmra.mrb[0].mxu0 %v1444
  %v1889 = vpop.f32.mrb[0].mxu0
  %v1890 = vadd.f32 %v881, %v1889
  %v1891 = vpop.f32.mrb[0].mxu0
  %v1892 = vadd.f32 %v883, %v1891
  %1893 = vmatprep.mubr.f32.mxu0 0.0
  %1894 = vmatmul.mubr.f32.gmra.mrb[0].mxu0 %v1447
  %v1895 = vpop.f32.mrb[0].mxu0
  %v1896 = vadd.f32 %v887, %v1895
  %v1897 = vpop.f32.mrb[0].mxu0
  %v1898 = vadd.f32 %v889, %v1897
  %1899 = vmatprep.mubr.f32.mxu0 0.0
  %1900 = vmatmul.mubr.f32.gmra.mrb[0].mxu0 %v1450
  %v1901 = vpop.f32.mrb[0].mxu0
  %v1902 = vadd.f32 %v893, %v1901
  %v1903 = vpop.f32.mrb[0].mxu0
  %v1904 = vadd.f32 %v895, %v1903
  %1905 = vmatprep.mubr.f32.mxu0 0.0
  %1906 = vmatmul.mubr.f32.gmra.mrb[0].mxu0 %v1453
  %v1907 = vpop.f32.mrb[0].mxu0
  %v1908 = vadd.f32 %v899, %v1907
  %v1909 = vpop.f32.mrb[0].mxu0
  %v1910 = vadd.f32 %v901, %v1909
  %1911 = vmatprep.mubr.f32.mxu0 0.0
  %1912 = vmatmul.mubr.f32.gmra.mrb[0].mxu0 %v1456
  %v1913 = vpop.f32.mrb[0].mxu0
  %v1914 = vadd.f32 %v905, %v1913
  %v1915 = vpop.f32.mrb[0].mxu0
  %v1916 = vadd.f32 %v907, %v1915
  %1917 = vmatprep.mubr.f32.mxu0 0.0
  %1918 = vmatmul.mubr.f32.gmra.mrb[0].mxu0 %v1459
  %v1919 = vpop.f32.mrb[0].mxu0
  %v1920 = vadd.f32 %v911, %v1919
  %v1921 = vpop.f32.mrb[0].mxu0
  %v1922 = vadd.f32 %v913, %v1921
  %1923 = vmatprep.mubr.f32.mxu0 0.0
  %1924 = vmatmul.mubr.f32.gmra.mrb[0].mxu0 %v1462
  %v1925 = vpop.f32.mrb[0].mxu0
  %v1926 = vadd.f32 %v917, %v1925
  %v1927 = vpop.f32.mrb[0].mxu0
  %v1928 = vadd.f32 %v919, %v1927
  %1929 = vmatprep.mubr.f32.mxu0 0.0
  %1930 = vmatmul.mubr.f32.gmra.mrb[0].mxu0 %v1465
  %v1931 = vpop.f32.mrb[0].mxu0
  %v1932 = vadd.f32 %v923, %v1931
  %v1933 = vpop.f32.mrb[0].mxu0
  %v1934 = vadd.f32 %v925, %v1933
  %1935 = vmatprep.mubr.f32.mxu0 0.0
  %1936 = vmatmul.mubr.f32.gmra.mrb[0].mxu0 %v1468
  %v1937 = vpop.f32.mrb[0].mxu0
  %v1938 = vadd.f32 %v929, %v1937
  %v1939 = vpop.f32.mrb[0].mxu0
  %v1940 = vadd.f32 %v931, %v1939
  %1941 = vmatprep.mubr.f32.mxu0 0.0
  %1942 = vmatmul.mubr.f32.gmra.mrb[0].mxu0 %v1471
  %v1943 = vpop.f32.mrb[0].mxu0
  %v1944 = vadd.f32 %v935, %v1943
  %v1945 = vpop.f32.mrb[0].mxu0
  %v1946 = vadd.f32 %v937, %v1945
  %1947 = vmatprep.mubr.f32.mxu0 0.0
  %1948 = vmatmul.mubr.f32.gmra.mrb[0].mxu0 %v1474
  %v1949 = vpop.f32.mrb[0].mxu0
  %v1950 = vadd.f32 %v941, %v1949
  %v1951 = vpop.f32.mrb[0].mxu0
  %v1952 = vadd.f32 %v943, %v1951
  %1953 = vmatprep.mubr.f32.mxu0 0.0
  %1954 = vmatmul.mubr.f32.gmra.mrb[0].mxu0 %v1477
  %v1955 = vpop.f32.mrb[0].mxu0
  %v1956 = vadd.f32 %v947, %v1955
  %v1957 = vpop.f32.mrb[0].mxu0
  %v1958 = vadd.f32 %v949, %v1957
  %1959 = vmatprep.mubr.f32.mxu0 0.0
  %1960 = vmatmul.mubr.f32.gmra.mrb[0].mxu0 %v1480
  %v1961 = vpop.f32.mrb[0].mxu0
  %v1962 = vadd.f32 %v953, %v1961
  %v1963 = vpop.f32.mrb[0].mxu0
  %v1964 = vadd.f32 %v955, %v1963
  %1965 = vmatprep.mubr.f32.mxu0 0.0
  %1966 = vmatmul.mubr.f32.gmra.mrb[0].mxu0 %v1483
  %v1967 = vpop.f32.mrb[0].mxu0
  %v1968 = vadd.f32 %v959, %v1967
  %v1969 = vpop.f32.mrb[0].mxu0
  %v1970 = vadd.f32 %v961, %v1969
  %1971 = vdwg.mxu0
  %1972 = vmatprep.subr.mxu0 %v197
  %1973 = vmatpush1.msra.mxu0 %v196
  %1974 = vmatprep.subr.mxu0 %v204
  %1975 = vmatpush1.msra.mxu0 %v203
  %1976 = vmatprep.subr.mxu0 %v211
  %1977 = vmatpush1.msra.mxu0 %v210
  %1978 = vmatprep.subr.mxu0 %v1501
  %1979 = vmatpush1.msra.mxu0 %v1498
  %1980 = vmatprep.subr.mxu0 0.0
  %1981 = vmatpush1.msra.mxu0 0.0
  %1982 = vmatprep.subr.mxu0 0.0
  %1983 = vmatpush1.msra.mxu0 0.0
  %1984 = vmatprep.subr.mxu0 0.0
  %1985 = vmatpush1.msra.mxu0 0.0
  %1986 = vmatprep.subr.mxu0 0.0
  %1987 = vmatpush1.msra.mxu0 0.0
  %1988 = vmatprep.subr.mxu0 0.0
  %1989 = vmatpush1.msra.mxu0 0.0
  %1990 = vmatprep.subr.mxu0 0.0
  %1991 = vmatpush1.msra.mxu0 0.0
  %1992 = vmatprep.subr.mxu0 0.0
  %1993 = vmatpush1.msra.mxu0 0.0
  %1994 = vmatprep.subr.mxu0 0.0
  %1995 = vmatpush1.msra.mxu0 0.0
  %1996 = vmatprep.subr.mxu0 0.0
  %1997 = vmatpush1.msra.mxu0 0.0
  %1998 = vmatprep.subr.mxu0 0.0
  %1999 = vmatpush1.msra.mxu0 0.0
  %2000 = vmatprep.subr.mxu0 0.0
  %2001 = vmatpush1.msra.mxu0 0.0
  %2002 = vmatprep.subr.mxu0 0.0
  %2003 = vmatpush1.msra.mxu0 0.0
  %2004 = vmatprep.subr.mxu0 0.0
  %2005 = vmatpush1.msra.mxu0 0.0
  %2006 = vmatprep.subr.mxu0 0.0
  %2007 = vmatpush1.msra.mxu0 0.0
  %2008 = vmatprep.subr.mxu0 0.0
  %2009 = vmatpush1.msra.mxu0 0.0
  %2010 = vmatprep.subr.mxu0 0.0
  %2011 = vmatpush1.msra.mxu0 0.0
  %2012 = vmatprep.subr.mxu0 0.0
  %2013 = vmatpush1.msra.mxu0 0.0
  %2014 = vmatprep.subr.mxu0 0.0
  %2015 = vmatpush1.msra.mxu0 0.0
  %2016 = vmatprep.subr.mxu0 0.0
  %2017 = vmatpush1.msra.mxu0 0.0
  %2018 = vmatprep.subr.mxu0 0.0
  %2019 = vmatpush1.msra.mxu0 0.0
  %2020 = vmatprep.subr.mxu0 0.0
  %2021 = vmatpush1.msra.mxu0 0.0
  %2022 = vmatprep.subr.mxu0 0.0
  %2023 = vmatpush1.msra.mxu0 0.0
  %2024 = vmatprep.subr.mxu0 0.0
  %2025 = vmatpush1.msra.mxu0 0.0
  %2026 = vmatprep.subr.mxu0 0.0
  %2027 = vmatpush1.msra.mxu0 0.0
  %2028 = vmatprep.subr.mxu0 0.0
  %2029 = vmatpush1.msra.mxu0 0.0
  %2030 = vmatprep.subr.mxu0 0.0
  %2031 = vmatpush1.msra.mxu0 0.0
  %2032 = vmatprep.subr.mxu0 0.0
  %2033 = vmatpush1.msra.mxu0 0.0
  %2034 = vmatprep.subr.mxu0 0.0
  %2035 = vmatpush1.msra.mxu0 0.0
  %2036 = vmatprep.mubr.f32.mxu0 0.0
  %2037 = vmatmul.mubr.f32.gmra.mrb[0].mxu0 %v1402
  %v2038 = vpop.f32.mrb[0].mxu0
  %v2039 = vadd.f32 %v1030, %v2038
  %v2040 = vpop.f32.mrb[0].mxu0
  %v2041 = vadd.f32 %v1032, %v2040
  %2042 = vmatprep.mubr.f32.mxu0 0.0
  %2043 = vmatmul.mubr.f32.gmra.mrb[0].mxu0 %v1405
  %v2044 = vpop.f32.mrb[0].mxu0
  %v2045 = vadd.f32 %v1036, %v2044
  %v2046 = vpop.f32.mrb[0].mxu0
  %v2047 = vadd.f32 %v1038, %v2046
  %2048 = vmatprep.mubr.f32.mxu0 0.0
  %2049 = vmatmul.mubr.f32.gmra.mrb[0].mxu0 %v1408
  %v2050 = vpop.f32.mrb[0].mxu0
  %v2051 = vadd.f32 %v1042, %v2050
  %v2052 = vpop.f32.mrb[0].mxu0
  %v2053 = vadd.f32 %v1044, %v2052
  %2054 = vmatprep.mubr.f32.mxu0 0.0
  %2055 = vmatmul.mubr.f32.gmra.mrb[0].mxu0 %v1411
  %v2056 = vpop.f32.mrb[0].mxu0
  %v2057 = vadd.f32 %v1048, %v2056
  %v2058 = vpop.f32.mrb[0].mxu0
  %v2059 = vadd.f32 %v1050, %v2058
  %2060 = vmatprep.mubr.f32.mxu0 0.0
  %2061 = vmatmul.mubr.f32.gmra.mrb[0].mxu0 %v1414
  %v2062 = vpop.f32.mrb[0].mxu0
  %v2063 = vadd.f32 %v1054, %v2062
  %v2064 = vpop.f32.mrb[0].mxu0
  %v2065 = vadd.f32 %v1056, %v2064
  %2066 = vmatprep.mubr.f32.mxu0 0.0
  %2067 = vmatmul.mubr.f32.gmra.mrb[0].mxu0 %v1417
  %v2068 = vpop.f32.mrb[0].mxu0
  %v2069 = vadd.f32 %v1060, %v2068
  %v2070 = vpop.f32.mrb[0].mxu0
  %v2071 = vadd.f32 %v1062, %v2070
  %2072 = vmatprep.mubr.f32.mxu0 0.0
  %2073 = vmatmul.mubr.f32.gmra.mrb[0].mxu0 %v1420
  %v2074 = vpop.f32.mrb[0].mxu0
  %v2075 = vadd.f32 %v1066, %v2074
  %v2076 = vpop.f32.mrb[0].mxu0
  %v2077 = vadd.f32 %v1068, %v2076
  %2078 = vmatprep.mubr.f32.mxu0 0.0
  %2079 = vmatmul.mubr.f32.gmra.mrb[0].mxu0 %v1423
  %v2080 = vpop.f32.mrb[0].mxu0
  %v2081 = vadd.f32 %v1072, %v2080
  %v2082 = vpop.f32.mrb[0].mxu0
  %v2083 = vadd.f32 %v1074, %v2082
  %2084 = vmatprep.mubr.f32.mxu0 0.0
  %2085 = vmatmul.mubr.f32.gmra.mrb[0].mxu0 %v1426
  %v2086 = vpop.f32.mrb[0].mxu0
  %v2087 = vadd.f32 %v1078, %v2086
  %v2088 = vpop.f32.mrb[0].mxu0
  %v2089 = vadd.f32 %v1080, %v2088
  %2090 = vmatprep.mubr.f32.mxu0 0.0
  %2091 = vmatmul.mubr.f32.gmra.mrb[0].mxu0 %v1429
  %v2092 = vpop.f32.mrb[0].mxu0
  %v2093 = vadd.f32 %v1084, %v2092
  %v2094 = vpop.f32.mrb[0].mxu0
  %v2095 = vadd.f32 %v1086, %v2094
  %2096 = vmatprep.mubr.f32.mxu0 0.0
  %2097 = vmatmul.mubr.f32.gmra.mrb[0].mxu0 %v1432
  %v2098 = vpop.f32.mrb[0].mxu0
  %v2099 = vadd.f32 %v1090, %v2098
  %v2100 = vpop.f32.mrb[0].mxu0
  %v2101 = vadd.f32 %v1092, %v2100
  %2102 = vmatprep.mubr.f32.mxu0 0.0
  %2103 = vmatmul.mubr.f32.gmra.mrb[0].mxu0 %v1435
  %v2104 = vpop.f32.mrb[0].mxu0
  %v2105 = vadd.f32 %v1096, %v2104
  %v2106 = vpop.f32.mrb[0].mxu0
  %v2107 = vadd.f32 %v1098, %v2106
  %2108 = vmatprep.mubr.f32.mxu0 0.0
  %2109 = vmatmul.mubr.f32.gmra.mrb[0].mxu0 %v1438
  %v2110 = vpop.f32.mrb[0].mxu0
  %v2111 = vadd.f32 %v1102, %v2110
  %v2112 = vpop.f32.mrb[0].mxu0
  %v2113 = vadd.f32 %v1104, %v2112
  %2114 = vmatprep.mubr.f32.mxu0 0.0
  %2115 = vmatmul.mubr.f32.gmra.mrb[0].mxu0 %v1441
  %v2116 = vpop.f32.mrb[0].mxu0
  %v2117 = vadd.f32 %v1108, %v2116
  %v2118 = vpop.f32.mrb[0].mxu0
  %v2119 = vadd.f32 %v1110, %v2118
  %2120 = vmatprep.mubr.f32.mxu0 0.0
  %2121 = vmatmul.mubr.f32.gmra.mrb[0].mxu0 %v1444
  %v2122 = vpop.f32.mrb[0].mxu0
  %v2123 = vadd.f32 %v1114, %v2122
  %v2124 = vpop.f32.mrb[0].mxu0
  %v2125 = vadd.f32 %v1116, %v2124
  %2126 = vmatprep.mubr.f32.mxu0 0.0
  %2127 = vmatmul.mubr.f32.gmra.mrb[0].mxu0 %v1447
  %v2128 = vpop.f32.mrb[0].mxu0
  %v2129 = vadd.f32 %v1120, %v2128
  %v2130 = vpop.f32.mrb[0].mxu0
  %v2131 = vadd.f32 %v1122, %v2130
  %2132 = vmatprep.mubr.f32.mxu0 0.0
  %2133 = vmatmul.mubr.f32.gmra.mrb[0].mxu0 %v1450
  %v2134 = vpop.f32.mrb[0].mxu0
  %v2135 = vadd.f32 %v1126, %v2134
  %v2136 = vpop.f32.mrb[0].mxu0
  %v2137 = vadd.f32 %v1128, %v2136
  %2138 = vmatprep.mubr.f32.mxu0 0.0
  %2139 = vmatmul.mubr.f32.gmra.mrb[0].mxu0 %v1453
  %v2140 = vpop.f32.mrb[0].mxu0
  %v2141 = vadd.f32 %v1132, %v2140
  %v2142 = vpop.f32.mrb[0].mxu0
  %v2143 = vadd.f32 %v1134, %v2142
  %2144 = vmatprep.mubr.f32.mxu0 0.0
  %2145 = vmatmul.mubr.f32.gmra.mrb[0].mxu0 %v1456
  %v2146 = vpop.f32.mrb[0].mxu0
  %v2147 = vadd.f32 %v1138, %v2146
  %v2148 = vpop.f32.mrb[0].mxu0
  %v2149 = vadd.f32 %v1140, %v2148
  %2150 = vmatprep.mubr.f32.mxu0 0.0
  %2151 = vmatmul.mubr.f32.gmra.mrb[0].mxu0 %v1459
  %v2152 = vpop.f32.mrb[0].mxu0
  %v2153 = vadd.f32 %v1144, %v2152
  %v2154 = vpop.f32.mrb[0].mxu0
  %v2155 = vadd.f32 %v1146, %v2154
  %2156 = vmatprep.mubr.f32.mxu0 0.0
  %2157 = vmatmul.mubr.f32.gmra.mrb[0].mxu0 %v1462
  %v2158 = vpop.f32.mrb[0].mxu0
  %v2159 = vadd.f32 %v1150, %v2158
  %v2160 = vpop.f32.mrb[0].mxu0
  %v2161 = vadd.f32 %v1152, %v2160
  %2162 = vmatprep.mubr.f32.mxu0 0.0
  %2163 = vmatmul.mubr.f32.gmra.mrb[0].mxu0 %v1465
  %v2164 = vpop.f32.mrb[0].mxu0
  %v2165 = vadd.f32 %v1156, %v2164
  %v2166 = vpop.f32.mrb[0].mxu0
  %v2167 = vadd.f32 %v1158, %v2166
  %2168 = vmatprep.mubr.f32.mxu0 0.0
  %2169 = vmatmul.mubr.f32.gmra.mrb[0].mxu0 %v1468
  %v2170 = vpop.f32.mrb[0].mxu0
  %v2171 = vadd.f32 %v1162, %v2170
  %v2172 = vpop.f32.mrb[0].mxu0
  %v2173 = vadd.f32 %v1164, %v2172
  %2174 = vmatprep.mubr.f32.mxu0 0.0
  %2175 = vmatmul.mubr.f32.gmra.mrb[0].mxu0 %v1471
  %v2176 = vpop.f32.mrb[0].mxu0
  %v2177 = vadd.f32 %v1168, %v2176
  %v2178 = vpop.f32.mrb[0].mxu0
  %v2179 = vadd.f32 %v1170, %v2178
  %2180 = vmatprep.mubr.f32.mxu0 0.0
  %2181 = vmatmul.mubr.f32.gmra.mrb[0].mxu0 %v1474
  %v2182 = vpop.f32.mrb[0].mxu0
  %v2183 = vadd.f32 %v1174, %v2182
  %v2184 = vpop.f32.mrb[0].mxu0
  %v2185 = vadd.f32 %v1176, %v2184
  %2186 = vmatprep.mubr.f32.mxu0 0.0
  %2187 = vmatmul.mubr.f32.gmra.mrb[0].mxu0 %v1477
  %v2188 = vpop.f32.mrb[0].mxu0
  %v2189 = vadd.f32 %v1180, %v2188
  %v2190 = vpop.f32.mrb[0].mxu0
  %v2191 = vadd.f32 %v1182, %v2190
  %2192 = vmatprep.mubr.f32.mxu0 0.0
  %2193 = vmatmul.mubr.f32.gmra.mrb[0].mxu0 %v1480
  %v2194 = vpop.f32.mrb[0].mxu0
  %v2195 = vadd.f32 %v1186, %v2194
  %v2196 = vpop.f32.mrb[0].mxu0
  %v2197 = vadd.f32 %v1188, %v2196
  %2198 = vmatprep.mubr.f32.mxu0 0.0
  %2199 = vmatmul.mubr.f32.gmra.mrb[0].mxu0 %v1483
  %v2200 = vpop.f32.mrb[0].mxu0
  %v2201 = vadd.f32 %v1192, %v2200
  %v2202 = vpop.f32.mrb[0].mxu0
  %v2203 = vadd.f32 %v1194, %v2202
  %2204 = vdwg.mxu0
  %2205 = vmatprep.subr.mxu0 0.0
  %2206 = vmatpush1.msra.mxu0 %v198
  %2207 = vmatprep.subr.mxu0 0.0
  %2208 = vmatpush1.msra.mxu0 %v205
  %2209 = vmatprep.subr.mxu0 0.0
  %2210 = vmatpush1.msra.mxu0 %v212
  %2211 = vmatprep.subr.mxu0 0.0
  %2212 = vmatpush1.msra.mxu0 %v1504
  %2213 = vmatprep.subr.mxu0 0.0
  %2214 = vmatpush1.msra.mxu0 0.0
  %2215 = vmatprep.subr.mxu0 0.0
  %2216 = vmatpush1.msra.mxu0 0.0
  %2217 = vmatprep.subr.mxu0 0.0
  %2218 = vmatpush1.msra.mxu0 0.0
  %2219 = vmatprep.subr.mxu0 0.0
  %2220 = vmatpush1.msra.mxu0 0.0
  %2221 = vmatprep.subr.mxu0 0.0
  %2222 = vmatpush1.msra.mxu0 0.0
  %2223 = vmatprep.subr.mxu0 0.0
  %2224 = vmatpush1.msra.mxu0 0.0
  %2225 = vmatprep.subr.mxu0 0.0
  %2226 = vmatpush1.msra.mxu0 0.0
  %2227 = vmatprep.subr.mxu0 0.0
  %2228 = vmatpush1.msra.mxu0 0.0
  %2229 = vmatprep.subr.mxu0 0.0
  %2230 = vmatpush1.msra.mxu0 0.0
  %2231 = vmatprep.subr.mxu0 0.0
  %2232 = vmatpush1.msra.mxu0 0.0
  %2233 = vmatprep.subr.mxu0 0.0
  %2234 = vmatpush1.msra.mxu0 0.0
  %2235 = vmatprep.subr.mxu0 0.0
  %2236 = vmatpush1.msra.mxu0 0.0
  %2237 = vmatprep.subr.mxu0 0.0
  %2238 = vmatpush1.msra.mxu0 0.0
  %2239 = vmatprep.subr.mxu0 0.0
  %2240 = vmatpush1.msra.mxu0 0.0
  %2241 = vmatprep.subr.mxu0 0.0
  %2242 = vmatpush1.msra.mxu0 0.0
  %2243 = vmatprep.subr.mxu0 0.0
  %2244 = vmatpush1.msra.mxu0 0.0
  %2245 = vmatprep.subr.mxu0 0.0
  %2246 = vmatpush1.msra.mxu0 0.0
  %2247 = vmatprep.subr.mxu0 0.0
  %2248 = vmatpush1.msra.mxu0 0.0
  %2249 = vmatprep.subr.mxu0 0.0
  %2250 = vmatpush1.msra.mxu0 0.0
  %2251 = vmatprep.subr.mxu0 0.0
  %2252 = vmatpush1.msra.mxu0 0.0
  %2253 = vmatprep.subr.mxu0 0.0
  %2254 = vmatpush1.msra.mxu0 0.0
  %2255 = vmatprep.subr.mxu0 0.0
  %2256 = vmatpush1.msra.mxu0 0.0
  %2257 = vmatprep.subr.mxu0 0.0
  %2258 = vmatpush1.msra.mxu0 0.0
  %2259 = vmatprep.subr.mxu0 0.0
  %2260 = vmatpush1.msra.mxu0 0.0
  %2261 = vmatprep.subr.mxu0 0.0
  %2262 = vmatpush1.msra.mxu0 0.0
  %2263 = vmatprep.subr.mxu0 0.0
  %2264 = vmatpush1.msra.mxu0 0.0
  %2265 = vmatprep.subr.mxu0 0.0
  %2266 = vmatpush1.msra.mxu0 0.0
  %2267 = vmatprep.subr.mxu0 0.0
  %2268 = vmatpush1.msra.mxu0 0.0
  %2269 = vmatprep.mubr.f32.mxu0 0.0
  %2270 = vmatmul.mubr.f32.gmra.mrb[0].mxu0 %v1402
  %v2271 = vpop.f32.mrb[0].mxu0
  %v2272 = vadd.f32 %v1263, %v2271
  %v2273 = vpop.f32.mrb[0].mxu0
  %2274 = vmatprep.mubr.f32.mxu0 0.0
  %2275 = vmatmul.mubr.f32.gmra.mrb[0].mxu0 %v1405
  %v2276 = vpop.f32.mrb[0].mxu0
  %v2277 = vadd.f32 %v1268, %v2276
  %v2278 = vpop.f32.mrb[0].mxu0
  %2279 = vmatprep.mubr.f32.mxu0 0.0
  %2280 = vmatmul.mubr.f32.gmra.mrb[0].mxu0 %v1408
  %v2281 = vpop.f32.mrb[0].mxu0
  %v2282 = vadd.f32 %v1273, %v2281
  %v2283 = vpop.f32.mrb[0].mxu0
  %2284 = vmatprep.mubr.f32.mxu0 0.0
  %2285 = vmatmul.mubr.f32.gmra.mrb[0].mxu0 %v1411
  %v2286 = vpop.f32.mrb[0].mxu0
  %v2287 = vadd.f32 %v1278, %v2286
  %v2288 = vpop.f32.mrb[0].mxu0
  %2289 = vmatprep.mubr.f32.mxu0 0.0
  %2290 = vmatmul.mubr.f32.gmra.mrb[0].mxu0 %v1414
  %v2291 = vpop.f32.mrb[0].mxu0
  %v2292 = vadd.f32 %v1283, %v2291
  %v2293 = vpop.f32.mrb[0].mxu0
  %2294 = vmatprep.mubr.f32.mxu0 0.0
  %2295 = vmatmul.mubr.f32.gmra.mrb[0].mxu0 %v1417
  %v2296 = vpop.f32.mrb[0].mxu0
  %v2297 = vadd.f32 %v1288, %v2296
  %v2298 = vpop.f32.mrb[0].mxu0
  %2299 = vmatprep.mubr.f32.mxu0 0.0
  %2300 = vmatmul.mubr.f32.gmra.mrb[0].mxu0 %v1420
  %v2301 = vpop.f32.mrb[0].mxu0
  %v2302 = vadd.f32 %v1293, %v2301
  %v2303 = vpop.f32.mrb[0].mxu0
  %2304 = vmatprep.mubr.f32.mxu0 0.0
  %2305 = vmatmul.mubr.f32.gmra.mrb[0].mxu0 %v1423
  %v2306 = vpop.f32.mrb[0].mxu0
  %v2307 = vadd.f32 %v1298, %v2306
  %v2308 = vpop.f32.mrb[0].mxu0
  %2309 = vmatprep.mubr.f32.mxu0 0.0
  %2310 = vmatmul.mubr.f32.gmra.mrb[0].mxu0 %v1426
  %v2311 = vpop.f32.mrb[0].mxu0
  %v2312 = vadd.f32 %v1303, %v2311
  %v2313 = vpop.f32.mrb[0].mxu0
  %2314 = vmatprep.mubr.f32.mxu0 0.0
  %2315 = vmatmul.mubr.f32.gmra.mrb[0].mxu0 %v1429
  %v2316 = vpop.f32.mrb[0].mxu0
  %v2317 = vadd.f32 %v1308, %v2316
  %v2318 = vpop.f32.mrb[0].mxu0
  %2319 = vmatprep.mubr.f32.mxu0 0.0
  %2320 = vmatmul.mubr.f32.gmra.mrb[0].mxu0 %v1432
  %v2321 = vpop.f32.mrb[0].mxu0
  %v2322 = vadd.f32 %v1313, %v2321
  %v2323 = vpop.f32.mrb[0].mxu0
  %2324 = vmatprep.mubr.f32.mxu0 0.0
  %2325 = vmatmul.mubr.f32.gmra.mrb[0].mxu0 %v1435
  %v2326 = vpop.f32.mrb[0].mxu0
  %v2327 = vadd.f32 %v1318, %v2326
  %v2328 = vpop.f32.mrb[0].mxu0
  %2329 = vmatprep.mubr.f32.mxu0 0.0
  %2330 = vmatmul.mubr.f32.gmra.mrb[0].mxu0 %v1438
  %v2331 = vpop.f32.mrb[0].mxu0
  %v2332 = vadd.f32 %v1323, %v2331
  %v2333 = vpop.f32.mrb[0].mxu0
  %2334 = vmatprep.mubr.f32.mxu0 0.0
  %2335 = vmatmul.mubr.f32.gmra.mrb[0].mxu0 %v1441
  %v2336 = vpop.f32.mrb[0].mxu0
  %v2337 = vadd.f32 %v1328, %v2336
  %v2338 = vpop.f32.mrb[0].mxu0
  %2339 = vmatprep.mubr.f32.mxu0 0.0
  %2340 = vmatmul.mubr.f32.gmra.mrb[0].mxu0 %v1444
  %v2341 = vpop.f32.mrb[0].mxu0
  %v2342 = vadd.f32 %v1333, %v2341
  %v2343 = vpop.f32.mrb[0].mxu0
  %2344 = vmatprep.mubr.f32.mxu0 0.0
  %2345 = vmatmul.mubr.f32.gmra.mrb[0].mxu0 %v1447
  %v2346 = vpop.f32.mrb[0].mxu0
  %v2347 = vadd.f32 %v1338, %v2346
  %v2348 = vpop.f32.mrb[0].mxu0
  %2349 = vmatprep.mubr.f32.mxu0 0.0
  %2350 = vmatmul.mubr.f32.gmra.mrb[0].mxu0 %v1450
  %v2351 = vpop.f32.mrb[0].mxu0
  %v2352 = vadd.f32 %v1343, %v2351
  %v2353 = vpop.f32.mrb[0].mxu0
  %2354 = vmatprep.mubr.f32.mxu0 0.0
  %2355 = vmatmul.mubr.f32.gmra.mrb[0].mxu0 %v1453
  %v2356 = vpop.f32.mrb[0].mxu0
  %v2357 = vadd.f32 %v1348, %v2356
  %v2358 = vpop.f32.mrb[0].mxu0
  %2359 = vmatprep.mubr.f32.mxu0 0.0
  %2360 = vmatmul.mubr.f32.gmra.mrb[0].mxu0 %v1456
  %v2361 = vpop.f32.mrb[0].mxu0
  %v2362 = vadd.f32 %v1353, %v2361
  %v2363 = vpop.f32.mrb[0].mxu0
  %2364 = vmatprep.mubr.f32.mxu0 0.0
  %2365 = vmatmul.mubr.f32.gmra.mrb[0].mxu0 %v1459
  %v2366 = vpop.f32.mrb[0].mxu0
  %v2367 = vadd.f32 %v1358, %v2366
  %v2368 = vpop.f32.mrb[0].mxu0
  %2369 = vmatprep.mubr.f32.mxu0 0.0
  %2370 = vmatmul.mubr.f32.gmra.mrb[0].mxu0 %v1462
  %v2371 = vpop.f32.mrb[0].mxu0
  %v2372 = vadd.f32 %v1363, %v2371
  %v2373 = vpop.f32.mrb[0].mxu0
  %2374 = vmatprep.mubr.f32.mxu0 0.0
  %2375 = vmatmul.mubr.f32.gmra.mrb[0].mxu0 %v1465
  %v2376 = vpop.f32.mrb[0].mxu0
  %v2377 = vadd.f32 %v1368, %v2376
  %v2378 = vpop.f32.mrb[0].mxu0
  %2379 = vmatprep.mubr.f32.mxu0 0.0
  %2380 = vmatmul.mubr.f32.gmra.mrb[0].mxu0 %v1468
  %v2381 = vpop.f32.mrb[0].mxu0
  %v2382 = vadd.f32 %v1373, %v2381
  %v2383 = vpop.f32.mrb[0].mxu0
  %2384 = vmatprep.mubr.f32.mxu0 0.0
  %2385 = vmatmul.mubr.f32.gmra.mrb[0].mxu0 %v1471
  %v2386 = vpop.f32.mrb[0].mxu0
  %v2387 = vadd.f32 %v1378, %v2386
  %v2388 = vpop.f32.mrb[0].mxu0
  %2389 = vmatprep.mubr.f32.mxu0 0.0
  %2390 = vmatmul.mubr.f32.gmra.mrb[0].mxu0 %v1474
  %v2391 = vpop.f32.mrb[0].mxu0
  %v2392 = vadd.f32 %v1383, %v2391
  %v2393 = vpop.f32.mrb[0].mxu0
  %2394 = vmatprep.mubr.f32.mxu0 0.0
  %2395 = vmatmul.mubr.f32.gmra.mrb[0].mxu0 %v1477
  %v2396 = vpop.f32.mrb[0].mxu0
  %v2397 = vadd.f32 %v1388, %v2396
  %v2398 = vpop.f32.mrb[0].mxu0
  %2399 = vmatprep.mubr.f32.mxu0 0.0
  %2400 = vmatmul.mubr.f32.gmra.mrb[0].mxu0 %v1480
  %v2401 = vpop.f32.mrb[0].mxu0
  %v2402 = vadd.f32 %v1393, %v2401
  %v2403 = vpop.f32.mrb[0].mxu0
  %2404 = vmatprep.mubr.f32.mxu0 0.0
  %2405 = vmatmul.mubr.f32.gmra.mrb[0].mxu0 %v1483
  %v2406 = vpop.f32.mrb[0].mxu0
  %v2407 = vadd.f32 %v1398, %v2406
  %v2408 = vpop.f32.mrb[0].mxu0
  %2409 = vdwg.mxu0
  %s2410 = scalar_lea.vmem %s1, 448
  %v2411 = vld [vmem:[%s2410] sm:$0xff]
  %v2412 = vld [vmem:[%s2410 + $0x8] sm:$0xff]
  %v2413 = vld [vmem:[%s2410 + $0x10] sm:$0xff]
  %v2414 = vld [vmem:[%s2410 + $0x18] sm:$0xff]
  %v2415 = vld [vmem:[%s2410 + $0x20] sm:$0xff]
  %v2416 = vld [vmem:[%s2410 + $0x28] sm:$0xff]
  %v2417 = vld [vmem:[%s2410 + $0x30] sm:$0xff]
  %v2418 = vld [vmem:[%s2410 + $0x38] sm:$0xff]
  %v2419 = vld [vmem:[%s2410 + $0x40] sm:$0xff]
  %v2420 = vld [vmem:[%s2410 + $0x48] sm:$0xff]
  %v2421 = vld [vmem:[%s2410 + $0x50] sm:$0xff]
  %v2422 = vld [vmem:[%s2410 + $0x58] sm:$0xff]
  %v2423 = vld [vmem:[%s2410 + $0x60] sm:$0xff]
  %v2424 = vld [vmem:[%s2410 + $0x68] sm:$0xff]
  %v2425 = vld [vmem:[%s2410 + $0x70] sm:$0xff]
  %v2426 = vld [vmem:[%s2410 + $0x78] sm:$0xff]
  %v2427 = vld [vmem:[%s2410 + $0x80] sm:$0xff]
  %v2428 = vld [vmem:[%s2410 + $0x88] sm:$0xff]
  %v2429 = vld [vmem:[%s2410 + $0x90] sm:$0xff]
  %v2430 = vld [vmem:[%s2410 + $0x98] sm:$0xff]
  %v2431 = vld [vmem:[%s2410 + $0xa0] sm:$0xff]
  %v2432 = vld [vmem:[%s2410 + $0xa8] sm:$0xff]
  %v2433 = vld [vmem:[%s2410 + $0xb0] sm:$0xff]
  %v2434 = vld [vmem:[%s2410 + $0xb8] sm:$0xff]
  %v2435 = vld [vmem:[%s2410 + $0xc0] sm:$0xff]
  %v2436 = vld [vmem:[%s2410 + $0xc8] sm:$0xff]
  %v2437 = vld [vmem:[%s2410 + $0xd0] sm:$0xff]
  %v2438 = vld [vmem:[%s2410 + $0xd8] sm:$0xff]
  %v2440 = vsel %vm390, %v2411, 0
  %v2443 = vsel %vm390, %v2412, 0
  %v2446 = vsel %vm390, %v2413, 0
  %v2449 = vsel %vm390, %v2414, 0
  %v2452 = vsel %vm390, %v2415, 0
  %v2455 = vsel %vm390, %v2416, 0
  %v2458 = vsel %vm390, %v2417, 0
  %v2461 = vsel %vm390, %v2418, 0
  %v2464 = vsel %vm390, %v2419, 0
  %v2467 = vsel %vm390, %v2420, 0
  %v2470 = vsel %vm390, %v2421, 0
  %v2473 = vsel %vm390, %v2422, 0
  %v2476 = vsel %vm390, %v2423, 0
  %v2479 = vsel %vm390, %v2424, 0
  %v2482 = vsel %vm390, %v2425, 0
  %v2485 = vsel %vm390, %v2426, 0
  %v2488 = vsel %vm390, %v2427, 0
  %v2491 = vsel %vm390, %v2428, 0
  %v2494 = vsel %vm390, %v2429, 0
  %v2497 = vsel %vm390, %v2430, 0
  %v2500 = vsel %vm390, %v2431, 0
  %v2503 = vsel %vm390, %v2432, 0
  %v2506 = vsel %vm390, %v2433, 0
  %v2509 = vsel %vm390, %v2434, 0
  %v2512 = vsel %vm390, %v2435, 0
  %v2515 = vsel %vm390, %v2436, 0
  %v2518 = vsel %vm390, %v2437, 0
  %v2521 = vsel %vm390, %v2438, 0
  %v2524 = vsel %vm475, %v326, 0
  %v2527 = vsel %vm475, %v327, 0
  %v2530 = vsel %vm475, %v328, 0
  %v2533 = vsel %vm475, %v329, 0
  %v2536 = vsel %vm475, %v330, 0
  %v2539 = vsel %vm475, %v331, 0
  %v2542 = vsel %vm475, %v332, 0
  %2544 = vmatprep.subr.mxu0 %v306
  %2545 = vmatpush1.msra.mxu0 %v305
  %2546 = vmatprep.subr.mxu0 %v313
  %2547 = vmatpush1.msra.mxu0 %v312
  %2548 = vmatprep.subr.mxu0 %v320
  %2549 = vmatpush1.msra.mxu0 %v319
  %2550 = vmatprep.subr.mxu0 %v2527
  %2551 = vmatpush1.msra.mxu0 %v2524
  %2552 = vmatprep.subr.mxu0 0.0
  %2553 = vmatpush1.msra.mxu0 0.0
  %2554 = vmatprep.subr.mxu0 0.0
  %2555 = vmatpush1.msra.mxu0 0.0
  %2556 = vmatprep.subr.mxu0 0.0
  %2557 = vmatpush1.msra.mxu0 0.0
  %2558 = vmatprep.subr.mxu0 0.0
  %2559 = vmatpush1.msra.mxu0 0.0
  %2560 = vmatprep.subr.mxu0 0.0
  %2561 = vmatpush1.msra.mxu0 0.0
  %2562 = vmatprep.subr.mxu0 0.0
  %2563 = vmatpush1.msra.mxu0 0.0
  %2564 = vmatprep.subr.mxu0 0.0
  %2565 = vmatpush1.msra.mxu0 0.0
  %2566 = vmatprep.subr.mxu0 0.0
  %2567 = vmatpush1.msra.mxu0 0.0
  %2568 = vmatprep.subr.mxu0 0.0
  %2569 = vmatpush1.msra.mxu0 0.0
  %2570 = vmatprep.subr.mxu0 0.0
  %2571 = vmatpush1.msra.mxu0 0.0
  %2572 = vmatprep.subr.mxu0 0.0
  %2573 = vmatpush1.msra.mxu0 0.0
  %2574 = vmatprep.subr.mxu0 0.0
  %2575 = vmatpush1.msra.mxu0 0.0
  %2576 = vmatprep.subr.mxu0 0.0
  %2577 = vmatpush1.msra.mxu0 0.0
  %2578 = vmatprep.subr.mxu0 0.0
  %2579 = vmatpush1.msra.mxu0 0.0
  %2580 = vmatprep.subr.mxu0 0.0
  %2581 = vmatpush1.msra.mxu0 0.0
  %2582 = vmatprep.subr.mxu0 0.0
  %2583 = vmatpush1.msra.mxu0 0.0
  %2584 = vmatprep.subr.mxu0 0.0
  %2585 = vmatpush1.msra.mxu0 0.0
  %2586 = vmatprep.subr.mxu0 0.0
  %2587 = vmatpush1.msra.mxu0 0.0
  %2588 = vmatprep.subr.mxu0 0.0
  %2589 = vmatpush1.msra.mxu0 0.0
  %2590 = vmatprep.subr.mxu0 0.0
  %2591 = vmatpush1.msra.mxu0 0.0
  %2592 = vmatprep.subr.mxu0 0.0
  %2593 = vmatpush1.msra.mxu0 0.0
  %2594 = vmatprep.subr.mxu0 0.0
  %2595 = vmatpush1.msra.mxu0 0.0
  %2596 = vmatprep.subr.mxu0 0.0
  %2597 = vmatpush1.msra.mxu0 0.0
  %2598 = vmatprep.subr.mxu0 0.0
  %2599 = vmatpush1.msra.mxu0 0.0
  %2600 = vmatprep.subr.mxu0 0.0
  %2601 = vmatpush1.msra.mxu0 0.0
  %2602 = vmatprep.subr.mxu0 0.0
  %2603 = vmatpush1.msra.mxu0 0.0
  %2604 = vmatprep.subr.mxu0 0.0
  %2605 = vmatpush1.msra.mxu0 0.0
  %2606 = vmatprep.subr.mxu0 0.0
  %2607 = vmatpush1.msra.mxu0 0.0
  %2608 = vmatprep.mubr.f32.mxu0 0.0
  %2609 = vmatmul.mubr.f32.gmra.mrb[0].mxu0 %v2440
  %v2610 = vpop.f32.mrb[0].mxu0
  %v2611 = vadd.f32 0.0, %v2610
  %v2612 = vpop.f32.mrb[0].mxu0
  %v2613 = vadd.f32 0.0, %v2612
  %2614 = vmatprep.mubr.f32.mxu0 0.0
  %2615 = vmatmul.mubr.f32.gmra.mrb[0].mxu0 %v2443
  %v2616 = vpop.f32.mrb[0].mxu0
  %v2617 = vadd.f32 0.0, %v2616
  %v2618 = vpop.f32.mrb[0].mxu0
  %v2619 = vadd.f32 0.0, %v2618
  %2620 = vmatprep.mubr.f32.mxu0 0.0
  %2621 = vmatmul.mubr.f32.gmra.mrb[0].mxu0 %v2446
  %v2622 = vpop.f32.mrb[0].mxu0
  %v2623 = vadd.f32 0.0, %v2622
  %v2624 = vpop.f32.mrb[0].mxu0
  %v2625 = vadd.f32 0.0, %v2624
  %2626 = vmatprep.mubr.f32.mxu0 0.0
  %2627 = vmatmul.mubr.f32.gmra.mrb[0].mxu0 %v2449
  %v2628 = vpop.f32.mrb[0].mxu0
  %v2629 = vadd.f32 0.0, %v2628
  %v2630 = vpop.f32.mrb[0].mxu0
  %v2631 = vadd.f32 0.0, %v2630
  %2632 = vmatprep.mubr.f32.mxu0 0.0
  %2633 = vmatmul.mubr.f32.gmra.mrb[0].mxu0 %v2452
  %v2634 = vpop.f32.mrb[0].mxu0
  %v2635 = vadd.f32 0.0, %v2634
  %v2636 = vpop.f32.mrb[0].mxu0
  %v2637 = vadd.f32 0.0, %v2636
  %2638 = vmatprep.mubr.f32.mxu0 0.0
  %2639 = vmatmul.mubr.f32.gmra.mrb[0].mxu0 %v2455
  %v2640 = vpop.f32.mrb[0].mxu0
  %v2641 = vadd.f32 0.0, %v2640
  %v2642 = vpop.f32.mrb[0].mxu0
  %v2643 = vadd.f32 0.0, %v2642
  %2644 = vmatprep.mubr.f32.mxu0 0.0
  %2645 = vmatmul.mubr.f32.gmra.mrb[0].mxu0 %v2458
  %v2646 = vpop.f32.mrb[0].mxu0
  %v2647 = vadd.f32 0.0, %v2646
  %v2648 = vpop.f32.mrb[0].mxu0
  %v2649 = vadd.f32 0.0, %v2648
  %2650 = vmatprep.mubr.f32.mxu0 0.0
  %2651 = vmatmul.mubr.f32.gmra.mrb[0].mxu0 %v2461
  %v2652 = vpop.f32.mrb[0].mxu0
  %v2653 = vadd.f32 0.0, %v2652
  %v2654 = vpop.f32.mrb[0].mxu0
  %v2655 = vadd.f32 0.0, %v2654
  %2656 = vmatprep.mubr.f32.mxu0 0.0
  %2657 = vmatmul.mubr.f32.gmra.mrb[0].mxu0 %v2464
  %v2658 = vpop.f32.mrb[0].mxu0
  %v2659 = vadd.f32 0.0, %v2658
  %v2660 = vpop.f32.mrb[0].mxu0
  %v2661 = vadd.f32 0.0, %v2660
  %2662 = vmatprep.mubr.f32.mxu0 0.0
  %2663 = vmatmul.mubr.f32.gmra.mrb[0].mxu0 %v2467
  %v2664 = vpop.f32.mrb[0].mxu0
  %v2665 = vadd.f32 0.0, %v2664
  %v2666 = vpop.f32.mrb[0].mxu0
  %v2667 = vadd.f32 0.0, %v2666
  %2668 = vmatprep.mubr.f32.mxu0 0.0
  %2669 = vmatmul.mubr.f32.gmra.mrb[0].mxu0 %v2470
  %v2670 = vpop.f32.mrb[0].mxu0
  %v2671 = vadd.f32 0.0, %v2670
  %v2672 = vpop.f32.mrb[0].mxu0
  %v2673 = vadd.f32 0.0, %v2672
  %2674 = vmatprep.mubr.f32.mxu0 0.0
  %2675 = vmatmul.mubr.f32.gmra.mrb[0].mxu0 %v2473
  %v2676 = vpop.f32.mrb[0].mxu0
  %v2677 = vadd.f32 0.0, %v2676
  %v2678 = vpop.f32.mrb[0].mxu0
  %v2679 = vadd.f32 0.0, %v2678
  %2680 = vmatprep.mubr.f32.mxu0 0.0
  %2681 = vmatmul.mubr.f32.gmra.mrb[0].mxu0 %v2476
  %v2682 = vpop.f32.mrb[0].mxu0
  %v2683 = vadd.f32 0.0, %v2682
  %v2684 = vpop.f32.mrb[0].mxu0
  %v2685 = vadd.f32 0.0, %v2684
  %2686 = vmatprep.mubr.f32.mxu0 0.0
  %2687 = vmatmul.mubr.f32.gmra.mrb[0].mxu0 %v2479
  %v2688 = vpop.f32.mrb[0].mxu0
  %v2689 = vadd.f32 0.0, %v2688
  %v2690 = vpop.f32.mrb[0].mxu0
  %v2691 = vadd.f32 0.0, %v2690
  %2692 = vmatprep.mubr.f32.mxu0 0.0
  %2693 = vmatmul.mubr.f32.gmra.mrb[0].mxu0 %v2482
  %v2694 = vpop.f32.mrb[0].mxu0
  %v2695 = vadd.f32 0.0, %v2694
  %v2696 = vpop.f32.mrb[0].mxu0
  %v2697 = vadd.f32 0.0, %v2696
  %2698 = vmatprep.mubr.f32.mxu0 0.0
  %2699 = vmatmul.mubr.f32.gmra.mrb[0].mxu0 %v2485
  %v2700 = vpop.f32.mrb[0].mxu0
  %v2701 = vadd.f32 0.0, %v2700
  %v2702 = vpop.f32.mrb[0].mxu0
  %v2703 = vadd.f32 0.0, %v2702
  %2704 = vmatprep.mubr.f32.mxu0 0.0
  %2705 = vmatmul.mubr.f32.gmra.mrb[0].mxu0 %v2488
  %v2706 = vpop.f32.mrb[0].mxu0
  %v2707 = vadd.f32 0.0, %v2706
  %v2708 = vpop.f32.mrb[0].mxu0
  %v2709 = vadd.f32 0.0, %v2708
  %2710 = vmatprep.mubr.f32.mxu0 0.0
  %2711 = vmatmul.mubr.f32.gmra.mrb[0].mxu0 %v2491
  %v2712 = vpop.f32.mrb[0].mxu0
  %v2713 = vadd.f32 0.0, %v2712
  %v2714 = vpop.f32.mrb[0].mxu0
  %v2715 = vadd.f32 0.0, %v2714
  %2716 = vmatprep.mubr.f32.mxu0 0.0
  %2717 = vmatmul.mubr.f32.gmra.mrb[0].mxu0 %v2494
  %v2718 = vpop.f32.mrb[0].mxu0
  %v2719 = vadd.f32 0.0, %v2718
  %v2720 = vpop.f32.mrb[0].mxu0
  %v2721 = vadd.f32 0.0, %v2720
  %2722 = vmatprep.mubr.f32.mxu0 0.0
  %2723 = vmatmul.mubr.f32.gmra.mrb[0].mxu0 %v2497
  %v2724 = vpop.f32.mrb[0].mxu0
  %v2725 = vadd.f32 0.0, %v2724
  %v2726 = vpop.f32.mrb[0].mxu0
  %v2727 = vadd.f32 0.0, %v2726
  %2728 = vmatprep.mubr.f32.mxu0 0.0
  %2729 = vmatmul.mubr.f32.gmra.mrb[0].mxu0 %v2500
  %v2730 = vpop.f32.mrb[0].mxu0
  %v2731 = vadd.f32 0.0, %v2730
  %v2732 = vpop.f32.mrb[0].mxu0
  %v2733 = vadd.f32 0.0, %v2732
  %2734 = vmatprep.mubr.f32.mxu0 0.0
  %2735 = vmatmul.mubr.f32.gmra.mrb[0].mxu0 %v2503
  %v2736 = vpop.f32.mrb[0].mxu0
  %v2737 = vadd.f32 0.0, %v2736
  %v2738 = vpop.f32.mrb[0].mxu0
  %v2739 = vadd.f32 0.0, %v2738
  %2740 = vmatprep.mubr.f32.mxu0 0.0
  %2741 = vmatmul.mubr.f32.gmra.mrb[0].mxu0 %v2506
  %v2742 = vpop.f32.mrb[0].mxu0
  %v2743 = vadd.f32 0.0, %v2742
  %v2744 = vpop.f32.mrb[0].mxu0
  %v2745 = vadd.f32 0.0, %v2744
  %2746 = vmatprep.mubr.f32.mxu0 0.0
  %2747 = vmatmul.mubr.f32.gmra.mrb[0].mxu0 %v2509
  %v2748 = vpop.f32.mrb[0].mxu0
  %v2749 = vadd.f32 0.0, %v2748
  %v2750 = vpop.f32.mrb[0].mxu0
  %v2751 = vadd.f32 0.0, %v2750
  %2752 = vmatprep.mubr.f32.mxu0 0.0
  %2753 = vmatmul.mubr.f32.gmra.mrb[0].mxu0 %v2512
  %v2754 = vpop.f32.mrb[0].mxu0
  %v2755 = vadd.f32 0.0, %v2754
  %v2756 = vpop.f32.mrb[0].mxu0
  %v2757 = vadd.f32 0.0, %v2756
  %2758 = vmatprep.mubr.f32.mxu0 0.0
  %2759 = vmatmul.mubr.f32.gmra.mrb[0].mxu0 %v2515
  %v2760 = vpop.f32.mrb[0].mxu0
  %v2761 = vadd.f32 0.0, %v2760
  %v2762 = vpop.f32.mrb[0].mxu0
  %v2763 = vadd.f32 0.0, %v2762
  %2764 = vmatprep.mubr.f32.mxu0 0.0
  %2765 = vmatmul.mubr.f32.gmra.mrb[0].mxu0 %v2518
  %v2766 = vpop.f32.mrb[0].mxu0
  %v2767 = vadd.f32 0.0, %v2766
  %v2768 = vpop.f32.mrb[0].mxu0
  %v2769 = vadd.f32 0.0, %v2768
  %2770 = vmatprep.mubr.f32.mxu0 0.0
  %2771 = vmatmul.mubr.f32.gmra.mrb[0].mxu0 %v2521
  %v2772 = vpop.f32.mrb[0].mxu0
  %v2773 = vadd.f32 0.0, %v2772
  %v2774 = vpop.f32.mrb[0].mxu0
  %v2775 = vadd.f32 0.0, %v2774
  %2776 = vdwg.mxu0
  %2777 = vmatprep.subr.mxu0 %v308
  %2778 = vmatpush1.msra.mxu0 %v307
  %2779 = vmatprep.subr.mxu0 %v315
  %2780 = vmatpush1.msra.mxu0 %v314
  %2781 = vmatprep.subr.mxu0 %v322
  %2782 = vmatpush1.msra.mxu0 %v321
  %2783 = vmatprep.subr.mxu0 %v2533
  %2784 = vmatpush1.msra.mxu0 %v2530
  %2785 = vmatprep.subr.mxu0 0.0
  %2786 = vmatpush1.msra.mxu0 0.0
  %2787 = vmatprep.subr.mxu0 0.0
  %2788 = vmatpush1.msra.mxu0 0.0
  %2789 = vmatprep.subr.mxu0 0.0
  %2790 = vmatpush1.msra.mxu0 0.0
  %2791 = vmatprep.subr.mxu0 0.0
  %2792 = vmatpush1.msra.mxu0 0.0
  %2793 = vmatprep.subr.mxu0 0.0
  %2794 = vmatpush1.msra.mxu0 0.0
  %2795 = vmatprep.subr.mxu0 0.0
  %2796 = vmatpush1.msra.mxu0 0.0
  %2797 = vmatprep.subr.mxu0 0.0
  %2798 = vmatpush1.msra.mxu0 0.0
  %2799 = vmatprep.subr.mxu0 0.0
  %2800 = vmatpush1.msra.mxu0 0.0
  %2801 = vmatprep.subr.mxu0 0.0
  %2802 = vmatpush1.msra.mxu0 0.0
  %2803 = vmatprep.subr.mxu0 0.0
  %2804 = vmatpush1.msra.mxu0 0.0
  %2805 = vmatprep.subr.mxu0 0.0
  %2806 = vmatpush1.msra.mxu0 0.0
  %2807 = vmatprep.subr.mxu0 0.0
  %2808 = vmatpush1.msra.mxu0 0.0
  %2809 = vmatprep.subr.mxu0 0.0
  %2810 = vmatpush1.msra.mxu0 0.0
  %2811 = vmatprep.subr.mxu0 0.0
  %2812 = vmatpush1.msra.mxu0 0.0
  %2813 = vmatprep.subr.mxu0 0.0
  %2814 = vmatpush1.msra.mxu0 0.0
  %2815 = vmatprep.subr.mxu0 0.0
  %2816 = vmatpush1.msra.mxu0 0.0
  %2817 = vmatprep.subr.mxu0 0.0
  %2818 = vmatpush1.msra.mxu0 0.0
  %2819 = vmatprep.subr.mxu0 0.0
  %2820 = vmatpush1.msra.mxu0 0.0
  %2821 = vmatprep.subr.mxu0 0.0
  %2822 = vmatpush1.msra.mxu0 0.0
  %2823 = vmatprep.subr.mxu0 0.0
  %2824 = vmatpush1.msra.mxu0 0.0
  %2825 = vmatprep.subr.mxu0 0.0
  %2826 = vmatpush1.msra.mxu0 0.0
  %2827 = vmatprep.subr.mxu0 0.0
  %2828 = vmatpush1.msra.mxu0 0.0
  %2829 = vmatprep.subr.mxu0 0.0
  %2830 = vmatpush1.msra.mxu0 0.0
  %2831 = vmatprep.subr.mxu0 0.0
  %2832 = vmatpush1.msra.mxu0 0.0
  %2833 = vmatprep.subr.mxu0 0.0
  %2834 = vmatpush1.msra.mxu0 0.0
  %2835 = vmatprep.subr.mxu0 0.0
  %2836 = vmatpush1.msra.mxu0 0.0
  %2837 = vmatprep.subr.mxu0 0.0
  %2838 = vmatpush1.msra.mxu0 0.0
  %2839 = vmatprep.subr.mxu0 0.0
  %2840 = vmatpush1.msra.mxu0 0.0
  %2841 = vmatprep.mubr.f32.mxu0 0.0
  %2842 = vmatmul.mubr.f32.gmra.mrb[0].mxu0 %v2440
  %v2843 = vpop.f32.mrb[0].mxu0
  %v2844 = vadd.f32 0.0, %v2843
  %v2845 = vpop.f32.mrb[0].mxu0
  %v2846 = vadd.f32 0.0, %v2845
  %2847 = vmatprep.mubr.f32.mxu0 0.0
  %2848 = vmatmul.mubr.f32.gmra.mrb[0].mxu0 %v2443
  %v2849 = vpop.f32.mrb[0].mxu0
  %v2850 = vadd.f32 0.0, %v2849
  %v2851 = vpop.f32.mrb[0].mxu0
  %v2852 = vadd.f32 0.0, %v2851
  %2853 = vmatprep.mubr.f32.mxu0 0.0
  %2854 = vmatmul.mubr.f32.gmra.mrb[0].mxu0 %v2446
  %v2855 = vpop.f32.mrb[0].mxu0
  %v2856 = vadd.f32 0.0, %v2855
  %v2857 = vpop.f32.mrb[0].mxu0
  %v2858 = vadd.f32 0.0, %v2857
  %2859 = vmatprep.mubr.f32.mxu0 0.0
  %2860 = vmatmul.mubr.f32.gmra.mrb[0].mxu0 %v2449
  %v2861 = vpop.f32.mrb[0].mxu0
  %v2862 = vadd.f32 0.0, %v2861
  %v2863 = vpop.f32.mrb[0].mxu0
  %v2864 = vadd.f32 0.0, %v2863
  %2865 = vmatprep.mubr.f32.mxu0 0.0
  %2866 = vmatmul.mubr.f32.gmra.mrb[0].mxu0 %v2452
  %v2867 = vpop.f32.mrb[0].mxu0
  %v2868 = vadd.f32 0.0, %v2867
  %v2869 = vpop.f32.mrb[0].mxu0
  %v2870 = vadd.f32 0.0, %v2869
  %2871 = vmatprep.mubr.f32.mxu0 0.0
  %2872 = vmatmul.mubr.f32.gmra.mrb[0].mxu0 %v2455
  %v2873 = vpop.f32.mrb[0].mxu0
  %v2874 = vadd.f32 0.0, %v2873
  %v2875 = vpop.f32.mrb[0].mxu0
  %v2876 = vadd.f32 0.0, %v2875
  %2877 = vmatprep.mubr.f32.mxu0 0.0
  %2878 = vmatmul.mubr.f32.gmra.mrb[0].mxu0 %v2458
  %v2879 = vpop.f32.mrb[0].mxu0
  %v2880 = vadd.f32 0.0, %v2879
  %v2881 = vpop.f32.mrb[0].mxu0
  %v2882 = vadd.f32 0.0, %v2881
  %2883 = vmatprep.mubr.f32.mxu0 0.0
  %2884 = vmatmul.mubr.f32.gmra.mrb[0].mxu0 %v2461
  %v2885 = vpop.f32.mrb[0].mxu0
  %v2886 = vadd.f32 0.0, %v2885
  %v2887 = vpop.f32.mrb[0].mxu0
  %v2888 = vadd.f32 0.0, %v2887
  %2889 = vmatprep.mubr.f32.mxu0 0.0
  %2890 = vmatmul.mubr.f32.gmra.mrb[0].mxu0 %v2464
  %v2891 = vpop.f32.mrb[0].mxu0
  %v2892 = vadd.f32 0.0, %v2891
  %v2893 = vpop.f32.mrb[0].mxu0
  %v2894 = vadd.f32 0.0, %v2893
  %2895 = vmatprep.mubr.f32.mxu0 0.0
  %2896 = vmatmul.mubr.f32.gmra.mrb[0].mxu0 %v2467
  %v2897 = vpop.f32.mrb[0].mxu0
  %v2898 = vadd.f32 0.0, %v2897
  %v2899 = vpop.f32.mrb[0].mxu0
  %v2900 = vadd.f32 0.0, %v2899
  %2901 = vmatprep.mubr.f32.mxu0 0.0
  %2902 = vmatmul.mubr.f32.gmra.mrb[0].mxu0 %v2470
  %v2903 = vpop.f32.mrb[0].mxu0
  %v2904 = vadd.f32 0.0, %v2903
  %v2905 = vpop.f32.mrb[0].mxu0
  %v2906 = vadd.f32 0.0, %v2905
  %2907 = vmatprep.mubr.f32.mxu0 0.0
  %2908 = vmatmul.mubr.f32.gmra.mrb[0].mxu0 %v2473
  %v2909 = vpop.f32.mrb[0].mxu0
  %v2910 = vadd.f32 0.0, %v2909
  %v2911 = vpop.f32.mrb[0].mxu0
  %v2912 = vadd.f32 0.0, %v2911
  %2913 = vmatprep.mubr.f32.mxu0 0.0
  %2914 = vmatmul.mubr.f32.gmra.mrb[0].mxu0 %v2476
  %v2915 = vpop.f32.mrb[0].mxu0
  %v2916 = vadd.f32 0.0, %v2915
  %v2917 = vpop.f32.mrb[0].mxu0
  %v2918 = vadd.f32 0.0, %v2917
  %2919 = vmatprep.mubr.f32.mxu0 0.0
  %2920 = vmatmul.mubr.f32.gmra.mrb[0].mxu0 %v2479
  %v2921 = vpop.f32.mrb[0].mxu0
  %v2922 = vadd.f32 0.0, %v2921
  %v2923 = vpop.f32.mrb[0].mxu0
  %v2924 = vadd.f32 0.0, %v2923
  %2925 = vmatprep.mubr.f32.mxu0 0.0
  %2926 = vmatmul.mubr.f32.gmra.mrb[0].mxu0 %v2482
  %v2927 = vpop.f32.mrb[0].mxu0
  %v2928 = vadd.f32 0.0, %v2927
  %v2929 = vpop.f32.mrb[0].mxu0
  %v2930 = vadd.f32 0.0, %v2929
  %2931 = vmatprep.mubr.f32.mxu0 0.0
  %2932 = vmatmul.mubr.f32.gmra.mrb[0].mxu0 %v2485
  %v2933 = vpop.f32.mrb[0].mxu0
  %v2934 = vadd.f32 0.0, %v2933
  %v2935 = vpop.f32.mrb[0].mxu0
  %v2936 = vadd.f32 0.0, %v2935
  %2937 = vmatprep.mubr.f32.mxu0 0.0
  %2938 = vmatmul.mubr.f32.gmra.mrb[0].mxu0 %v2488
  %v2939 = vpop.f32.mrb[0].mxu0
  %v2940 = vadd.f32 0.0, %v2939
  %v2941 = vpop.f32.mrb[0].mxu0
  %v2942 = vadd.f32 0.0, %v2941
  %2943 = vmatprep.mubr.f32.mxu0 0.0
  %2944 = vmatmul.mubr.f32.gmra.mrb[0].mxu0 %v2491
  %v2945 = vpop.f32.mrb[0].mxu0
  %v2946 = vadd.f32 0.0, %v2945
  %v2947 = vpop.f32.mrb[0].mxu0
  %v2948 = vadd.f32 0.0, %v2947
  %2949 = vmatprep.mubr.f32.mxu0 0.0
  %2950 = vmatmul.mubr.f32.gmra.mrb[0].mxu0 %v2494
  %v2951 = vpop.f32.mrb[0].mxu0
  %v2952 = vadd.f32 0.0, %v2951
  %v2953 = vpop.f32.mrb[0].mxu0
  %v2954 = vadd.f32 0.0, %v2953
  %2955 = vmatprep.mubr.f32.mxu0 0.0
  %2956 = vmatmul.mubr.f32.gmra.mrb[0].mxu0 %v2497
  %v2957 = vpop.f32.mrb[0].mxu0
  %v2958 = vadd.f32 0.0, %v2957
  %v2959 = vpop.f32.mrb[0].mxu0
  %v2960 = vadd.f32 0.0, %v2959
  %2961 = vmatprep.mubr.f32.mxu0 0.0
  %2962 = vmatmul.mubr.f32.gmra.mrb[0].mxu0 %v2500
  %v2963 = vpop.f32.mrb[0].mxu0
  %v2964 = vadd.f32 0.0, %v2963
  %v2965 = vpop.f32.mrb[0].mxu0
  %v2966 = vadd.f32 0.0, %v2965
  %2967 = vmatprep.mubr.f32.mxu0 0.0
  %2968 = vmatmul.mubr.f32.gmra.mrb[0].mxu0 %v2503
  %v2969 = vpop.f32.mrb[0].mxu0
  %v2970 = vadd.f32 0.0, %v2969
  %v2971 = vpop.f32.mrb[0].mxu0
  %v2972 = vadd.f32 0.0, %v2971
  %2973 = vmatprep.mubr.f32.mxu0 0.0
  %2974 = vmatmul.mubr.f32.gmra.mrb[0].mxu0 %v2506
  %v2975 = vpop.f32.mrb[0].mxu0
  %v2976 = vadd.f32 0.0, %v2975
  %v2977 = vpop.f32.mrb[0].mxu0
  %v2978 = vadd.f32 0.0, %v2977
  %2979 = vmatprep.mubr.f32.mxu0 0.0
  %2980 = vmatmul.mubr.f32.gmra.mrb[0].mxu0 %v2509
  %v2981 = vpop.f32.mrb[0].mxu0
  %v2982 = vadd.f32 0.0, %v2981
  %v2983 = vpop.f32.mrb[0].mxu0
  %v2984 = vadd.f32 0.0, %v2983
  %2985 = vmatprep.mubr.f32.mxu0 0.0
  %2986 = vmatmul.mubr.f32.gmra.mrb[0].mxu0 %v2512
  %v2987 = vpop.f32.mrb[0].mxu0
  %v2988 = vadd.f32 0.0, %v2987
  %v2989 = vpop.f32.mrb[0].mxu0
  %v2990 = vadd.f32 0.0, %v2989
  %2991 = vmatprep.mubr.f32.mxu0 0.0
  %2992 = vmatmul.mubr.f32.gmra.mrb[0].mxu0 %v2515
  %v2993 = vpop.f32.mrb[0].mxu0
  %v2994 = vadd.f32 0.0, %v2993
  %v2995 = vpop.f32.mrb[0].mxu0
  %v2996 = vadd.f32 0.0, %v2995
  %2997 = vmatprep.mubr.f32.mxu0 0.0
  %2998 = vmatmul.mubr.f32.gmra.mrb[0].mxu0 %v2518
  %v2999 = vpop.f32.mrb[0].mxu0
  %v3000 = vadd.f32 0.0, %v2999
  %v3001 = vpop.f32.mrb[0].mxu0
  %v3002 = vadd.f32 0.0, %v3001
  %3003 = vmatprep.mubr.f32.mxu0 0.0
  %3004 = vmatmul.mubr.f32.gmra.mrb[0].mxu0 %v2521
  %v3005 = vpop.f32.mrb[0].mxu0
  %v3006 = vadd.f32 0.0, %v3005
  %v3007 = vpop.f32.mrb[0].mxu0
  %v3008 = vadd.f32 0.0, %v3007
  %3009 = vdwg.mxu0
  %3010 = vmatprep.subr.mxu0 %v310
  %3011 = vmatpush1.msra.mxu0 %v309
  %3012 = vmatprep.subr.mxu0 %v317
  %3013 = vmatpush1.msra.mxu0 %v316
  %3014 = vmatprep.subr.mxu0 %v324
  %3015 = vmatpush1.msra.mxu0 %v323
  %3016 = vmatprep.subr.mxu0 %v2539
  %3017 = vmatpush1.msra.mxu0 %v2536
  %3018 = vmatprep.subr.mxu0 0.0
  %3019 = vmatpush1.msra.mxu0 0.0
  %3020 = vmatprep.subr.mxu0 0.0
  %3021 = vmatpush1.msra.mxu0 0.0
  %3022 = vmatprep.subr.mxu0 0.0
  %3023 = vmatpush1.msra.mxu0 0.0
  %3024 = vmatprep.subr.mxu0 0.0
  %3025 = vmatpush1.msra.mxu0 0.0
  %3026 = vmatprep.subr.mxu0 0.0
  %3027 = vmatpush1.msra.mxu0 0.0
  %3028 = vmatprep.subr.mxu0 0.0
  %3029 = vmatpush1.msra.mxu0 0.0
  %3030 = vmatprep.subr.mxu0 0.0
  %3031 = vmatpush1.msra.mxu0 0.0
  %3032 = vmatprep.subr.mxu0 0.0
  %3033 = vmatpush1.msra.mxu0 0.0
  %3034 = vmatprep.subr.mxu0 0.0
  %3035 = vmatpush1.msra.mxu0 0.0
  %3036 = vmatprep.subr.mxu0 0.0
  %3037 = vmatpush1.msra.mxu0 0.0
  %3038 = vmatprep.subr.mxu0 0.0
  %3039 = vmatpush1.msra.mxu0 0.0
  %3040 = vmatprep.subr.mxu0 0.0
  %3041 = vmatpush1.msra.mxu0 0.0
  %3042 = vmatprep.subr.mxu0 0.0
  %3043 = vmatpush1.msra.mxu0 0.0
  %3044 = vmatprep.subr.mxu0 0.0
  %3045 = vmatpush1.msra.mxu0 0.0
  %3046 = vmatprep.subr.mxu0 0.0
  %3047 = vmatpush1.msra.mxu0 0.0
  %3048 = vmatprep.subr.mxu0 0.0
  %3049 = vmatpush1.msra.mxu0 0.0
  %3050 = vmatprep.subr.mxu0 0.0
  %3051 = vmatpush1.msra.mxu0 0.0
  %3052 = vmatprep.subr.mxu0 0.0
  %3053 = vmatpush1.msra.mxu0 0.0
  %3054 = vmatprep.subr.mxu0 0.0
  %3055 = vmatpush1.msra.mxu0 0.0
  %3056 = vmatprep.subr.mxu0 0.0
  %3057 = vmatpush1.msra.mxu0 0.0
  %3058 = vmatprep.subr.mxu0 0.0
  %3059 = vmatpush1.msra.mxu0 0.0
  %3060 = vmatprep.subr.mxu0 0.0
  %3061 = vmatpush1.msra.mxu0 0.0
  %3062 = vmatprep.subr.mxu0 0.0
  %3063 = vmatpush1.msra.mxu0 0.0
  %3064 = vmatprep.subr.mxu0 0.0
  %3065 = vmatpush1.msra.mxu0 0.0
  %3066 = vmatprep.subr.mxu0 0.0
  %3067 = vmatpush1.msra.mxu0 0.0
  %3068 = vmatprep.subr.mxu0 0.0
  %3069 = vmatpush1.msra.mxu0 0.0
  %3070 = vmatprep.subr.mxu0 0.0
  %3071 = vmatpush1.msra.mxu0 0.0
  %3072 = vmatprep.subr.mxu0 0.0
  %3073 = vmatpush1.msra.mxu0 0.0
  %3074 = vmatprep.mubr.f32.mxu0 0.0
  %3075 = vmatmul.mubr.f32.gmra.mrb[0].mxu0 %v2440
  %v3076 = vpop.f32.mrb[0].mxu0
  %v3077 = vadd.f32 0.0, %v3076
  %v3078 = vpop.f32.mrb[0].mxu0
  %v3079 = vadd.f32 0.0, %v3078
  %3080 = vmatprep.mubr.f32.mxu0 0.0
  %3081 = vmatmul.mubr.f32.gmra.mrb[0].mxu0 %v2443
  %v3082 = vpop.f32.mrb[0].mxu0
  %v3083 = vadd.f32 0.0, %v3082
  %v3084 = vpop.f32.mrb[0].mxu0
  %v3085 = vadd.f32 0.0, %v3084
  %3086 = vmatprep.mubr.f32.mxu0 0.0
  %3087 = vmatmul.mubr.f32.gmra.mrb[0].mxu0 %v2446
  %v3088 = vpop.f32.mrb[0].mxu0
  %v3089 = vadd.f32 0.0, %v3088
  %v3090 = vpop.f32.mrb[0].mxu0
  %v3091 = vadd.f32 0.0, %v3090
  %3092 = vmatprep.mubr.f32.mxu0 0.0
  %3093 = vmatmul.mubr.f32.gmra.mrb[0].mxu0 %v2449
  %v3094 = vpop.f32.mrb[0].mxu0
  %v3095 = vadd.f32 0.0, %v3094
  %v3096 = vpop.f32.mrb[0].mxu0
  %v3097 = vadd.f32 0.0, %v3096
  %3098 = vmatprep.mubr.f32.mxu0 0.0
  %3099 = vmatmul.mubr.f32.gmra.mrb[0].mxu0 %v2452
  %v3100 = vpop.f32.mrb[0].mxu0
  %v3101 = vadd.f32 0.0, %v3100
  %v3102 = vpop.f32.mrb[0].mxu0
  %v3103 = vadd.f32 0.0, %v3102
  %3104 = vmatprep.mubr.f32.mxu0 0.0
  %3105 = vmatmul.mubr.f32.gmra.mrb[0].mxu0 %v2455
  %v3106 = vpop.f32.mrb[0].mxu0
  %v3107 = vadd.f32 0.0, %v3106
  %v3108 = vpop.f32.mrb[0].mxu0
  %v3109 = vadd.f32 0.0, %v3108
  %3110 = vmatprep.mubr.f32.mxu0 0.0
  %3111 = vmatmul.mubr.f32.gmra.mrb[0].mxu0 %v2458
  %v3112 = vpop.f32.mrb[0].mxu0
  %v3113 = vadd.f32 0.0, %v3112
  %v3114 = vpop.f32.mrb[0].mxu0
  %v3115 = vadd.f32 0.0, %v3114
  %3116 = vmatprep.mubr.f32.mxu0 0.0
  %3117 = vmatmul.mubr.f32.gmra.mrb[0].mxu0 %v2461
  %v3118 = vpop.f32.mrb[0].mxu0
  %v3119 = vadd.f32 0.0, %v3118
  %v3120 = vpop.f32.mrb[0].mxu0
  %v3121 = vadd.f32 0.0, %v3120
  %3122 = vmatprep.mubr.f32.mxu0 0.0
  %3123 = vmatmul.mubr.f32.gmra.mrb[0].mxu0 %v2464
  %v3124 = vpop.f32.mrb[0].mxu0
  %v3125 = vadd.f32 0.0, %v3124
  %v3126 = vpop.f32.mrb[0].mxu0
  %v3127 = vadd.f32 0.0, %v3126
  %3128 = vmatprep.mubr.f32.mxu0 0.0
  %3129 = vmatmul.mubr.f32.gmra.mrb[0].mxu0 %v2467
  %v3130 = vpop.f32.mrb[0].mxu0
  %v3131 = vadd.f32 0.0, %v3130
  %v3132 = vpop.f32.mrb[0].mxu0
  %v3133 = vadd.f32 0.0, %v3132
  %3134 = vmatprep.mubr.f32.mxu0 0.0
  %3135 = vmatmul.mubr.f32.gmra.mrb[0].mxu0 %v2470
  %v3136 = vpop.f32.mrb[0].mxu0
  %v3137 = vadd.f32 0.0, %v3136
  %v3138 = vpop.f32.mrb[0].mxu0
  %v3139 = vadd.f32 0.0, %v3138
  %3140 = vmatprep.mubr.f32.mxu0 0.0
  %3141 = vmatmul.mubr.f32.gmra.mrb[0].mxu0 %v2473
  %v3142 = vpop.f32.mrb[0].mxu0
  %v3143 = vadd.f32 0.0, %v3142
  %v3144 = vpop.f32.mrb[0].mxu0
  %v3145 = vadd.f32 0.0, %v3144
  %3146 = vmatprep.mubr.f32.mxu0 0.0
  %3147 = vmatmul.mubr.f32.gmra.mrb[0].mxu0 %v2476
  %v3148 = vpop.f32.mrb[0].mxu0
  %v3149 = vadd.f32 0.0, %v3148
  %v3150 = vpop.f32.mrb[0].mxu0
  %v3151 = vadd.f32 0.0, %v3150
  %3152 = vmatprep.mubr.f32.mxu0 0.0
  %3153 = vmatmul.mubr.f32.gmra.mrb[0].mxu0 %v2479
  %v3154 = vpop.f32.mrb[0].mxu0
  %v3155 = vadd.f32 0.0, %v3154
  %v3156 = vpop.f32.mrb[0].mxu0
  %v3157 = vadd.f32 0.0, %v3156
  %3158 = vmatprep.mubr.f32.mxu0 0.0
  %3159 = vmatmul.mubr.f32.gmra.mrb[0].mxu0 %v2482
  %v3160 = vpop.f32.mrb[0].mxu0
  %v3161 = vadd.f32 0.0, %v3160
  %v3162 = vpop.f32.mrb[0].mxu0
  %v3163 = vadd.f32 0.0, %v3162
  %3164 = vmatprep.mubr.f32.mxu0 0.0
  %3165 = vmatmul.mubr.f32.gmra.mrb[0].mxu0 %v2485
  %v3166 = vpop.f32.mrb[0].mxu0
  %v3167 = vadd.f32 0.0, %v3166
  %v3168 = vpop.f32.mrb[0].mxu0
  %v3169 = vadd.f32 0.0, %v3168
  %3170 = vmatprep.mubr.f32.mxu0 0.0
  %3171 = vmatmul.mubr.f32.gmra.mrb[0].mxu0 %v2488
  %v3172 = vpop.f32.mrb[0].mxu0
  %v3173 = vadd.f32 0.0, %v3172
  %v3174 = vpop.f32.mrb[0].mxu0
  %v3175 = vadd.f32 0.0, %v3174
  %3176 = vmatprep.mubr.f32.mxu0 0.0
  %3177 = vmatmul.mubr.f32.gmra.mrb[0].mxu0 %v2491
  %v3178 = vpop.f32.mrb[0].mxu0
  %v3179 = vadd.f32 0.0, %v3178
  %v3180 = vpop.f32.mrb[0].mxu0
  %v3181 = vadd.f32 0.0, %v3180
  %3182 = vmatprep.mubr.f32.mxu0 0.0
  %3183 = vmatmul.mubr.f32.gmra.mrb[0].mxu0 %v2494
  %v3184 = vpop.f32.mrb[0].mxu0
  %v3185 = vadd.f32 0.0, %v3184
  %v3186 = vpop.f32.mrb[0].mxu0
  %v3187 = vadd.f32 0.0, %v3186
  %3188 = vmatprep.mubr.f32.mxu0 0.0
  %3189 = vmatmul.mubr.f32.gmra.mrb[0].mxu0 %v2497
  %v3190 = vpop.f32.mrb[0].mxu0
  %v3191 = vadd.f32 0.0, %v3190
  %v3192 = vpop.f32.mrb[0].mxu0
  %v3193 = vadd.f32 0.0, %v3192
  %3194 = vmatprep.mubr.f32.mxu0 0.0
  %3195 = vmatmul.mubr.f32.gmra.mrb[0].mxu0 %v2500
  %v3196 = vpop.f32.mrb[0].mxu0
  %v3197 = vadd.f32 0.0, %v3196
  %v3198 = vpop.f32.mrb[0].mxu0
  %v3199 = vadd.f32 0.0, %v3198
  %3200 = vmatprep.mubr.f32.mxu0 0.0
  %3201 = vmatmul.mubr.f32.gmra.mrb[0].mxu0 %v2503
  %v3202 = vpop.f32.mrb[0].mxu0
  %v3203 = vadd.f32 0.0, %v3202
  %v3204 = vpop.f32.mrb[0].mxu0
  %v3205 = vadd.f32 0.0, %v3204
  %3206 = vmatprep.mubr.f32.mxu0 0.0
  %3207 = vmatmul.mubr.f32.gmra.mrb[0].mxu0 %v2506
  %v3208 = vpop.f32.mrb[0].mxu0
  %v3209 = vadd.f32 0.0, %v3208
  %v3210 = vpop.f32.mrb[0].mxu0
  %v3211 = vadd.f32 0.0, %v3210
  %3212 = vmatprep.mubr.f32.mxu0 0.0
  %3213 = vmatmul.mubr.f32.gmra.mrb[0].mxu0 %v2509
  %v3214 = vpop.f32.mrb[0].mxu0
  %v3215 = vadd.f32 0.0, %v3214
  %v3216 = vpop.f32.mrb[0].mxu0
  %v3217 = vadd.f32 0.0, %v3216
  %3218 = vmatprep.mubr.f32.mxu0 0.0
  %3219 = vmatmul.mubr.f32.gmra.mrb[0].mxu0 %v2512
  %v3220 = vpop.f32.mrb[0].mxu0
  %v3221 = vadd.f32 0.0, %v3220
  %v3222 = vpop.f32.mrb[0].mxu0
  %v3223 = vadd.f32 0.0, %v3222
  %3224 = vmatprep.mubr.f32.mxu0 0.0
  %3225 = vmatmul.mubr.f32.gmra.mrb[0].mxu0 %v2515
  %v3226 = vpop.f32.mrb[0].mxu0
  %v3227 = vadd.f32 0.0, %v3226
  %v3228 = vpop.f32.mrb[0].mxu0
  %v3229 = vadd.f32 0.0, %v3228
  %3230 = vmatprep.mubr.f32.mxu0 0.0
  %3231 = vmatmul.mubr.f32.gmra.mrb[0].mxu0 %v2518
  %v3232 = vpop.f32.mrb[0].mxu0
  %v3233 = vadd.f32 0.0, %v3232
  %v3234 = vpop.f32.mrb[0].mxu0
  %v3235 = vadd.f32 0.0, %v3234
  %3236 = vmatprep.mubr.f32.mxu0 0.0
  %3237 = vmatmul.mubr.f32.gmra.mrb[0].mxu0 %v2521
  %v3238 = vpop.f32.mrb[0].mxu0
  %v3239 = vadd.f32 0.0, %v3238
  %v3240 = vpop.f32.mrb[0].mxu0
  %v3241 = vadd.f32 0.0, %v3240
  %3242 = vdwg.mxu0
  %3243 = vmatprep.subr.mxu0 0.0
  %3244 = vmatpush1.msra.mxu0 %v311
  %3245 = vmatprep.subr.mxu0 0.0
  %3246 = vmatpush1.msra.mxu0 %v318
  %3247 = vmatprep.subr.mxu0 0.0
  %3248 = vmatpush1.msra.mxu0 %v325
  %3249 = vmatprep.subr.mxu0 0.0
  %3250 = vmatpush1.msra.mxu0 %v2542
  %3251 = vmatprep.subr.mxu0 0.0
  %3252 = vmatpush1.msra.mxu0 0.0
  %3253 = vmatprep.subr.mxu0 0.0
  %3254 = vmatpush1.msra.mxu0 0.0
  %3255 = vmatprep.subr.mxu0 0.0
  %3256 = vmatpush1.msra.mxu0 0.0
  %3257 = vmatprep.subr.mxu0 0.0
  %3258 = vmatpush1.msra.mxu0 0.0
  %3259 = vmatprep.subr.mxu0 0.0
  %3260 = vmatpush1.msra.mxu0 0.0
  %3261 = vmatprep.subr.mxu0 0.0
  %3262 = vmatpush1.msra.mxu0 0.0
  %3263 = vmatprep.subr.mxu0 0.0
  %3264 = vmatpush1.msra.mxu0 0.0
  %3265 = vmatprep.subr.mxu0 0.0
  %3266 = vmatpush1.msra.mxu0 0.0
  %3267 = vmatprep.subr.mxu0 0.0
  %3268 = vmatpush1.msra.mxu0 0.0
  %3269 = vmatprep.subr.mxu0 0.0
  %3270 = vmatpush1.msra.mxu0 0.0
  %3271 = vmatprep.subr.mxu0 0.0
  %3272 = vmatpush1.msra.mxu0 0.0
  %3273 = vmatprep.subr.mxu0 0.0
  %3274 = vmatpush1.msra.mxu0 0.0
  %3275 = vmatprep.subr.mxu0 0.0
  %3276 = vmatpush1.msra.mxu0 0.0
  %3277 = vmatprep.subr.mxu0 0.0
  %3278 = vmatpush1.msra.mxu0 0.0
  %3279 = vmatprep.subr.mxu0 0.0
  %3280 = vmatpush1.msra.mxu0 0.0
  %3281 = vmatprep.subr.mxu0 0.0
  %3282 = vmatpush1.msra.mxu0 0.0
  %3283 = vmatprep.subr.mxu0 0.0
  %3284 = vmatpush1.msra.mxu0 0.0
  %3285 = vmatprep.subr.mxu0 0.0
  %3286 = vmatpush1.msra.mxu0 0.0
  %3287 = vmatprep.subr.mxu0 0.0
  %3288 = vmatpush1.msra.mxu0 0.0
  %3289 = vmatprep.subr.mxu0 0.0
  %3290 = vmatpush1.msra.mxu0 0.0
  %3291 = vmatprep.subr.mxu0 0.0
  %3292 = vmatpush1.msra.mxu0 0.0
  %3293 = vmatprep.subr.mxu0 0.0
  %3294 = vmatpush1.msra.mxu0 0.0
  %3295 = vmatprep.subr.mxu0 0.0
  %3296 = vmatpush1.msra.mxu0 0.0
  %3297 = vmatprep.subr.mxu0 0.0
  %3298 = vmatpush1.msra.mxu0 0.0
  %3299 = vmatprep.subr.mxu0 0.0
  %3300 = vmatpush1.msra.mxu0 0.0
  %3301 = vmatprep.subr.mxu0 0.0
  %3302 = vmatpush1.msra.mxu0 0.0
  %3303 = vmatprep.subr.mxu0 0.0
  %3304 = vmatpush1.msra.mxu0 0.0
  %3305 = vmatprep.subr.mxu0 0.0
  %3306 = vmatpush1.msra.mxu0 0.0
  %3307 = vmatprep.mubr.f32.mxu0 0.0
  %3308 = vmatmul.mubr.f32.gmra.mrb[0].mxu0 %v2440
  %v3309 = vpop.f32.mrb[0].mxu0
  %v3310 = vadd.f32 0.0, %v3309
  %v3311 = vpop.f32.mrb[0].mxu0
  %3312 = vmatprep.mubr.f32.mxu0 0.0
  %3313 = vmatmul.mubr.f32.gmra.mrb[0].mxu0 %v2443
  %v3314 = vpop.f32.mrb[0].mxu0
  %v3315 = vadd.f32 0.0, %v3314
  %v3316 = vpop.f32.mrb[0].mxu0
  %3317 = vmatprep.mubr.f32.mxu0 0.0
  %3318 = vmatmul.mubr.f32.gmra.mrb[0].mxu0 %v2446
  %v3319 = vpop.f32.mrb[0].mxu0
  %v3320 = vadd.f32 0.0, %v3319
  %v3321 = vpop.f32.mrb[0].mxu0
  %3322 = vmatprep.mubr.f32.mxu0 0.0
  %3323 = vmatmul.mubr.f32.gmra.mrb[0].mxu0 %v2449
  %v3324 = vpop.f32.mrb[0].mxu0
  %v3325 = vadd.f32 0.0, %v3324
  %v3326 = vpop.f32.mrb[0].mxu0
  %3327 = vmatprep.mubr.f32.mxu0 0.0
  %3328 = vmatmul.mubr.f32.gmra.mrb[0].mxu0 %v2452
  %v3329 = vpop.f32.mrb[0].mxu0
  %v3330 = vadd.f32 0.0, %v3329
  %v3331 = vpop.f32.mrb[0].mxu0
  %3332 = vmatprep.mubr.f32.mxu0 0.0
  %3333 = vmatmul.mubr.f32.gmra.mrb[0].mxu0 %v2455
  %v3334 = vpop.f32.mrb[0].mxu0
  %v3335 = vadd.f32 0.0, %v3334
  %v3336 = vpop.f32.mrb[0].mxu0
  %3337 = vmatprep.mubr.f32.mxu0 0.0
  %3338 = vmatmul.mubr.f32.gmra.mrb[0].mxu0 %v2458
  %v3339 = vpop.f32.mrb[0].mxu0
  %v3340 = vadd.f32 0.0, %v3339
  %v3341 = vpop.f32.mrb[0].mxu0
  %3342 = vmatprep.mubr.f32.mxu0 0.0
  %3343 = vmatmul.mubr.f32.gmra.mrb[0].mxu0 %v2461
  %v3344 = vpop.f32.mrb[0].mxu0
  %v3345 = vadd.f32 0.0, %v3344
  %v3346 = vpop.f32.mrb[0].mxu0
  %3347 = vmatprep.mubr.f32.mxu0 0.0
  %3348 = vmatmul.mubr.f32.gmra.mrb[0].mxu0 %v2464
  %v3349 = vpop.f32.mrb[0].mxu0
  %v3350 = vadd.f32 0.0, %v3349
  %v3351 = vpop.f32.mrb[0].mxu0
  %3352 = vmatprep.mubr.f32.mxu0 0.0
  %3353 = vmatmul.mubr.f32.gmra.mrb[0].mxu0 %v2467
  %v3354 = vpop.f32.mrb[0].mxu0
  %v3355 = vadd.f32 0.0, %v3354
  %v3356 = vpop.f32.mrb[0].mxu0
  %3357 = vmatprep.mubr.f32.mxu0 0.0
  %3358 = vmatmul.mubr.f32.gmra.mrb[0].mxu0 %v2470
  %v3359 = vpop.f32.mrb[0].mxu0
  %v3360 = vadd.f32 0.0, %v3359
  %v3361 = vpop.f32.mrb[0].mxu0
  %3362 = vmatprep.mubr.f32.mxu0 0.0
  %3363 = vmatmul.mubr.f32.gmra.mrb[0].mxu0 %v2473
  %v3364 = vpop.f32.mrb[0].mxu0
  %v3365 = vadd.f32 0.0, %v3364
  %v3366 = vpop.f32.mrb[0].mxu0
  %3367 = vmatprep.mubr.f32.mxu0 0.0
  %3368 = vmatmul.mubr.f32.gmra.mrb[0].mxu0 %v2476
  %v3369 = vpop.f32.mrb[0].mxu0
  %v3370 = vadd.f32 0.0, %v3369
  %v3371 = vpop.f32.mrb[0].mxu0
  %3372 = vmatprep.mubr.f32.mxu0 0.0
  %3373 = vmatmul.mubr.f32.gmra.mrb[0].mxu0 %v2479
  %v3374 = vpop.f32.mrb[0].mxu0
  %v3375 = vadd.f32 0.0, %v3374
  %v3376 = vpop.f32.mrb[0].mxu0
  %3377 = vmatprep.mubr.f32.mxu0 0.0
  %3378 = vmatmul.mubr.f32.gmra.mrb[0].mxu0 %v2482
  %v3379 = vpop.f32.mrb[0].mxu0
  %v3380 = vadd.f32 0.0, %v3379
  %v3381 = vpop.f32.mrb[0].mxu0
  %3382 = vmatprep.mubr.f32.mxu0 0.0
  %3383 = vmatmul.mubr.f32.gmra.mrb[0].mxu0 %v2485
  %v3384 = vpop.f32.mrb[0].mxu0
  %v3385 = vadd.f32 0.0, %v3384
  %v3386 = vpop.f32.mrb[0].mxu0
  %3387 = vmatprep.mubr.f32.mxu0 0.0
  %3388 = vmatmul.mubr.f32.gmra.mrb[0].mxu0 %v2488
  %v3389 = vpop.f32.mrb[0].mxu0
  %v3390 = vadd.f32 0.0, %v3389
  %v3391 = vpop.f32.mrb[0].mxu0
  %3392 = vmatprep.mubr.f32.mxu0 0.0
  %3393 = vmatmul.mubr.f32.gmra.mrb[0].mxu0 %v2491
  %v3394 = vpop.f32.mrb[0].mxu0
  %v3395 = vadd.f32 0.0, %v3394
  %v3396 = vpop.f32.mrb[0].mxu0
  %3397 = vmatprep.mubr.f32.mxu0 0.0
  %3398 = vmatmul.mubr.f32.gmra.mrb[0].mxu0 %v2494
  %v3399 = vpop.f32.mrb[0].mxu0
  %v3400 = vadd.f32 0.0, %v3399
  %v3401 = vpop.f32.mrb[0].mxu0
  %3402 = vmatprep.mubr.f32.mxu0 0.0
  %3403 = vmatmul.mubr.f32.gmra.mrb[0].mxu0 %v2497
  %v3404 = vpop.f32.mrb[0].mxu0
  %v3405 = vadd.f32 0.0, %v3404
  %v3406 = vpop.f32.mrb[0].mxu0
  %3407 = vmatprep.mubr.f32.mxu0 0.0
  %3408 = vmatmul.mubr.f32.gmra.mrb[0].mxu0 %v2500
  %v3409 = vpop.f32.mrb[0].mxu0
  %v3410 = vadd.f32 0.0, %v3409
  %v3411 = vpop.f32.mrb[0].mxu0
  %3412 = vmatprep.mubr.f32.mxu0 0.0
  %3413 = vmatmul.mubr.f32.gmra.mrb[0].mxu0 %v2503
  %v3414 = vpop.f32.mrb[0].mxu0
  %v3415 = vadd.f32 0.0, %v3414
  %v3416 = vpop.f32.mrb[0].mxu0
  %3417 = vmatprep.mubr.f32.mxu0 0.0
  %3418 = vmatmul.mubr.f32.gmra.mrb[0].mxu0 %v2506
  %v3419 = vpop.f32.mrb[0].mxu0
  %v3420 = vadd.f32 0.0, %v3419
  %v3421 = vpop.f32.mrb[0].mxu0
  %3422 = vmatprep.mubr.f32.mxu0 0.0
  %3423 = vmatmul.mubr.f32.gmra.mrb[0].mxu0 %v2509
  %v3424 = vpop.f32.mrb[0].mxu0
  %v3425 = vadd.f32 0.0, %v3424
  %v3426 = vpop.f32.mrb[0].mxu0
  %3427 = vmatprep.mubr.f32.mxu0 0.0
  %3428 = vmatmul.mubr.f32.gmra.mrb[0].mxu0 %v2512
  %v3429 = vpop.f32.mrb[0].mxu0
  %v3430 = vadd.f32 0.0, %v3429
  %v3431 = vpop.f32.mrb[0].mxu0
  %3432 = vmatprep.mubr.f32.mxu0 0.0
  %3433 = vmatmul.mubr.f32.gmra.mrb[0].mxu0 %v2515
  %v3434 = vpop.f32.mrb[0].mxu0
  %v3435 = vadd.f32 0.0, %v3434
  %v3436 = vpop.f32.mrb[0].mxu0
  %3437 = vmatprep.mubr.f32.mxu0 0.0
  %3438 = vmatmul.mubr.f32.gmra.mrb[0].mxu0 %v2518
  %v3439 = vpop.f32.mrb[0].mxu0
  %v3440 = vadd.f32 0.0, %v3439
  %v3441 = vpop.f32.mrb[0].mxu0
  %3442 = vmatprep.mubr.f32.mxu0 0.0
  %3443 = vmatmul.mubr.f32.gmra.mrb[0].mxu0 %v2521
  %v3444 = vpop.f32.mrb[0].mxu0
  %v3445 = vadd.f32 0.0, %v3444
  %v3446 = vpop.f32.mrb[0].mxu0
  %3447 = vdwg.mxu0
  %v3448 = vadd.f32 %v1573, %v2611
  %v3449 = vadd.f32 %v1575, %v2613
  %v3450 = vadd.f32 %v1806, %v2844
  %v3451 = vadd.f32 %v1808, %v2846
  %v3452 = vadd.f32 %v2039, %v3077
  %v3453 = vadd.f32 %v2041, %v3079
  %v3454 = vadd.f32 %v2272, %v3310
  %v3455 = vadd.f32 %v1579, %v2617
  %v3456 = vadd.f32 %v1581, %v2619
  %v3457 = vadd.f32 %v1812, %v2850
  %v3458 = vadd.f32 %v1814, %v2852
  %v3459 = vadd.f32 %v2045, %v3083
  %v3460 = vadd.f32 %v2047, %v3085
  %v3461 = vadd.f32 %v2277, %v3315
  %v3462 = vadd.f32 %v1585, %v2623
  %v3463 = vadd.f32 %v1587, %v2625
  %v3464 = vadd.f32 %v1818, %v2856
  %v3465 = vadd.f32 %v1820, %v2858
  %v3466 = vadd.f32 %v2051, %v3089
  %v3467 = vadd.f32 %v2053, %v3091
  %v3468 = vadd.f32 %v2282, %v3320
  %v3469 = vadd.f32 %v1591, %v2629
  %v3470 = vadd.f32 %v1593, %v2631
  %v3471 = vadd.f32 %v1824, %v2862
  %v3472 = vadd.f32 %v1826, %v2864
  %v3473 = vadd.f32 %v2057, %v3095
  %v3474 = vadd.f32 %v2059, %v3097
  %v3475 = vadd.f32 %v2287, %v3325
  %v3476 = vadd.f32 %v1597, %v2635
  %v3477 = vadd.f32 %v1599, %v2637
  %v3478 = vadd.f32 %v1830, %v2868
  %v3479 = vadd.f32 %v1832, %v2870
  %v3480 = vadd.f32 %v2063, %v3101
  %v3481 = vadd.f32 %v2065, %v3103
  %v3482 = vadd.f32 %v2292, %v3330
  %v3483 = vadd.f32 %v1603, %v2641
  %v3484 = vadd.f32 %v1605, %v2643
  %v3485 = vadd.f32 %v1836, %v2874
  %v3486 = vadd.f32 %v1838, %v2876
  %v3487 = vadd.f32 %v2069, %v3107
  %v3488 = vadd.f32 %v2071, %v3109
  %v3489 = vadd.f32 %v2297, %v3335
  %v3490 = vadd.f32 %v1609, %v2647
  %v3491 = vadd.f32 %v1611, %v2649
  %v3492 = vadd.f32 %v1842, %v2880
  %v3493 = vadd.f32 %v1844, %v2882
  %v3494 = vadd.f32 %v2075, %v3113
  %v3495 = vadd.f32 %v2077, %v3115
  %v3496 = vadd.f32 %v2302, %v3340
  %v3497 = vadd.f32 %v1615, %v2653
  %v3498 = vadd.f32 %v1617, %v2655
  %v3499 = vadd.f32 %v1848, %v2886
  %v3500 = vadd.f32 %v1850, %v2888
  %v3501 = vadd.f32 %v2081, %v3119
  %v3502 = vadd.f32 %v2083, %v3121
  %v3503 = vadd.f32 %v2307, %v3345
  %v3504 = vadd.f32 %v1621, %v2659
  %v3505 = vadd.f32 %v1623, %v2661
  %v3506 = vadd.f32 %v1854, %v2892
  %v3507 = vadd.f32 %v1856, %v2894
  %v3508 = vadd.f32 %v2087, %v3125
  %v3509 = vadd.f32 %v2089, %v3127
  %v3510 = vadd.f32 %v2312, %v3350
  %v3511 = vadd.f32 %v1627, %v2665
  %v3512 = vadd.f32 %v1629, %v2667
  %v3513 = vadd.f32 %v1860, %v2898
  %v3514 = vadd.f32 %v1862, %v2900
  %v3515 = vadd.f32 %v2093, %v3131
  %v3516 = vadd.f32 %v2095, %v3133
  %v3517 = vadd.f32 %v2317, %v3355
  %v3518 = vadd.f32 %v1633, %v2671
  %v3519 = vadd.f32 %v1635, %v2673
  %v3520 = vadd.f32 %v1866, %v2904
  %v3521 = vadd.f32 %v1868, %v2906
  %v3522 = vadd.f32 %v2099, %v3137
  %v3523 = vadd.f32 %v2101, %v3139
  %v3524 = vadd.f32 %v2322, %v3360
  %v3525 = vadd.f32 %v1639, %v2677
  %v3526 = vadd.f32 %v1641, %v2679
  %v3527 = vadd.f32 %v1872, %v2910
  %v3528 = vadd.f32 %v1874, %v2912
  %v3529 = vadd.f32 %v2105, %v3143
  %v3530 = vadd.f32 %v2107, %v3145
  %v3531 = vadd.f32 %v2327, %v3365
  %v3532 = vadd.f32 %v1645, %v2683
  %v3533 = vadd.f32 %v1647, %v2685
  %v3534 = vadd.f32 %v1878, %v2916
  %v3535 = vadd.f32 %v1880, %v2918
  %v3536 = vadd.f32 %v2111, %v3149
  %v3537 = vadd.f32 %v2113, %v3151
  %v3538 = vadd.f32 %v2332, %v3370
  %v3539 = vadd.f32 %v1651, %v2689
  %v3540 = vadd.f32 %v1653, %v2691
  %v3541 = vadd.f32 %v1884, %v2922
  %v3542 = vadd.f32 %v1886, %v2924
  %v3543 = vadd.f32 %v2117, %v3155
  %v3544 = vadd.f32 %v2119, %v3157
  %v3545 = vadd.f32 %v2337, %v3375
  %v3546 = vadd.f32 %v1657, %v2695
  %v3547 = vadd.f32 %v1659, %v2697
  %v3548 = vadd.f32 %v1890, %v2928
  %v3549 = vadd.f32 %v1892, %v2930
  %v3550 = vadd.f32 %v2123, %v3161
  %v3551 = vadd.f32 %v2125, %v3163
  %v3552 = vadd.f32 %v2342, %v3380
  %v3553 = vadd.f32 %v1663, %v2701
  %v3554 = vadd.f32 %v1665, %v2703
  %v3555 = vadd.f32 %v1896, %v2934
  %v3556 = vadd.f32 %v1898, %v2936
  %v3557 = vadd.f32 %v2129, %v3167
  %v3558 = vadd.f32 %v2131, %v3169
  %v3559 = vadd.f32 %v2347, %v3385
  %v3560 = vadd.f32 %v1669, %v2707
  %v3561 = vadd.f32 %v1671, %v2709
  %v3562 = vadd.f32 %v1902, %v2940
  %v3563 = vadd.f32 %v1904, %v2942
  %v3564 = vadd.f32 %v2135, %v3173
  %v3565 = vadd.f32 %v2137, %v3175
  %v3566 = vadd.f32 %v2352, %v3390
  %v3567 = vadd.f32 %v1675, %v2713
  %v3568 = vadd.f32 %v1677, %v2715
  %v3569 = vadd.f32 %v1908, %v2946
  %v3570 = vadd.f32 %v1910, %v2948
  %v3571 = vadd.f32 %v2141, %v3179
  %v3572 = vadd.f32 %v2143, %v3181
  %v3573 = vadd.f32 %v2357, %v3395
  %v3574 = vadd.f32 %v1681, %v2719
  %v3575 = vadd.f32 %v1683, %v2721
  %v3576 = vadd.f32 %v1914, %v2952
  %v3577 = vadd.f32 %v1916, %v2954
  %v3578 = vadd.f32 %v2147, %v3185
  %v3579 = vadd.f32 %v2149, %v3187
  %v3580 = vadd.f32 %v2362, %v3400
  %v3581 = vadd.f32 %v1687, %v2725
  %v3582 = vadd.f32 %v1689, %v2727
  %v3583 = vadd.f32 %v1920, %v2958
  %v3584 = vadd.f32 %v1922, %v2960
  %v3585 = vadd.f32 %v2153, %v3191
  %v3586 = vadd.f32 %v2155, %v3193
  %v3587 = vadd.f32 %v2367, %v3405
  %v3588 = vadd.f32 %v1693, %v2731
  %v3589 = vadd.f32 %v1695, %v2733
  %v3590 = vadd.f32 %v1926, %v2964
  %v3591 = vadd.f32 %v1928, %v2966
  %v3592 = vadd.f32 %v2159, %v3197
  %v3593 = vadd.f32 %v2161, %v3199
  %v3594 = vadd.f32 %v2372, %v3410
  %v3595 = vadd.f32 %v1699, %v2737
  %v3596 = vadd.f32 %v1701, %v2739
  %v3597 = vadd.f32 %v1932, %v2970
  %v3598 = vadd.f32 %v1934, %v2972
  %v3599 = vadd.f32 %v2165, %v3203
  %v3600 = vadd.f32 %v2167, %v3205
  %v3601 = vadd.f32 %v2377, %v3415
  %v3602 = vadd.f32 %v1705, %v2743
  %v3603 = vadd.f32 %v1707, %v2745
  %v3604 = vadd.f32 %v1938, %v2976
  %v3605 = vadd.f32 %v1940, %v2978
  %v3606 = vadd.f32 %v2171, %v3209
  %v3607 = vadd.f32 %v2173, %v3211
  %v3608 = vadd.f32 %v2382, %v3420
  %v3609 = vadd.f32 %v1711, %v2749
  %v3610 = vadd.f32 %v1713, %v2751
  %v3611 = vadd.f32 %v1944, %v2982
  %v3612 = vadd.f32 %v1946, %v2984
  %v3613 = vadd.f32 %v2177, %v3215
  %v3614 = vadd.f32 %v2179, %v3217
  %v3615 = vadd.f32 %v2387, %v3425
  %v3616 = vadd.f32 %v1717, %v2755
  %v3617 = vadd.f32 %v1719, %v2757
  %v3618 = vadd.f32 %v1950, %v2988
  %v3619 = vadd.f32 %v1952, %v2990
  %v3620 = vadd.f32 %v2183, %v3221
  %v3621 = vadd.f32 %v2185, %v3223
  %v3622 = vadd.f32 %v2392, %v3430
  %v3623 = vadd.f32 %v1723, %v2761
  %v3624 = vadd.f32 %v1725, %v2763
  %v3625 = vadd.f32 %v1956, %v2994
  %v3626 = vadd.f32 %v1958, %v2996
  %v3627 = vadd.f32 %v2189, %v3227
  %v3628 = vadd.f32 %v2191, %v3229
  %v3629 = vadd.f32 %v2397, %v3435
  %v3630 = vadd.f32 %v1729, %v2767
  %v3631 = vadd.f32 %v1731, %v2769
  %v3632 = vadd.f32 %v1962, %v3000
  %v3633 = vadd.f32 %v1964, %v3002
  %v3634 = vadd.f32 %v2195, %v3233
  %v3635 = vadd.f32 %v2197, %v3235
  %v3636 = vadd.f32 %v2402, %v3440
  %v3637 = vadd.f32 %v1735, %v2773
  %v3638 = vadd.f32 %v1737, %v2775
  %v3639 = vadd.f32 %v1968, %v3006
  %v3640 = vadd.f32 %v1970, %v3008
  %v3641 = vadd.f32 %v2201, %v3239
  %v3642 = vadd.f32 %v2203, %v3241
  %v3643 = vadd.f32 %v2407, %v3445
  %v3644 = vld [vmem:[%s2] sm:$0xff]
  %v3645 = vld [vmem:[%s2 + $0x8] sm:$0xff]
  %v3646 = vld [vmem:[%s2 + $0x10] sm:$0xff]
  %v3647 = vld [vmem:[%s2 + $0x18] sm:$0xff]
  %v3648 = vld [vmem:[%s2 + $0x20] sm:$0xff]
  %v3649 = vld [vmem:[%s2 + $0x28] sm:$0xff]
  %v3650 = vld [vmem:[%s2 + $0x30] sm:$0xff]
  %v3651 = vld [vmem:[%s2 + $0x38] sm:$0xff]
  %v3652 = vld [vmem:[%s2 + $0x40] sm:$0xff]
  %v3653 = vld [vmem:[%s2 + $0x48] sm:$0xff]
  %v3654 = vld [vmem:[%s2 + $0x50] sm:$0xff]
  %v3655 = vld [vmem:[%s2 + $0x58] sm:$0xff]
  %v3656 = vld [vmem:[%s2 + $0x60] sm:$0xff]
  %v3657 = vld [vmem:[%s2 + $0x68] sm:$0xff]
  %v3658 = vld [vmem:[%s2 + $0x70] sm:$0xff]
  %v3659 = vld [vmem:[%s2 + $0x78] sm:$0xff]
  %v3660 = vld [vmem:[%s2 + $0x80] sm:$0xff]
  %v3661 = vld [vmem:[%s2 + $0x88] sm:$0xff]
  %v3662 = vld [vmem:[%s2 + $0x90] sm:$0xff]
  %v3663 = vld [vmem:[%s2 + $0x98] sm:$0xff]
  %v3664 = vld [vmem:[%s2 + $0xa0] sm:$0xff]
  %v3665 = vld [vmem:[%s2 + $0xa8] sm:$0xff]
  %v3666 = vld [vmem:[%s2 + $0xb0] sm:$0xff]
  %v3667 = vld [vmem:[%s2 + $0xb8] sm:$0xff]
  %v3668 = vld [vmem:[%s2 + $0xc0] sm:$0xff]
  %v3669 = vld [vmem:[%s2 + $0xc8] sm:$0xff]
  %v3670 = vld [vmem:[%s2 + $0xd0] sm:$0xff]
  %v3671 = vld [vmem:[%s2 + $0xd8] sm:$0xff]
  %3673 = vset.pattern.permute.xlu0 0
  %3674 = vperm.xlu0 %3673, %v3644
  %v3675 = vpop.permute.xlu0 %3674
  %3678 = vset.pattern.permute.xlu0 0
  %3679 = vperm.xlu0 %3678, %v3645
  %v3680 = vpop.permute.xlu0 %3679
  %3683 = vset.pattern.permute.xlu0 0
  %3684 = vperm.xlu0 %3683, %v3646
  %v3685 = vpop.permute.xlu0 %3684
  %3688 = vset.pattern.permute.xlu0 0
  %3689 = vperm.xlu0 %3688, %v3647
  %v3690 = vpop.permute.xlu0 %3689
  %3693 = vset.pattern.permute.xlu0 0
  %3694 = vperm.xlu0 %3693, %v3648
  %v3695 = vpop.permute.xlu0 %3694
  %3698 = vset.pattern.permute.xlu0 0
  %3699 = vperm.xlu0 %3698, %v3649
  %v3700 = vpop.permute.xlu0 %3699
  %3703 = vset.pattern.permute.xlu0 0
  %3704 = vperm.xlu0 %3703, %v3650
  %v3705 = vpop.permute.xlu0 %3704
  %3708 = vset.pattern.permute.xlu0 0
  %3709 = vperm.xlu0 %3708, %v3651
  %v3710 = vpop.permute.xlu0 %3709
  %3713 = vset.pattern.permute.xlu0 0
  %3714 = vperm.xlu0 %3713, %v3652
  %v3715 = vpop.permute.xlu0 %3714
  %3718 = vset.pattern.permute.xlu0 0
  %3719 = vperm.xlu0 %3718, %v3653
  %v3720 = vpop.permute.xlu0 %3719
  %3723 = vset.pattern.permute.xlu0 0
  %3724 = vperm.xlu0 %3723, %v3654
  %v3725 = vpop.permute.xlu0 %3724
  %3728 = vset.pattern.permute.xlu0 0
  %3729 = vperm.xlu0 %3728, %v3655
  %v3730 = vpop.permute.xlu0 %3729
  %3733 = vset.pattern.permute.xlu0 0
  %3734 = vperm.xlu0 %3733, %v3656
  %v3735 = vpop.permute.xlu0 %3734
  %3738 = vset.pattern.permute.xlu0 0
  %3739 = vperm.xlu0 %3738, %v3657
  %v3740 = vpop.permute.xlu0 %3739
  %3743 = vset.pattern.permute.xlu0 0
  %3744 = vperm.xlu0 %3743, %v3658
  %v3745 = vpop.permute.xlu0 %3744
  %3748 = vset.pattern.permute.xlu0 0
  %3749 = vperm.xlu0 %3748, %v3659
  %v3750 = vpop.permute.xlu0 %3749
  %3753 = vset.pattern.permute.xlu0 0
  %3754 = vperm.xlu0 %3753, %v3660
  %v3755 = vpop.permute.xlu0 %3754
  %3758 = vset.pattern.permute.xlu0 0
  %3759 = vperm.xlu0 %3758, %v3661
  %v3760 = vpop.permute.xlu0 %3759
  %3763 = vset.pattern.permute.xlu0 0
  %3764 = vperm.xlu0 %3763, %v3662
  %v3765 = vpop.permute.xlu0 %3764
  %3768 = vset.pattern.permute.xlu0 0
  %3769 = vperm.xlu0 %3768, %v3663
  %v3770 = vpop.permute.xlu0 %3769
  %3773 = vset.pattern.permute.xlu0 0
  %3774 = vperm.xlu0 %3773, %v3664
  %v3775 = vpop.permute.xlu0 %3774
  %3778 = vset.pattern.permute.xlu0 0
  %3779 = vperm.xlu0 %3778, %v3665
  %v3780 = vpop.permute.xlu0 %3779
  %3783 = vset.pattern.permute.xlu0 0
  %3784 = vperm.xlu0 %3783, %v3666
  %v3785 = vpop.permute.xlu0 %3784
  %3788 = vset.pattern.permute.xlu0 0
  %3789 = vperm.xlu0 %3788, %v3667
  %v3790 = vpop.permute.xlu0 %3789
  %3793 = vset.pattern.permute.xlu0 0
  %3794 = vperm.xlu0 %3793, %v3668
  %v3795 = vpop.permute.xlu0 %3794
  %3798 = vset.pattern.permute.xlu0 0
  %3799 = vperm.xlu0 %3798, %v3669
  %v3800 = vpop.permute.xlu0 %3799
  %3803 = vset.pattern.permute.xlu0 0
  %3804 = vperm.xlu0 %3803, %v3670
  %v3805 = vpop.permute.xlu0 %3804
  %3808 = vset.pattern.permute.xlu0 0
  %3809 = vperm.xlu0 %3808, %v3671
  %v3810 = vpop.permute.xlu0 %3809
  %v3812 = vadd.f32 %v3448, %v3675
  %v3813 = vadd.f32 %v3449, %v3675
  %v3814 = vadd.f32 %v3450, %v3675
  %v3815 = vadd.f32 %v3451, %v3675
  %v3816 = vadd.f32 %v3452, %v3675
  %v3817 = vadd.f32 %v3453, %v3675
  %v3818 = vadd.f32 %v3454, %v3675
  %v3819 = vadd.f32 %v3455, %v3680
  %v3820 = vadd.f32 %v3456, %v3680
  %v3821 = vadd.f32 %v3457, %v3680
  %v3822 = vadd.f32 %v3458, %v3680
  %v3823 = vadd.f32 %v3459, %v3680
  %v3824 = vadd.f32 %v3460, %v3680
  %v3825 = vadd.f32 %v3461, %v3680
  %v3826 = vadd.f32 %v3462, %v3685
  %v3827 = vadd.f32 %v3463, %v3685
  %v3828 = vadd.f32 %v3464, %v3685
  %v3829 = vadd.f32 %v3465, %v3685
  %v3830 = vadd.f32 %v3466, %v3685
  %v3831 = vadd.f32 %v3467, %v3685
  %v3832 = vadd.f32 %v3468, %v3685
  %v3833 = vadd.f32 %v3469, %v3690
  %v3834 = vadd.f32 %v3470, %v3690
  %v3835 = vadd.f32 %v3471, %v3690
  %v3836 = vadd.f32 %v3472, %v3690
  %v3837 = vadd.f32 %v3473, %v3690
  %v3838 = vadd.f32 %v3474, %v3690
  %v3839 = vadd.f32 %v3475, %v3690
  %v3840 = vadd.f32 %v3476, %v3695
  %v3841 = vadd.f32 %v3477, %v3695
  %v3842 = vadd.f32 %v3478, %v3695
  %v3843 = vadd.f32 %v3479, %v3695
  %v3844 = vadd.f32 %v3480, %v3695
  %v3845 = vadd.f32 %v3481, %v3695
  %v3846 = vadd.f32 %v3482, %v3695
  %v3847 = vadd.f32 %v3483, %v3700
  %v3848 = vadd.f32 %v3484, %v3700
  %v3849 = vadd.f32 %v3485, %v3700
  %v3850 = vadd.f32 %v3486, %v3700
  %v3851 = vadd.f32 %v3487, %v3700
  %v3852 = vadd.f32 %v3488, %v3700
  %v3853 = vadd.f32 %v3489, %v3700
  %v3854 = vadd.f32 %v3490, %v3705
  %v3855 = vadd.f32 %v3491, %v3705
  %v3856 = vadd.f32 %v3492, %v3705
  %v3857 = vadd.f32 %v3493, %v3705
  %v3858 = vadd.f32 %v3494, %v3705
  %v3859 = vadd.f32 %v3495, %v3705
  %v3860 = vadd.f32 %v3496, %v3705
  %v3861 = vadd.f32 %v3497, %v3710
  %v3862 = vadd.f32 %v3498, %v3710
  %v3863 = vadd.f32 %v3499, %v3710
  %v3864 = vadd.f32 %v3500, %v3710
  %v3865 = vadd.f32 %v3501, %v3710
  %v3866 = vadd.f32 %v3502, %v3710
  %v3867 = vadd.f32 %v3503, %v3710
  %v3868 = vadd.f32 %v3504, %v3715
  %v3869 = vadd.f32 %v3505, %v3715
  %v3870 = vadd.f32 %v3506, %v3715
  %v3871 = vadd.f32 %v3507, %v3715
  %v3872 = vadd.f32 %v3508, %v3715
  %v3873 = vadd.f32 %v3509, %v3715
  %v3874 = vadd.f32 %v3510, %v3715
  %v3875 = vadd.f32 %v3511, %v3720
  %v3876 = vadd.f32 %v3512, %v3720
  %v3877 = vadd.f32 %v3513, %v3720
  %v3878 = vadd.f32 %v3514, %v3720
  %v3879 = vadd.f32 %v3515, %v3720
  %v3880 = vadd.f32 %v3516, %v3720
  %v3881 = vadd.f32 %v3517, %v3720
  %v3882 = vadd.f32 %v3518, %v3725
  %v3883 = vadd.f32 %v3519, %v3725
  %v3884 = vadd.f32 %v3520, %v3725
  %v3885 = vadd.f32 %v3521, %v3725
  %v3886 = vadd.f32 %v3522, %v3725
  %v3887 = vadd.f32 %v3523, %v3725
  %v3888 = vadd.f32 %v3524, %v3725
  %v3889 = vadd.f32 %v3525, %v3730
  %v3890 = vadd.f32 %v3526, %v3730
  %v3891 = vadd.f32 %v3527, %v3730
  %v3892 = vadd.f32 %v3528, %v3730
  %v3893 = vadd.f32 %v3529, %v3730
  %v3894 = vadd.f32 %v3530, %v3730
  %v3895 = vadd.f32 %v3531, %v3730
  %v3896 = vadd.f32 %v3532, %v3735
  %v3897 = vadd.f32 %v3533, %v3735
  %v3898 = vadd.f32 %v3534, %v3735
  %v3899 = vadd.f32 %v3535, %v3735
  %v3900 = vadd.f32 %v3536, %v3735
  %v3901 = vadd.f32 %v3537, %v3735
  %v3902 = vadd.f32 %v3538, %v3735
  %v3903 = vadd.f32 %v3539, %v3740
  %v3904 = vadd.f32 %v3540, %v3740
  %v3905 = vadd.f32 %v3541, %v3740
  %v3906 = vadd.f32 %v3542, %v3740
  %v3907 = vadd.f32 %v3543, %v3740
  %v3908 = vadd.f32 %v3544, %v3740
  %v3909 = vadd.f32 %v3545, %v3740
  %v3910 = vadd.f32 %v3546, %v3745
  %v3911 = vadd.f32 %v3547, %v3745
  %v3912 = vadd.f32 %v3548, %v3745
  %v3913 = vadd.f32 %v3549, %v3745
  %v3914 = vadd.f32 %v3550, %v3745
  %v3915 = vadd.f32 %v3551, %v3745
  %v3916 = vadd.f32 %v3552, %v3745
  %v3917 = vadd.f32 %v3553, %v3750
  %v3918 = vadd.f32 %v3554, %v3750
  %v3919 = vadd.f32 %v3555, %v3750
  %v3920 = vadd.f32 %v3556, %v3750
  %v3921 = vadd.f32 %v3557, %v3750
  %v3922 = vadd.f32 %v3558, %v3750
  %v3923 = vadd.f32 %v3559, %v3750
  %v3924 = vadd.f32 %v3560, %v3755
  %v3925 = vadd.f32 %v3561, %v3755
  %v3926 = vadd.f32 %v3562, %v3755
  %v3927 = vadd.f32 %v3563, %v3755
  %v3928 = vadd.f32 %v3564, %v3755
  %v3929 = vadd.f32 %v3565, %v3755
  %v3930 = vadd.f32 %v3566, %v3755
  %v3931 = vadd.f32 %v3567, %v3760
  %v3932 = vadd.f32 %v3568, %v3760
  %v3933 = vadd.f32 %v3569, %v3760
  %v3934 = vadd.f32 %v3570, %v3760
  %v3935 = vadd.f32 %v3571, %v3760
  %v3936 = vadd.f32 %v3572, %v3760
  %v3937 = vadd.f32 %v3573, %v3760
  %v3938 = vadd.f32 %v3574, %v3765
  %v3939 = vadd.f32 %v3575, %v3765
  %v3940 = vadd.f32 %v3576, %v3765
  %v3941 = vadd.f32 %v3577, %v3765
  %v3942 = vadd.f32 %v3578, %v3765
  %v3943 = vadd.f32 %v3579, %v3765
  %v3944 = vadd.f32 %v3580, %v3765
  %v3945 = vadd.f32 %v3581, %v3770
  %v3946 = vadd.f32 %v3582, %v3770
  %v3947 = vadd.f32 %v3583, %v3770
  %v3948 = vadd.f32 %v3584, %v3770
  %v3949 = vadd.f32 %v3585, %v3770
  %v3950 = vadd.f32 %v3586, %v3770
  %v3951 = vadd.f32 %v3587, %v3770
  %v3952 = vadd.f32 %v3588, %v3775
  %v3953 = vadd.f32 %v3589, %v3775
  %v3954 = vadd.f32 %v3590, %v3775
  %v3955 = vadd.f32 %v3591, %v3775
  %v3956 = vadd.f32 %v3592, %v3775
  %v3957 = vadd.f32 %v3593, %v3775
  %v3958 = vadd.f32 %v3594, %v3775
  %v3959 = vadd.f32 %v3595, %v3780
  %v3960 = vadd.f32 %v3596, %v3780
  %v3961 = vadd.f32 %v3597, %v3780
  %v3962 = vadd.f32 %v3598, %v3780
  %v3963 = vadd.f32 %v3599, %v3780
  %v3964 = vadd.f32 %v3600, %v3780
  %v3965 = vadd.f32 %v3601, %v3780
  %v3966 = vadd.f32 %v3602, %v3785
  %v3967 = vadd.f32 %v3603, %v3785
  %v3968 = vadd.f32 %v3604, %v3785
  %v3969 = vadd.f32 %v3605, %v3785
  %v3970 = vadd.f32 %v3606, %v3785
  %v3971 = vadd.f32 %v3607, %v3785
  %v3972 = vadd.f32 %v3608, %v3785
  %v3973 = vadd.f32 %v3609, %v3790
  %v3974 = vadd.f32 %v3610, %v3790
  %v3975 = vadd.f32 %v3611, %v3790
  %v3976 = vadd.f32 %v3612, %v3790
  %v3977 = vadd.f32 %v3613, %v3790
  %v3978 = vadd.f32 %v3614, %v3790
  %v3979 = vadd.f32 %v3615, %v3790
  %v3980 = vadd.f32 %v3616, %v3795
  %v3981 = vadd.f32 %v3617, %v3795
  %v3982 = vadd.f32 %v3618, %v3795
  %v3983 = vadd.f32 %v3619, %v3795
  %v3984 = vadd.f32 %v3620, %v3795
  %v3985 = vadd.f32 %v3621, %v3795
  %v3986 = vadd.f32 %v3622, %v3795
  %v3987 = vadd.f32 %v3623, %v3800
  %v3988 = vadd.f32 %v3624, %v3800
  %v3989 = vadd.f32 %v3625, %v3800
  %v3990 = vadd.f32 %v3626, %v3800
  %v3991 = vadd.f32 %v3627, %v3800
  %v3992 = vadd.f32 %v3628, %v3800
  %v3993 = vadd.f32 %v3629, %v3800
  %v3994 = vadd.f32 %v3630, %v3805
  %v3995 = vadd.f32 %v3631, %v3805
  %v3996 = vadd.f32 %v3632, %v3805
  %v3997 = vadd.f32 %v3633, %v3805
  %v3998 = vadd.f32 %v3634, %v3805
  %v3999 = vadd.f32 %v3635, %v3805
  %v4000 = vadd.f32 %v3636, %v3805
  %v4001 = vadd.f32 %v3637, %v3810
  %v4002 = vadd.f32 %v3638, %v3810
  %v4003 = vadd.f32 %v3639, %v3810
  %v4004 = vadd.f32 %v3640, %v3810
  %v4005 = vadd.f32 %v3641, %v3810
  %v4006 = vadd.f32 %v3642, %v3810
  %v4007 = vadd.f32 %v3643, %v3810
  %v4008 = vmax.f32 %v3812, 0.0
  %v4009 = vmax.f32 %v3813, 0.0
  %v4010 = vmax.f32 %v3814, 0.0
  %v4011 = vmax.f32 %v3815, 0.0
  %v4012 = vmax.f32 %v3816, 0.0
  %v4013 = vmax.f32 %v3817, 0.0
  %v4014 = vmax.f32 %v3818, 0.0
  %v4015 = vmax.f32 %v3819, 0.0
  %v4016 = vmax.f32 %v3820, 0.0
  %v4017 = vmax.f32 %v3821, 0.0
  %v4018 = vmax.f32 %v3822, 0.0
  %v4019 = vmax.f32 %v3823, 0.0
  %v4020 = vmax.f32 %v3824, 0.0
  %v4021 = vmax.f32 %v3825, 0.0
  %v4022 = vmax.f32 %v3826, 0.0
  %v4023 = vmax.f32 %v3827, 0.0
  %v4024 = vmax.f32 %v3828, 0.0
  %v4025 = vmax.f32 %v3829, 0.0
  %v4026 = vmax.f32 %v3830, 0.0
  %v4027 = vmax.f32 %v3831, 0.0
  %v4028 = vmax.f32 %v3832, 0.0
  %v4029 = vmax.f32 %v3833, 0.0
  %v4030 = vmax.f32 %v3834, 0.0
  %v4031 = vmax.f32 %v3835, 0.0
  %v4032 = vmax.f32 %v3836, 0.0
  %v4033 = vmax.f32 %v3837, 0.0
  %v4034 = vmax.f32 %v3838, 0.0
  %v4035 = vmax.f32 %v3839, 0.0
  %v4036 = vmax.f32 %v3840, 0.0
  %v4037 = vmax.f32 %v3841, 0.0
  %v4038 = vmax.f32 %v3842, 0.0
  %v4039 = vmax.f32 %v3843, 0.0
  %v4040 = vmax.f32 %v3844, 0.0
  %v4041 = vmax.f32 %v3845, 0.0
  %v4042 = vmax.f32 %v3846, 0.0
  %v4043 = vmax.f32 %v3847, 0.0
  %v4044 = vmax.f32 %v3848, 0.0
  %v4045 = vmax.f32 %v3849, 0.0
  %v4046 = vmax.f32 %v3850, 0.0
  %v4047 = vmax.f32 %v3851, 0.0
  %v4048 = vmax.f32 %v3852, 0.0
  %v4049 = vmax.f32 %v3853, 0.0
  %v4050 = vmax.f32 %v3854, 0.0
  %v4051 = vmax.f32 %v3855, 0.0
  %v4052 = vmax.f32 %v3856, 0.0
  %v4053 = vmax.f32 %v3857, 0.0
  %v4054 = vmax.f32 %v3858, 0.0
  %v4055 = vmax.f32 %v3859, 0.0
  %v4056 = vmax.f32 %v3860, 0.0
  %v4057 = vmax.f32 %v3861, 0.0
  %v4058 = vmax.f32 %v3862, 0.0
  %v4059 = vmax.f32 %v3863, 0.0
  %v4060 = vmax.f32 %v3864, 0.0
  %v4061 = vmax.f32 %v3865, 0.0
  %v4062 = vmax.f32 %v3866, 0.0
  %v4063 = vmax.f32 %v3867, 0.0
  %v4064 = vmax.f32 %v3868, 0.0
  %v4065 = vmax.f32 %v3869, 0.0
  %v4066 = vmax.f32 %v3870, 0.0
  %v4067 = vmax.f32 %v3871, 0.0
  %v4068 = vmax.f32 %v3872, 0.0
  %v4069 = vmax.f32 %v3873, 0.0
  %v4070 = vmax.f32 %v3874, 0.0
  %v4071 = vmax.f32 %v3875, 0.0
  %v4072 = vmax.f32 %v3876, 0.0
  %v4073 = vmax.f32 %v3877, 0.0
  %v4074 = vmax.f32 %v3878, 0.0
  %v4075 = vmax.f32 %v3879, 0.0
  %v4076 = vmax.f32 %v3880, 0.0
  %v4077 = vmax.f32 %v3881, 0.0
  %v4078 = vmax.f32 %v3882, 0.0
  %v4079 = vmax.f32 %v3883, 0.0
  %v4080 = vmax.f32 %v3884, 0.0
  %v4081 = vmax.f32 %v3885, 0.0
  %v4082 = vmax.f32 %v3886, 0.0
  %v4083 = vmax.f32 %v3887, 0.0
  %v4084 = vmax.f32 %v3888, 0.0
  %v4085 = vmax.f32 %v3889, 0.0
  %v4086 = vmax.f32 %v3890, 0.0
  %v4087 = vmax.f32 %v3891, 0.0
  %v4088 = vmax.f32 %v3892, 0.0
  %v4089 = vmax.f32 %v3893, 0.0
  %v4090 = vmax.f32 %v3894, 0.0
  %v4091 = vmax.f32 %v3895, 0.0
  %v4092 = vmax.f32 %v3896, 0.0
  %v4093 = vmax.f32 %v3897, 0.0
  %v4094 = vmax.f32 %v3898, 0.0
  %v4095 = vmax.f32 %v3899, 0.0
  %v4096 = vmax.f32 %v3900, 0.0
  %v4097 = vmax.f32 %v3901, 0.0
  %v4098 = vmax.f32 %v3902, 0.0
  %v4099 = vmax.f32 %v3903, 0.0
  %v4100 = vmax.f32 %v3904, 0.0
  %v4101 = vmax.f32 %v3905, 0.0
  %v4102 = vmax.f32 %v3906, 0.0
  %v4103 = vmax.f32 %v3907, 0.0
  %v4104 = vmax.f32 %v3908, 0.0
  %v4105 = vmax.f32 %v3909, 0.0
  %v4106 = vmax.f32 %v3910, 0.0
  %v4107 = vmax.f32 %v3911, 0.0
  %v4108 = vmax.f32 %v3912, 0.0
  %v4109 = vmax.f32 %v3913, 0.0
  %v4110 = vmax.f32 %v3914, 0.0
  %v4111 = vmax.f32 %v3915, 0.0
  %v4112 = vmax.f32 %v3916, 0.0
  %v4113 = vmax.f32 %v3917, 0.0
  %v4114 = vmax.f32 %v3918, 0.0
  %v4115 = vmax.f32 %v3919, 0.0
  %v4116 = vmax.f32 %v3920, 0.0
  %v4117 = vmax.f32 %v3921, 0.0
  %v4118 = vmax.f32 %v3922, 0.0
  %v4119 = vmax.f32 %v3923, 0.0
  %v4120 = vmax.f32 %v3924, 0.0
  %v4121 = vmax.f32 %v3925, 0.0
  %v4122 = vmax.f32 %v3926, 0.0
  %v4123 = vmax.f32 %v3927, 0.0
  %v4124 = vmax.f32 %v3928, 0.0
  %v4125 = vmax.f32 %v3929, 0.0
  %v4126 = vmax.f32 %v3930, 0.0
  %v4127 = vmax.f32 %v3931, 0.0
  %v4128 = vmax.f32 %v3932, 0.0
  %v4129 = vmax.f32 %v3933, 0.0
  %v4130 = vmax.f32 %v3934, 0.0
  %v4131 = vmax.f32 %v3935, 0.0
  %v4132 = vmax.f32 %v3936, 0.0
  %v4133 = vmax.f32 %v3937, 0.0
  %v4134 = vmax.f32 %v3938, 0.0
  %v4135 = vmax.f32 %v3939, 0.0
  %v4136 = vmax.f32 %v3940, 0.0
  %v4137 = vmax.f32 %v3941, 0.0
  %v4138 = vmax.f32 %v3942, 0.0
  %v4139 = vmax.f32 %v3943, 0.0
  %v4140 = vmax.f32 %v3944, 0.0
  %v4141 = vmax.f32 %v3945, 0.0
  %v4142 = vmax.f32 %v3946, 0.0
  %v4143 = vmax.f32 %v3947, 0.0
  %v4144 = vmax.f32 %v3948, 0.0
  %v4145 = vmax.f32 %v3949, 0.0
  %v4146 = vmax.f32 %v3950, 0.0
  %v4147 = vmax.f32 %v3951, 0.0
  %v4148 = vmax.f32 %v3952, 0.0
  %v4149 = vmax.f32 %v3953, 0.0
  %v4150 = vmax.f32 %v3954, 0.0
  %v4151 = vmax.f32 %v3955, 0.0
  %v4152 = vmax.f32 %v3956, 0.0
  %v4153 = vmax.f32 %v3957, 0.0
  %v4154 = vmax.f32 %v3958, 0.0
  %v4155 = vmax.f32 %v3959, 0.0
  %v4156 = vmax.f32 %v3960, 0.0
  %v4157 = vmax.f32 %v3961, 0.0
  %v4158 = vmax.f32 %v3962, 0.0
  %v4159 = vmax.f32 %v3963, 0.0
  %v4160 = vmax.f32 %v3964, 0.0
  %v4161 = vmax.f32 %v3965, 0.0
  %v4162 = vmax.f32 %v3966, 0.0
  %v4163 = vmax.f32 %v3967, 0.0
  %v4164 = vmax.f32 %v3968, 0.0
  %v4165 = vmax.f32 %v3969, 0.0
  %v4166 = vmax.f32 %v3970, 0.0
  %v4167 = vmax.f32 %v3971, 0.0
  %v4168 = vmax.f32 %v3972, 0.0
  %v4169 = vmax.f32 %v3973, 0.0
  %v4170 = vmax.f32 %v3974, 0.0
  %v4171 = vmax.f32 %v3975, 0.0
  %v4172 = vmax.f32 %v3976, 0.0
  %v4173 = vmax.f32 %v3977, 0.0
  %v4174 = vmax.f32 %v3978, 0.0
  %v4175 = vmax.f32 %v3979, 0.0
  %v4176 = vmax.f32 %v3980, 0.0
  %v4177 = vmax.f32 %v3981, 0.0
  %v4178 = vmax.f32 %v3982, 0.0
  %v4179 = vmax.f32 %v3983, 0.0
  %v4180 = vmax.f32 %v3984, 0.0
  %v4181 = vmax.f32 %v3985, 0.0
  %v4182 = vmax.f32 %v3986, 0.0
  %v4183 = vmax.f32 %v3987, 0.0
  %v4184 = vmax.f32 %v3988, 0.0
  %v4185 = vmax.f32 %v3989, 0.0
  %v4186 = vmax.f32 %v3990, 0.0
  %v4187 = vmax.f32 %v3991, 0.0
  %v4188 = vmax.f32 %v3992, 0.0
  %v4189 = vmax.f32 %v3993, 0.0
  %v4190 = vmax.f32 %v3994, 0.0
  %v4191 = vmax.f32 %v3995, 0.0
  %v4192 = vmax.f32 %v3996, 0.0
  %v4193 = vmax.f32 %v3997, 0.0
  %v4194 = vmax.f32 %v3998, 0.0
  %v4195 = vmax.f32 %v3999, 0.0
  %v4196 = vmax.f32 %v4000, 0.0
  %v4197 = vmax.f32 %v4001, 0.0
  %v4198 = vmax.f32 %v4002, 0.0
  %v4199 = vmax.f32 %v4003, 0.0
  %v4200 = vmax.f32 %v4004, 0.0
  %v4201 = vmax.f32 %v4005, 0.0
  %v4202 = vmax.f32 %v4006, 0.0
  %v4203 = vmax.f32 %v4007, 0.0
  %v4204 = vld [vmem:[%s5] sm:$0xff]
  %v4205 = vld [vmem:[%s5 + $0x8] sm:$0xff]
  %v4206 = vld [vmem:[%s5 + $0x10] sm:$0xff]
  %v4207 = vld [vmem:[%s5 + $0x18] sm:$0xff]
  %v4208 = vld [vmem:[%s5 + $0x20] sm:$0xff]
  %v4209 = vld [vmem:[%s5 + $0x28] sm:$0xff]
  %v4210 = vld [vmem:[%s5 + $0x30] sm:$0xff]
  %v4211 = vld [vmem:[%s5 + $0x38] sm:$0xff]
  %v4212 = vld [vmem:[%s5 + $0x40] sm:$0xff]
  %v4213 = vld [vmem:[%s5 + $0x48] sm:$0xff]
  %v4214 = vld [vmem:[%s5 + $0x50] sm:$0xff]
  %v4215 = vld [vmem:[%s5 + $0x58] sm:$0xff]
  %v4216 = vld [vmem:[%s5 + $0x60] sm:$0xff]
  %v4217 = vld [vmem:[%s5 + $0x68] sm:$0xff]
  %v4218 = vld [vmem:[%s5 + $0x70] sm:$0xff]
  %v4219 = vld [vmem:[%s5 + $0x78] sm:$0xff]
  %v4220 = vld [vmem:[%s5 + $0x80] sm:$0xff]
  %v4221 = vld [vmem:[%s5 + $0x88] sm:$0xff]
  %v4222 = vld [vmem:[%s5 + $0x90] sm:$0xff]
  %v4223 = vld [vmem:[%s5 + $0x98] sm:$0xff]
  %v4224 = vld [vmem:[%s5 + $0xa0] sm:$0xff]
  %v4225 = vld [vmem:[%s5 + $0xa8] sm:$0xff]
  %v4226 = vld [vmem:[%s5 + $0xb0] sm:$0xff]
  %v4227 = vld [vmem:[%s5 + $0xb8] sm:$0xff]
  %v4228 = vld [vmem:[%s5 + $0xc0] sm:$0xff]
  %v4229 = vld [vmem:[%s5 + $0xc8] sm:$0xff]
  %v4230 = vld [vmem:[%s5 + $0xd0] sm:$0xff]
  %v4231 = vld [vmem:[%s5 + $0xd8] sm:$0xff]
  %v4232 = vrot.slane %v4008, 1
  %v4233 = vrot.slane %v4009, 1
  %v4234 = vrot.slane %v4010, 1
  %v4235 = vrot.slane %v4011, 1
  %v4236 = vrot.slane %v4012, 1
  %v4237 = vrot.slane %v4013, 1
  %v4238 = vrot.slane %v4014, 1
  %v4239 = vrot.slane %v4015, 1
  %v4240 = vrot.slane %v4016, 1
  %v4241 = vrot.slane %v4017, 1
  %v4242 = vrot.slane %v4018, 1
  %v4243 = vrot.slane %v4019, 1
  %v4244 = vrot.slane %v4020, 1
  %v4245 = vrot.slane %v4021, 1
  %v4246 = vrot.slane %v4022, 1
  %v4247 = vrot.slane %v4023, 1
  %v4248 = vrot.slane %v4024, 1
  %v4249 = vrot.slane %v4025, 1
  %v4250 = vrot.slane %v4026, 1
  %v4251 = vrot.slane %v4027, 1
  %v4252 = vrot.slane %v4028, 1
  %v4253 = vrot.slane %v4029, 1
  %v4254 = vrot.slane %v4030, 1
  %v4255 = vrot.slane %v4031, 1
  %v4256 = vrot.slane %v4032, 1
  %v4257 = vrot.slane %v4033, 1
  %v4258 = vrot.slane %v4034, 1
  %v4259 = vrot.slane %v4035, 1
  %v4260 = vrot.slane %v4036, 1
  %v4261 = vrot.slane %v4037, 1
  %v4262 = vrot.slane %v4038, 1
  %v4263 = vrot.slane %v4039, 1
  %v4264 = vrot.slane %v4040, 1
  %v4265 = vrot.slane %v4041, 1
  %v4266 = vrot.slane %v4042, 1
  %v4267 = vrot.slane %v4043, 1
  %v4268 = vrot.slane %v4044, 1
  %v4269 = vrot.slane %v4045, 1
  %v4270 = vrot.slane %v4046, 1
  %v4271 = vrot.slane %v4047, 1
  %v4272 = vrot.slane %v4048, 1
  %v4273 = vrot.slane %v4049, 1
  %v4274 = vrot.slane %v4050, 1
  %v4275 = vrot.slane %v4051, 1
  %v4276 = vrot.slane %v4052, 1
  %v4277 = vrot.slane %v4053, 1
  %v4278 = vrot.slane %v4054, 1
  %v4279 = vrot.slane %v4055, 1
  %v4280 = vrot.slane %v4056, 1
  %v4281 = vrot.slane %v4057, 1
  %v4282 = vrot.slane %v4058, 1
  %v4283 = vrot.slane %v4059, 1
  %v4284 = vrot.slane %v4060, 1
  %v4285 = vrot.slane %v4061, 1
  %v4286 = vrot.slane %v4062, 1
  %v4287 = vrot.slane %v4063, 1
  %v4288 = vrot.slane %v4064, 1
  %v4289 = vrot.slane %v4065, 1
  %v4290 = vrot.slane %v4066, 1
  %v4291 = vrot.slane %v4067, 1
  %v4292 = vrot.slane %v4068, 1
  %v4293 = vrot.slane %v4069, 1
  %v4294 = vrot.slane %v4070, 1
  %v4295 = vrot.slane %v4071, 1
  %v4296 = vrot.slane %v4072, 1
  %v4297 = vrot.slane %v4073, 1
  %v4298 = vrot.slane %v4074, 1
  %v4299 = vrot.slane %v4075, 1
  %v4300 = vrot.slane %v4076, 1
  %v4301 = vrot.slane %v4077, 1
  %v4302 = vrot.slane %v4078, 1
  %v4303 = vrot.slane %v4079, 1
  %v4304 = vrot.slane %v4080, 1
  %v4305 = vrot.slane %v4081, 1
  %v4306 = vrot.slane %v4082, 1
  %v4307 = vrot.slane %v4083, 1
  %v4308 = vrot.slane %v4084, 1
  %v4309 = vrot.slane %v4085, 1
  %v4310 = vrot.slane %v4086, 1
  %v4311 = vrot.slane %v4087, 1
  %v4312 = vrot.slane %v4088, 1
  %v4313 = vrot.slane %v4089, 1
  %v4314 = vrot.slane %v4090, 1
  %v4315 = vrot.slane %v4091, 1
  %v4316 = vrot.slane %v4092, 1
  %v4317 = vrot.slane %v4093, 1
  %v4318 = vrot.slane %v4094, 1
  %v4319 = vrot.slane %v4095, 1
  %v4320 = vrot.slane %v4096, 1
  %v4321 = vrot.slane %v4097, 1
  %v4322 = vrot.slane %v4098, 1
  %v4323 = vrot.slane %v4099, 1
  %v4324 = vrot.slane %v4100, 1
  %v4325 = vrot.slane %v4101, 1
  %v4326 = vrot.slane %v4102, 1
  %v4327 = vrot.slane %v4103, 1
  %v4328 = vrot.slane %v4104, 1
  %v4329 = vrot.slane %v4105, 1
  %v4330 = vrot.slane %v4106, 1
  %v4331 = vrot.slane %v4107, 1
  %v4332 = vrot.slane %v4108, 1
  %v4333 = vrot.slane %v4109, 1
  %v4334 = vrot.slane %v4110, 1
  %v4335 = vrot.slane %v4111, 1
  %v4336 = vrot.slane %v4112, 1
  %v4337 = vrot.slane %v4113, 1
  %v4338 = vrot.slane %v4114, 1
  %v4339 = vrot.slane %v4115, 1
  %v4340 = vrot.slane %v4116, 1
  %v4341 = vrot.slane %v4117, 1
  %v4342 = vrot.slane %v4118, 1
  %v4343 = vrot.slane %v4119, 1
  %v4344 = vrot.slane %v4120, 1
  %v4345 = vrot.slane %v4121, 1
  %v4346 = vrot.slane %v4122, 1
  %v4347 = vrot.slane %v4123, 1
  %v4348 = vrot.slane %v4124, 1
  %v4349 = vrot.slane %v4125, 1
  %v4350 = vrot.slane %v4126, 1
  %v4351 = vrot.slane %v4127, 1
  %v4352 = vrot.slane %v4128, 1
  %v4353 = vrot.slane %v4129, 1
  %v4354 = vrot.slane %v4130, 1
  %v4355 = vrot.slane %v4131, 1
  %v4356 = vrot.slane %v4132, 1
  %v4357 = vrot.slane %v4133, 1
  %v4358 = vrot.slane %v4134, 1
  %v4359 = vrot.slane %v4135, 1
  %v4360 = vrot.slane %v4136, 1
  %v4361 = vrot.slane %v4137, 1
  %v4362 = vrot.slane %v4138, 1
  %v4363 = vrot.slane %v4139, 1
  %v4364 = vrot.slane %v4140, 1
  %v4365 = vrot.slane %v4141, 1
  %v4366 = vrot.slane %v4142, 1
  %v4367 = vrot.slane %v4143, 1
  %v4368 = vrot.slane %v4144, 1
  %v4369 = vrot.slane %v4145, 1
  %v4370 = vrot.slane %v4146, 1
  %v4371 = vrot.slane %v4147, 1
  %v4372 = vrot.slane %v4148, 1
  %v4373 = vrot.slane %v4149, 1
  %v4374 = vrot.slane %v4150, 1
  %v4375 = vrot.slane %v4151, 1
  %v4376 = vrot.slane %v4152, 1
  %v4377 = vrot.slane %v4153, 1
  %v4378 = vrot.slane %v4154, 1
  %v4379 = vrot.slane %v4155, 1
  %v4380 = vrot.slane %v4156, 1
  %v4381 = vrot.slane %v4157, 1
  %v4382 = vrot.slane %v4158, 1
  %v4383 = vrot.slane %v4159, 1
  %v4384 = vrot.slane %v4160, 1
  %v4385 = vrot.slane %v4161, 1
  %v4386 = vrot.slane %v4162, 1
  %v4387 = vrot.slane %v4163, 1
  %v4388 = vrot.slane %v4164, 1
  %v4389 = vrot.slane %v4165, 1
  %v4390 = vrot.slane %v4166, 1
  %v4391 = vrot.slane %v4167, 1
  %v4392 = vrot.slane %v4168, 1
  %v4393 = vrot.slane %v4169, 1
  %v4394 = vrot.slane %v4170, 1
  %v4395 = vrot.slane %v4171, 1
  %v4396 = vrot.slane %v4172, 1
  %v4397 = vrot.slane %v4173, 1
  %v4398 = vrot.slane %v4174, 1
  %v4399 = vrot.slane %v4175, 1
  %v4400 = vrot.slane %v4176, 1
  %v4401 = vrot.slane %v4177, 1
  %v4402 = vrot.slane %v4178, 1
  %v4403 = vrot.slane %v4179, 1
  %v4404 = vrot.slane %v4180, 1
  %v4405 = vrot.slane %v4181, 1
  %v4406 = vrot.slane %v4182, 1
  %v4407 = vrot.slane %v4183, 1
  %v4408 = vrot.slane %v4184, 1
  %v4409 = vrot.slane %v4185, 1
  %v4410 = vrot.slane %v4186, 1
  %v4411 = vrot.slane %v4187, 1
  %v4412 = vrot.slane %v4188, 1
  %v4413 = vrot.slane %v4189, 1
  %v4414 = vrot.slane %v4190, 1
  %v4415 = vrot.slane %v4191, 1
  %v4416 = vrot.slane %v4192, 1
  %v4417 = vrot.slane %v4193, 1
  %v4418 = vrot.slane %v4194, 1
  %v4419 = vrot.slane %v4195, 1
  %v4420 = vrot.slane %v4196, 1
  %v4421 = vrot.slane %v4197, 1
  %v4422 = vrot.slane %v4198, 1
  %v4423 = vrot.slane %v4199, 1
  %v4424 = vrot.slane %v4200, 1
  %v4425 = vrot.slane %v4201, 1
  %v4426 = vrot.slane %v4202, 1
  %v4427 = vrot.slane %v4203, 1
  %v4428 = vlaneseq
  %v4429 = vshrl.u32 %v4428, 7
  %vm4430 = vcmp.lt.s32.totalorder %v4429, 7
  %v4431 = vsel %vm4430, %v4414, %v4421
  %v4432 = vsel %vm4430, %v4415, %v4422
  %v4433 = vsel %vm4430, %v4416, %v4423
  %v4434 = vsel %vm4430, %v4417, %v4424
  %v4435 = vsel %vm4430, %v4418, %v4425
  %v4436 = vsel %vm4430, %v4419, %v4426
  %v4437 = vsel %vm4430, %v4420, %v4427
  %v4438 = vsel %vm4430, %v4407, %v4414
  %v4439 = vsel %vm4430, %v4408, %v4415
  %v4440 = vsel %vm4430, %v4409, %v4416
  %v4441 = vsel %vm4430, %v4410, %v4417
  %v4442 = vsel %vm4430, %v4411, %v4418
  %v4443 = vsel %vm4430, %v4412, %v4419
  %v4444 = vsel %vm4430, %v4413, %v4420
  %v4445 = vsel %vm4430, %v4400, %v4407
  %v4446 = vsel %vm4430, %v4401, %v4408
  %v4447 = vsel %vm4430, %v4402, %v4409
  %v4448 = vsel %vm4430, %v4403, %v4410
  %v4449 = vsel %vm4430, %v4404, %v4411
  %v4450 = vsel %vm4430, %v4405, %v4412
  %v4451 = vsel %vm4430, %v4406, %v4413
  %v4452 = vsel %vm4430, %v4393, %v4400
  %v4453 = vsel %vm4430, %v4394, %v4401
  %v4454 = vsel %vm4430, %v4395, %v4402
  %v4455 = vsel %vm4430, %v4396, %v4403
  %v4456 = vsel %vm4430, %v4397, %v4404
  %v4457 = vsel %vm4430, %v4398, %v4405
  %v4458 = vsel %vm4430, %v4399, %v4406
  %v4459 = vsel %vm4430, %v4386, %v4393
  %v4460 = vsel %vm4430, %v4387, %v4394
  %v4461 = vsel %vm4430, %v4388, %v4395
  %v4462 = vsel %vm4430, %v4389, %v4396
  %v4463 = vsel %vm4430, %v4390, %v4397
  %v4464 = vsel %vm4430, %v4391, %v4398
  %v4465 = vsel %vm4430, %v4392, %v4399
  %v4466 = vsel %vm4430, %v4379, %v4386
  %v4467 = vsel %vm4430, %v4380, %v4387
  %v4468 = vsel %vm4430, %v4381, %v4388
  %v4469 = vsel %vm4430, %v4382, %v4389
  %v4470 = vsel %vm4430, %v4383, %v4390
  %v4471 = vsel %vm4430, %v4384, %v4391
  %v4472 = vsel %vm4430, %v4385, %v4392
  %v4473 = vsel %vm4430, %v4372, %v4379
  %v4474 = vsel %vm4430, %v4373, %v4380
  %v4475 = vsel %vm4430, %v4374, %v4381
  %v4476 = vsel %vm4430, %v4375, %v4382
  %v4477 = vsel %vm4430, %v4376, %v4383
  %v4478 = vsel %vm4430, %v4377, %v4384
  %v4479 = vsel %vm4430, %v4378, %v4385
  %v4480 = vsel %vm4430, %v4365, %v4372
  %v4481 = vsel %vm4430, %v4366, %v4373
  %v4482 = vsel %vm4430, %v4367, %v4374
  %v4483 = vsel %vm4430, %v4368, %v4375
  %v4484 = vsel %vm4430, %v4369, %v4376
  %v4485 = vsel %vm4430, %v4370, %v4377
  %v4486 = vsel %vm4430, %v4371, %v4378
  %v4487 = vsel %vm4430, %v4358, %v4365
  %v4488 = vsel %vm4430, %v4359, %v4366
  %v4489 = vsel %vm4430, %v4360, %v4367
  %v4490 = vsel %vm4430, %v4361, %v4368
  %v4491 = vsel %vm4430, %v4362, %v4369
  %v4492 = vsel %vm4430, %v4363, %v4370
  %v4493 = vsel %vm4430, %v4364, %v4371
  %v4494 = vsel %vm4430, %v4351, %v4358
  %v4495 = vsel %vm4430, %v4352, %v4359
  %v4496 = vsel %vm4430, %v4353, %v4360
  %v4497 = vsel %vm4430, %v4354, %v4361
  %v4498 = vsel %vm4430, %v4355, %v4362
  %v4499 = vsel %vm4430, %v4356, %v4363
  %v4500 = vsel %vm4430, %v4357, %v4364
  %v4501 = vsel %vm4430, %v4344, %v4351
  %v4502 = vsel %vm4430, %v4345, %v4352
  %v4503 = vsel %vm4430, %v4346, %v4353
  %v4504 = vsel %vm4430, %v4347, %v4354
  %v4505 = vsel %vm4430, %v4348, %v4355
  %v4506 = vsel %vm4430, %v4349, %v4356
  %v4507 = vsel %vm4430, %v4350, %v4357
  %v4508 = vsel %vm4430, %v4337, %v4344
  %v4509 = vsel %vm4430, %v4338, %v4345
  %v4510 = vsel %vm4430, %v4339, %v4346
  %v4511 = vsel %vm4430, %v4340, %v4347
  %v4512 = vsel %vm4430, %v4341, %v4348
  %v4513 = vsel %vm4430, %v4342, %v4349
  %v4514 = vsel %vm4430, %v4343, %v4350
  %v4515 = vsel %vm4430, %v4330, %v4337
  %v4516 = vsel %vm4430, %v4331, %v4338
  %v4517 = vsel %vm4430, %v4332, %v4339
  %v4518 = vsel %vm4430, %v4333, %v4340
  %v4519 = vsel %vm4430, %v4334, %v4341
  %v4520 = vsel %vm4430, %v4335, %v4342
  %v4521 = vsel %vm4430, %v4336, %v4343
  %v4522 = vsel %vm4430, %v4323, %v4330
  %v4523 = vsel %vm4430, %v4324, %v4331
  %v4524 = vsel %vm4430, %v4325, %v4332
  %v4525 = vsel %vm4430, %v4326, %v4333
  %v4526 = vsel %vm4430, %v4327, %v4334
  %v4527 = vsel %vm4430, %v4328, %v4335
  %v4528 = vsel %vm4430, %v4329, %v4336
  %v4529 = vsel %vm4430, %v4316, %v4323
  %v4530 = vsel %vm4430, %v4317, %v4324
  %v4531 = vsel %vm4430, %v4318, %v4325
  %v4532 = vsel %vm4430, %v4319, %v4326
  %v4533 = vsel %vm4430, %v4320, %v4327
  %v4534 = vsel %vm4430, %v4321, %v4328
  %v4535 = vsel %vm4430, %v4322, %v4329
  %v4536 = vsel %vm4430, %v4309, %v4316
  %v4537 = vsel %vm4430, %v4310, %v4317
  %v4538 = vsel %vm4430, %v4311, %v4318
  %v4539 = vsel %vm4430, %v4312, %v4319
  %v4540 = vsel %vm4430, %v4313, %v4320
  %v4541 = vsel %vm4430, %v4314, %v4321
  %v4542 = vsel %vm4430, %v4315, %v4322
  %v4543 = vsel %vm4430, %v4302, %v4309
  %v4544 = vsel %vm4430, %v4303, %v4310
  %v4545 = vsel %vm4430, %v4304, %v4311
  %v4546 = vsel %vm4430, %v4305, %v4312
  %v4547 = vsel %vm4430, %v4306, %v4313
  %v4548 = vsel %vm4430, %v4307, %v4314
  %v4549 = vsel %vm4430, %v4308, %v4315
  %v4550 = vsel %vm4430, %v4295, %v4302
  %v4551 = vsel %vm4430, %v4296, %v4303
  %v4552 = vsel %vm4430, %v4297, %v4304
  %v4553 = vsel %vm4430, %v4298, %v4305
  %v4554 = vsel %vm4430, %v4299, %v4306
  %v4555 = vsel %vm4430, %v4300, %v4307
  %v4556 = vsel %vm4430, %v4301, %v4308
  %v4557 = vsel %vm4430, %v4288, %v4295
  %v4558 = vsel %vm4430, %v4289, %v4296
  %v4559 = vsel %vm4430, %v4290, %v4297
  %v4560 = vsel %vm4430, %v4291, %v4298
  %v4561 = vsel %vm4430, %v4292, %v4299
  %v4562 = vsel %vm4430, %v4293, %v4300
  %v4563 = vsel %vm4430, %v4294, %v4301
  %v4564 = vsel %vm4430, %v4281, %v4288
  %v4565 = vsel %vm4430, %v4282, %v4289
  %v4566 = vsel %vm4430, %v4283, %v4290
  %v4567 = vsel %vm4430, %v4284, %v4291
  %v4568 = vsel %vm4430, %v4285, %v4292
  %v4569 = vsel %vm4430, %v4286, %v4293
  %v4570 = vsel %vm4430, %v4287, %v4294
  %v4571 = vsel %vm4430, %v4274, %v4281
  %v4572 = vsel %vm4430, %v4275, %v4282
  %v4573 = vsel %vm4430, %v4276, %v4283
  %v4574 = vsel %vm4430, %v4277, %v4284
  %v4575 = vsel %vm4430, %v4278, %v4285
  %v4576 = vsel %vm4430, %v4279, %v4286
  %v4577 = vsel %vm4430, %v4280, %v4287
  %v4578 = vsel %vm4430, %v4267, %v4274
  %v4579 = vsel %vm4430, %v4268, %v4275
  %v4580 = vsel %vm4430, %v4269, %v4276
  %v4581 = vsel %vm4430, %v4270, %v4277
  %v4582 = vsel %vm4430, %v4271, %v4278
  %v4583 = vsel %vm4430, %v4272, %v4279
  %v4584 = vsel %vm4430, %v4273, %v4280
  %v4585 = vsel %vm4430, %v4260, %v4267
  %v4586 = vsel %vm4430, %v4261, %v4268
  %v4587 = vsel %vm4430, %v4262, %v4269
  %v4588 = vsel %vm4430, %v4263, %v4270
  %v4589 = vsel %vm4430, %v4264, %v4271
  %v4590 = vsel %vm4430, %v4265, %v4272
  %v4591 = vsel %vm4430, %v4266, %v4273
  %v4592 = vsel %vm4430, %v4253, %v4260
  %v4593 = vsel %vm4430, %v4254, %v4261
  %v4594 = vsel %vm4430, %v4255, %v4262
  %v4595 = vsel %vm4430, %v4256, %v4263
  %v4596 = vsel %vm4430, %v4257, %v4264
  %v4597 = vsel %vm4430, %v4258, %v4265
  %v4598 = vsel %vm4430, %v4259, %v4266
  %v4599 = vsel %vm4430, %v4246, %v4253
  %v4600 = vsel %vm4430, %v4247, %v4254
  %v4601 = vsel %vm4430, %v4248, %v4255
  %v4602 = vsel %vm4430, %v4249, %v4256
  %v4603 = vsel %vm4430, %v4250, %v4257
  %v4604 = vsel %vm4430, %v4251, %v4258
  %v4605 = vsel %vm4430, %v4252, %v4259
  %v4606 = vsel %vm4430, %v4239, %v4246
  %v4607 = vsel %vm4430, %v4240, %v4247
  %v4608 = vsel %vm4430, %v4241, %v4248
  %v4609 = vsel %vm4430, %v4242, %v4249
  %v4610 = vsel %vm4430, %v4243, %v4250
  %v4611 = vsel %vm4430, %v4244, %v4251
  %v4612 = vsel %vm4430, %v4245, %v4252
  %v4613 = vsel %vm4430, %v4232, %v4239
  %v4614 = vsel %vm4430, %v4233, %v4240
  %v4615 = vsel %vm4430, %v4234, %v4241
  %v4616 = vsel %vm4430, %v4235, %v4242
  %v4617 = vsel %vm4430, %v4236, %v4243
  %v4618 = vsel %vm4430, %v4237, %v4244
  %v4619 = vsel %vm4430, %v4238, %v4245
  %v4620 = vsel %vm4430, %v4421, %v4232
  %v4621 = vsel %vm4430, %v4422, %v4233
  %v4622 = vsel %vm4430, %v4423, %v4234
  %v4623 = vsel %vm4430, %v4424, %v4235
  %v4624 = vsel %vm4430, %v4425, %v4236
  %v4625 = vsel %vm4430, %v4426, %v4237
  %v4626 = vsel %vm4430, %v4427, %v4238
  %v4627 = vmax.f32 %v4008, %v4613
  %v4628 = vmax.f32 %v4009, %v4614
  %v4629 = vmax.f32 %v4010, %v4615
  %v4630 = vmax.f32 %v4011, %v4616
  %v4631 = vmax.f32 %v4012, %v4617
  %v4632 = vmax.f32 %v4013, %v4618
  %v4633 = vmax.f32 %v4014, %v4619
  %v4634 = vmax.f32 %v4015, %v4606
  %v4635 = vmax.f32 %v4016, %v4607
  %v4636 = vmax.f32 %v4017, %v4608
  %v4637 = vmax.f32 %v4018, %v4609
  %v4638 = vmax.f32 %v4019, %v4610
  %v4639 = vmax.f32 %v4020, %v4611
  %v4640 = vmax.f32 %v4021, %v4612
  %v4641 = vmax.f32 %v4022, %v4599
  %v4642 = vmax.f32 %v4023, %v4600
  %v4643 = vmax.f32 %v4024, %v4601
  %v4644 = vmax.f32 %v4025, %v4602
  %v4645 = vmax.f32 %v4026, %v4603
  %v4646 = vmax.f32 %v4027, %v4604
  %v4647 = vmax.f32 %v4028, %v4605
  %v4648 = vmax.f32 %v4029, %v4592
  %v4649 = vmax.f32 %v4030, %v4593
  %v4650 = vmax.f32 %v4031, %v4594
  %v4651 = vmax.f32 %v4032, %v4595
  %v4652 = vmax.f32 %v4033, %v4596
  %v4653 = vmax.f32 %v4034, %v4597
  %v4654 = vmax.f32 %v4035, %v4598
  %v4655 = vmax.f32 %v4036, %v4585
  %v4656 = vmax.f32 %v4037, %v4586
  %v4657 = vmax.f32 %v4038, %v4587
  %v4658 = vmax.f32 %v4039, %v4588
  %v4659 = vmax.f32 %v4040, %v4589
  %v4660 = vmax.f32 %v4041, %v4590
  %v4661 = vmax.f32 %v4042, %v4591
  %v4662 = vmax.f32 %v4043, %v4578
  %v4663 = vmax.f32 %v4044, %v4579
  %v4664 = vmax.f32 %v4045, %v4580
  %v4665 = vmax.f32 %v4046, %v4581
  %v4666 = vmax.f32 %v4047, %v4582
  %v4667 = vmax.f32 %v4048, %v4583
  %v4668 = vmax.f32 %v4049, %v4584
  %v4669 = vmax.f32 %v4050, %v4571
  %v4670 = vmax.f32 %v4051, %v4572
  %v4671 = vmax.f32 %v4052, %v4573
  %v4672 = vmax.f32 %v4053, %v4574
  %v4673 = vmax.f32 %v4054, %v4575
  %v4674 = vmax.f32 %v4055, %v4576
  %v4675 = vmax.f32 %v4056, %v4577
  %v4676 = vmax.f32 %v4057, %v4564
  %v4677 = vmax.f32 %v4058, %v4565
  %v4678 = vmax.f32 %v4059, %v4566
  %v4679 = vmax.f32 %v4060, %v4567
  %v4680 = vmax.f32 %v4061, %v4568
  %v4681 = vmax.f32 %v4062, %v4569
  %v4682 = vmax.f32 %v4063, %v4570
  %v4683 = vmax.f32 %v4064, %v4557
  %v4684 = vmax.f32 %v4065, %v4558
  %v4685 = vmax.f32 %v4066, %v4559
  %v4686 = vmax.f32 %v4067, %v4560
  %v4687 = vmax.f32 %v4068, %v4561
  %v4688 = vmax.f32 %v4069, %v4562
  %v4689 = vmax.f32 %v4070, %v4563
  %v4690 = vmax.f32 %v4071, %v4550
  %v4691 = vmax.f32 %v4072, %v4551
  %v4692 = vmax.f32 %v4073, %v4552
  %v4693 = vmax.f32 %v4074, %v4553
  %v4694 = vmax.f32 %v4075, %v4554
  %v4695 = vmax.f32 %v4076, %v4555
  %v4696 = vmax.f32 %v4077, %v4556
  %v4697 = vmax.f32 %v4078, %v4543
  %v4698 = vmax.f32 %v4079, %v4544
  %v4699 = vmax.f32 %v4080, %v4545
  %v4700 = vmax.f32 %v4081, %v4546
  %v4701 = vmax.f32 %v4082, %v4547
  %v4702 = vmax.f32 %v4083, %v4548
  %v4703 = vmax.f32 %v4084, %v4549
  %v4704 = vmax.f32 %v4085, %v4536
  %v4705 = vmax.f32 %v4086, %v4537
  %v4706 = vmax.f32 %v4087, %v4538
  %v4707 = vmax.f32 %v4088, %v4539
  %v4708 = vmax.f32 %v4089, %v4540
  %v4709 = vmax.f32 %v4090, %v4541
  %v4710 = vmax.f32 %v4091, %v4542
  %v4711 = vmax.f32 %v4092, %v4529
  %v4712 = vmax.f32 %v4093, %v4530
  %v4713 = vmax.f32 %v4094, %v4531
  %v4714 = vmax.f32 %v4095, %v4532
  %v4715 = vmax.f32 %v4096, %v4533
  %v4716 = vmax.f32 %v4097, %v4534
  %v4717 = vmax.f32 %v4098, %v4535
  %v4718 = vmax.f32 %v4099, %v4522
  %v4719 = vmax.f32 %v4100, %v4523
  %v4720 = vmax.f32 %v4101, %v4524
  %v4721 = vmax.f32 %v4102, %v4525
  %v4722 = vmax.f32 %v4103, %v4526
  %v4723 = vmax.f32 %v4104, %v4527
  %v4724 = vmax.f32 %v4105, %v4528
  %v4725 = vmax.f32 %v4106, %v4515
  %v4726 = vmax.f32 %v4107, %v4516
  %v4727 = vmax.f32 %v4108, %v4517
  %v4728 = vmax.f32 %v4109, %v4518
  %v4729 = vmax.f32 %v4110, %v4519
  %v4730 = vmax.f32 %v4111, %v4520
  %v4731 = vmax.f32 %v4112, %v4521
  %v4732 = vmax.f32 %v4113, %v4508
  %v4733 = vmax.f32 %v4114, %v4509
  %v4734 = vmax.f32 %v4115, %v4510
  %v4735 = vmax.f32 %v4116, %v4511
  %v4736 = vmax.f32 %v4117, %v4512
  %v4737 = vmax.f32 %v4118, %v4513
  %v4738 = vmax.f32 %v4119, %v4514
  %v4739 = vmax.f32 %v4120, %v4501
  %v4740 = vmax.f32 %v4121, %v4502
  %v4741 = vmax.f32 %v4122, %v4503
  %v4742 = vmax.f32 %v4123, %v4504
  %v4743 = vmax.f32 %v4124, %v4505
  %v4744 = vmax.f32 %v4125, %v4506
  %v4745 = vmax.f32 %v4126, %v4507
  %v4746 = vmax.f32 %v4127, %v4494
  %v4747 = vmax.f32 %v4128, %v4495
  %v4748 = vmax.f32 %v4129, %v4496
  %v4749 = vmax.f32 %v4130, %v4497
  %v4750 = vmax.f32 %v4131, %v4498
  %v4751 = vmax.f32 %v4132, %v4499
  %v4752 = vmax.f32 %v4133, %v4500
  %v4753 = vmax.f32 %v4134, %v4487
  %v4754 = vmax.f32 %v4135, %v4488
  %v4755 = vmax.f32 %v4136, %v4489
  %v4756 = vmax.f32 %v4137, %v4490
  %v4757 = vmax.f32 %v4138, %v4491
  %v4758 = vmax.f32 %v4139, %v4492
  %v4759 = vmax.f32 %v4140, %v4493
  %v4760 = vmax.f32 %v4141, %v4480
  %v4761 = vmax.f32 %v4142, %v4481
  %v4762 = vmax.f32 %v4143, %v4482
  %v4763 = vmax.f32 %v4144, %v4483
  %v4764 = vmax.f32 %v4145, %v4484
  %v4765 = vmax.f32 %v4146, %v4485
  %v4766 = vmax.f32 %v4147, %v4486
  %v4767 = vmax.f32 %v4148, %v4473
  %v4768 = vmax.f32 %v4149, %v4474
  %v4769 = vmax.f32 %v4150, %v4475
  %v4770 = vmax.f32 %v4151, %v4476
  %v4771 = vmax.f32 %v4152, %v4477
  %v4772 = vmax.f32 %v4153, %v4478
  %v4773 = vmax.f32 %v4154, %v4479
  %v4774 = vmax.f32 %v4155, %v4466
  %v4775 = vmax.f32 %v4156, %v4467
  %v4776 = vmax.f32 %v4157, %v4468
  %v4777 = vmax.f32 %v4158, %v4469
  %v4778 = vmax.f32 %v4159, %v4470
  %v4779 = vmax.f32 %v4160, %v4471
  %v4780 = vmax.f32 %v4161, %v4472
  %v4781 = vmax.f32 %v4162, %v4459
  %v4782 = vmax.f32 %v4163, %v4460
  %v4783 = vmax.f32 %v4164, %v4461
  %v4784 = vmax.f32 %v4165, %v4462
  %v4785 = vmax.f32 %v4166, %v4463
  %v4786 = vmax.f32 %v4167, %v4464
  %v4787 = vmax.f32 %v4168, %v4465
  %v4788 = vmax.f32 %v4169, %v4452
  %v4789 = vmax.f32 %v4170, %v4453
  %v4790 = vmax.f32 %v4171, %v4454
  %v4791 = vmax.f32 %v4172, %v4455
  %v4792 = vmax.f32 %v4173, %v4456
  %v4793 = vmax.f32 %v4174, %v4457
  %v4794 = vmax.f32 %v4175, %v4458
  %v4795 = vmax.f32 %v4176, %v4445
  %v4796 = vmax.f32 %v4177, %v4446
  %v4797 = vmax.f32 %v4178, %v4447
  %v4798 = vmax.f32 %v4179, %v4448
  %v4799 = vmax.f32 %v4180, %v4449
  %v4800 = vmax.f32 %v4181, %v4450
  %v4801 = vmax.f32 %v4182, %v4451
  %v4802 = vmax.f32 %v4183, %v4438
  %v4803 = vmax.f32 %v4184, %v4439
  %v4804 = vmax.f32 %v4185, %v4440
  %v4805 = vmax.f32 %v4186, %v4441
  %v4806 = vmax.f32 %v4187, %v4442
  %v4807 = vmax.f32 %v4188, %v4443
  %v4808 = vmax.f32 %v4189, %v4444
  %v4809 = vmax.f32 %v4190, %v4431
  %v4810 = vmax.f32 %v4191, %v4432
  %v4811 = vmax.f32 %v4192, %v4433
  %v4812 = vmax.f32 %v4193, %v4434
  %v4813 = vmax.f32 %v4194, %v4435
  %v4814 = vmax.f32 %v4195, %v4436
  %v4815 = vmax.f32 %v4196, %v4437
  %v4816 = vmax.f32 %v4197, %v4620
  %v4817 = vmax.f32 %v4198, %v4621
  %v4818 = vmax.f32 %v4199, %v4622
  %v4819 = vmax.f32 %v4200, %v4623
  %v4820 = vmax.f32 %v4201, %v4624
  %v4821 = vmax.f32 %v4202, %v4625
  %v4822 = vmax.f32 %v4203, %v4626
  %vm4823 = vcmask 785408
  %v4825 = vsel %vm4823, %v4205, 0
  %v4828 = vsel %vm4823, %v4207, 0
  %v4831 = vsel %vm4823, %v4209, 0
  %v4834 = vsel %vm4823, %v4211, 0
  %v4837 = vsel %vm4823, %v4213, 0
  %v4840 = vsel %vm4823, %v4215, 0
  %v4843 = vsel %vm4823, %v4217, 0
  %v4846 = vsel %vm4823, %v4219, 0
  %v4849 = vsel %vm4823, %v4221, 0
  %v4852 = vsel %vm4823, %v4223, 0
  %v4855 = vsel %vm4823, %v4225, 0
  %v4858 = vsel %vm4823, %v4227, 0
  %v4861 = vsel %vm4823, %v4229, 0
  %v4864 = vsel %vm4823, %v4231, 0
  %4866 = vmatprep.subr.mxu0 %v4628
  %4867 = vmatpush1.msra.mxu0 %v4627
  %4868 = vmatprep.subr.mxu0 %v4635
  %4869 = vmatpush1.msra.mxu0 %v4634
  %4870 = vmatprep.subr.mxu0 %v4642
  %4871 = vmatpush1.msra.mxu0 %v4641
  %4872 = vmatprep.subr.mxu0 %v4649
  %4873 = vmatpush1.msra.mxu0 %v4648
  %4874 = vmatprep.subr.mxu0 %v4656
  %4875 = vmatpush1.msra.mxu0 %v4655
  %4876 = vmatprep.subr.mxu0 %v4663
  %4877 = vmatpush1.msra.mxu0 %v4662
  %4878 = vmatprep.subr.mxu0 %v4670
  %4879 = vmatpush1.msra.mxu0 %v4669
  %4880 = vmatprep.subr.mxu0 %v4677
  %4881 = vmatpush1.msra.mxu0 %v4676
  %4882 = vmatprep.subr.mxu0 %v4684
  %4883 = vmatpush1.msra.mxu0 %v4683
  %4884 = vmatprep.subr.mxu0 %v4691
  %4885 = vmatpush1.msra.mxu0 %v4690
  %4886 = vmatprep.subr.mxu0 %v4698
  %4887 = vmatpush1.msra.mxu0 %v4697
  %4888 = vmatprep.subr.mxu0 %v4705
  %4889 = vmatpush1.msra.mxu0 %v4704
  %4890 = vmatprep.subr.mxu0 %v4712
  %4891 = vmatpush1.msra.mxu0 %v4711
  %4892 = vmatprep.subr.mxu0 %v4719
  %4893 = vmatpush1.msra.mxu0 %v4718
  %4894 = vmatprep.subr.mxu0 %v4726
  %4895 = vmatpush1.msra.mxu0 %v4725
  %4896 = vmatprep.subr.mxu0 %v4733
  %4897 = vmatpush1.msra.mxu0 %v4732
  %4898 = vmatprep.subr.mxu0 %v4740
  %4899 = vmatpush1.msra.mxu0 %v4739
  %4900 = vmatprep.subr.mxu0 %v4747
  %4901 = vmatpush1.msra.mxu0 %v4746
  %4902 = vmatprep.subr.mxu0 %v4754
  %4903 = vmatpush1.msra.mxu0 %v4753
  %4904 = vmatprep.subr.mxu0 %v4761
  %4905 = vmatpush1.msra.mxu0 %v4760
  %4906 = vmatprep.subr.mxu0 %v4768
  %4907 = vmatpush1.msra.mxu0 %v4767
  %4908 = vmatprep.subr.mxu0 %v4775
  %4909 = vmatpush1.msra.mxu0 %v4774
  %4910 = vmatprep.subr.mxu0 %v4782
  %4911 = vmatpush1.msra.mxu0 %v4781
  %4912 = vmatprep.subr.mxu0 %v4789
  %4913 = vmatpush1.msra.mxu0 %v4788
  %4914 = vmatprep.subr.mxu0 %v4796
  %4915 = vmatpush1.msra.mxu0 %v4795
  %4916 = vmatprep.subr.mxu0 %v4803
  %4917 = vmatpush1.msra.mxu0 %v4802
  %4918 = vmatprep.subr.mxu0 %v4810
  %4919 = vmatpush1.msra.mxu0 %v4809
  %4920 = vmatprep.subr.mxu0 %v4817
  %4921 = vmatpush1.msra.mxu0 %v4816
  %4922 = vmatprep.subr.mxu0 0.0
  %4923 = vmatpush1.msra.mxu0 0.0
  %4924 = vmatprep.subr.mxu0 0.0
  %4925 = vmatpush1.msra.mxu0 0.0
  %4926 = vmatprep.subr.mxu0 0.0
  %4927 = vmatpush1.msra.mxu0 0.0
  %4928 = vmatprep.subr.mxu0 0.0
  %4929 = vmatpush1.msra.mxu0 0.0
  %4930 = vmatprep.mubr.f32.mxu0 %v4825
  %4931 = vmatmul.mubr.f32.gmra.mrb[0].mxu0 %v4204
  %v4932 = vpop.f32.mrb[0].mxu0
  %v4933 = vadd.f32 0.0, %v4932
  %v4934 = vpop.f32.mrb[0].mxu0
  %v4935 = vadd.f32 0.0, %v4934
  %4936 = vmatprep.mubr.f32.mxu0 %v4828
  %4937 = vmatmul.mubr.f32.gmra.mrb[0].mxu0 %v4206
  %v4938 = vpop.f32.mrb[0].mxu0
  %v4939 = vadd.f32 0.0, %v4938
  %v4940 = vpop.f32.mrb[0].mxu0
  %v4941 = vadd.f32 0.0, %v4940
  %4942 = vmatprep.mubr.f32.mxu0 %v4831
  %4943 = vmatmul.mubr.f32.gmra.mrb[0].mxu0 %v4208
  %v4944 = vpop.f32.mrb[0].mxu0
  %v4945 = vadd.f32 0.0, %v4944
  %v4946 = vpop.f32.mrb[0].mxu0
  %v4947 = vadd.f32 0.0, %v4946
  %4948 = vmatprep.mubr.f32.mxu0 %v4834
  %4949 = vmatmul.mubr.f32.gmra.mrb[0].mxu0 %v4210
  %v4950 = vpop.f32.mrb[0].mxu0
  %v4951 = vadd.f32 0.0, %v4950
  %v4952 = vpop.f32.mrb[0].mxu0
  %v4953 = vadd.f32 0.0, %v4952
  %4954 = vmatprep.mubr.f32.mxu0 %v4837
  %4955 = vmatmul.mubr.f32.gmra.mrb[0].mxu0 %v4212
  %v4956 = vpop.f32.mrb[0].mxu0
  %v4957 = vadd.f32 0.0, %v4956
  %v4958 = vpop.f32.mrb[0].mxu0
  %v4959 = vadd.f32 0.0, %v4958
  %4960 = vmatprep.mubr.f32.mxu0 %v4840
  %4961 = vmatmul.mubr.f32.gmra.mrb[0].mxu0 %v4214
  %v4962 = vpop.f32.mrb[0].mxu0
  %v4963 = vadd.f32 0.0, %v4962
  %v4964 = vpop.f32.mrb[0].mxu0
  %v4965 = vadd.f32 0.0, %v4964
  %4966 = vmatprep.mubr.f32.mxu0 %v4843
  %4967 = vmatmul.mubr.f32.gmra.mrb[0].mxu0 %v4216
  %v4968 = vpop.f32.mrb[0].mxu0
  %v4969 = vadd.f32 0.0, %v4968
  %v4970 = vpop.f32.mrb[0].mxu0
  %v4971 = vadd.f32 0.0, %v4970
  %4972 = vmatprep.mubr.f32.mxu0 %v4846
  %4973 = vmatmul.mubr.f32.gmra.mrb[0].mxu0 %v4218
  %v4974 = vpop.f32.mrb[0].mxu0
  %v4975 = vadd.f32 0.0, %v4974
  %v4976 = vpop.f32.mrb[0].mxu0
  %v4977 = vadd.f32 0.0, %v4976
  %4978 = vmatprep.mubr.f32.mxu0 %v4849
  %4979 = vmatmul.mubr.f32.gmra.mrb[0].mxu0 %v4220
  %v4980 = vpop.f32.mrb[0].mxu0
  %v4981 = vadd.f32 0.0, %v4980
  %v4982 = vpop.f32.mrb[0].mxu0
  %v4983 = vadd.f32 0.0, %v4982
  %4984 = vmatprep.mubr.f32.mxu0 %v4852
  %4985 = vmatmul.mubr.f32.gmra.mrb[0].mxu0 %v4222
  %v4986 = vpop.f32.mrb[0].mxu0
  %v4987 = vadd.f32 0.0, %v4986
  %v4988 = vpop.f32.mrb[0].mxu0
  %v4989 = vadd.f32 0.0, %v4988
  %4990 = vmatprep.mubr.f32.mxu0 %v4855
  %4991 = vmatmul.mubr.f32.gmra.mrb[0].mxu0 %v4224
  %v4992 = vpop.f32.mrb[0].mxu0
  %v4993 = vadd.f32 0.0, %v4992
  %v4994 = vpop.f32.mrb[0].mxu0
  %v4995 = vadd.f32 0.0, %v4994
  %4996 = vmatprep.mubr.f32.mxu0 %v4858
  %4997 = vmatmul.mubr.f32.gmra.mrb[0].mxu0 %v4226
  %v4998 = vpop.f32.mrb[0].mxu0
  %v4999 = vadd.f32 0.0, %v4998
  %v5000 = vpop.f32.mrb[0].mxu0
  %v5001 = vadd.f32 0.0, %v5000
  %5002 = vmatprep.mubr.f32.mxu0 %v4861
  %5003 = vmatmul.mubr.f32.gmra.mrb[0].mxu0 %v4228
  %v5004 = vpop.f32.mrb[0].mxu0
  %v5005 = vadd.f32 0.0, %v5004
  %v5006 = vpop.f32.mrb[0].mxu0
  %v5007 = vadd.f32 0.0, %v5006
  %5008 = vmatprep.mubr.f32.mxu0 %v4864
  %5009 = vmatmul.mubr.f32.gmra.mrb[0].mxu0 %v4230
  %v5010 = vpop.f32.mrb[0].mxu0
  %v5011 = vadd.f32 0.0, %v5010
  %v5012 = vpop.f32.mrb[0].mxu0
  %v5013 = vadd.f32 0.0, %v5012
  %5014 = vdwg.mxu0
  %5015 = vmatprep.subr.mxu0 %v4630
  %5016 = vmatpush1.msra.mxu0 %v4629
  %5017 = vmatprep.subr.mxu0 %v4637
  %5018 = vmatpush1.msra.mxu0 %v4636
  %5019 = vmatprep.subr.mxu0 %v4644
  %5020 = vmatpush1.msra.mxu0 %v4643
  %5021 = vmatprep.subr.mxu0 %v4651
  %5022 = vmatpush1.msra.mxu0 %v4650
  %5023 = vmatprep.subr.mxu0 %v4658
  %5024 = vmatpush1.msra.mxu0 %v4657
  %5025 = vmatprep.subr.mxu0 %v4665
  %5026 = vmatpush1.msra.mxu0 %v4664
  %5027 = vmatprep.subr.mxu0 %v4672
  %5028 = vmatpush1.msra.mxu0 %v4671
  %5029 = vmatprep.subr.mxu0 %v4679
  %5030 = vmatpush1.msra.mxu0 %v4678
  %5031 = vmatprep.subr.mxu0 %v4686
  %5032 = vmatpush1.msra.mxu0 %v4685
  %5033 = vmatprep.subr.mxu0 %v4693
  %5034 = vmatpush1.msra.mxu0 %v4692
  %5035 = vmatprep.subr.mxu0 %v4700
  %5036 = vmatpush1.msra.mxu0 %v4699
  %5037 = vmatprep.subr.mxu0 %v4707
  %5038 = vmatpush1.msra.mxu0 %v4706
  %5039 = vmatprep.subr.mxu0 %v4714
  %5040 = vmatpush1.msra.mxu0 %v4713
  %5041 = vmatprep.subr.mxu0 %v4721
  %5042 = vmatpush1.msra.mxu0 %v4720
  %5043 = vmatprep.subr.mxu0 %v4728
  %5044 = vmatpush1.msra.mxu0 %v4727
  %5045 = vmatprep.subr.mxu0 %v4735
  %5046 = vmatpush1.msra.mxu0 %v4734
  %5047 = vmatprep.subr.mxu0 %v4742
  %5048 = vmatpush1.msra.mxu0 %v4741
  %5049 = vmatprep.subr.mxu0 %v4749
  %5050 = vmatpush1.msra.mxu0 %v4748
  %5051 = vmatprep.subr.mxu0 %v4756
  %5052 = vmatpush1.msra.mxu0 %v4755
  %5053 = vmatprep.subr.mxu0 %v4763
  %5054 = vmatpush1.msra.mxu0 %v4762
  %5055 = vmatprep.subr.mxu0 %v4770
  %5056 = vmatpush1.msra.mxu0 %v4769
  %5057 = vmatprep.subr.mxu0 %v4777
  %5058 = vmatpush1.msra.mxu0 %v4776
  %5059 = vmatprep.subr.mxu0 %v4784
  %5060 = vmatpush1.msra.mxu0 %v4783
  %5061 = vmatprep.subr.mxu0 %v4791
  %5062 = vmatpush1.msra.mxu0 %v4790
  %5063 = vmatprep.subr.mxu0 %v4798
  %5064 = vmatpush1.msra.mxu0 %v4797
  %5065 = vmatprep.subr.mxu0 %v4805
  %5066 = vmatpush1.msra.mxu0 %v4804
  %5067 = vmatprep.subr.mxu0 %v4812
  %5068 = vmatpush1.msra.mxu0 %v4811
  %5069 = vmatprep.subr.mxu0 %v4819
  %5070 = vmatpush1.msra.mxu0 %v4818
  %5071 = vmatprep.subr.mxu0 0.0
  %5072 = vmatpush1.msra.mxu0 0.0
  %5073 = vmatprep.subr.mxu0 0.0
  %5074 = vmatpush1.msra.mxu0 0.0
  %5075 = vmatprep.subr.mxu0 0.0
  %5076 = vmatpush1.msra.mxu0 0.0
  %5077 = vmatprep.subr.mxu0 0.0
  %5078 = vmatpush1.msra.mxu0 0.0
  %5079 = vmatprep.mubr.f32.mxu0 %v4825
  %5080 = vmatmul.mubr.f32.gmra.mrb[0].mxu0 %v4204
  %v5081 = vpop.f32.mrb[0].mxu0
  %v5082 = vadd.f32 0.0, %v5081
  %v5083 = vpop.f32.mrb[0].mxu0
  %v5084 = vadd.f32 0.0, %v5083
  %5085 = vmatprep.mubr.f32.mxu0 %v4828
  %5086 = vmatmul.mubr.f32.gmra.mrb[0].mxu0 %v4206
  %v5087 = vpop.f32.mrb[0].mxu0
  %v5088 = vadd.f32 0.0, %v5087
  %v5089 = vpop.f32.mrb[0].mxu0
  %v5090 = vadd.f32 0.0, %v5089
  %5091 = vmatprep.mubr.f32.mxu0 %v4831
  %5092 = vmatmul.mubr.f32.gmra.mrb[0].mxu0 %v4208
  %v5093 = vpop.f32.mrb[0].mxu0
  %v5094 = vadd.f32 0.0, %v5093
  %v5095 = vpop.f32.mrb[0].mxu0
  %v5096 = vadd.f32 0.0, %v5095
  %5097 = vmatprep.mubr.f32.mxu0 %v4834
  %5098 = vmatmul.mubr.f32.gmra.mrb[0].mxu0 %v4210
  %v5099 = vpop.f32.mrb[0].mxu0
  %v5100 = vadd.f32 0.0, %v5099
  %v5101 = vpop.f32.mrb[0].mxu0
  %v5102 = vadd.f32 0.0, %v5101
  %5103 = vmatprep.mubr.f32.mxu0 %v4837
  %5104 = vmatmul.mubr.f32.gmra.mrb[0].mxu0 %v4212
  %v5105 = vpop.f32.mrb[0].mxu0
  %v5106 = vadd.f32 0.0, %v5105
  %v5107 = vpop.f32.mrb[0].mxu0
  %v5108 = vadd.f32 0.0, %v5107
  %5109 = vmatprep.mubr.f32.mxu0 %v4840
  %5110 = vmatmul.mubr.f32.gmra.mrb[0].mxu0 %v4214
  %v5111 = vpop.f32.mrb[0].mxu0
  %v5112 = vadd.f32 0.0, %v5111
  %v5113 = vpop.f32.mrb[0].mxu0
  %v5114 = vadd.f32 0.0, %v5113
  %5115 = vmatprep.mubr.f32.mxu0 %v4843
  %5116 = vmatmul.mubr.f32.gmra.mrb[0].mxu0 %v4216
  %v5117 = vpop.f32.mrb[0].mxu0
  %v5118 = vadd.f32 0.0, %v5117
  %v5119 = vpop.f32.mrb[0].mxu0
  %v5120 = vadd.f32 0.0, %v5119
  %5121 = vmatprep.mubr.f32.mxu0 %v4846
  %5122 = vmatmul.mubr.f32.gmra.mrb[0].mxu0 %v4218
  %v5123 = vpop.f32.mrb[0].mxu0
  %v5124 = vadd.f32 0.0, %v5123
  %v5125 = vpop.f32.mrb[0].mxu0
  %v5126 = vadd.f32 0.0, %v5125
  %5127 = vmatprep.mubr.f32.mxu0 %v4849
  %5128 = vmatmul.mubr.f32.gmra.mrb[0].mxu0 %v4220
  %v5129 = vpop.f32.mrb[0].mxu0
  %v5130 = vadd.f32 0.0, %v5129
  %v5131 = vpop.f32.mrb[0].mxu0
  %v5132 = vadd.f32 0.0, %v5131
  %5133 = vmatprep.mubr.f32.mxu0 %v4852
  %5134 = vmatmul.mubr.f32.gmra.mrb[0].mxu0 %v4222
  %v5135 = vpop.f32.mrb[0].mxu0
  %v5136 = vadd.f32 0.0, %v5135
  %v5137 = vpop.f32.mrb[0].mxu0
  %v5138 = vadd.f32 0.0, %v5137
  %5139 = vmatprep.mubr.f32.mxu0 %v4855
  %5140 = vmatmul.mubr.f32.gmra.mrb[0].mxu0 %v4224
  %v5141 = vpop.f32.mrb[0].mxu0
  %v5142 = vadd.f32 0.0, %v5141
  %v5143 = vpop.f32.mrb[0].mxu0
  %v5144 = vadd.f32 0.0, %v5143
  %5145 = vmatprep.mubr.f32.mxu0 %v4858
  %5146 = vmatmul.mubr.f32.gmra.mrb[0].mxu0 %v4226
  %v5147 = vpop.f32.mrb[0].mxu0
  %v5148 = vadd.f32 0.0, %v5147
  %v5149 = vpop.f32.mrb[0].mxu0
  %v5150 = vadd.f32 0.0, %v5149
  %5151 = vmatprep.mubr.f32.mxu0 %v4861
  %5152 = vmatmul.mubr.f32.gmra.mrb[0].mxu0 %v4228
  %v5153 = vpop.f32.mrb[0].mxu0
  %v5154 = vadd.f32 0.0, %v5153
  %v5155 = vpop.f32.mrb[0].mxu0
  %v5156 = vadd.f32 0.0, %v5155
  %5157 = vmatprep.mubr.f32.mxu0 %v4864
  %5158 = vmatmul.mubr.f32.gmra.mrb[0].mxu0 %v4230
  %v5159 = vpop.f32.mrb[0].mxu0
  %v5160 = vadd.f32 0.0, %v5159
  %v5161 = vpop.f32.mrb[0].mxu0
  %v5162 = vadd.f32 0.0, %v5161
  %5163 = vdwg.mxu0
  %5164 = vmatprep.subr.mxu0 %v4632
  %5165 = vmatpush1.msra.mxu0 %v4631
  %5166 = vmatprep.subr.mxu0 %v4639
  %5167 = vmatpush1.msra.mxu0 %v4638
  %5168 = vmatprep.subr.mxu0 %v4646
  %5169 = vmatpush1.msra.mxu0 %v4645
  %5170 = vmatprep.subr.mxu0 %v4653
  %5171 = vmatpush1.msra.mxu0 %v4652
  %5172 = vmatprep.subr.mxu0 %v4660
  %5173 = vmatpush1.msra.mxu0 %v4659
  %5174 = vmatprep.subr.mxu0 %v4667
  %5175 = vmatpush1.msra.mxu0 %v4666
  %5176 = vmatprep.subr.mxu0 %v4674
  %5177 = vmatpush1.msra.mxu0 %v4673
  %5178 = vmatprep.subr.mxu0 %v4681
  %5179 = vmatpush1.msra.mxu0 %v4680
  %5180 = vmatprep.subr.mxu0 %v4688
  %5181 = vmatpush1.msra.mxu0 %v4687
  %5182 = vmatprep.subr.mxu0 %v4695
  %5183 = vmatpush1.msra.mxu0 %v4694
  %5184 = vmatprep.subr.mxu0 %v4702
  %5185 = vmatpush1.msra.mxu0 %v4701
  %5186 = vmatprep.subr.mxu0 %v4709
  %5187 = vmatpush1.msra.mxu0 %v4708
  %5188 = vmatprep.subr.mxu0 %v4716
  %5189 = vmatpush1.msra.mxu0 %v4715
  %5190 = vmatprep.subr.mxu0 %v4723
  %5191 = vmatpush1.msra.mxu0 %v4722
  %5192 = vmatprep.subr.mxu0 %v4730
  %5193 = vmatpush1.msra.mxu0 %v4729
  %5194 = vmatprep.subr.mxu0 %v4737
  %5195 = vmatpush1.msra.mxu0 %v4736
  %5196 = vmatprep.subr.mxu0 %v4744
  %5197 = vmatpush1.msra.mxu0 %v4743
  %5198 = vmatprep.subr.mxu0 %v4751
  %5199 = vmatpush1.msra.mxu0 %v4750
  %5200 = vmatprep.subr.mxu0 %v4758
  %5201 = vmatpush1.msra.mxu0 %v4757
  %5202 = vmatprep.subr.mxu0 %v4765
  %5203 = vmatpush1.msra.mxu0 %v4764
  %5204 = vmatprep.subr.mxu0 %v4772
  %5205 = vmatpush1.msra.mxu0 %v4771
  %5206 = vmatprep.subr.mxu0 %v4779
  %5207 = vmatpush1.msra.mxu0 %v4778
  %5208 = vmatprep.subr.mxu0 %v4786
  %5209 = vmatpush1.msra.mxu0 %v4785
  %5210 = vmatprep.subr.mxu0 %v4793
  %5211 = vmatpush1.msra.mxu0 %v4792
  %5212 = vmatprep.subr.mxu0 %v4800
  %5213 = vmatpush1.msra.mxu0 %v4799
  %5214 = vmatprep.subr.mxu0 %v4807
  %5215 = vmatpush1.msra.mxu0 %v4806
  %5216 = vmatprep.subr.mxu0 %v4814
  %5217 = vmatpush1.msra.mxu0 %v4813
  %5218 = vmatprep.subr.mxu0 %v4821
  %5219 = vmatpush1.msra.mxu0 %v4820
  %5220 = vmatprep.subr.mxu0 0.0
  %5221 = vmatpush1.msra.mxu0 0.0
  %5222 = vmatprep.subr.mxu0 0.0
  %5223 = vmatpush1.msra.mxu0 0.0
  %5224 = vmatprep.subr.mxu0 0.0
  %5225 = vmatpush1.msra.mxu0 0.0
  %5226 = vmatprep.subr.mxu0 0.0
  %5227 = vmatpush1.msra.mxu0 0.0
  %5228 = vmatprep.mubr.f32.mxu0 %v4825
  %5229 = vmatmul.mubr.f32.gmra.mrb[0].mxu0 %v4204
  %v5230 = vpop.f32.mrb[0].mxu0
  %v5231 = vadd.f32 0.0, %v5230
  %v5232 = vpop.f32.mrb[0].mxu0
  %v5233 = vadd.f32 0.0, %v5232
  %5234 = vmatprep.mubr.f32.mxu0 %v4828
  %5235 = vmatmul.mubr.f32.gmra.mrb[0].mxu0 %v4206
  %v5236 = vpop.f32.mrb[0].mxu0
  %v5237 = vadd.f32 0.0, %v5236
  %v5238 = vpop.f32.mrb[0].mxu0
  %v5239 = vadd.f32 0.0, %v5238
  %5240 = vmatprep.mubr.f32.mxu0 %v4831
  %5241 = vmatmul.mubr.f32.gmra.mrb[0].mxu0 %v4208
  %v5242 = vpop.f32.mrb[0].mxu0
  %v5243 = vadd.f32 0.0, %v5242
  %v5244 = vpop.f32.mrb[0].mxu0
  %v5245 = vadd.f32 0.0, %v5244
  %5246 = vmatprep.mubr.f32.mxu0 %v4834
  %5247 = vmatmul.mubr.f32.gmra.mrb[0].mxu0 %v4210
  %v5248 = vpop.f32.mrb[0].mxu0
  %v5249 = vadd.f32 0.0, %v5248
  %v5250 = vpop.f32.mrb[0].mxu0
  %v5251 = vadd.f32 0.0, %v5250
  %5252 = vmatprep.mubr.f32.mxu0 %v4837
  %5253 = vmatmul.mubr.f32.gmra.mrb[0].mxu0 %v4212
  %v5254 = vpop.f32.mrb[0].mxu0
  %v5255 = vadd.f32 0.0, %v5254
  %v5256 = vpop.f32.mrb[0].mxu0
  %v5257 = vadd.f32 0.0, %v5256
  %5258 = vmatprep.mubr.f32.mxu0 %v4840
  %5259 = vmatmul.mubr.f32.gmra.mrb[0].mxu0 %v4214
  %v5260 = vpop.f32.mrb[0].mxu0
  %v5261 = vadd.f32 0.0, %v5260
  %v5262 = vpop.f32.mrb[0].mxu0
  %v5263 = vadd.f32 0.0, %v5262
  %5264 = vmatprep.mubr.f32.mxu0 %v4843
  %5265 = vmatmul.mubr.f32.gmra.mrb[0].mxu0 %v4216
  %v5266 = vpop.f32.mrb[0].mxu0
  %v5267 = vadd.f32 0.0, %v5266
  %v5268 = vpop.f32.mrb[0].mxu0
  %v5269 = vadd.f32 0.0, %v5268
  %5270 = vmatprep.mubr.f32.mxu0 %v4846
  %5271 = vmatmul.mubr.f32.gmra.mrb[0].mxu0 %v4218
  %v5272 = vpop.f32.mrb[0].mxu0
  %v5273 = vadd.f32 0.0, %v5272
  %v5274 = vpop.f32.mrb[0].mxu0
  %v5275 = vadd.f32 0.0, %v5274
  %5276 = vmatprep.mubr.f32.mxu0 %v4849
  %5277 = vmatmul.mubr.f32.gmra.mrb[0].mxu0 %v4220
  %v5278 = vpop.f32.mrb[0].mxu0
  %v5279 = vadd.f32 0.0, %v5278
  %v5280 = vpop.f32.mrb[0].mxu0
  %v5281 = vadd.f32 0.0, %v5280
  %5282 = vmatprep.mubr.f32.mxu0 %v4852
  %5283 = vmatmul.mubr.f32.gmra.mrb[0].mxu0 %v4222
  %v5284 = vpop.f32.mrb[0].mxu0
  %v5285 = vadd.f32 0.0, %v5284
  %v5286 = vpop.f32.mrb[0].mxu0
  %v5287 = vadd.f32 0.0, %v5286
  %5288 = vmatprep.mubr.f32.mxu0 %v4855
  %5289 = vmatmul.mubr.f32.gmra.mrb[0].mxu0 %v4224
  %v5290 = vpop.f32.mrb[0].mxu0
  %v5291 = vadd.f32 0.0, %v5290
  %v5292 = vpop.f32.mrb[0].mxu0
  %v5293 = vadd.f32 0.0, %v5292
  %5294 = vmatprep.mubr.f32.mxu0 %v4858
  %5295 = vmatmul.mubr.f32.gmra.mrb[0].mxu0 %v4226
  %v5296 = vpop.f32.mrb[0].mxu0
  %v5297 = vadd.f32 0.0, %v5296
  %v5298 = vpop.f32.mrb[0].mxu0
  %v5299 = vadd.f32 0.0, %v5298
  %5300 = vmatprep.mubr.f32.mxu0 %v4861
  %5301 = vmatmul.mubr.f32.gmra.mrb[0].mxu0 %v4228
  %v5302 = vpop.f32.mrb[0].mxu0
  %v5303 = vadd.f32 0.0, %v5302
  %v5304 = vpop.f32.mrb[0].mxu0
  %v5305 = vadd.f32 0.0, %v5304
  %5306 = vmatprep.mubr.f32.mxu0 %v4864
  %5307 = vmatmul.mubr.f32.gmra.mrb[0].mxu0 %v4230
  %v5308 = vpop.f32.mrb[0].mxu0
  %v5309 = vadd.f32 0.0, %v5308
  %v5310 = vpop.f32.mrb[0].mxu0
  %v5311 = vadd.f32 0.0, %v5310
  %5312 = vdwg.mxu0
  %5313 = vmatprep.subr.mxu0 0.0
  %5314 = vmatpush1.msra.mxu0 %v4633
  %5315 = vmatprep.subr.mxu0 0.0
  %5316 = vmatpush1.msra.mxu0 %v4640
  %5317 = vmatprep.subr.mxu0 0.0
  %5318 = vmatpush1.msra.mxu0 %v4647
  %5319 = vmatprep.subr.mxu0 0.0
  %5320 = vmatpush1.msra.mxu0 %v4654
  %5321 = vmatprep.subr.mxu0 0.0
  %5322 = vmatpush1.msra.mxu0 %v4661
  %5323 = vmatprep.subr.mxu0 0.0
  %5324 = vmatpush1.msra.mxu0 %v4668
  %5325 = vmatprep.subr.mxu0 0.0
  %5326 = vmatpush1.msra.mxu0 %v4675
  %5327 = vmatprep.subr.mxu0 0.0
  %5328 = vmatpush1.msra.mxu0 %v4682
  %5329 = vmatprep.subr.mxu0 0.0
  %5330 = vmatpush1.msra.mxu0 %v4689
  %5331 = vmatprep.subr.mxu0 0.0
  %5332 = vmatpush1.msra.mxu0 %v4696
  %5333 = vmatprep.subr.mxu0 0.0
  %5334 = vmatpush1.msra.mxu0 %v4703
  %5335 = vmatprep.subr.mxu0 0.0
  %5336 = vmatpush1.msra.mxu0 %v4710
  %5337 = vmatprep.subr.mxu0 0.0
  %5338 = vmatpush1.msra.mxu0 %v4717
  %5339 = vmatprep.subr.mxu0 0.0
  %5340 = vmatpush1.msra.mxu0 %v4724
  %5341 = vmatprep.subr.mxu0 0.0
  %5342 = vmatpush1.msra.mxu0 %v4731
  %5343 = vmatprep.subr.mxu0 0.0
  %5344 = vmatpush1.msra.mxu0 %v4738
  %5345 = vmatprep.subr.mxu0 0.0
  %5346 = vmatpush1.msra.mxu0 %v4745
  %5347 = vmatprep.subr.mxu0 0.0
  %5348 = vmatpush1.msra.mxu0 %v4752
  %5349 = vmatprep.subr.mxu0 0.0
  %5350 = vmatpush1.msra.mxu0 %v4759
  %5351 = vmatprep.subr.mxu0 0.0
  %5352 = vmatpush1.msra.mxu0 %v4766
  %5353 = vmatprep.subr.mxu0 0.0
  %5354 = vmatpush1.msra.mxu0 %v4773
  %5355 = vmatprep.subr.mxu0 0.0
  %5356 = vmatpush1.msra.mxu0 %v4780
  %5357 = vmatprep.subr.mxu0 0.0
  %5358 = vmatpush1.msra.mxu0 %v4787
  %5359 = vmatprep.subr.mxu0 0.0
  %5360 = vmatpush1.msra.mxu0 %v4794
  %5361 = vmatprep.subr.mxu0 0.0
  %5362 = vmatpush1.msra.mxu0 %v4801
  %5363 = vmatprep.subr.mxu0 0.0
  %5364 = vmatpush1.msra.mxu0 %v4808
  %5365 = vmatprep.subr.mxu0 0.0
  %5366 = vmatpush1.msra.mxu0 %v4815
  %5367 = vmatprep.subr.mxu0 0.0
  %5368 = vmatpush1.msra.mxu0 %v4822
  %5369 = vmatprep.subr.mxu0 0.0
  %5370 = vmatpush1.msra.mxu0 0.0
  %5371 = vmatprep.subr.mxu0 0.0
  %5372 = vmatpush1.msra.mxu0 0.0
  %5373 = vmatprep.subr.mxu0 0.0
  %5374 = vmatpush1.msra.mxu0 0.0
  %5375 = vmatprep.subr.mxu0 0.0
  %5376 = vmatpush1.msra.mxu0 0.0
  %5377 = vmatprep.mubr.f32.mxu0 %v4825
  %5378 = vmatmul.mubr.f32.gmra.mrb[0].mxu0 %v4204
  %v5379 = vpop.f32.mrb[0].mxu0
  %v5380 = vadd.f32 0.0, %v5379
  %v5381 = vpop.f32.mrb[0].mxu0
  %5382 = vmatprep.mubr.f32.mxu0 %v4828
  %5383 = vmatmul.mubr.f32.gmra.mrb[0].mxu0 %v4206
  %v5384 = vpop.f32.mrb[0].mxu0
  %v5385 = vadd.f32 0.0, %v5384
  %v5386 = vpop.f32.mrb[0].mxu0
  %5387 = vmatprep.mubr.f32.mxu0 %v4831
  %5388 = vmatmul.mubr.f32.gmra.mrb[0].mxu0 %v4208
  %v5389 = vpop.f32.mrb[0].mxu0
  %v5390 = vadd.f32 0.0, %v5389
  %v5391 = vpop.f32.mrb[0].mxu0
  %5392 = vmatprep.mubr.f32.mxu0 %v4834
  %5393 = vmatmul.mubr.f32.gmra.mrb[0].mxu0 %v4210
  %v5394 = vpop.f32.mrb[0].mxu0
  %v5395 = vadd.f32 0.0, %v5394
  %v5396 = vpop.f32.mrb[0].mxu0
  %5397 = vmatprep.mubr.f32.mxu0 %v4837
  %5398 = vmatmul.mubr.f32.gmra.mrb[0].mxu0 %v4212
  %v5399 = vpop.f32.mrb[0].mxu0
  %v5400 = vadd.f32 0.0, %v5399
  %v5401 = vpop.f32.mrb[0].mxu0
  %5402 = vmatprep.mubr.f32.mxu0 %v4840
  %5403 = vmatmul.mubr.f32.gmra.mrb[0].mxu0 %v4214
  %v5404 = vpop.f32.mrb[0].mxu0
  %v5405 = vadd.f32 0.0, %v5404
  %v5406 = vpop.f32.mrb[0].mxu0
  %5407 = vmatprep.mubr.f32.mxu0 %v4843
  %5408 = vmatmul.mubr.f32.gmra.mrb[0].mxu0 %v4216
  %v5409 = vpop.f32.mrb[0].mxu0
  %v5410 = vadd.f32 0.0, %v5409
  %v5411 = vpop.f32.mrb[0].mxu0
  %5412 = vmatprep.mubr.f32.mxu0 %v4846
  %5413 = vmatmul.mubr.f32.gmra.mrb[0].mxu0 %v4218
  %v5414 = vpop.f32.mrb[0].mxu0
  %v5415 = vadd.f32 0.0, %v5414
  %v5416 = vpop.f32.mrb[0].mxu0
  %5417 = vmatprep.mubr.f32.mxu0 %v4849
  %5418 = vmatmul.mubr.f32.gmra.mrb[0].mxu0 %v4220
  %v5419 = vpop.f32.mrb[0].mxu0
  %v5420 = vadd.f32 0.0, %v5419
  %v5421 = vpop.f32.mrb[0].mxu0
  %5422 = vmatprep.mubr.f32.mxu0 %v4852
  %5423 = vmatmul.mubr.f32.gmra.mrb[0].mxu0 %v4222
  %v5424 = vpop.f32.mrb[0].mxu0
  %v5425 = vadd.f32 0.0, %v5424
  %v5426 = vpop.f32.mrb[0].mxu0
  %5427 = vmatprep.mubr.f32.mxu0 %v4855
  %5428 = vmatmul.mubr.f32.gmra.mrb[0].mxu0 %v4224
  %v5429 = vpop.f32.mrb[0].mxu0
  %v5430 = vadd.f32 0.0, %v5429
  %v5431 = vpop.f32.mrb[0].mxu0
  %5432 = vmatprep.mubr.f32.mxu0 %v4858
  %5433 = vmatmul.mubr.f32.gmra.mrb[0].mxu0 %v4226
  %v5434 = vpop.f32.mrb[0].mxu0
  %v5435 = vadd.f32 0.0, %v5434
  %v5436 = vpop.f32.mrb[0].mxu0
  %5437 = vmatprep.mubr.f32.mxu0 %v4861
  %5438 = vmatmul.mubr.f32.gmra.mrb[0].mxu0 %v4228
  %v5439 = vpop.f32.mrb[0].mxu0
  %v5440 = vadd.f32 0.0, %v5439
  %v5441 = vpop.f32.mrb[0].mxu0
  %5442 = vmatprep.mubr.f32.mxu0 %v4864
  %5443 = vmatmul.mubr.f32.gmra.mrb[0].mxu0 %v4230
  %v5444 = vpop.f32.mrb[0].mxu0
  %v5445 = vadd.f32 0.0, %v5444
  %v5446 = vpop.f32.mrb[0].mxu0
  %5447 = vdwg.mxu0
  %5448 = vrot.lane.b32.xlu0 %v4933, 96
  %v5449 = vpop.permute.xlu0 %5448
  %5450 = vrot.lane.b32.xlu0 %v4939, 96
  %v5451 = vpop.permute.xlu0 %5450
  %5452 = vrot.lane.b32.xlu0 %v4945, 96
  %v5453 = vpop.permute.xlu0 %5452
  %5454 = vrot.lane.b32.xlu0 %v4951, 96
  %v5455 = vpop.permute.xlu0 %5454
  %5456 = vrot.lane.b32.xlu0 %v4957, 96
  %v5457 = vpop.permute.xlu0 %5456
  %5458 = vrot.lane.b32.xlu0 %v4963, 96
  %v5459 = vpop.permute.xlu0 %5458
  %5460 = vrot.lane.b32.xlu0 %v4969, 96
  %v5461 = vpop.permute.xlu0 %5460
  %5462 = vrot.lane.b32.xlu0 %v4975, 96
  %v5463 = vpop.permute.xlu0 %5462
  %5464 = vrot.lane.b32.xlu0 %v4981, 96
  %v5465 = vpop.permute.xlu0 %5464
  %5466 = vrot.lane.b32.xlu0 %v4987, 96
  %v5467 = vpop.permute.xlu0 %5466
  %5468 = vrot.lane.b32.xlu0 %v4993, 96
  %v5469 = vpop.permute.xlu0 %5468
  %5470 = vrot.lane.b32.xlu0 %v4999, 96
  %v5471 = vpop.permute.xlu0 %5470
  %5472 = vrot.lane.b32.xlu0 %v5005, 96
  %v5473 = vpop.permute.xlu0 %5472
  %5474 = vrot.lane.b32.xlu0 %v5011, 96
  %v5475 = vpop.permute.xlu0 %5474
  %5476 = vrot.lane.b32.xlu0 %v4935, 96
  %v5477 = vpop.permute.xlu0 %5476
  %5478 = vrot.lane.b32.xlu0 %v4941, 96
  %v5479 = vpop.permute.xlu0 %5478
  %5480 = vrot.lane.b32.xlu0 %v4947, 96
  %v5481 = vpop.permute.xlu0 %5480
  %5482 = vrot.lane.b32.xlu0 %v4953, 96
  %v5483 = vpop.permute.xlu0 %5482
  %5484 = vrot.lane.b32.xlu0 %v4959, 96
  %v5485 = vpop.permute.xlu0 %5484
  %5486 = vrot.lane.b32.xlu0 %v4965, 96
  %v5487 = vpop.permute.xlu0 %5486
  %5488 = vrot.lane.b32.xlu0 %v4971, 96
  %v5489 = vpop.permute.xlu0 %5488
  %5490 = vrot.lane.b32.xlu0 %v4977, 96
  %v5491 = vpop.permute.xlu0 %5490
  %5492 = vrot.lane.b32.xlu0 %v4983, 96
  %v5493 = vpop.permute.xlu0 %5492
  %5494 = vrot.lane.b32.xlu0 %v4989, 96
  %v5495 = vpop.permute.xlu0 %5494
  %5496 = vrot.lane.b32.xlu0 %v4995, 96
  %v5497 = vpop.permute.xlu0 %5496
  %5498 = vrot.lane.b32.xlu0 %v5001, 96
  %v5499 = vpop.permute.xlu0 %5498
  %5500 = vrot.lane.b32.xlu0 %v5007, 96
  %v5501 = vpop.permute.xlu0 %5500
  %5502 = vrot.lane.b32.xlu0 %v5013, 96
  %v5503 = vpop.permute.xlu0 %5502
  %5504 = vrot.lane.b32.xlu0 %v5082, 96
  %v5505 = vpop.permute.xlu0 %5504
  %5506 = vrot.lane.b32.xlu0 %v5088, 96
  %v5507 = vpop.permute.xlu0 %5506
  %5508 = vrot.lane.b32.xlu0 %v5094, 96
  %v5509 = vpop.permute.xlu0 %5508
  %5510 = vrot.lane.b32.xlu0 %v5100, 96
  %v5511 = vpop.permute.xlu0 %5510
  %5512 = vrot.lane.b32.xlu0 %v5106, 96
  %v5513 = vpop.permute.xlu0 %5512
  %5514 = vrot.lane.b32.xlu0 %v5112, 96
  %v5515 = vpop.permute.xlu0 %5514
  %5516 = vrot.lane.b32.xlu0 %v5118, 96
  %v5517 = vpop.permute.xlu0 %5516
  %5518 = vrot.lane.b32.xlu0 %v5124, 96
  %v5519 = vpop.permute.xlu0 %5518
  %5520 = vrot.lane.b32.xlu0 %v5130, 96
  %v5521 = vpop.permute.xlu0 %5520
  %5522 = vrot.lane.b32.xlu0 %v5136, 96
  %v5523 = vpop.permute.xlu0 %5522
  %5524 = vrot.lane.b32.xlu0 %v5142, 96
  %v5525 = vpop.permute.xlu0 %5524
  %5526 = vrot.lane.b32.xlu0 %v5148, 96
  %v5527 = vpop.permute.xlu0 %5526
  %5528 = vrot.lane.b32.xlu0 %v5154, 96
  %v5529 = vpop.permute.xlu0 %5528
  %5530 = vrot.lane.b32.xlu0 %v5160, 96
  %v5531 = vpop.permute.xlu0 %5530
  %5532 = vrot.lane.b32.xlu0 %v5084, 96
  %v5533 = vpop.permute.xlu0 %5532
  %5534 = vrot.lane.b32.xlu0 %v5090, 96
  %v5535 = vpop.permute.xlu0 %5534
  %5536 = vrot.lane.b32.xlu0 %v5096, 96
  %v5537 = vpop.permute.xlu0 %5536
  %5538 = vrot.lane.b32.xlu0 %v5102, 96
  %v5539 = vpop.permute.xlu0 %5538
  %5540 = vrot.lane.b32.xlu0 %v5108, 96
  %v5541 = vpop.permute.xlu0 %5540
  %5542 = vrot.lane.b32.xlu0 %v5114, 96
  %v5543 = vpop.permute.xlu0 %5542
  %5544 = vrot.lane.b32.xlu0 %v5120, 96
  %v5545 = vpop.permute.xlu0 %5544
  %5546 = vrot.lane.b32.xlu0 %v5126, 96
  %v5547 = vpop.permute.xlu0 %5546
  %5548 = vrot.lane.b32.xlu0 %v5132, 96
  %v5549 = vpop.permute.xlu0 %5548
  %5550 = vrot.lane.b32.xlu0 %v5138, 96
  %v5551 = vpop.permute.xlu0 %5550
  %5552 = vrot.lane.b32.xlu0 %v5144, 96
  %v5553 = vpop.permute.xlu0 %5552
  %5554 = vrot.lane.b32.xlu0 %v5150, 96
  %v5555 = vpop.permute.xlu0 %5554
  %5556 = vrot.lane.b32.xlu0 %v5156, 96
  %v5557 = vpop.permute.xlu0 %5556
  %5558 = vrot.lane.b32.xlu0 %v5162, 96
  %v5559 = vpop.permute.xlu0 %5558
  %5560 = vrot.lane.b32.xlu0 %v5231, 96
  %v5561 = vpop.permute.xlu0 %5560
  %5562 = vrot.lane.b32.xlu0 %v5237, 96
  %v5563 = vpop.permute.xlu0 %5562
  %5564 = vrot.lane.b32.xlu0 %v5243, 96
  %v5565 = vpop.permute.xlu0 %5564
  %5566 = vrot.lane.b32.xlu0 %v5249, 96
  %v5567 = vpop.permute.xlu0 %5566
  %5568 = vrot.lane.b32.xlu0 %v5255, 96
  %v5569 = vpop.permute.xlu0 %5568
  %5570 = vrot.lane.b32.xlu0 %v5261, 96
  %v5571 = vpop.permute.xlu0 %5570
  %5572 = vrot.lane.b32.xlu0 %v5267, 96
  %v5573 = vpop.permute.xlu0 %5572
  %5574 = vrot.lane.b32.xlu0 %v5273, 96
  %v5575 = vpop.permute.xlu0 %5574
  %5576 = vrot.lane.b32.xlu0 %v5279, 96
  %v5577 = vpop.permute.xlu0 %5576
  %5578 = vrot.lane.b32.xlu0 %v5285, 96
  %v5579 = vpop.permute.xlu0 %5578
  %5580 = vrot.lane.b32.xlu0 %v5291, 96
  %v5581 = vpop.permute.xlu0 %5580
  %5582 = vrot.lane.b32.xlu0 %v5297, 96
  %v5583 = vpop.permute.xlu0 %5582
  %5584 = vrot.lane.b32.xlu0 %v5303, 96
  %v5585 = vpop.permute.xlu0 %5584
  %5586 = vrot.lane.b32.xlu0 %v5309, 96
  %v5587 = vpop.permute.xlu0 %5586
  %5588 = vrot.lane.b32.xlu0 %v5233, 96
  %v5589 = vpop.permute.xlu0 %5588
  %5590 = vrot.lane.b32.xlu0 %v5239, 96
  %v5591 = vpop.permute.xlu0 %5590
  %5592 = vrot.lane.b32.xlu0 %v5245, 96
  %v5593 = vpop.permute.xlu0 %5592
  %5594 = vrot.lane.b32.xlu0 %v5251, 96
  %v5595 = vpop.permute.xlu0 %5594
  %5596 = vrot.lane.b32.xlu0 %v5257, 96
  %v5597 = vpop.permute.xlu0 %5596
  %5598 = vrot.lane.b32.xlu0 %v5263, 96
  %v5599 = vpop.permute.xlu0 %5598
  %5600 = vrot.lane.b32.xlu0 %v5269, 96
  %v5601 = vpop.permute.xlu0 %5600
  %5602 = vrot.lane.b32.xlu0 %v5275, 96
  %v5603 = vpop.permute.xlu0 %5602
  %5604 = vrot.lane.b32.xlu0 %v5281, 96
  %v5605 = vpop.permute.xlu0 %5604
  %5606 = vrot.lane.b32.xlu0 %v5287, 96
  %v5607 = vpop.permute.xlu0 %5606
  %5608 = vrot.lane.b32.xlu0 %v5293, 96
  %v5609 = vpop.permute.xlu0 %5608
  %5610 = vrot.lane.b32.xlu0 %v5299, 96
  %v5611 = vpop.permute.xlu0 %5610
  %5612 = vrot.lane.b32.xlu0 %v5305, 96
  %v5613 = vpop.permute.xlu0 %5612
  %5614 = vrot.lane.b32.xlu0 %v5311, 96
  %v5615 = vpop.permute.xlu0 %5614
  %5616 = vrot.lane.b32.xlu0 %v5380, 96
  %v5617 = vpop.permute.xlu0 %5616
  %5618 = vrot.lane.b32.xlu0 %v5385, 96
  %v5619 = vpop.permute.xlu0 %5618
  %5620 = vrot.lane.b32.xlu0 %v5390, 96
  %v5621 = vpop.permute.xlu0 %5620
  %5622 = vrot.lane.b32.xlu0 %v5395, 96
  %v5623 = vpop.permute.xlu0 %5622
  %5624 = vrot.lane.b32.xlu0 %v5400, 96
  %v5625 = vpop.permute.xlu0 %5624
  %5626 = vrot.lane.b32.xlu0 %v5405, 96
  %v5627 = vpop.permute.xlu0 %5626
  %5628 = vrot.lane.b32.xlu0 %v5410, 96
  %v5629 = vpop.permute.xlu0 %5628
  %5630 = vrot.lane.b32.xlu0 %v5415, 96
  %v5631 = vpop.permute.xlu0 %5630
  %5632 = vrot.lane.b32.xlu0 %v5420, 96
  %v5633 = vpop.permute.xlu0 %5632
  %5634 = vrot.lane.b32.xlu0 %v5425, 96
  %v5635 = vpop.permute.xlu0 %5634
  %5636 = vrot.lane.b32.xlu0 %v5430, 96
  %v5637 = vpop.permute.xlu0 %5636
  %5638 = vrot.lane.b32.xlu0 %v5435, 96
  %v5639 = vpop.permute.xlu0 %5638
  %5640 = vrot.lane.b32.xlu0 %v5440, 96
  %v5641 = vpop.permute.xlu0 %5640
  %5642 = vrot.lane.b32.xlu0 %v5445, 96
  %v5643 = vpop.permute.xlu0 %5642
  %v5644 = vsel %vm276, %v5589, %v5617
  %v5645 = vsel %vm276, %v5591, %v5619
  %v5646 = vsel %vm276, %v5593, %v5621
  %v5647 = vsel %vm276, %v5595, %v5623
  %v5648 = vsel %vm276, %v5597, %v5625
  %v5649 = vsel %vm276, %v5599, %v5627
  %v5650 = vsel %vm276, %v5601, %v5629
  %v5651 = vsel %vm276, %v5603, %v5631
  %v5652 = vsel %vm276, %v5605, %v5633
  %v5653 = vsel %vm276, %v5607, %v5635
  %v5654 = vsel %vm276, %v5609, %v5637
  %v5655 = vsel %vm276, %v5611, %v5639
  %v5656 = vsel %vm276, %v5613, %v5641
  %v5657 = vsel %vm276, %v5615, %v5643
  %v5658 = vsel %vm276, %v5561, %v5589
  %v5659 = vsel %vm276, %v5563, %v5591
  %v5660 = vsel %vm276, %v5565, %v5593
  %v5661 = vsel %vm276, %v5567, %v5595
  %v5662 = vsel %vm276, %v5569, %v5597
  %v5663 = vsel %vm276, %v5571, %v5599
  %v5664 = vsel %vm276, %v5573, %v5601
  %v5665 = vsel %vm276, %v5575, %v5603
  %v5666 = vsel %vm276, %v5577, %v5605
  %v5667 = vsel %vm276, %v5579, %v5607
  %v5668 = vsel %vm276, %v5581, %v5609
  %v5669 = vsel %vm276, %v5583, %v5611
  %v5670 = vsel %vm276, %v5585, %v5613
  %v5671 = vsel %vm276, %v5587, %v5615
  %v5672 = vsel %vm276, %v5533, %v5561
  %v5673 = vsel %vm276, %v5535, %v5563
  %v5674 = vsel %vm276, %v5537, %v5565
  %v5675 = vsel %vm276, %v5539, %v5567
  %v5676 = vsel %vm276, %v5541, %v5569
  %v5677 = vsel %vm276, %v5543, %v5571
  %v5678 = vsel %vm276, %v5545, %v5573
  %v5679 = vsel %vm276, %v5547, %v5575
  %v5680 = vsel %vm276, %v5549, %v5577
  %v5681 = vsel %vm276, %v5551, %v5579
  %v5682 = vsel %vm276, %v5553, %v5581
  %v5683 = vsel %vm276, %v5555, %v5583
  %v5684 = vsel %vm276, %v5557, %v5585
  %v5685 = vsel %vm276, %v5559, %v5587
  %v5686 = vsel %vm276, %v5505, %v5533
  %v5687 = vsel %vm276, %v5507, %v5535
  %v5688 = vsel %vm276, %v5509, %v5537
  %v5689 = vsel %vm276, %v5511, %v5539
  %v5690 = vsel %vm276, %v5513, %v5541
  %v5691 = vsel %vm276, %v5515, %v5543
  %v5692 = vsel %vm276, %v5517, %v5545
  %v5693 = vsel %vm276, %v5519, %v5547
  %v5694 = vsel %vm276, %v5521, %v5549
  %v5695 = vsel %vm276, %v5523, %v5551
  %v5696 = vsel %vm276, %v5525, %v5553
  %v5697 = vsel %vm276, %v5527, %v5555
  %v5698 = vsel %vm276, %v5529, %v5557
  %v5699 = vsel %vm276, %v5531, %v5559
  %v5700 = vsel %vm276, %v5477, %v5505
  %v5701 = vsel %vm276, %v5479, %v5507
  %v5702 = vsel %vm276, %v5481, %v5509
  %v5703 = vsel %vm276, %v5483, %v5511
  %v5704 = vsel %vm276, %v5485, %v5513
  %v5705 = vsel %vm276, %v5487, %v5515
  %v5706 = vsel %vm276, %v5489, %v5517
  %v5707 = vsel %vm276, %v5491, %v5519
  %v5708 = vsel %vm276, %v5493, %v5521
  %v5709 = vsel %vm276, %v5495, %v5523
  %v5710 = vsel %vm276, %v5497, %v5525
  %v5711 = vsel %vm276, %v5499, %v5527
  %v5712 = vsel %vm276, %v5501, %v5529
  %v5713 = vsel %vm276, %v5503, %v5531
  %v5714 = vsel %vm276, %v5449, %v5477
  %v5715 = vsel %vm276, %v5451, %v5479
  %v5716 = vsel %vm276, %v5453, %v5481
  %v5717 = vsel %vm276, %v5455, %v5483
  %v5718 = vsel %vm276, %v5457, %v5485
  %v5719 = vsel %vm276, %v5459, %v5487
  %v5720 = vsel %vm276, %v5461, %v5489
  %v5721 = vsel %vm276, %v5463, %v5491
  %v5722 = vsel %vm276, %v5465, %v5493
  %v5723 = vsel %vm276, %v5467, %v5495
  %v5724 = vsel %vm276, %v5469, %v5497
  %v5725 = vsel %vm276, %v5471, %v5499
  %v5726 = vsel %vm276, %v5473, %v5501
  %v5727 = vsel %vm276, %v5475, %v5503
  %v5728 = vsel %vm276, %v5617, %v5449
  %v5729 = vsel %vm276, %v5619, %v5451
  %v5730 = vsel %vm276, %v5621, %v5453
  %v5731 = vsel %vm276, %v5623, %v5455
  %v5732 = vsel %vm276, %v5625, %v5457
  %v5733 = vsel %vm276, %v5627, %v5459
  %v5734 = vsel %vm276, %v5629, %v5461
  %v5735 = vsel %vm276, %v5631, %v5463
  %v5736 = vsel %vm276, %v5633, %v5465
  %v5737 = vsel %vm276, %v5635, %v5467
  %v5738 = vsel %vm276, %v5637, %v5469
  %v5739 = vsel %vm276, %v5639, %v5471
  %v5740 = vsel %vm276, %v5641, %v5473
  %v5741 = vsel %vm276, %v5643, %v5475
  %v5742 = vmax.f32 %v4933, %v5714
  %v5743 = vmax.f32 %v4935, %v5700
  %v5744 = vmax.f32 %v5082, %v5686
  %v5745 = vmax.f32 %v5084, %v5672
  %v5746 = vmax.f32 %v5231, %v5658
  %v5747 = vmax.f32 %v5233, %v5644
  %v5748 = vmax.f32 %v5380, %v5728
  %v5749 = vmax.f32 %v4939, %v5715
  %v5750 = vmax.f32 %v4941, %v5701
  %v5751 = vmax.f32 %v5088, %v5687
  %v5752 = vmax.f32 %v5090, %v5673
  %v5753 = vmax.f32 %v5237, %v5659
  %v5754 = vmax.f32 %v5239, %v5645
  %v5755 = vmax.f32 %v5385, %v5729
  %v5756 = vmax.f32 %v4945, %v5716
  %v5757 = vmax.f32 %v4947, %v5702
  %v5758 = vmax.f32 %v5094, %v5688
  %v5759 = vmax.f32 %v5096, %v5674
  %v5760 = vmax.f32 %v5243, %v5660
  %v5761 = vmax.f32 %v5245, %v5646
  %v5762 = vmax.f32 %v5390, %v5730
  %v5763 = vmax.f32 %v4951, %v5717
  %v5764 = vmax.f32 %v4953, %v5703
  %v5765 = vmax.f32 %v5100, %v5689
  %v5766 = vmax.f32 %v5102, %v5675
  %v5767 = vmax.f32 %v5249, %v5661
  %v5768 = vmax.f32 %v5251, %v5647
  %v5769 = vmax.f32 %v5395, %v5731
  %v5770 = vmax.f32 %v4957, %v5718
  %v5771 = vmax.f32 %v4959, %v5704
  %v5772 = vmax.f32 %v5106, %v5690
  %v5773 = vmax.f32 %v5108, %v5676
  %v5774 = vmax.f32 %v5255, %v5662
  %v5775 = vmax.f32 %v5257, %v5648
  %v5776 = vmax.f32 %v5400, %v5732
  %v5777 = vmax.f32 %v4963, %v5719
  %v5778 = vmax.f32 %v4965, %v5705
  %v5779 = vmax.f32 %v5112, %v5691
  %v5780 = vmax.f32 %v5114, %v5677
  %v5781 = vmax.f32 %v5261, %v5663
  %v5782 = vmax.f32 %v5263, %v5649
  %v5783 = vmax.f32 %v5405, %v5733
  %v5784 = vmax.f32 %v4969, %v5720
  %v5785 = vmax.f32 %v4971, %v5706
  %v5786 = vmax.f32 %v5118, %v5692
  %v5787 = vmax.f32 %v5120, %v5678
  %v5788 = vmax.f32 %v5267, %v5664
  %v5789 = vmax.f32 %v5269, %v5650
  %v5790 = vmax.f32 %v5410, %v5734
  %v5791 = vmax.f32 %v4975, %v5721
  %v5792 = vmax.f32 %v4977, %v5707
  %v5793 = vmax.f32 %v5124, %v5693
  %v5794 = vmax.f32 %v5126, %v5679
  %v5795 = vmax.f32 %v5273, %v5665
  %v5796 = vmax.f32 %v5275, %v5651
  %v5797 = vmax.f32 %v5415, %v5735
  %v5798 = vmax.f32 %v4981, %v5722
  %v5799 = vmax.f32 %v4983, %v5708
  %v5800 = vmax.f32 %v5130, %v5694
  %v5801 = vmax.f32 %v5132, %v5680
  %v5802 = vmax.f32 %v5279, %v5666
  %v5803 = vmax.f32 %v5281, %v5652
  %v5804 = vmax.f32 %v5420, %v5736
  %v5805 = vmax.f32 %v4987, %v5723
  %v5806 = vmax.f32 %v4989, %v5709
  %v5807 = vmax.f32 %v5136, %v5695
  %v5808 = vmax.f32 %v5138, %v5681
  %v5809 = vmax.f32 %v5285, %v5667
  %v5810 = vmax.f32 %v5287, %v5653
  %v5811 = vmax.f32 %v5425, %v5737
  %v5812 = vmax.f32 %v4993, %v5724
  %v5813 = vmax.f32 %v4995, %v5710
  %v5814 = vmax.f32 %v5142, %v5696
  %v5815 = vmax.f32 %v5144, %v5682
  %v5816 = vmax.f32 %v5291, %v5668
  %v5817 = vmax.f32 %v5293, %v5654
  %v5818 = vmax.f32 %v5430, %v5738
  %v5819 = vmax.f32 %v4999, %v5725
  %v5820 = vmax.f32 %v5001, %v5711
  %v5821 = vmax.f32 %v5148, %v5697
  %v5822 = vmax.f32 %v5150, %v5683
  %v5823 = vmax.f32 %v5297, %v5669
  %v5824 = vmax.f32 %v5299, %v5655
  %v5825 = vmax.f32 %v5435, %v5739
  %v5826 = vmax.f32 %v5005, %v5726
  %v5827 = vmax.f32 %v5007, %v5712
  %v5828 = vmax.f32 %v5154, %v5698
  %v5829 = vmax.f32 %v5156, %v5684
  %v5830 = vmax.f32 %v5303, %v5670
  %v5831 = vmax.f32 %v5305, %v5656
  %v5832 = vmax.f32 %v5440, %v5740
  %v5833 = vmax.f32 %v5011, %v5727
  %v5834 = vmax.f32 %v5013, %v5713
  %v5835 = vmax.f32 %v5160, %v5699
  %v5836 = vmax.f32 %v5162, %v5685
  %v5837 = vmax.f32 %v5309, %v5671
  %v5838 = vmax.f32 %v5311, %v5657
  %v5839 = vmax.f32 %v5445, %v5741
  %vm5840 = vcmp.ge.s32.totalorder %v30, 64
  %vm5841 = vcmp.ge.s32.totalorder %v31, 64
  %vm5842 = vcmp.ge.s32.totalorder %v32, 64
  %vm5843 = vcmp.ge.s32.totalorder %v33, 64
  %vm5844 = vcmp.ge.s32.totalorder %v34, 64
  %vm5845 = vcmp.ge.s32.totalorder %v35, 64
  %vm5846 = vcmp.ge.s32.totalorder %v36, 64
  %v5847 = vsel %vm5840, 1, 0
  %v5848 = vsel %vm5841, 1, 0
  %v5849 = vsel %vm5842, 1, 0
  %v5850 = vsel %vm5843, 1, 0
  %v5851 = vsel %vm5844, 1, 0
  %v5852 = vsel %vm5845, 1, 0
  %v5853 = vsel %vm5846, 1, 0
  %v5854 = vcvt.s32.f32 %v5847
  %v5855 = vcvt.s32.f32 %v5848
  %v5856 = vcvt.s32.f32 %v5849
  %v5857 = vcvt.s32.f32 %v5850
  %v5858 = vcvt.s32.f32 %v5851
  %v5859 = vcvt.s32.f32 %v5852
  %v5860 = vcvt.s32.f32 %v5853
  %vm5861 = vcmp.lt.s32.totalorder %v30, 832
  %vm5862 = vcmp.lt.s32.totalorder %v31, 832
  %vm5863 = vcmp.lt.s32.totalorder %v32, 832
  %vm5864 = vcmp.lt.s32.totalorder %v33, 832
  %vm5865 = vcmp.lt.s32.totalorder %v34, 832
  %vm5866 = vcmp.lt.s32.totalorder %v35, 832
  %vm5867 = vcmp.lt.s32.totalorder %v36, 832
  %v5868 = vsel %vm5861, 1, 0
  %v5869 = vsel %vm5862, 1, 0
  %v5870 = vsel %vm5863, 1, 0
  %v5871 = vsel %vm5864, 1, 0
  %v5872 = vsel %vm5865, 1, 0
  %v5873 = vsel %vm5866, 1, 0
  %v5874 = vsel %vm5867, 1, 0
  %v5875 = vcvt.s32.f32 %v5868
  %v5876 = vcvt.s32.f32 %v5869
  %v5877 = vcvt.s32.f32 %v5870
  %v5878 = vcvt.s32.f32 %v5871
  %v5879 = vcvt.s32.f32 %v5872
  %v5880 = vcvt.s32.f32 %v5873
  %v5881 = vcvt.s32.f32 %v5874
  %5882 = vrot.lane.b32.xlu0 %v5742, 64
  %v5883 = vpop.permute.xlu0 %5882
  %5884 = vrot.lane.b32.xlu0 %v5749, 64
  %v5885 = vpop.permute.xlu0 %5884
  %5886 = vrot.lane.b32.xlu0 %v5756, 64
  %v5887 = vpop.permute.xlu0 %5886
  %5888 = vrot.lane.b32.xlu0 %v5763, 64
  %v5889 = vpop.permute.xlu0 %5888
  %5890 = vrot.lane.b32.xlu0 %v5770, 64
  %v5891 = vpop.permute.xlu0 %5890
  %5892 = vrot.lane.b32.xlu0 %v5777, 64
  %v5893 = vpop.permute.xlu0 %5892
  %5894 = vrot.lane.b32.xlu0 %v5784, 64
  %v5895 = vpop.permute.xlu0 %5894
  %5896 = vrot.lane.b32.xlu0 %v5791, 64
  %v5897 = vpop.permute.xlu0 %5896
  %5898 = vrot.lane.b32.xlu0 %v5798, 64
  %v5899 = vpop.permute.xlu0 %5898
  %5900 = vrot.lane.b32.xlu0 %v5805, 64
  %v5901 = vpop.permute.xlu0 %5900
  %5902 = vrot.lane.b32.xlu0 %v5812, 64
  %v5903 = vpop.permute.xlu0 %5902
  %5904 = vrot.lane.b32.xlu0 %v5819, 64
  %v5905 = vpop.permute.xlu0 %5904
  %5906 = vrot.lane.b32.xlu0 %v5826, 64
  %v5907 = vpop.permute.xlu0 %5906
  %5908 = vrot.lane.b32.xlu0 %v5833, 64
  %v5909 = vpop.permute.xlu0 %5908
  %5910 = vrot.lane.b32.xlu0 %v5743, 64
  %v5911 = vpop.permute.xlu0 %5910
  %5912 = vrot.lane.b32.xlu0 %v5750, 64
  %v5913 = vpop.permute.xlu0 %5912
  %5914 = vrot.lane.b32.xlu0 %v5757, 64
  %v5915 = vpop.permute.xlu0 %5914
  %5916 = vrot.lane.b32.xlu0 %v5764, 64
  %v5917 = vpop.permute.xlu0 %5916
  %5918 = vrot.lane.b32.xlu0 %v5771, 64
  %v5919 = vpop.permute.xlu0 %5918
  %5920 = vrot.lane.b32.xlu0 %v5778, 64
  %v5921 = vpop.permute.xlu0 %5920
  %5922 = vrot.lane.b32.xlu0 %v5785, 64
  %v5923 = vpop.permute.xlu0 %5922
  %5924 = vrot.lane.b32.xlu0 %v5792, 64
  %v5925 = vpop.permute.xlu0 %5924
  %5926 = vrot.lane.b32.xlu0 %v5799, 64
  %v5927 = vpop.permute.xlu0 %5926
  %5928 = vrot.lane.b32.xlu0 %v5806, 64
  %v5929 = vpop.permute.xlu0 %5928
  %5930 = vrot.lane.b32.xlu0 %v5813, 64
  %v5931 = vpop.permute.xlu0 %5930
  %5932 = vrot.lane.b32.xlu0 %v5820, 64
  %v5933 = vpop.permute.xlu0 %5932
  %5934 = vrot.lane.b32.xlu0 %v5827, 64
  %v5935 = vpop.permute.xlu0 %5934
  %5936 = vrot.lane.b32.xlu0 %v5834, 64
  %v5937 = vpop.permute.xlu0 %5936
  %5938 = vrot.lane.b32.xlu0 %v5744, 64
  %v5939 = vpop.permute.xlu0 %5938
  %5940 = vrot.lane.b32.xlu0 %v5751, 64
  %v5941 = vpop.permute.xlu0 %5940
  %5942 = vrot.lane.b32.xlu0 %v5758, 64
  %v5943 = vpop.permute.xlu0 %5942
  %5944 = vrot.lane.b32.xlu0 %v5765, 64
  %v5945 = vpop.permute.xlu0 %5944
  %5946 = vrot.lane.b32.xlu0 %v5772, 64
  %v5947 = vpop.permute.xlu0 %5946
  %5948 = vrot.lane.b32.xlu0 %v5779, 64
  %v5949 = vpop.permute.xlu0 %5948
  %5950 = vrot.lane.b32.xlu0 %v5786, 64
  %v5951 = vpop.permute.xlu0 %5950
  %5952 = vrot.lane.b32.xlu0 %v5793, 64
  %v5953 = vpop.permute.xlu0 %5952
  %5954 = vrot.lane.b32.xlu0 %v5800, 64
  %v5955 = vpop.permute.xlu0 %5954
  %5956 = vrot.lane.b32.xlu0 %v5807, 64
  %v5957 = vpop.permute.xlu0 %5956
  %5958 = vrot.lane.b32.xlu0 %v5814, 64
  %v5959 = vpop.permute.xlu0 %5958
  %5960 = vrot.lane.b32.xlu0 %v5821, 64
  %v5961 = vpop.permute.xlu0 %5960
  %5962 = vrot.lane.b32.xlu0 %v5828, 64
  %v5963 = vpop.permute.xlu0 %5962
  %5964 = vrot.lane.b32.xlu0 %v5835, 64
  %v5965 = vpop.permute.xlu0 %5964
  %5966 = vrot.lane.b32.xlu0 %v5745, 64
  %v5967 = vpop.permute.xlu0 %5966
  %5968 = vrot.lane.b32.xlu0 %v5752, 64
  %v5969 = vpop.permute.xlu0 %5968
  %5970 = vrot.lane.b32.xlu0 %v5759, 64
  %v5971 = vpop.permute.xlu0 %5970
  %5972 = vrot.lane.b32.xlu0 %v5766, 64
  %v5973 = vpop.permute.xlu0 %5972
  %5974 = vrot.lane.b32.xlu0 %v5773, 64
  %v5975 = vpop.permute.xlu0 %5974
  %5976 = vrot.lane.b32.xlu0 %v5780, 64
  %v5977 = vpop.permute.xlu0 %5976
  %5978 = vrot.lane.b32.xlu0 %v5787, 64
  %v5979 = vpop.permute.xlu0 %5978
  %5980 = vrot.lane.b32.xlu0 %v5794, 64
  %v5981 = vpop.permute.xlu0 %5980
  %5982 = vrot.lane.b32.xlu0 %v5801, 64
  %v5983 = vpop.permute.xlu0 %5982
  %5984 = vrot.lane.b32.xlu0 %v5808, 64
  %v5985 = vpop.permute.xlu0 %5984
  %5986 = vrot.lane.b32.xlu0 %v5815, 64
  %v5987 = vpop.permute.xlu0 %5986
  %5988 = vrot.lane.b32.xlu0 %v5822, 64
  %v5989 = vpop.permute.xlu0 %5988
  %5990 = vrot.lane.b32.xlu0 %v5829, 64
  %v5991 = vpop.permute.xlu0 %5990
  %5992 = vrot.lane.b32.xlu0 %v5836, 64
  %v5993 = vpop.permute.xlu0 %5992
  %5994 = vrot.lane.b32.xlu0 %v5746, 64
  %v5995 = vpop.permute.xlu0 %5994
  %5996 = vrot.lane.b32.xlu0 %v5753, 64
  %v5997 = vpop.permute.xlu0 %5996
  %5998 = vrot.lane.b32.xlu0 %v5760, 64
  %v5999 = vpop.permute.xlu0 %5998
  %6000 = vrot.lane.b32.xlu0 %v5767, 64
  %v6001 = vpop.permute.xlu0 %6000
  %6002 = vrot.lane.b32.xlu0 %v5774, 64
  %v6003 = vpop.permute.xlu0 %6002
  %6004 = vrot.lane.b32.xlu0 %v5781, 64
  %v6005 = vpop.permute.xlu0 %6004
  %6006 = vrot.lane.b32.xlu0 %v5788, 64
  %v6007 = vpop.permute.xlu0 %6006
  %6008 = vrot.lane.b32.xlu0 %v5795, 64
  %v6009 = vpop.permute.xlu0 %6008
  %6010 = vrot.lane.b32.xlu0 %v5802, 64
  %v6011 = vpop.permute.xlu0 %6010
  %6012 = vrot.lane.b32.xlu0 %v5809, 64
  %v6013 = vpop.permute.xlu0 %6012
  %6014 = vrot.lane.b32.xlu0 %v5816, 64
  %v6015 = vpop.permute.xlu0 %6014
  %6016 = vrot.lane.b32.xlu0 %v5823, 64
  %v6017 = vpop.permute.xlu0 %6016
  %6018 = vrot.lane.b32.xlu0 %v5830, 64
  %v6019 = vpop.permute.xlu0 %6018
  %6020 = vrot.lane.b32.xlu0 %v5837, 64
  %v6021 = vpop.permute.xlu0 %6020
  %6022 = vrot.lane.b32.xlu0 %v5747, 64
  %v6023 = vpop.permute.xlu0 %6022
  %6024 = vrot.lane.b32.xlu0 %v5754, 64
  %v6025 = vpop.permute.xlu0 %6024
  %6026 = vrot.lane.b32.xlu0 %v5761, 64
  %v6027 = vpop.permute.xlu0 %6026
  %6028 = vrot.lane.b32.xlu0 %v5768, 64
  %v6029 = vpop.permute.xlu0 %6028
  %6030 = vrot.lane.b32.xlu0 %v5775, 64
  %v6031 = vpop.permute.xlu0 %6030
  %6032 = vrot.lane.b32.xlu0 %v5782, 64
  %v6033 = vpop.permute.xlu0 %6032
  %6034 = vrot.lane.b32.xlu0 %v5789, 64
  %v6035 = vpop.permute.xlu0 %6034
  %6036 = vrot.lane.b32.xlu0 %v5796, 64
  %v6037 = vpop.permute.xlu0 %6036
  %6038 = vrot.lane.b32.xlu0 %v5803, 64
  %v6039 = vpop.permute.xlu0 %6038
  %6040 = vrot.lane.b32.xlu0 %v5810, 64
  %v6041 = vpop.permute.xlu0 %6040
  %6042 = vrot.lane.b32.xlu0 %v5817, 64
  %v6043 = vpop.permute.xlu0 %6042
  %6044 = vrot.lane.b32.xlu0 %v5824, 64
  %v6045 = vpop.permute.xlu0 %6044
  %6046 = vrot.lane.b32.xlu0 %v5831, 64
  %v6047 = vpop.permute.xlu0 %6046
  %6048 = vrot.lane.b32.xlu0 %v5838, 64
  %v6049 = vpop.permute.xlu0 %6048
  %6050 = vrot.lane.b32.xlu0 %v5748, 64
  %v6051 = vpop.permute.xlu0 %6050
  %6052 = vrot.lane.b32.xlu0 %v5755, 64
  %v6053 = vpop.permute.xlu0 %6052
  %6054 = vrot.lane.b32.xlu0 %v5762, 64
  %v6055 = vpop.permute.xlu0 %6054
  %6056 = vrot.lane.b32.xlu0 %v5769, 64
  %v6057 = vpop.permute.xlu0 %6056
  %6058 = vrot.lane.b32.xlu0 %v5776, 64
  %v6059 = vpop.permute.xlu0 %6058
  %6060 = vrot.lane.b32.xlu0 %v5783, 64
  %v6061 = vpop.permute.xlu0 %6060
  %6062 = vrot.lane.b32.xlu0 %v5790, 64
  %v6063 = vpop.permute.xlu0 %6062
  %6064 = vrot.lane.b32.xlu0 %v5797, 64
  %v6065 = vpop.permute.xlu0 %6064
  %6066 = vrot.lane.b32.xlu0 %v5804, 64
  %v6067 = vpop.permute.xlu0 %6066
  %6068 = vrot.lane.b32.xlu0 %v5811, 64
  %v6069 = vpop.permute.xlu0 %6068
  %6070 = vrot.lane.b32.xlu0 %v5818, 64
  %v6071 = vpop.permute.xlu0 %6070
  %6072 = vrot.lane.b32.xlu0 %v5825, 64
  %v6073 = vpop.permute.xlu0 %6072
  %6074 = vrot.lane.b32.xlu0 %v5832, 64
  %v6075 = vpop.permute.xlu0 %6074
  %6076 = vrot.lane.b32.xlu0 %v5839, 64
  %v6077 = vpop.permute.xlu0 %6076
  %vm6078 = vcmp.lt.s32.totalorder %v30, 64
  %v6079 = vsel %vm6078, %v6023, %v6051
  %v6080 = vsel %vm6078, %v6025, %v6053
  %v6081 = vsel %vm6078, %v6027, %v6055
  %v6082 = vsel %vm6078, %v6029, %v6057
  %v6083 = vsel %vm6078, %v6031, %v6059
  %v6084 = vsel %vm6078, %v6033, %v6061
  %v6085 = vsel %vm6078, %v6035, %v6063
  %v6086 = vsel %vm6078, %v6037, %v6065
  %v6087 = vsel %vm6078, %v6039, %v6067
  %v6088 = vsel %vm6078, %v6041, %v6069
  %v6089 = vsel %vm6078, %v6043, %v6071
  %v6090 = vsel %vm6078, %v6045, %v6073
  %v6091 = vsel %vm6078, %v6047, %v6075
  %v6092 = vsel %vm6078, %v6049, %v6077
  %v6093 = vsel %vm6078, %v5995, %v6023
  %v6094 = vsel %vm6078, %v5997, %v6025
  %v6095 = vsel %vm6078, %v5999, %v6027
  %v6096 = vsel %vm6078, %v6001, %v6029
  %v6097 = vsel %vm6078, %v6003, %v6031
  %v6098 = vsel %vm6078, %v6005, %v6033
  %v6099 = vsel %vm6078, %v6007, %v6035
  %v6100 = vsel %vm6078, %v6009, %v6037
  %v6101 = vsel %vm6078, %v6011, %v6039
  %v6102 = vsel %vm6078, %v6013, %v6041
  %v6103 = vsel %vm6078, %v6015, %v6043
  %v6104 = vsel %vm6078, %v6017, %v6045
  %v6105 = vsel %vm6078, %v6019, %v6047
  %v6106 = vsel %vm6078, %v6021, %v6049
  %v6107 = vsel %vm6078, %v5967, %v5995
  %v6108 = vsel %vm6078, %v5969, %v5997
  %v6109 = vsel %vm6078, %v5971, %v5999
  %v6110 = vsel %vm6078, %v5973, %v6001
  %v6111 = vsel %vm6078, %v5975, %v6003
  %v6112 = vsel %vm6078, %v5977, %v6005
  %v6113 = vsel %vm6078, %v5979, %v6007
  %v6114 = vsel %vm6078, %v5981, %v6009
  %v6115 = vsel %vm6078, %v5983, %v6011
  %v6116 = vsel %vm6078, %v5985, %v6013
  %v6117 = vsel %vm6078, %v5987, %v6015
  %v6118 = vsel %vm6078, %v5989, %v6017
  %v6119 = vsel %vm6078, %v5991, %v6019
  %v6120 = vsel %vm6078, %v5993, %v6021
  %v6121 = vsel %vm6078, %v5939, %v5967
  %v6122 = vsel %vm6078, %v5941, %v5969
  %v6123 = vsel %vm6078, %v5943, %v5971
  %v6124 = vsel %vm6078, %v5945, %v5973
  %v6125 = vsel %vm6078, %v5947, %v5975
  %v6126 = vsel %vm6078, %v5949, %v5977
  %v6127 = vsel %vm6078, %v5951, %v5979
  %v6128 = vsel %vm6078, %v5953, %v5981
  %v6129 = vsel %vm6078, %v5955, %v5983
  %v6130 = vsel %vm6078, %v5957, %v5985
  %v6131 = vsel %vm6078, %v5959, %v5987
  %v6132 = vsel %vm6078, %v5961, %v5989
  %v6133 = vsel %vm6078, %v5963, %v5991
  %v6134 = vsel %vm6078, %v5965, %v5993
  %v6135 = vsel %vm6078, %v5911, %v5939
  %v6136 = vsel %vm6078, %v5913, %v5941
  %v6137 = vsel %vm6078, %v5915, %v5943
  %v6138 = vsel %vm6078, %v5917, %v5945
  %v6139 = vsel %vm6078, %v5919, %v5947
  %v6140 = vsel %vm6078, %v5921, %v5949
  %v6141 = vsel %vm6078, %v5923, %v5951
  %v6142 = vsel %vm6078, %v5925, %v5953
  %v6143 = vsel %vm6078, %v5927, %v5955
  %v6144 = vsel %vm6078, %v5929, %v5957
  %v6145 = vsel %vm6078, %v5931, %v5959
  %v6146 = vsel %vm6078, %v5933, %v5961
  %v6147 = vsel %vm6078, %v5935, %v5963
  %v6148 = vsel %vm6078, %v5937, %v5965
  %v6149 = vsel %vm6078, %v5883, %v5911
  %v6150 = vsel %vm6078, %v5885, %v5913
  %v6151 = vsel %vm6078, %v5887, %v5915
  %v6152 = vsel %vm6078, %v5889, %v5917
  %v6153 = vsel %vm6078, %v5891, %v5919
  %v6154 = vsel %vm6078, %v5893, %v5921
  %v6155 = vsel %vm6078, %v5895, %v5923
  %v6156 = vsel %vm6078, %v5897, %v5925
  %v6157 = vsel %vm6078, %v5899, %v5927
  %v6158 = vsel %vm6078, %v5901, %v5929
  %v6159 = vsel %vm6078, %v5903, %v5931
  %v6160 = vsel %vm6078, %v5905, %v5933
  %v6161 = vsel %vm6078, %v5907, %v5935
  %v6162 = vsel %vm6078, %v5909, %v5937
  %v6163 = vsel %vm6078, %v6051, %v5883
  %v6164 = vsel %vm6078, %v6053, %v5885
  %v6165 = vsel %vm6078, %v6055, %v5887
  %v6166 = vsel %vm6078, %v6057, %v5889
  %v6167 = vsel %vm6078, %v6059, %v5891
  %v6168 = vsel %vm6078, %v6061, %v5893
  %v6169 = vsel %vm6078, %v6063, %v5895
  %v6170 = vsel %vm6078, %v6065, %v5897
  %v6171 = vsel %vm6078, %v6067, %v5899
  %v6172 = vsel %vm6078, %v6069, %v5901
  %v6173 = vsel %vm6078, %v6071, %v5903
  %v6174 = vsel %vm6078, %v6073, %v5905
  %v6175 = vsel %vm6078, %v6075, %v5907
  %v6176 = vsel %vm6078, %v6077, %v5909
  %v6177 = vmul.f32 %v6163, %v5854
  %v6178 = vmul.f32 %v6149, %v5855
  %v6179 = vmul.f32 %v6135, %v5856
  %v6180 = vmul.f32 %v6121, %v5857
  %v6181 = vmul.f32 %v6107, %v5858
  %v6182 = vmul.f32 %v6093, %v5859
  %v6183 = vmul.f32 %v6079, %v5860
  %v6184 = vmul.f32 %v6164, %v5854
  %v6185 = vmul.f32 %v6150, %v5855
  %v6186 = vmul.f32 %v6136, %v5856
  %v6187 = vmul.f32 %v6122, %v5857
  %v6188 = vmul.f32 %v6108, %v5858
  %v6189 = vmul.f32 %v6094, %v5859
  %v6190 = vmul.f32 %v6080, %v5860
  %v6191 = vmul.f32 %v6165, %v5854
  %v6192 = vmul.f32 %v6151, %v5855
  %v6193 = vmul.f32 %v6137, %v5856
  %v6194 = vmul.f32 %v6123, %v5857
  %v6195 = vmul.f32 %v6109, %v5858
  %v6196 = vmul.f32 %v6095, %v5859
  %v6197 = vmul.f32 %v6081, %v5860
  %v6198 = vmul.f32 %v6166, %v5854
  %v6199 = vmul.f32 %v6152, %v5855
  %v6200 = vmul.f32 %v6138, %v5856
  %v6201 = vmul.f32 %v6124, %v5857
  %v6202 = vmul.f32 %v6110, %v5858
  %v6203 = vmul.f32 %v6096, %v5859
  %v6204 = vmul.f32 %v6082, %v5860
  %v6205 = vmul.f32 %v6167, %v5854
  %v6206 = vmul.f32 %v6153, %v5855
  %v6207 = vmul.f32 %v6139, %v5856
  %v6208 = vmul.f32 %v6125, %v5857
  %v6209 = vmul.f32 %v6111, %v5858
  %v6210 = vmul.f32 %v6097, %v5859
  %v6211 = vmul.f32 %v6083, %v5860
  %v6212 = vmul.f32 %v6168, %v5854
  %v6213 = vmul.f32 %v6154, %v5855
  %v6214 = vmul.f32 %v6140, %v5856
  %v6215 = vmul.f32 %v6126, %v5857
  %v6216 = vmul.f32 %v6112, %v5858
  %v6217 = vmul.f32 %v6098, %v5859
  %v6218 = vmul.f32 %v6084, %v5860
  %v6219 = vmul.f32 %v6169, %v5854
  %v6220 = vmul.f32 %v6155, %v5855
  %v6221 = vmul.f32 %v6141, %v5856
  %v6222 = vmul.f32 %v6127, %v5857
  %v6223 = vmul.f32 %v6113, %v5858
  %v6224 = vmul.f32 %v6099, %v5859
  %v6225 = vmul.f32 %v6085, %v5860
  %v6226 = vmul.f32 %v6170, %v5854
  %v6227 = vmul.f32 %v6156, %v5855
  %v6228 = vmul.f32 %v6142, %v5856
  %v6229 = vmul.f32 %v6128, %v5857
  %v6230 = vmul.f32 %v6114, %v5858
  %v6231 = vmul.f32 %v6100, %v5859
  %v6232 = vmul.f32 %v6086, %v5860
  %v6233 = vmul.f32 %v6171, %v5854
  %v6234 = vmul.f32 %v6157, %v5855
  %v6235 = vmul.f32 %v6143, %v5856
  %v6236 = vmul.f32 %v6129, %v5857
  %v6237 = vmul.f32 %v6115, %v5858
  %v6238 = vmul.f32 %v6101, %v5859
  %v6239 = vmul.f32 %v6087, %v5860
  %v6240 = vmul.f32 %v6172, %v5854
  %v6241 = vmul.f32 %v6158, %v5855
  %v6242 = vmul.f32 %v6144, %v5856
  %v6243 = vmul.f32 %v6130, %v5857
  %v6244 = vmul.f32 %v6116, %v5858
  %v6245 = vmul.f32 %v6102, %v5859
  %v6246 = vmul.f32 %v6088, %v5860
  %v6247 = vmul.f32 %v6173, %v5854
  %v6248 = vmul.f32 %v6159, %v5855
  %v6249 = vmul.f32 %v6145, %v5856
  %v6250 = vmul.f32 %v6131, %v5857
  %v6251 = vmul.f32 %v6117, %v5858
  %v6252 = vmul.f32 %v6103, %v5859
  %v6253 = vmul.f32 %v6089, %v5860
  %v6254 = vmul.f32 %v6174, %v5854
  %v6255 = vmul.f32 %v6160, %v5855
  %v6256 = vmul.f32 %v6146, %v5856
  %v6257 = vmul.f32 %v6132, %v5857
  %v6258 = vmul.f32 %v6118, %v5858
  %v6259 = vmul.f32 %v6104, %v5859
  %v6260 = vmul.f32 %v6090, %v5860
  %v6261 = vmul.f32 %v6175, %v5854
  %v6262 = vmul.f32 %v6161, %v5855
  %v6263 = vmul.f32 %v6147, %v5856
  %v6264 = vmul.f32 %v6133, %v5857
  %v6265 = vmul.f32 %v6119, %v5858
  %v6266 = vmul.f32 %v6105, %v5859
  %v6267 = vmul.f32 %v6091, %v5860
  %v6268 = vmul.f32 %v6176, %v5854
  %v6269 = vmul.f32 %v6162, %v5855
  %v6270 = vmul.f32 %v6148, %v5856
  %v6271 = vmul.f32 %v6134, %v5857
  %v6272 = vmul.f32 %v6120, %v5858
  %v6273 = vmul.f32 %v6106, %v5859
  %v6274 = vmul.f32 %v6092, %v5860
  %v6275 = vmul.f32 %v6149, %v5875
  %v6276 = vmul.f32 %v6135, %v5876
  %v6277 = vmul.f32 %v6121, %v5877
  %v6278 = vmul.f32 %v6107, %v5878
  %v6279 = vmul.f32 %v6093, %v5879
  %v6280 = vmul.f32 %v6079, %v5880
  %v6281 = vmul.f32 %v6163, %v5881
  %v6282 = vmul.f32 %v6150, %v5875
  %v6283 = vmul.f32 %v6136, %v5876
  %v6284 = vmul.f32 %v6122, %v5877
  %v6285 = vmul.f32 %v6108, %v5878
  %v6286 = vmul.f32 %v6094, %v5879
  %v6287 = vmul.f32 %v6080, %v5880
  %v6288 = vmul.f32 %v6164, %v5881
  %v6289 = vmul.f32 %v6151, %v5875
  %v6290 = vmul.f32 %v6137, %v5876
  %v6291 = vmul.f32 %v6123, %v5877
  %v6292 = vmul.f32 %v6109, %v5878
  %v6293 = vmul.f32 %v6095, %v5879
  %v6294 = vmul.f32 %v6081, %v5880
  %v6295 = vmul.f32 %v6165, %v5881
  %v6296 = vmul.f32 %v6152, %v5875
  %v6297 = vmul.f32 %v6138, %v5876
  %v6298 = vmul.f32 %v6124, %v5877
  %v6299 = vmul.f32 %v6110, %v5878
  %v6300 = vmul.f32 %v6096, %v5879
  %v6301 = vmul.f32 %v6082, %v5880
  %v6302 = vmul.f32 %v6166, %v5881
  %v6303 = vmul.f32 %v6153, %v5875
  %v6304 = vmul.f32 %v6139, %v5876
  %v6305 = vmul.f32 %v6125, %v5877
  %v6306 = vmul.f32 %v6111, %v5878
  %v6307 = vmul.f32 %v6097, %v5879
  %v6308 = vmul.f32 %v6083, %v5880
  %v6309 = vmul.f32 %v6167, %v5881
  %v6310 = vmul.f32 %v6154, %v5875
  %v6311 = vmul.f32 %v6140, %v5876
  %v6312 = vmul.f32 %v6126, %v5877
  %v6313 = vmul.f32 %v6112, %v5878
  %v6314 = vmul.f32 %v6098, %v5879
  %v6315 = vmul.f32 %v6084, %v5880
  %v6316 = vmul.f32 %v6168, %v5881
  %v6317 = vmul.f32 %v6155, %v5875
  %v6318 = vmul.f32 %v6141, %v5876
  %v6319 = vmul.f32 %v6127, %v5877
  %v6320 = vmul.f32 %v6113, %v5878
  %v6321 = vmul.f32 %v6099, %v5879
  %v6322 = vmul.f32 %v6085, %v5880
  %v6323 = vmul.f32 %v6169, %v5881
  %v6324 = vmul.f32 %v6156, %v5875
  %v6325 = vmul.f32 %v6142, %v5876
  %v6326 = vmul.f32 %v6128, %v5877
  %v6327 = vmul.f32 %v6114, %v5878
  %v6328 = vmul.f32 %v6100, %v5879
  %v6329 = vmul.f32 %v6086, %v5880
  %v6330 = vmul.f32 %v6170, %v5881
  %v6331 = vmul.f32 %v6157, %v5875
  %v6332 = vmul.f32 %v6143, %v5876
  %v6333 = vmul.f32 %v6129, %v5877
  %v6334 = vmul.f32 %v6115, %v5878
  %v6335 = vmul.f32 %v6101, %v5879
  %v6336 = vmul.f32 %v6087, %v5880
  %v6337 = vmul.f32 %v6171, %v5881
  %v6338 = vmul.f32 %v6158, %v5875
  %v6339 = vmul.f32 %v6144, %v5876
  %v6340 = vmul.f32 %v6130, %v5877
  %v6341 = vmul.f32 %v6116, %v5878
  %v6342 = vmul.f32 %v6102, %v5879
  %v6343 = vmul.f32 %v6088, %v5880
  %v6344 = vmul.f32 %v6172, %v5881
  %v6345 = vmul.f32 %v6159, %v5875
  %v6346 = vmul.f32 %v6145, %v5876
  %v6347 = vmul.f32 %v6131, %v5877
  %v6348 = vmul.f32 %v6117, %v5878
  %v6349 = vmul.f32 %v6103, %v5879
  %v6350 = vmul.f32 %v6089, %v5880
  %v6351 = vmul.f32 %v6173, %v5881
  %v6352 = vmul.f32 %v6160, %v5875
  %v6353 = vmul.f32 %v6146, %v5876
  %v6354 = vmul.f32 %v6132, %v5877
  %v6355 = vmul.f32 %v6118, %v5878
  %v6356 = vmul.f32 %v6104, %v5879
  %v6357 = vmul.f32 %v6090, %v5880
  %v6358 = vmul.f32 %v6174, %v5881
  %v6359 = vmul.f32 %v6161, %v5875
  %v6360 = vmul.f32 %v6147, %v5876
  %v6361 = vmul.f32 %v6133, %v5877
  %v6362 = vmul.f32 %v6119, %v5878
  %v6363 = vmul.f32 %v6105, %v5879
  %v6364 = vmul.f32 %v6091, %v5880
  %v6365 = vmul.f32 %v6175, %v5881
  %v6366 = vmul.f32 %v6162, %v5875
  %v6367 = vmul.f32 %v6148, %v5876
  %v6368 = vmul.f32 %v6134, %v5877
  %v6369 = vmul.f32 %v6120, %v5878
  %v6370 = vmul.f32 %v6106, %v5879
  %v6371 = vmul.f32 %v6092, %v5880
  %v6372 = vmul.f32 %v6176, %v5881
  %v6373 = vld [vmem:[%s3] sm:$0xff]
  %v6374 = vld [vmem:[%s3 + $0x8] sm:$0xff]
  %v6375 = vld [vmem:[%s3 + $0x10] sm:$0xff]
  %v6376 = vld [vmem:[%s3 + $0x18] sm:$0xff]
  %v6377 = vld [vmem:[%s3 + $0x20] sm:$0xff]
  %v6378 = vld [vmem:[%s3 + $0x28] sm:$0xff]
  %v6379 = vld [vmem:[%s3 + $0x30] sm:$0xff]
  %v6380 = vld [vmem:[%s3 + $0x38] sm:$0xff]
  %v6381 = vld [vmem:[%s3 + $0x40] sm:$0xff]
  %v6382 = vld [vmem:[%s3 + $0x48] sm:$0xff]
  %v6383 = vld [vmem:[%s3 + $0x50] sm:$0xff]
  %v6384 = vld [vmem:[%s3 + $0x58] sm:$0xff]
  %v6385 = vld [vmem:[%s3 + $0x60] sm:$0xff]
  %v6386 = vld [vmem:[%s3 + $0x68] sm:$0xff]
  %v6387 = vld [vmem:[%s3 + $0x70] sm:$0xff]
  %v6388 = vld [vmem:[%s3 + $0x78] sm:$0xff]
  %v6389 = vld [vmem:[%s3 + $0x80] sm:$0xff]
  %v6390 = vld [vmem:[%s3 + $0x88] sm:$0xff]
  %v6391 = vld [vmem:[%s3 + $0x90] sm:$0xff]
  %v6392 = vld [vmem:[%s3 + $0x98] sm:$0xff]
  %v6393 = vld [vmem:[%s3 + $0xa0] sm:$0xff]
  %v6394 = vld [vmem:[%s3 + $0xa8] sm:$0xff]
  %v6395 = vld [vmem:[%s3 + $0xb0] sm:$0xff]
  %v6396 = vld [vmem:[%s3 + $0xb8] sm:$0xff]
  %v6397 = vld [vmem:[%s3 + $0xc0] sm:$0xff]
  %v6398 = vld [vmem:[%s3 + $0xc8] sm:$0xff]
  %v6399 = vld [vmem:[%s3 + $0xd0] sm:$0xff]
  %v6400 = vld [vmem:[%s3 + $0xd8] sm:$0xff]
  %s6401 = scalar_lea.vmem %s3, 224
  %v6402 = vld [vmem:[%s6401] sm:$0xff]
  %v6403 = vld [vmem:[%s6401 + $0x8] sm:$0xff]
  %v6404 = vld [vmem:[%s6401 + $0x10] sm:$0xff]
  %v6405 = vld [vmem:[%s6401 + $0x18] sm:$0xff]
  %v6406 = vld [vmem:[%s6401 + $0x20] sm:$0xff]
  %v6407 = vld [vmem:[%s6401 + $0x28] sm:$0xff]
  %v6408 = vld [vmem:[%s6401 + $0x30] sm:$0xff]
  %v6409 = vld [vmem:[%s6401 + $0x38] sm:$0xff]
  %v6410 = vld [vmem:[%s6401 + $0x40] sm:$0xff]
  %v6411 = vld [vmem:[%s6401 + $0x48] sm:$0xff]
  %v6412 = vld [vmem:[%s6401 + $0x50] sm:$0xff]
  %v6413 = vld [vmem:[%s6401 + $0x58] sm:$0xff]
  %v6414 = vld [vmem:[%s6401 + $0x60] sm:$0xff]
  %v6415 = vld [vmem:[%s6401 + $0x68] sm:$0xff]
  %v6416 = vld [vmem:[%s6401 + $0x70] sm:$0xff]
  %v6417 = vld [vmem:[%s6401 + $0x78] sm:$0xff]
  %v6418 = vld [vmem:[%s6401 + $0x80] sm:$0xff]
  %v6419 = vld [vmem:[%s6401 + $0x88] sm:$0xff]
  %v6420 = vld [vmem:[%s6401 + $0x90] sm:$0xff]
  %v6421 = vld [vmem:[%s6401 + $0x98] sm:$0xff]
  %v6422 = vld [vmem:[%s6401 + $0xa0] sm:$0xff]
  %v6423 = vld [vmem:[%s6401 + $0xa8] sm:$0xff]
  %v6424 = vld [vmem:[%s6401 + $0xb0] sm:$0xff]
  %v6425 = vld [vmem:[%s6401 + $0xb8] sm:$0xff]
  %v6426 = vld [vmem:[%s6401 + $0xc0] sm:$0xff]
  %v6427 = vld [vmem:[%s6401 + $0xc8] sm:$0xff]
  %v6428 = vld [vmem:[%s6401 + $0xd0] sm:$0xff]
  %v6429 = vld [vmem:[%s6401 + $0xd8] sm:$0xff]
  %vm6430 = vcmask 916480
  %v6432 = vsel %vm6430, %v6402, 0
  %v6435 = vsel %vm6430, %v6403, 0
  %v6438 = vsel %vm6430, %v6404, 0
  %v6441 = vsel %vm6430, %v6405, 0
  %v6444 = vsel %vm6430, %v6406, 0
  %v6447 = vsel %vm6430, %v6407, 0
  %v6450 = vsel %vm6430, %v6408, 0
  %v6453 = vsel %vm6430, %v6409, 0
  %v6456 = vsel %vm6430, %v6410, 0
  %v6459 = vsel %vm6430, %v6411, 0
  %v6462 = vsel %vm6430, %v6412, 0
  %v6465 = vsel %vm6430, %v6413, 0
  %v6468 = vsel %vm6430, %v6414, 0
  %v6471 = vsel %vm6430, %v6415, 0
  %v6474 = vsel %vm6430, %v6416, 0
  %v6477 = vsel %vm6430, %v6417, 0
  %v6480 = vsel %vm6430, %v6418, 0
  %v6483 = vsel %vm6430, %v6419, 0
  %v6486 = vsel %vm6430, %v6420, 0
  %v6489 = vsel %vm6430, %v6421, 0
  %v6492 = vsel %vm6430, %v6422, 0
  %v6495 = vsel %vm6430, %v6423, 0
  %v6498 = vsel %vm6430, %v6424, 0
  %v6501 = vsel %vm6430, %v6425, 0
  %v6504 = vsel %vm6430, %v6426, 0
  %v6507 = vsel %vm6430, %v6427, 0
  %v6510 = vsel %vm6430, %v6428, 0
  %v6513 = vsel %vm6430, %v6429, 0
  %6515 = vmatprep.subr.mxu0 %v5743
  %6516 = vmatpush1.msra.mxu0 %v5742
  %6517 = vmatprep.subr.mxu0 %v5750
  %6518 = vmatpush1.msra.mxu0 %v5749
  %6519 = vmatprep.subr.mxu0 %v5757
  %6520 = vmatpush1.msra.mxu0 %v5756
  %6521 = vmatprep.subr.mxu0 %v5764
  %6522 = vmatpush1.msra.mxu0 %v5763
  %6523 = vmatprep.subr.mxu0 %v5771
  %6524 = vmatpush1.msra.mxu0 %v5770
  %6525 = vmatprep.subr.mxu0 %v5778
  %6526 = vmatpush1.msra.mxu0 %v5777
  %6527 = vmatprep.subr.mxu0 %v5785
  %6528 = vmatpush1.msra.mxu0 %v5784
  %6529 = vmatprep.subr.mxu0 %v5792
  %6530 = vmatpush1.msra.mxu0 %v5791
  %6531 = vmatprep.subr.mxu0 %v5799
  %6532 = vmatpush1.msra.mxu0 %v5798
  %6533 = vmatprep.subr.mxu0 %v5806
  %6534 = vmatpush1.msra.mxu0 %v5805
  %6535 = vmatprep.subr.mxu0 %v5813
  %6536 = vmatpush1.msra.mxu0 %v5812
  %6537 = vmatprep.subr.mxu0 %v5820
  %6538 = vmatpush1.msra.mxu0 %v5819
  %6539 = vmatprep.subr.mxu0 %v5827
  %6540 = vmatpush1.msra.mxu0 %v5826
  %6541 = vmatprep.subr.mxu0 %v5834
  %6542 = vmatpush1.msra.mxu0 %v5833
  %6543 = vmatprep.subr.mxu0 0.0
  %6544 = vmatpush1.msra.mxu0 0.0
  %6545 = vmatprep.subr.mxu0 0.0
  %6546 = vmatpush1.msra.mxu0 0.0
  %6547 = vmatprep.subr.mxu0 0.0
  %6548 = vmatpush1.msra.mxu0 0.0
  %6549 = vmatprep.subr.mxu0 0.0
  %6550 = vmatpush1.msra.mxu0 0.0
  %6551 = vmatprep.subr.mxu0 0.0
  %6552 = vmatpush1.msra.mxu0 0.0
  %6553 = vmatprep.subr.mxu0 0.0
  %6554 = vmatpush1.msra.mxu0 0.0
  %6555 = vmatprep.subr.mxu0 0.0
  %6556 = vmatpush1.msra.mxu0 0.0
  %6557 = vmatprep.subr.mxu0 0.0
  %6558 = vmatpush1.msra.mxu0 0.0
  %6559 = vmatprep.subr.mxu0 0.0
  %6560 = vmatpush1.msra.mxu0 0.0
  %6561 = vmatprep.subr.mxu0 0.0
  %6562 = vmatpush1.msra.mxu0 0.0
  %6563 = vmatprep.subr.mxu0 0.0
  %6564 = vmatpush1.msra.mxu0 0.0
  %6565 = vmatprep.subr.mxu0 0.0
  %6566 = vmatpush1.msra.mxu0 0.0
  %6567 = vmatprep.subr.mxu0 0.0
  %6568 = vmatpush1.msra.mxu0 0.0
  %6569 = vmatprep.subr.mxu0 0.0
  %6570 = vmatpush1.msra.mxu0 0.0
  %6571 = vmatprep.subr.mxu0 0.0
  %6572 = vmatpush1.msra.mxu0 0.0
  %6573 = vmatprep.subr.mxu0 0.0
  %6574 = vmatpush1.msra.mxu0 0.0
  %6575 = vmatprep.subr.mxu0 0.0
  %6576 = vmatpush1.msra.mxu0 0.0
  %6577 = vmatprep.subr.mxu0 0.0
  %6578 = vmatpush1.msra.mxu0 0.0
  %6579 = vmatprep.mubr.f32.mxu0 0.0
  %6580 = vmatmul.mubr.f32.gmra.mrb[0].mxu0 %v6432
  %v6581 = vpop.f32.mrb[0].mxu0
  %v6582 = vadd.f32 0.0, %v6581
  %v6583 = vpop.f32.mrb[0].mxu0
  %v6584 = vadd.f32 0.0, %v6583
  %6585 = vmatprep.mubr.f32.mxu0 0.0
  %6586 = vmatmul.mubr.f32.gmra.mrb[0].mxu0 %v6435
  %v6587 = vpop.f32.mrb[0].mxu0
  %v6588 = vadd.f32 0.0, %v6587
  %v6589 = vpop.f32.mrb[0].mxu0
  %v6590 = vadd.f32 0.0, %v6589
  %6591 = vmatprep.mubr.f32.mxu0 0.0
  %6592 = vmatmul.mubr.f32.gmra.mrb[0].mxu0 %v6438
  %v6593 = vpop.f32.mrb[0].mxu0
  %v6594 = vadd.f32 0.0, %v6593
  %v6595 = vpop.f32.mrb[0].mxu0
  %v6596 = vadd.f32 0.0, %v6595
  %6597 = vmatprep.mubr.f32.mxu0 0.0
  %6598 = vmatmul.mubr.f32.gmra.mrb[0].mxu0 %v6441
  %v6599 = vpop.f32.mrb[0].mxu0
  %v6600 = vadd.f32 0.0, %v6599
  %v6601 = vpop.f32.mrb[0].mxu0
  %v6602 = vadd.f32 0.0, %v6601
  %6603 = vmatprep.mubr.f32.mxu0 0.0
  %6604 = vmatmul.mubr.f32.gmra.mrb[0].mxu0 %v6444
  %v6605 = vpop.f32.mrb[0].mxu0
  %v6606 = vadd.f32 0.0, %v6605
  %v6607 = vpop.f32.mrb[0].mxu0
  %v6608 = vadd.f32 0.0, %v6607
  %6609 = vmatprep.mubr.f32.mxu0 0.0
  %6610 = vmatmul.mubr.f32.gmra.mrb[0].mxu0 %v6447
  %v6611 = vpop.f32.mrb[0].mxu0
  %v6612 = vadd.f32 0.0, %v6611
  %v6613 = vpop.f32.mrb[0].mxu0
  %v6614 = vadd.f32 0.0, %v6613
  %6615 = vmatprep.mubr.f32.mxu0 0.0
  %6616 = vmatmul.mubr.f32.gmra.mrb[0].mxu0 %v6450
  %v6617 = vpop.f32.mrb[0].mxu0
  %v6618 = vadd.f32 0.0, %v6617
  %v6619 = vpop.f32.mrb[0].mxu0
  %v6620 = vadd.f32 0.0, %v6619
  %6621 = vmatprep.mubr.f32.mxu0 0.0
  %6622 = vmatmul.mubr.f32.gmra.mrb[0].mxu0 %v6453
  %v6623 = vpop.f32.mrb[0].mxu0
  %v6624 = vadd.f32 0.0, %v6623
  %v6625 = vpop.f32.mrb[0].mxu0
  %v6626 = vadd.f32 0.0, %v6625
  %6627 = vmatprep.mubr.f32.mxu0 0.0
  %6628 = vmatmul.mubr.f32.gmra.mrb[0].mxu0 %v6456
  %v6629 = vpop.f32.mrb[0].mxu0
  %v6630 = vadd.f32 0.0, %v6629
  %v6631 = vpop.f32.mrb[0].mxu0
  %v6632 = vadd.f32 0.0, %v6631
  %6633 = vmatprep.mubr.f32.mxu0 0.0
  %6634 = vmatmul.mubr.f32.gmra.mrb[0].mxu0 %v6459
  %v6635 = vpop.f32.mrb[0].mxu0
  %v6636 = vadd.f32 0.0, %v6635
  %v6637 = vpop.f32.mrb[0].mxu0
  %v6638 = vadd.f32 0.0, %v6637
  %6639 = vmatprep.mubr.f32.mxu0 0.0
  %6640 = vmatmul.mubr.f32.gmra.mrb[0].mxu0 %v6462
  %v6641 = vpop.f32.mrb[0].mxu0
  %v6642 = vadd.f32 0.0, %v6641
  %v6643 = vpop.f32.mrb[0].mxu0
  %v6644 = vadd.f32 0.0, %v6643
  %6645 = vmatprep.mubr.f32.mxu0 0.0
  %6646 = vmatmul.mubr.f32.gmra.mrb[0].mxu0 %v6465
  %v6647 = vpop.f32.mrb[0].mxu0
  %v6648 = vadd.f32 0.0, %v6647
  %v6649 = vpop.f32.mrb[0].mxu0
  %v6650 = vadd.f32 0.0, %v6649
  %6651 = vmatprep.mubr.f32.mxu0 0.0
  %6652 = vmatmul.mubr.f32.gmra.mrb[0].mxu0 %v6468
  %v6653 = vpop.f32.mrb[0].mxu0
  %v6654 = vadd.f32 0.0, %v6653
  %v6655 = vpop.f32.mrb[0].mxu0
  %v6656 = vadd.f32 0.0, %v6655
  %6657 = vmatprep.mubr.f32.mxu0 0.0
  %6658 = vmatmul.mubr.f32.gmra.mrb[0].mxu0 %v6471
  %v6659 = vpop.f32.mrb[0].mxu0
  %v6660 = vadd.f32 0.0, %v6659
  %v6661 = vpop.f32.mrb[0].mxu0
  %v6662 = vadd.f32 0.0, %v6661
  %6663 = vmatprep.mubr.f32.mxu0 0.0
  %6664 = vmatmul.mubr.f32.gmra.mrb[0].mxu0 %v6474
  %v6665 = vpop.f32.mrb[0].mxu0
  %v6666 = vadd.f32 0.0, %v6665
  %v6667 = vpop.f32.mrb[0].mxu0
  %v6668 = vadd.f32 0.0, %v6667
  %6669 = vmatprep.mubr.f32.mxu0 0.0
  %6670 = vmatmul.mubr.f32.gmra.mrb[0].mxu0 %v6477
  %v6671 = vpop.f32.mrb[0].mxu0
  %v6672 = vadd.f32 0.0, %v6671
  %v6673 = vpop.f32.mrb[0].mxu0
  %v6674 = vadd.f32 0.0, %v6673
  %6675 = vmatprep.mubr.f32.mxu0 0.0
  %6676 = vmatmul.mubr.f32.gmra.mrb[0].mxu0 %v6480
  %v6677 = vpop.f32.mrb[0].mxu0
  %v6678 = vadd.f32 0.0, %v6677
  %v6679 = vpop.f32.mrb[0].mxu0
  %v6680 = vadd.f32 0.0, %v6679
  %6681 = vmatprep.mubr.f32.mxu0 0.0
  %6682 = vmatmul.mubr.f32.gmra.mrb[0].mxu0 %v6483
  %v6683 = vpop.f32.mrb[0].mxu0
  %v6684 = vadd.f32 0.0, %v6683
  %v6685 = vpop.f32.mrb[0].mxu0
  %v6686 = vadd.f32 0.0, %v6685
  %6687 = vmatprep.mubr.f32.mxu0 0.0
  %6688 = vmatmul.mubr.f32.gmra.mrb[0].mxu0 %v6486
  %v6689 = vpop.f32.mrb[0].mxu0
  %v6690 = vadd.f32 0.0, %v6689
  %v6691 = vpop.f32.mrb[0].mxu0
  %v6692 = vadd.f32 0.0, %v6691
  %6693 = vmatprep.mubr.f32.mxu0 0.0
  %6694 = vmatmul.mubr.f32.gmra.mrb[0].mxu0 %v6489
  %v6695 = vpop.f32.mrb[0].mxu0
  %v6696 = vadd.f32 0.0, %v6695
  %v6697 = vpop.f32.mrb[0].mxu0
  %v6698 = vadd.f32 0.0, %v6697
  %6699 = vmatprep.mubr.f32.mxu0 0.0
  %6700 = vmatmul.mubr.f32.gmra.mrb[0].mxu0 %v6492
  %v6701 = vpop.f32.mrb[0].mxu0
  %v6702 = vadd.f32 0.0, %v6701
  %v6703 = vpop.f32.mrb[0].mxu0
  %v6704 = vadd.f32 0.0, %v6703
  %6705 = vmatprep.mubr.f32.mxu0 0.0
  %6706 = vmatmul.mubr.f32.gmra.mrb[0].mxu0 %v6495
  %v6707 = vpop.f32.mrb[0].mxu0
  %v6708 = vadd.f32 0.0, %v6707
  %v6709 = vpop.f32.mrb[0].mxu0
  %v6710 = vadd.f32 0.0, %v6709
  %6711 = vmatprep.mubr.f32.mxu0 0.0
  %6712 = vmatmul.mubr.f32.gmra.mrb[0].mxu0 %v6498
  %v6713 = vpop.f32.mrb[0].mxu0
  %v6714 = vadd.f32 0.0, %v6713
  %v6715 = vpop.f32.mrb[0].mxu0
  %v6716 = vadd.f32 0.0, %v6715
  %6717 = vmatprep.mubr.f32.mxu0 0.0
  %6718 = vmatmul.mubr.f32.gmra.mrb[0].mxu0 %v6501
  %v6719 = vpop.f32.mrb[0].mxu0
  %v6720 = vadd.f32 0.0, %v6719
  %v6721 = vpop.f32.mrb[0].mxu0
  %v6722 = vadd.f32 0.0, %v6721
  %6723 = vmatprep.mubr.f32.mxu0 0.0
  %6724 = vmatmul.mubr.f32.gmra.mrb[0].mxu0 %v6504
  %v6725 = vpop.f32.mrb[0].mxu0
  %v6726 = vadd.f32 0.0, %v6725
  %v6727 = vpop.f32.mrb[0].mxu0
  %v6728 = vadd.f32 0.0, %v6727
  %6729 = vmatprep.mubr.f32.mxu0 0.0
  %6730 = vmatmul.mubr.f32.gmra.mrb[0].mxu0 %v6507
  %v6731 = vpop.f32.mrb[0].mxu0
  %v6732 = vadd.f32 0.0, %v6731
  %v6733 = vpop.f32.mrb[0].mxu0
  %v6734 = vadd.f32 0.0, %v6733
  %6735 = vmatprep.mubr.f32.mxu0 0.0
  %6736 = vmatmul.mubr.f32.gmra.mrb[0].mxu0 %v6510
  %v6737 = vpop.f32.mrb[0].mxu0
  %v6738 = vadd.f32 0.0, %v6737
  %v6739 = vpop.f32.mrb[0].mxu0
  %v6740 = vadd.f32 0.0, %v6739
  %6741 = vmatprep.mubr.f32.mxu0 0.0
  %6742 = vmatmul.mubr.f32.gmra.mrb[0].mxu0 %v6513
  %v6743 = vpop.f32.mrb[0].mxu0
  %v6744 = vadd.f32 0.0, %v6743
  %v6745 = vpop.f32.mrb[0].mxu0
  %v6746 = vadd.f32 0.0, %v6745
  %6747 = vdwg.mxu0
  %6748 = vmatprep.subr.mxu0 %v5745
  %6749 = vmatpush1.msra.mxu0 %v5744
  %6750 = vmatprep.subr.mxu0 %v5752
  %6751 = vmatpush1.msra.mxu0 %v5751
  %6752 = vmatprep.subr.mxu0 %v5759
  %6753 = vmatpush1.msra.mxu0 %v5758
  %6754 = vmatprep.subr.mxu0 %v5766
  %6755 = vmatpush1.msra.mxu0 %v5765
  %6756 = vmatprep.subr.mxu0 %v5773
  %6757 = vmatpush1.msra.mxu0 %v5772
  %6758 = vmatprep.subr.mxu0 %v5780
  %6759 = vmatpush1.msra.mxu0 %v5779
  %6760 = vmatprep.subr.mxu0 %v5787
  %6761 = vmatpush1.msra.mxu0 %v5786
  %6762 = vmatprep.subr.mxu0 %v5794
  %6763 = vmatpush1.msra.mxu0 %v5793
  %6764 = vmatprep.subr.mxu0 %v5801
  %6765 = vmatpush1.msra.mxu0 %v5800
  %6766 = vmatprep.subr.mxu0 %v5808
  %6767 = vmatpush1.msra.mxu0 %v5807
  %6768 = vmatprep.subr.mxu0 %v5815
  %6769 = vmatpush1.msra.mxu0 %v5814
  %6770 = vmatprep.subr.mxu0 %v5822
  %6771 = vmatpush1.msra.mxu0 %v5821
  %6772 = vmatprep.subr.mxu0 %v5829
  %6773 = vmatpush1.msra.mxu0 %v5828
  %6774 = vmatprep.subr.mxu0 %v5836
  %6775 = vmatpush1.msra.mxu0 %v5835
  %6776 = vmatprep.subr.mxu0 0.0
  %6777 = vmatpush1.msra.mxu0 0.0
  %6778 = vmatprep.subr.mxu0 0.0
  %6779 = vmatpush1.msra.mxu0 0.0
  %6780 = vmatprep.subr.mxu0 0.0
  %6781 = vmatpush1.msra.mxu0 0.0
  %6782 = vmatprep.subr.mxu0 0.0
  %6783 = vmatpush1.msra.mxu0 0.0
  %6784 = vmatprep.subr.mxu0 0.0
  %6785 = vmatpush1.msra.mxu0 0.0
  %6786 = vmatprep.subr.mxu0 0.0
  %6787 = vmatpush1.msra.mxu0 0.0
  %6788 = vmatprep.subr.mxu0 0.0
  %6789 = vmatpush1.msra.mxu0 0.0
  %6790 = vmatprep.subr.mxu0 0.0
  %6791 = vmatpush1.msra.mxu0 0.0
  %6792 = vmatprep.subr.mxu0 0.0
  %6793 = vmatpush1.msra.mxu0 0.0
  %6794 = vmatprep.subr.mxu0 0.0
  %6795 = vmatpush1.msra.mxu0 0.0
  %6796 = vmatprep.subr.mxu0 0.0
  %6797 = vmatpush1.msra.mxu0 0.0
  %6798 = vmatprep.subr.mxu0 0.0
  %6799 = vmatpush1.msra.mxu0 0.0
  %6800 = vmatprep.subr.mxu0 0.0
  %6801 = vmatpush1.msra.mxu0 0.0
  %6802 = vmatprep.subr.mxu0 0.0
  %6803 = vmatpush1.msra.mxu0 0.0
  %6804 = vmatprep.subr.mxu0 0.0
  %6805 = vmatpush1.msra.mxu0 0.0
  %6806 = vmatprep.subr.mxu0 0.0
  %6807 = vmatpush1.msra.mxu0 0.0
  %6808 = vmatprep.subr.mxu0 0.0
  %6809 = vmatpush1.msra.mxu0 0.0
  %6810 = vmatprep.subr.mxu0 0.0
  %6811 = vmatpush1.msra.mxu0 0.0
  %6812 = vmatprep.mubr.f32.mxu0 0.0
  %6813 = vmatmul.mubr.f32.gmra.mrb[0].mxu0 %v6432
  %v6814 = vpop.f32.mrb[0].mxu0
  %v6815 = vadd.f32 0.0, %v6814
  %v6816 = vpop.f32.mrb[0].mxu0
  %v6817 = vadd.f32 0.0, %v6816
  %6818 = vmatprep.mubr.f32.mxu0 0.0
  %6819 = vmatmul.mubr.f32.gmra.mrb[0].mxu0 %v6435
  %v6820 = vpop.f32.mrb[0].mxu0
  %v6821 = vadd.f32 0.0, %v6820
  %v6822 = vpop.f32.mrb[0].mxu0
  %v6823 = vadd.f32 0.0, %v6822
  %6824 = vmatprep.mubr.f32.mxu0 0.0
  %6825 = vmatmul.mubr.f32.gmra.mrb[0].mxu0 %v6438
  %v6826 = vpop.f32.mrb[0].mxu0
  %v6827 = vadd.f32 0.0, %v6826
  %v6828 = vpop.f32.mrb[0].mxu0
  %v6829 = vadd.f32 0.0, %v6828
  %6830 = vmatprep.mubr.f32.mxu0 0.0
  %6831 = vmatmul.mubr.f32.gmra.mrb[0].mxu0 %v6441
  %v6832 = vpop.f32.mrb[0].mxu0
  %v6833 = vadd.f32 0.0, %v6832
  %v6834 = vpop.f32.mrb[0].mxu0
  %v6835 = vadd.f32 0.0, %v6834
  %6836 = vmatprep.mubr.f32.mxu0 0.0
  %6837 = vmatmul.mubr.f32.gmra.mrb[0].mxu0 %v6444
  %v6838 = vpop.f32.mrb[0].mxu0
  %v6839 = vadd.f32 0.0, %v6838
  %v6840 = vpop.f32.mrb[0].mxu0
  %v6841 = vadd.f32 0.0, %v6840
  %6842 = vmatprep.mubr.f32.mxu0 0.0
  %6843 = vmatmul.mubr.f32.gmra.mrb[0].mxu0 %v6447
  %v6844 = vpop.f32.mrb[0].mxu0
  %v6845 = vadd.f32 0.0, %v6844
  %v6846 = vpop.f32.mrb[0].mxu0
  %v6847 = vadd.f32 0.0, %v6846
  %6848 = vmatprep.mubr.f32.mxu0 0.0
  %6849 = vmatmul.mubr.f32.gmra.mrb[0].mxu0 %v6450
  %v6850 = vpop.f32.mrb[0].mxu0
  %v6851 = vadd.f32 0.0, %v6850
  %v6852 = vpop.f32.mrb[0].mxu0
  %v6853 = vadd.f32 0.0, %v6852
  %6854 = vmatprep.mubr.f32.mxu0 0.0
  %6855 = vmatmul.mubr.f32.gmra.mrb[0].mxu0 %v6453
  %v6856 = vpop.f32.mrb[0].mxu0
  %v6857 = vadd.f32 0.0, %v6856
  %v6858 = vpop.f32.mrb[0].mxu0
  %v6859 = vadd.f32 0.0, %v6858
  %6860 = vmatprep.mubr.f32.mxu0 0.0
  %6861 = vmatmul.mubr.f32.gmra.mrb[0].mxu0 %v6456
  %v6862 = vpop.f32.mrb[0].mxu0
  %v6863 = vadd.f32 0.0, %v6862
  %v6864 = vpop.f32.mrb[0].mxu0
  %v6865 = vadd.f32 0.0, %v6864
  %6866 = vmatprep.mubr.f32.mxu0 0.0
  %6867 = vmatmul.mubr.f32.gmra.mrb[0].mxu0 %v6459
  %v6868 = vpop.f32.mrb[0].mxu0
  %v6869 = vadd.f32 0.0, %v6868
  %v6870 = vpop.f32.mrb[0].mxu0
  %v6871 = vadd.f32 0.0, %v6870
  %6872 = vmatprep.mubr.f32.mxu0 0.0
  %6873 = vmatmul.mubr.f32.gmra.mrb[0].mxu0 %v6462
  %v6874 = vpop.f32.mrb[0].mxu0
  %v6875 = vadd.f32 0.0, %v6874
  %v6876 = vpop.f32.mrb[0].mxu0
  %v6877 = vadd.f32 0.0, %v6876
  %6878 = vmatprep.mubr.f32.mxu0 0.0
  %6879 = vmatmul.mubr.f32.gmra.mrb[0].mxu0 %v6465
  %v6880 = vpop.f32.mrb[0].mxu0
  %v6881 = vadd.f32 0.0, %v6880
  %v6882 = vpop.f32.mrb[0].mxu0
  %v6883 = vadd.f32 0.0, %v6882
  %6884 = vmatprep.mubr.f32.mxu0 0.0
  %6885 = vmatmul.mubr.f32.gmra.mrb[0].mxu0 %v6468
  %v6886 = vpop.f32.mrb[0].mxu0
  %v6887 = vadd.f32 0.0, %v6886
  %v6888 = vpop.f32.mrb[0].mxu0
  %v6889 = vadd.f32 0.0, %v6888
  %6890 = vmatprep.mubr.f32.mxu0 0.0
  %6891 = vmatmul.mubr.f32.gmra.mrb[0].mxu0 %v6471
  %v6892 = vpop.f32.mrb[0].mxu0
  %v6893 = vadd.f32 0.0, %v6892
  %v6894 = vpop.f32.mrb[0].mxu0
  %v6895 = vadd.f32 0.0, %v6894
  %6896 = vmatprep.mubr.f32.mxu0 0.0
  %6897 = vmatmul.mubr.f32.gmra.mrb[0].mxu0 %v6474
  %v6898 = vpop.f32.mrb[0].mxu0
  %v6899 = vadd.f32 0.0, %v6898
  %v6900 = vpop.f32.mrb[0].mxu0
  %v6901 = vadd.f32 0.0, %v6900
  %6902 = vmatprep.mubr.f32.mxu0 0.0
  %6903 = vmatmul.mubr.f32.gmra.mrb[0].mxu0 %v6477
  %v6904 = vpop.f32.mrb[0].mxu0
  %v6905 = vadd.f32 0.0, %v6904
  %v6906 = vpop.f32.mrb[0].mxu0
  %v6907 = vadd.f32 0.0, %v6906
  %6908 = vmatprep.mubr.f32.mxu0 0.0
  %6909 = vmatmul.mubr.f32.gmra.mrb[0].mxu0 %v6480
  %v6910 = vpop.f32.mrb[0].mxu0
  %v6911 = vadd.f32 0.0, %v6910
  %v6912 = vpop.f32.mrb[0].mxu0
  %v6913 = vadd.f32 0.0, %v6912
  %6914 = vmatprep.mubr.f32.mxu0 0.0
  %6915 = vmatmul.mubr.f32.gmra.mrb[0].mxu0 %v6483
  %v6916 = vpop.f32.mrb[0].mxu0
  %v6917 = vadd.f32 0.0, %v6916
  %v6918 = vpop.f32.mrb[0].mxu0
  %v6919 = vadd.f32 0.0, %v6918
  %6920 = vmatprep.mubr.f32.mxu0 0.0
  %6921 = vmatmul.mubr.f32.gmra.mrb[0].mxu0 %v6486
  %v6922 = vpop.f32.mrb[0].mxu0
  %v6923 = vadd.f32 0.0, %v6922
  %v6924 = vpop.f32.mrb[0].mxu0
  %v6925 = vadd.f32 0.0, %v6924
  %6926 = vmatprep.mubr.f32.mxu0 0.0
  %6927 = vmatmul.mubr.f32.gmra.mrb[0].mxu0 %v6489
  %v6928 = vpop.f32.mrb[0].mxu0
  %v6929 = vadd.f32 0.0, %v6928
  %v6930 = vpop.f32.mrb[0].mxu0
  %v6931 = vadd.f32 0.0, %v6930
  %6932 = vmatprep.mubr.f32.mxu0 0.0
  %6933 = vmatmul.mubr.f32.gmra.mrb[0].mxu0 %v6492
  %v6934 = vpop.f32.mrb[0].mxu0
  %v6935 = vadd.f32 0.0, %v6934
  %v6936 = vpop.f32.mrb[0].mxu0
  %v6937 = vadd.f32 0.0, %v6936
  %6938 = vmatprep.mubr.f32.mxu0 0.0
  %6939 = vmatmul.mubr.f32.gmra.mrb[0].mxu0 %v6495
  %v6940 = vpop.f32.mrb[0].mxu0
  %v6941 = vadd.f32 0.0, %v6940
  %v6942 = vpop.f32.mrb[0].mxu0
  %v6943 = vadd.f32 0.0, %v6942
  %6944 = vmatprep.mubr.f32.mxu0 0.0
  %6945 = vmatmul.mubr.f32.gmra.mrb[0].mxu0 %v6498
  %v6946 = vpop.f32.mrb[0].mxu0
  %v6947 = vadd.f32 0.0, %v6946
  %v6948 = vpop.f32.mrb[0].mxu0
  %v6949 = vadd.f32 0.0, %v6948
  %6950 = vmatprep.mubr.f32.mxu0 0.0
  %6951 = vmatmul.mubr.f32.gmra.mrb[0].mxu0 %v6501
  %v6952 = vpop.f32.mrb[0].mxu0
  %v6953 = vadd.f32 0.0, %v6952
  %v6954 = vpop.f32.mrb[0].mxu0
  %v6955 = vadd.f32 0.0, %v6954
  %6956 = vmatprep.mubr.f32.mxu0 0.0
  %6957 = vmatmul.mubr.f32.gmra.mrb[0].mxu0 %v6504
  %v6958 = vpop.f32.mrb[0].mxu0
  %v6959 = vadd.f32 0.0, %v6958
  %v6960 = vpop.f32.mrb[0].mxu0
  %v6961 = vadd.f32 0.0, %v6960
  %6962 = vmatprep.mubr.f32.mxu0 0.0
  %6963 = vmatmul.mubr.f32.gmra.mrb[0].mxu0 %v6507
  %v6964 = vpop.f32.mrb[0].mxu0
  %v6965 = vadd.f32 0.0, %v6964
  %v6966 = vpop.f32.mrb[0].mxu0
  %v6967 = vadd.f32 0.0, %v6966
  %6968 = vmatprep.mubr.f32.mxu0 0.0
  %6969 = vmatmul.mubr.f32.gmra.mrb[0].mxu0 %v6510
  %v6970 = vpop.f32.mrb[0].mxu0
  %v6971 = vadd.f32 0.0, %v6970
  %v6972 = vpop.f32.mrb[0].mxu0
  %v6973 = vadd.f32 0.0, %v6972
  %6974 = vmatprep.mubr.f32.mxu0 0.0
  %6975 = vmatmul.mubr.f32.gmra.mrb[0].mxu0 %v6513
  %v6976 = vpop.f32.mrb[0].mxu0
  %v6977 = vadd.f32 0.0, %v6976
  %v6978 = vpop.f32.mrb[0].mxu0
  %v6979 = vadd.f32 0.0, %v6978
  %6980 = vdwg.mxu0
  %6981 = vmatprep.subr.mxu0 %v5747
  %6982 = vmatpush1.msra.mxu0 %v5746
  %6983 = vmatprep.subr.mxu0 %v5754
  %6984 = vmatpush1.msra.mxu0 %v5753
  %6985 = vmatprep.subr.mxu0 %v5761
  %6986 = vmatpush1.msra.mxu0 %v5760
  %6987 = vmatprep.subr.mxu0 %v5768
  %6988 = vmatpush1.msra.mxu0 %v5767
  %6989 = vmatprep.subr.mxu0 %v5775
  %6990 = vmatpush1.msra.mxu0 %v5774
  %6991 = vmatprep.subr.mxu0 %v5782
  %6992 = vmatpush1.msra.mxu0 %v5781
  %6993 = vmatprep.subr.mxu0 %v5789
  %6994 = vmatpush1.msra.mxu0 %v5788
  %6995 = vmatprep.subr.mxu0 %v5796
  %6996 = vmatpush1.msra.mxu0 %v5795
  %6997 = vmatprep.subr.mxu0 %v5803
  %6998 = vmatpush1.msra.mxu0 %v5802
  %6999 = vmatprep.subr.mxu0 %v5810
  %7000 = vmatpush1.msra.mxu0 %v5809
  %7001 = vmatprep.subr.mxu0 %v5817
  %7002 = vmatpush1.msra.mxu0 %v5816
  %7003 = vmatprep.subr.mxu0 %v5824
  %7004 = vmatpush1.msra.mxu0 %v5823
  %7005 = vmatprep.subr.mxu0 %v5831
  %7006 = vmatpush1.msra.mxu0 %v5830
  %7007 = vmatprep.subr.mxu0 %v5838
  %7008 = vmatpush1.msra.mxu0 %v5837
  %7009 = vmatprep.subr.mxu0 0.0
  %7010 = vmatpush1.msra.mxu0 0.0
  %7011 = vmatprep.subr.mxu0 0.0
  %7012 = vmatpush1.msra.mxu0 0.0
  %7013 = vmatprep.subr.mxu0 0.0
  %7014 = vmatpush1.msra.mxu0 0.0
  %7015 = vmatprep.subr.mxu0 0.0
  %7016 = vmatpush1.msra.mxu0 0.0
  %7017 = vmatprep.subr.mxu0 0.0
  %7018 = vmatpush1.msra.mxu0 0.0
  %7019 = vmatprep.subr.mxu0 0.0
  %7020 = vmatpush1.msra.mxu0 0.0
  %7021 = vmatprep.subr.mxu0 0.0
  %7022 = vmatpush1.msra.mxu0 0.0
  %7023 = vmatprep.subr.mxu0 0.0
  %7024 = vmatpush1.msra.mxu0 0.0
  %7025 = vmatprep.subr.mxu0 0.0
  %7026 = vmatpush1.msra.mxu0 0.0
  %7027 = vmatprep.subr.mxu0 0.0
  %7028 = vmatpush1.msra.mxu0 0.0
  %7029 = vmatprep.subr.mxu0 0.0
  %7030 = vmatpush1.msra.mxu0 0.0
  %7031 = vmatprep.subr.mxu0 0.0
  %7032 = vmatpush1.msra.mxu0 0.0
  %7033 = vmatprep.subr.mxu0 0.0
  %7034 = vmatpush1.msra.mxu0 0.0
  %7035 = vmatprep.subr.mxu0 0.0
  %7036 = vmatpush1.msra.mxu0 0.0
  %7037 = vmatprep.subr.mxu0 0.0
  %7038 = vmatpush1.msra.mxu0 0.0
  %7039 = vmatprep.subr.mxu0 0.0
  %7040 = vmatpush1.msra.mxu0 0.0
  %7041 = vmatprep.subr.mxu0 0.0
  %7042 = vmatpush1.msra.mxu0 0.0
  %7043 = vmatprep.subr.mxu0 0.0
  %7044 = vmatpush1.msra.mxu0 0.0
  %7045 = vmatprep.mubr.f32.mxu0 0.0
  %7046 = vmatmul.mubr.f32.gmra.mrb[0].mxu0 %v6432
  %v7047 = vpop.f32.mrb[0].mxu0
  %v7048 = vadd.f32 0.0, %v7047
  %v7049 = vpop.f32.mrb[0].mxu0
  %v7050 = vadd.f32 0.0, %v7049
  %7051 = vmatprep.mubr.f32.mxu0 0.0
  %7052 = vmatmul.mubr.f32.gmra.mrb[0].mxu0 %v6435
  %v7053 = vpop.f32.mrb[0].mxu0
  %v7054 = vadd.f32 0.0, %v7053
  %v7055 = vpop.f32.mrb[0].mxu0
  %v7056 = vadd.f32 0.0, %v7055
  %7057 = vmatprep.mubr.f32.mxu0 0.0
  %7058 = vmatmul.mubr.f32.gmra.mrb[0].mxu0 %v6438
  %v7059 = vpop.f32.mrb[0].mxu0
  %v7060 = vadd.f32 0.0, %v7059
  %v7061 = vpop.f32.mrb[0].mxu0
  %v7062 = vadd.f32 0.0, %v7061
  %7063 = vmatprep.mubr.f32.mxu0 0.0
  %7064 = vmatmul.mubr.f32.gmra.mrb[0].mxu0 %v6441
  %v7065 = vpop.f32.mrb[0].mxu0
  %v7066 = vadd.f32 0.0, %v7065
  %v7067 = vpop.f32.mrb[0].mxu0
  %v7068 = vadd.f32 0.0, %v7067
  %7069 = vmatprep.mubr.f32.mxu0 0.0
  %7070 = vmatmul.mubr.f32.gmra.mrb[0].mxu0 %v6444
  %v7071 = vpop.f32.mrb[0].mxu0
  %v7072 = vadd.f32 0.0, %v7071
  %v7073 = vpop.f32.mrb[0].mxu0
  %v7074 = vadd.f32 0.0, %v7073
  %7075 = vmatprep.mubr.f32.mxu0 0.0
  %7076 = vmatmul.mubr.f32.gmra.mrb[0].mxu0 %v6447
  %v7077 = vpop.f32.mrb[0].mxu0
  %v7078 = vadd.f32 0.0, %v7077
  %v7079 = vpop.f32.mrb[0].mxu0
  %v7080 = vadd.f32 0.0, %v7079
  %7081 = vmatprep.mubr.f32.mxu0 0.0
  %7082 = vmatmul.mubr.f32.gmra.mrb[0].mxu0 %v6450
  %v7083 = vpop.f32.mrb[0].mxu0
  %v7084 = vadd.f32 0.0, %v7083
  %v7085 = vpop.f32.mrb[0].mxu0
  %v7086 = vadd.f32 0.0, %v7085
  %7087 = vmatprep.mubr.f32.mxu0 0.0
  %7088 = vmatmul.mubr.f32.gmra.mrb[0].mxu0 %v6453
  %v7089 = vpop.f32.mrb[0].mxu0
  %v7090 = vadd.f32 0.0, %v7089
  %v7091 = vpop.f32.mrb[0].mxu0
  %v7092 = vadd.f32 0.0, %v7091
  %7093 = vmatprep.mubr.f32.mxu0 0.0
  %7094 = vmatmul.mubr.f32.gmra.mrb[0].mxu0 %v6456
  %v7095 = vpop.f32.mrb[0].mxu0
  %v7096 = vadd.f32 0.0, %v7095
  %v7097 = vpop.f32.mrb[0].mxu0
  %v7098 = vadd.f32 0.0, %v7097
  %7099 = vmatprep.mubr.f32.mxu0 0.0
  %7100 = vmatmul.mubr.f32.gmra.mrb[0].mxu0 %v6459
  %v7101 = vpop.f32.mrb[0].mxu0
  %v7102 = vadd.f32 0.0, %v7101
  %v7103 = vpop.f32.mrb[0].mxu0
  %v7104 = vadd.f32 0.0, %v7103
  %7105 = vmatprep.mubr.f32.mxu0 0.0
  %7106 = vmatmul.mubr.f32.gmra.mrb[0].mxu0 %v6462
  %v7107 = vpop.f32.mrb[0].mxu0
  %v7108 = vadd.f32 0.0, %v7107
  %v7109 = vpop.f32.mrb[0].mxu0
  %v7110 = vadd.f32 0.0, %v7109
  %7111 = vmatprep.mubr.f32.mxu0 0.0
  %7112 = vmatmul.mubr.f32.gmra.mrb[0].mxu0 %v6465
  %v7113 = vpop.f32.mrb[0].mxu0
  %v7114 = vadd.f32 0.0, %v7113
  %v7115 = vpop.f32.mrb[0].mxu0
  %v7116 = vadd.f32 0.0, %v7115
  %7117 = vmatprep.mubr.f32.mxu0 0.0
  %7118 = vmatmul.mubr.f32.gmra.mrb[0].mxu0 %v6468
  %v7119 = vpop.f32.mrb[0].mxu0
  %v7120 = vadd.f32 0.0, %v7119
  %v7121 = vpop.f32.mrb[0].mxu0
  %v7122 = vadd.f32 0.0, %v7121
  %7123 = vmatprep.mubr.f32.mxu0 0.0
  %7124 = vmatmul.mubr.f32.gmra.mrb[0].mxu0 %v6471
  %v7125 = vpop.f32.mrb[0].mxu0
  %v7126 = vadd.f32 0.0, %v7125
  %v7127 = vpop.f32.mrb[0].mxu0
  %v7128 = vadd.f32 0.0, %v7127
  %7129 = vmatprep.mubr.f32.mxu0 0.0
  %7130 = vmatmul.mubr.f32.gmra.mrb[0].mxu0 %v6474
  %v7131 = vpop.f32.mrb[0].mxu0
  %v7132 = vadd.f32 0.0, %v7131
  %v7133 = vpop.f32.mrb[0].mxu0
  %v7134 = vadd.f32 0.0, %v7133
  %7135 = vmatprep.mubr.f32.mxu0 0.0
  %7136 = vmatmul.mubr.f32.gmra.mrb[0].mxu0 %v6477
  %v7137 = vpop.f32.mrb[0].mxu0
  %v7138 = vadd.f32 0.0, %v7137
  %v7139 = vpop.f32.mrb[0].mxu0
  %v7140 = vadd.f32 0.0, %v7139
  %7141 = vmatprep.mubr.f32.mxu0 0.0
  %7142 = vmatmul.mubr.f32.gmra.mrb[0].mxu0 %v6480
  %v7143 = vpop.f32.mrb[0].mxu0
  %v7144 = vadd.f32 0.0, %v7143
  %v7145 = vpop.f32.mrb[0].mxu0
  %v7146 = vadd.f32 0.0, %v7145
  %7147 = vmatprep.mubr.f32.mxu0 0.0
  %7148 = vmatmul.mubr.f32.gmra.mrb[0].mxu0 %v6483
  %v7149 = vpop.f32.mrb[0].mxu0
  %v7150 = vadd.f32 0.0, %v7149
  %v7151 = vpop.f32.mrb[0].mxu0
  %v7152 = vadd.f32 0.0, %v7151
  %7153 = vmatprep.mubr.f32.mxu0 0.0
  %7154 = vmatmul.mubr.f32.gmra.mrb[0].mxu0 %v6486
  %v7155 = vpop.f32.mrb[0].mxu0
  %v7156 = vadd.f32 0.0, %v7155
  %v7157 = vpop.f32.mrb[0].mxu0
  %v7158 = vadd.f32 0.0, %v7157
  %7159 = vmatprep.mubr.f32.mxu0 0.0
  %7160 = vmatmul.mubr.f32.gmra.mrb[0].mxu0 %v6489
  %v7161 = vpop.f32.mrb[0].mxu0
  %v7162 = vadd.f32 0.0, %v7161
  %v7163 = vpop.f32.mrb[0].mxu0
  %v7164 = vadd.f32 0.0, %v7163
  %7165 = vmatprep.mubr.f32.mxu0 0.0
  %7166 = vmatmul.mubr.f32.gmra.mrb[0].mxu0 %v6492
  %v7167 = vpop.f32.mrb[0].mxu0
  %v7168 = vadd.f32 0.0, %v7167
  %v7169 = vpop.f32.mrb[0].mxu0
  %v7170 = vadd.f32 0.0, %v7169
  %7171 = vmatprep.mubr.f32.mxu0 0.0
  %7172 = vmatmul.mubr.f32.gmra.mrb[0].mxu0 %v6495
  %v7173 = vpop.f32.mrb[0].mxu0
  %v7174 = vadd.f32 0.0, %v7173
  %v7175 = vpop.f32.mrb[0].mxu0
  %v7176 = vadd.f32 0.0, %v7175
  %7177 = vmatprep.mubr.f32.mxu0 0.0
  %7178 = vmatmul.mubr.f32.gmra.mrb[0].mxu0 %v6498
  %v7179 = vpop.f32.mrb[0].mxu0
  %v7180 = vadd.f32 0.0, %v7179
  %v7181 = vpop.f32.mrb[0].mxu0
  %v7182 = vadd.f32 0.0, %v7181
  %7183 = vmatprep.mubr.f32.mxu0 0.0
  %7184 = vmatmul.mubr.f32.gmra.mrb[0].mxu0 %v6501
  %v7185 = vpop.f32.mrb[0].mxu0
  %v7186 = vadd.f32 0.0, %v7185
  %v7187 = vpop.f32.mrb[0].mxu0
  %v7188 = vadd.f32 0.0, %v7187
  %7189 = vmatprep.mubr.f32.mxu0 0.0
  %7190 = vmatmul.mubr.f32.gmra.mrb[0].mxu0 %v6504
  %v7191 = vpop.f32.mrb[0].mxu0
  %v7192 = vadd.f32 0.0, %v7191
  %v7193 = vpop.f32.mrb[0].mxu0
  %v7194 = vadd.f32 0.0, %v7193
  %7195 = vmatprep.mubr.f32.mxu0 0.0
  %7196 = vmatmul.mubr.f32.gmra.mrb[0].mxu0 %v6507
  %v7197 = vpop.f32.mrb[0].mxu0
  %v7198 = vadd.f32 0.0, %v7197
  %v7199 = vpop.f32.mrb[0].mxu0
  %v7200 = vadd.f32 0.0, %v7199
  %7201 = vmatprep.mubr.f32.mxu0 0.0
  %7202 = vmatmul.mubr.f32.gmra.mrb[0].mxu0 %v6510
  %v7203 = vpop.f32.mrb[0].mxu0
  %v7204 = vadd.f32 0.0, %v7203
  %v7205 = vpop.f32.mrb[0].mxu0
  %v7206 = vadd.f32 0.0, %v7205
  %7207 = vmatprep.mubr.f32.mxu0 0.0
  %7208 = vmatmul.mubr.f32.gmra.mrb[0].mxu0 %v6513
  %v7209 = vpop.f32.mrb[0].mxu0
  %v7210 = vadd.f32 0.0, %v7209
  %v7211 = vpop.f32.mrb[0].mxu0
  %v7212 = vadd.f32 0.0, %v7211
  %7213 = vdwg.mxu0
  %7214 = vmatprep.subr.mxu0 0.0
  %7215 = vmatpush1.msra.mxu0 %v5748
  %7216 = vmatprep.subr.mxu0 0.0
  %7217 = vmatpush1.msra.mxu0 %v5755
  %7218 = vmatprep.subr.mxu0 0.0
  %7219 = vmatpush1.msra.mxu0 %v5762
  %7220 = vmatprep.subr.mxu0 0.0
  %7221 = vmatpush1.msra.mxu0 %v5769
  %7222 = vmatprep.subr.mxu0 0.0
  %7223 = vmatpush1.msra.mxu0 %v5776
  %7224 = vmatprep.subr.mxu0 0.0
  %7225 = vmatpush1.msra.mxu0 %v5783
  %7226 = vmatprep.subr.mxu0 0.0
  %7227 = vmatpush1.msra.mxu0 %v5790
  %7228 = vmatprep.subr.mxu0 0.0
  %7229 = vmatpush1.msra.mxu0 %v5797
  %7230 = vmatprep.subr.mxu0 0.0
  %7231 = vmatpush1.msra.mxu0 %v5804
  %7232 = vmatprep.subr.mxu0 0.0
  %7233 = vmatpush1.msra.mxu0 %v5811
  %7234 = vmatprep.subr.mxu0 0.0
  %7235 = vmatpush1.msra.mxu0 %v5818
  %7236 = vmatprep.subr.mxu0 0.0
  %7237 = vmatpush1.msra.mxu0 %v5825
  %7238 = vmatprep.subr.mxu0 0.0
  %7239 = vmatpush1.msra.mxu0 %v5832
  %7240 = vmatprep.subr.mxu0 0.0
  %7241 = vmatpush1.msra.mxu0 %v5839
  %7242 = vmatprep.subr.mxu0 0.0
  %7243 = vmatpush1.msra.mxu0 0.0
  %7244 = vmatprep.subr.mxu0 0.0
  %7245 = vmatpush1.msra.mxu0 0.0
  %7246 = vmatprep.subr.mxu0 0.0
  %7247 = vmatpush1.msra.mxu0 0.0
  %7248 = vmatprep.subr.mxu0 0.0
  %7249 = vmatpush1.msra.mxu0 0.0
  %7250 = vmatprep.subr.mxu0 0.0
  %7251 = vmatpush1.msra.mxu0 0.0
  %7252 = vmatprep.subr.mxu0 0.0
  %7253 = vmatpush1.msra.mxu0 0.0
  %7254 = vmatprep.subr.mxu0 0.0
  %7255 = vmatpush1.msra.mxu0 0.0
  %7256 = vmatprep.subr.mxu0 0.0
  %7257 = vmatpush1.msra.mxu0 0.0
  %7258 = vmatprep.subr.mxu0 0.0
  %7259 = vmatpush1.msra.mxu0 0.0
  %7260 = vmatprep.subr.mxu0 0.0
  %7261 = vmatpush1.msra.mxu0 0.0
  %7262 = vmatprep.subr.mxu0 0.0
  %7263 = vmatpush1.msra.mxu0 0.0
  %7264 = vmatprep.subr.mxu0 0.0
  %7265 = vmatpush1.msra.mxu0 0.0
  %7266 = vmatprep.subr.mxu0 0.0
  %7267 = vmatpush1.msra.mxu0 0.0
  %7268 = vmatprep.subr.mxu0 0.0
  %7269 = vmatpush1.msra.mxu0 0.0
  %7270 = vmatprep.subr.mxu0 0.0
  %7271 = vmatpush1.msra.mxu0 0.0
  %7272 = vmatprep.subr.mxu0 0.0
  %7273 = vmatpush1.msra.mxu0 0.0
  %7274 = vmatprep.subr.mxu0 0.0
  %7275 = vmatpush1.msra.mxu0 0.0
  %7276 = vmatprep.subr.mxu0 0.0
  %7277 = vmatpush1.msra.mxu0 0.0
  %7278 = vmatprep.mubr.f32.mxu0 0.0
  %7279 = vmatmul.mubr.f32.gmra.mrb[0].mxu0 %v6432
  %v7280 = vpop.f32.mrb[0].mxu0
  %v7281 = vadd.f32 0.0, %v7280
  %v7282 = vpop.f32.mrb[0].mxu0
  %7283 = vmatprep.mubr.f32.mxu0 0.0
  %7284 = vmatmul.mubr.f32.gmra.mrb[0].mxu0 %v6435
  %v7285 = vpop.f32.mrb[0].mxu0
  %v7286 = vadd.f32 0.0, %v7285
  %v7287 = vpop.f32.mrb[0].mxu0
  %7288 = vmatprep.mubr.f32.mxu0 0.0
  %7289 = vmatmul.mubr.f32.gmra.mrb[0].mxu0 %v6438
  %v7290 = vpop.f32.mrb[0].mxu0
  %v7291 = vadd.f32 0.0, %v7290
  %v7292 = vpop.f32.mrb[0].mxu0
  %7293 = vmatprep.mubr.f32.mxu0 0.0
  %7294 = vmatmul.mubr.f32.gmra.mrb[0].mxu0 %v6441
  %v7295 = vpop.f32.mrb[0].mxu0
  %v7296 = vadd.f32 0.0, %v7295
  %v7297 = vpop.f32.mrb[0].mxu0
  %7298 = vmatprep.mubr.f32.mxu0 0.0
  %7299 = vmatmul.mubr.f32.gmra.mrb[0].mxu0 %v6444
  %v7300 = vpop.f32.mrb[0].mxu0
  %v7301 = vadd.f32 0.0, %v7300
  %v7302 = vpop.f32.mrb[0].mxu0
  %7303 = vmatprep.mubr.f32.mxu0 0.0
  %7304 = vmatmul.mubr.f32.gmra.mrb[0].mxu0 %v6447
  %v7305 = vpop.f32.mrb[0].mxu0
  %v7306 = vadd.f32 0.0, %v7305
  %v7307 = vpop.f32.mrb[0].mxu0
  %7308 = vmatprep.mubr.f32.mxu0 0.0
  %7309 = vmatmul.mubr.f32.gmra.mrb[0].mxu0 %v6450
  %v7310 = vpop.f32.mrb[0].mxu0
  %v7311 = vadd.f32 0.0, %v7310
  %v7312 = vpop.f32.mrb[0].mxu0
  %7313 = vmatprep.mubr.f32.mxu0 0.0
  %7314 = vmatmul.mubr.f32.gmra.mrb[0].mxu0 %v6453
  %v7315 = vpop.f32.mrb[0].mxu0
  %v7316 = vadd.f32 0.0, %v7315
  %v7317 = vpop.f32.mrb[0].mxu0
  %7318 = vmatprep.mubr.f32.mxu0 0.0
  %7319 = vmatmul.mubr.f32.gmra.mrb[0].mxu0 %v6456
  %v7320 = vpop.f32.mrb[0].mxu0
  %v7321 = vadd.f32 0.0, %v7320
  %v7322 = vpop.f32.mrb[0].mxu0
  %7323 = vmatprep.mubr.f32.mxu0 0.0
  %7324 = vmatmul.mubr.f32.gmra.mrb[0].mxu0 %v6459
  %v7325 = vpop.f32.mrb[0].mxu0
  %v7326 = vadd.f32 0.0, %v7325
  %v7327 = vpop.f32.mrb[0].mxu0
  %7328 = vmatprep.mubr.f32.mxu0 0.0
  %7329 = vmatmul.mubr.f32.gmra.mrb[0].mxu0 %v6462
  %v7330 = vpop.f32.mrb[0].mxu0
  %v7331 = vadd.f32 0.0, %v7330
  %v7332 = vpop.f32.mrb[0].mxu0
  %7333 = vmatprep.mubr.f32.mxu0 0.0
  %7334 = vmatmul.mubr.f32.gmra.mrb[0].mxu0 %v6465
  %v7335 = vpop.f32.mrb[0].mxu0
  %v7336 = vadd.f32 0.0, %v7335
  %v7337 = vpop.f32.mrb[0].mxu0
  %7338 = vmatprep.mubr.f32.mxu0 0.0
  %7339 = vmatmul.mubr.f32.gmra.mrb[0].mxu0 %v6468
  %v7340 = vpop.f32.mrb[0].mxu0
  %v7341 = vadd.f32 0.0, %v7340
  %v7342 = vpop.f32.mrb[0].mxu0
  %7343 = vmatprep.mubr.f32.mxu0 0.0
  %7344 = vmatmul.mubr.f32.gmra.mrb[0].mxu0 %v6471
  %v7345 = vpop.f32.mrb[0].mxu0
  %v7346 = vadd.f32 0.0, %v7345
  %v7347 = vpop.f32.mrb[0].mxu0
  %7348 = vmatprep.mubr.f32.mxu0 0.0
  %7349 = vmatmul.mubr.f32.gmra.mrb[0].mxu0 %v6474
  %v7350 = vpop.f32.mrb[0].mxu0
  %v7351 = vadd.f32 0.0, %v7350
  %v7352 = vpop.f32.mrb[0].mxu0
  %7353 = vmatprep.mubr.f32.mxu0 0.0
  %7354 = vmatmul.mubr.f32.gmra.mrb[0].mxu0 %v6477
  %v7355 = vpop.f32.mrb[0].mxu0
  %v7356 = vadd.f32 0.0, %v7355
  %v7357 = vpop.f32.mrb[0].mxu0
  %7358 = vmatprep.mubr.f32.mxu0 0.0
  %7359 = vmatmul.mubr.f32.gmra.mrb[0].mxu0 %v6480
  %v7360 = vpop.f32.mrb[0].mxu0
  %v7361 = vadd.f32 0.0, %v7360
  %v7362 = vpop.f32.mrb[0].mxu0
  %7363 = vmatprep.mubr.f32.mxu0 0.0
  %7364 = vmatmul.mubr.f32.gmra.mrb[0].mxu0 %v6483
  %v7365 = vpop.f32.mrb[0].mxu0
  %v7366 = vadd.f32 0.0, %v7365
  %v7367 = vpop.f32.mrb[0].mxu0
  %7368 = vmatprep.mubr.f32.mxu0 0.0
  %7369 = vmatmul.mubr.f32.gmra.mrb[0].mxu0 %v6486
  %v7370 = vpop.f32.mrb[0].mxu0
  %v7371 = vadd.f32 0.0, %v7370
  %v7372 = vpop.f32.mrb[0].mxu0
  %7373 = vmatprep.mubr.f32.mxu0 0.0
  %7374 = vmatmul.mubr.f32.gmra.mrb[0].mxu0 %v6489
  %v7375 = vpop.f32.mrb[0].mxu0
  %v7376 = vadd.f32 0.0, %v7375
  %v7377 = vpop.f32.mrb[0].mxu0
  %7378 = vmatprep.mubr.f32.mxu0 0.0
  %7379 = vmatmul.mubr.f32.gmra.mrb[0].mxu0 %v6492
  %v7380 = vpop.f32.mrb[0].mxu0
  %v7381 = vadd.f32 0.0, %v7380
  %v7382 = vpop.f32.mrb[0].mxu0
  %7383 = vmatprep.mubr.f32.mxu0 0.0
  %7384 = vmatmul.mubr.f32.gmra.mrb[0].mxu0 %v6495
  %v7385 = vpop.f32.mrb[0].mxu0
  %v7386 = vadd.f32 0.0, %v7385
  %v7387 = vpop.f32.mrb[0].mxu0
  %7388 = vmatprep.mubr.f32.mxu0 0.0
  %7389 = vmatmul.mubr.f32.gmra.mrb[0].mxu0 %v6498
  %v7390 = vpop.f32.mrb[0].mxu0
  %v7391 = vadd.f32 0.0, %v7390
  %v7392 = vpop.f32.mrb[0].mxu0
  %7393 = vmatprep.mubr.f32.mxu0 0.0
  %7394 = vmatmul.mubr.f32.gmra.mrb[0].mxu0 %v6501
  %v7395 = vpop.f32.mrb[0].mxu0
  %v7396 = vadd.f32 0.0, %v7395
  %v7397 = vpop.f32.mrb[0].mxu0
  %7398 = vmatprep.mubr.f32.mxu0 0.0
  %7399 = vmatmul.mubr.f32.gmra.mrb[0].mxu0 %v6504
  %v7400 = vpop.f32.mrb[0].mxu0
  %v7401 = vadd.f32 0.0, %v7400
  %v7402 = vpop.f32.mrb[0].mxu0
  %7403 = vmatprep.mubr.f32.mxu0 0.0
  %7404 = vmatmul.mubr.f32.gmra.mrb[0].mxu0 %v6507
  %v7405 = vpop.f32.mrb[0].mxu0
  %v7406 = vadd.f32 0.0, %v7405
  %v7407 = vpop.f32.mrb[0].mxu0
  %7408 = vmatprep.mubr.f32.mxu0 0.0
  %7409 = vmatmul.mubr.f32.gmra.mrb[0].mxu0 %v6510
  %v7410 = vpop.f32.mrb[0].mxu0
  %v7411 = vadd.f32 0.0, %v7410
  %v7412 = vpop.f32.mrb[0].mxu0
  %7413 = vmatprep.mubr.f32.mxu0 0.0
  %7414 = vmatmul.mubr.f32.gmra.mrb[0].mxu0 %v6513
  %v7415 = vpop.f32.mrb[0].mxu0
  %v7416 = vadd.f32 0.0, %v7415
  %v7417 = vpop.f32.mrb[0].mxu0
  %7418 = vdwg.mxu0
  %v7420 = vsel %vm6430, %v6373, 0
  %v7423 = vsel %vm6430, %v6374, 0
  %v7426 = vsel %vm6430, %v6375, 0
  %v7429 = vsel %vm6430, %v6376, 0
  %v7432 = vsel %vm6430, %v6377, 0
  %v7435 = vsel %vm6430, %v6378, 0
  %v7438 = vsel %vm6430, %v6379, 0
  %v7441 = vsel %vm6430, %v6380, 0
  %v7444 = vsel %vm6430, %v6381, 0
  %v7447 = vsel %vm6430, %v6382, 0
  %v7450 = vsel %vm6430, %v6383, 0
  %v7453 = vsel %vm6430, %v6384, 0
  %v7456 = vsel %vm6430, %v6385, 0
  %v7459 = vsel %vm6430, %v6386, 0
  %v7462 = vsel %vm6430, %v6387, 0
  %v7465 = vsel %vm6430, %v6388, 0
  %v7468 = vsel %vm6430, %v6389, 0
  %v7471 = vsel %vm6430, %v6390, 0
  %v7474 = vsel %vm6430, %v6391, 0
  %v7477 = vsel %vm6430, %v6392, 0
  %v7480 = vsel %vm6430, %v6393, 0
  %v7483 = vsel %vm6430, %v6394, 0
  %v7486 = vsel %vm6430, %v6395, 0
  %v7489 = vsel %vm6430, %v6396, 0
  %v7492 = vsel %vm6430, %v6397, 0
  %v7495 = vsel %vm6430, %v6398, 0
  %v7498 = vsel %vm6430, %v6399, 0
  %v7501 = vsel %vm6430, %v6400, 0
  %7503 = vmatprep.subr.mxu0 %v6178
  %7504 = vmatpush1.msra.mxu0 %v6177
  %7505 = vmatprep.subr.mxu0 %v6185
  %7506 = vmatpush1.msra.mxu0 %v6184
  %7507 = vmatprep.subr.mxu0 %v6192
  %7508 = vmatpush1.msra.mxu0 %v6191
  %7509 = vmatprep.subr.mxu0 %v6199
  %7510 = vmatpush1.msra.mxu0 %v6198
  %7511 = vmatprep.subr.mxu0 %v6206
  %7512 = vmatpush1.msra.mxu0 %v6205
  %7513 = vmatprep.subr.mxu0 %v6213
  %7514 = vmatpush1.msra.mxu0 %v6212
  %7515 = vmatprep.subr.mxu0 %v6220
  %7516 = vmatpush1.msra.mxu0 %v6219
  %7517 = vmatprep.subr.mxu0 %v6227
  %7518 = vmatpush1.msra.mxu0 %v6226
  %7519 = vmatprep.subr.mxu0 %v6234
  %7520 = vmatpush1.msra.mxu0 %v6233
  %7521 = vmatprep.subr.mxu0 %v6241
  %7522 = vmatpush1.msra.mxu0 %v6240
  %7523 = vmatprep.subr.mxu0 %v6248
  %7524 = vmatpush1.msra.mxu0 %v6247
  %7525 = vmatprep.subr.mxu0 %v6255
  %7526 = vmatpush1.msra.mxu0 %v6254
  %7527 = vmatprep.subr.mxu0 %v6262
  %7528 = vmatpush1.msra.mxu0 %v6261
  %7529 = vmatprep.subr.mxu0 %v6269
  %7530 = vmatpush1.msra.mxu0 %v6268
  %7531 = vmatprep.subr.mxu0 0.0
  %7532 = vmatpush1.msra.mxu0 0.0
  %7533 = vmatprep.subr.mxu0 0.0
  %7534 = vmatpush1.msra.mxu0 0.0
  %7535 = vmatprep.subr.mxu0 0.0
  %7536 = vmatpush1.msra.mxu0 0.0
  %7537 = vmatprep.subr.mxu0 0.0
  %7538 = vmatpush1.msra.mxu0 0.0
  %7539 = vmatprep.subr.mxu0 0.0
  %7540 = vmatpush1.msra.mxu0 0.0
  %7541 = vmatprep.subr.mxu0 0.0
  %7542 = vmatpush1.msra.mxu0 0.0
  %7543 = vmatprep.subr.mxu0 0.0
  %7544 = vmatpush1.msra.mxu0 0.0
  %7545 = vmatprep.subr.mxu0 0.0
  %7546 = vmatpush1.msra.mxu0 0.0
  %7547 = vmatprep.subr.mxu0 0.0
  %7548 = vmatpush1.msra.mxu0 0.0
  %7549 = vmatprep.subr.mxu0 0.0
  %7550 = vmatpush1.msra.mxu0 0.0
  %7551 = vmatprep.subr.mxu0 0.0
  %7552 = vmatpush1.msra.mxu0 0.0
  %7553 = vmatprep.subr.mxu0 0.0
  %7554 = vmatpush1.msra.mxu0 0.0
  %7555 = vmatprep.subr.mxu0 0.0
  %7556 = vmatpush1.msra.mxu0 0.0
  %7557 = vmatprep.subr.mxu0 0.0
  %7558 = vmatpush1.msra.mxu0 0.0
  %7559 = vmatprep.subr.mxu0 0.0
  %7560 = vmatpush1.msra.mxu0 0.0
  %7561 = vmatprep.subr.mxu0 0.0
  %7562 = vmatpush1.msra.mxu0 0.0
  %7563 = vmatprep.subr.mxu0 0.0
  %7564 = vmatpush1.msra.mxu0 0.0
  %7565 = vmatprep.subr.mxu0 0.0
  %7566 = vmatpush1.msra.mxu0 0.0
  %7567 = vmatprep.mubr.f32.mxu0 0.0
  %7568 = vmatmul.mubr.f32.gmra.mrb[0].mxu0 %v7420
  %v7569 = vpop.f32.mrb[0].mxu0
  %v7570 = vadd.f32 %v6582, %v7569
  %v7571 = vpop.f32.mrb[0].mxu0
  %v7572 = vadd.f32 %v6584, %v7571
  %7573 = vmatprep.mubr.f32.mxu0 0.0
  %7574 = vmatmul.mubr.f32.gmra.mrb[0].mxu0 %v7423
  %v7575 = vpop.f32.mrb[0].mxu0
  %v7576 = vadd.f32 %v6588, %v7575
  %v7577 = vpop.f32.mrb[0].mxu0
  %v7578 = vadd.f32 %v6590, %v7577
  %7579 = vmatprep.mubr.f32.mxu0 0.0
  %7580 = vmatmul.mubr.f32.gmra.mrb[0].mxu0 %v7426
  %v7581 = vpop.f32.mrb[0].mxu0
  %v7582 = vadd.f32 %v6594, %v7581
  %v7583 = vpop.f32.mrb[0].mxu0
  %v7584 = vadd.f32 %v6596, %v7583
  %7585 = vmatprep.mubr.f32.mxu0 0.0
  %7586 = vmatmul.mubr.f32.gmra.mrb[0].mxu0 %v7429
  %v7587 = vpop.f32.mrb[0].mxu0
  %v7588 = vadd.f32 %v6600, %v7587
  %v7589 = vpop.f32.mrb[0].mxu0
  %v7590 = vadd.f32 %v6602, %v7589
  %7591 = vmatprep.mubr.f32.mxu0 0.0
  %7592 = vmatmul.mubr.f32.gmra.mrb[0].mxu0 %v7432
  %v7593 = vpop.f32.mrb[0].mxu0
  %v7594 = vadd.f32 %v6606, %v7593
  %v7595 = vpop.f32.mrb[0].mxu0
  %v7596 = vadd.f32 %v6608, %v7595
  %7597 = vmatprep.mubr.f32.mxu0 0.0
  %7598 = vmatmul.mubr.f32.gmra.mrb[0].mxu0 %v7435
  %v7599 = vpop.f32.mrb[0].mxu0
  %v7600 = vadd.f32 %v6612, %v7599
  %v7601 = vpop.f32.mrb[0].mxu0
  %v7602 = vadd.f32 %v6614, %v7601
  %7603 = vmatprep.mubr.f32.mxu0 0.0
  %7604 = vmatmul.mubr.f32.gmra.mrb[0].mxu0 %v7438
  %v7605 = vpop.f32.mrb[0].mxu0
  %v7606 = vadd.f32 %v6618, %v7605
  %v7607 = vpop.f32.mrb[0].mxu0
  %v7608 = vadd.f32 %v6620, %v7607
  %7609 = vmatprep.mubr.f32.mxu0 0.0
  %7610 = vmatmul.mubr.f32.gmra.mrb[0].mxu0 %v7441
  %v7611 = vpop.f32.mrb[0].mxu0
  %v7612 = vadd.f32 %v6624, %v7611
  %v7613 = vpop.f32.mrb[0].mxu0
  %v7614 = vadd.f32 %v6626, %v7613
  %7615 = vmatprep.mubr.f32.mxu0 0.0
  %7616 = vmatmul.mubr.f32.gmra.mrb[0].mxu0 %v7444
  %v7617 = vpop.f32.mrb[0].mxu0
  %v7618 = vadd.f32 %v6630, %v7617
  %v7619 = vpop.f32.mrb[0].mxu0
  %v7620 = vadd.f32 %v6632, %v7619
  %7621 = vmatprep.mubr.f32.mxu0 0.0
  %7622 = vmatmul.mubr.f32.gmra.mrb[0].mxu0 %v7447
  %v7623 = vpop.f32.mrb[0].mxu0
  %v7624 = vadd.f32 %v6636, %v7623
  %v7625 = vpop.f32.mrb[0].mxu0
  %v7626 = vadd.f32 %v6638, %v7625
  %7627 = vmatprep.mubr.f32.mxu0 0.0
  %7628 = vmatmul.mubr.f32.gmra.mrb[0].mxu0 %v7450
  %v7629 = vpop.f32.mrb[0].mxu0
  %v7630 = vadd.f32 %v6642, %v7629
  %v7631 = vpop.f32.mrb[0].mxu0
  %v7632 = vadd.f32 %v6644, %v7631
  %7633 = vmatprep.mubr.f32.mxu0 0.0
  %7634 = vmatmul.mubr.f32.gmra.mrb[0].mxu0 %v7453
  %v7635 = vpop.f32.mrb[0].mxu0
  %v7636 = vadd.f32 %v6648, %v7635
  %v7637 = vpop.f32.mrb[0].mxu0
  %v7638 = vadd.f32 %v6650, %v7637
  %7639 = vmatprep.mubr.f32.mxu0 0.0
  %7640 = vmatmul.mubr.f32.gmra.mrb[0].mxu0 %v7456
  %v7641 = vpop.f32.mrb[0].mxu0
  %v7642 = vadd.f32 %v6654, %v7641
  %v7643 = vpop.f32.mrb[0].mxu0
  %v7644 = vadd.f32 %v6656, %v7643
  %7645 = vmatprep.mubr.f32.mxu0 0.0
  %7646 = vmatmul.mubr.f32.gmra.mrb[0].mxu0 %v7459
  %v7647 = vpop.f32.mrb[0].mxu0
  %v7648 = vadd.f32 %v6660, %v7647
  %v7649 = vpop.f32.mrb[0].mxu0
  %v7650 = vadd.f32 %v6662, %v7649
  %7651 = vmatprep.mubr.f32.mxu0 0.0
  %7652 = vmatmul.mubr.f32.gmra.mrb[0].mxu0 %v7462
  %v7653 = vpop.f32.mrb[0].mxu0
  %v7654 = vadd.f32 %v6666, %v7653
  %v7655 = vpop.f32.mrb[0].mxu0
  %v7656 = vadd.f32 %v6668, %v7655
  %7657 = vmatprep.mubr.f32.mxu0 0.0
  %7658 = vmatmul.mubr.f32.gmra.mrb[0].mxu0 %v7465
  %v7659 = vpop.f32.mrb[0].mxu0
  %v7660 = vadd.f32 %v6672, %v7659
  %v7661 = vpop.f32.mrb[0].mxu0
  %v7662 = vadd.f32 %v6674, %v7661
  %7663 = vmatprep.mubr.f32.mxu0 0.0
  %7664 = vmatmul.mubr.f32.gmra.mrb[0].mxu0 %v7468
  %v7665 = vpop.f32.mrb[0].mxu0
  %v7666 = vadd.f32 %v6678, %v7665
  %v7667 = vpop.f32.mrb[0].mxu0
  %v7668 = vadd.f32 %v6680, %v7667
  %7669 = vmatprep.mubr.f32.mxu0 0.0
  %7670 = vmatmul.mubr.f32.gmra.mrb[0].mxu0 %v7471
  %v7671 = vpop.f32.mrb[0].mxu0
  %v7672 = vadd.f32 %v6684, %v7671
  %v7673 = vpop.f32.mrb[0].mxu0
  %v7674 = vadd.f32 %v6686, %v7673
  %7675 = vmatprep.mubr.f32.mxu0 0.0
  %7676 = vmatmul.mubr.f32.gmra.mrb[0].mxu0 %v7474
  %v7677 = vpop.f32.mrb[0].mxu0
  %v7678 = vadd.f32 %v6690, %v7677
  %v7679 = vpop.f32.mrb[0].mxu0
  %v7680 = vadd.f32 %v6692, %v7679
  %7681 = vmatprep.mubr.f32.mxu0 0.0
  %7682 = vmatmul.mubr.f32.gmra.mrb[0].mxu0 %v7477
  %v7683 = vpop.f32.mrb[0].mxu0
  %v7684 = vadd.f32 %v6696, %v7683
  %v7685 = vpop.f32.mrb[0].mxu0
  %v7686 = vadd.f32 %v6698, %v7685
  %7687 = vmatprep.mubr.f32.mxu0 0.0
  %7688 = vmatmul.mubr.f32.gmra.mrb[0].mxu0 %v7480
  %v7689 = vpop.f32.mrb[0].mxu0
  %v7690 = vadd.f32 %v6702, %v7689
  %v7691 = vpop.f32.mrb[0].mxu0
  %v7692 = vadd.f32 %v6704, %v7691
  %7693 = vmatprep.mubr.f32.mxu0 0.0
  %7694 = vmatmul.mubr.f32.gmra.mrb[0].mxu0 %v7483
  %v7695 = vpop.f32.mrb[0].mxu0
  %v7696 = vadd.f32 %v6708, %v7695
  %v7697 = vpop.f32.mrb[0].mxu0
  %v7698 = vadd.f32 %v6710, %v7697
  %7699 = vmatprep.mubr.f32.mxu0 0.0
  %7700 = vmatmul.mubr.f32.gmra.mrb[0].mxu0 %v7486
  %v7701 = vpop.f32.mrb[0].mxu0
  %v7702 = vadd.f32 %v6714, %v7701
  %v7703 = vpop.f32.mrb[0].mxu0
  %v7704 = vadd.f32 %v6716, %v7703
  %7705 = vmatprep.mubr.f32.mxu0 0.0
  %7706 = vmatmul.mubr.f32.gmra.mrb[0].mxu0 %v7489
  %v7707 = vpop.f32.mrb[0].mxu0
  %v7708 = vadd.f32 %v6720, %v7707
  %v7709 = vpop.f32.mrb[0].mxu0
  %v7710 = vadd.f32 %v6722, %v7709
  %7711 = vmatprep.mubr.f32.mxu0 0.0
  %7712 = vmatmul.mubr.f32.gmra.mrb[0].mxu0 %v7492
  %v7713 = vpop.f32.mrb[0].mxu0
  %v7714 = vadd.f32 %v6726, %v7713
  %v7715 = vpop.f32.mrb[0].mxu0
  %v7716 = vadd.f32 %v6728, %v7715
  %7717 = vmatprep.mubr.f32.mxu0 0.0
  %7718 = vmatmul.mubr.f32.gmra.mrb[0].mxu0 %v7495
  %v7719 = vpop.f32.mrb[0].mxu0
  %v7720 = vadd.f32 %v6732, %v7719
  %v7721 = vpop.f32.mrb[0].mxu0
  %v7722 = vadd.f32 %v6734, %v7721
  %7723 = vmatprep.mubr.f32.mxu0 0.0
  %7724 = vmatmul.mubr.f32.gmra.mrb[0].mxu0 %v7498
  %v7725 = vpop.f32.mrb[0].mxu0
  %v7726 = vadd.f32 %v6738, %v7725
  %v7727 = vpop.f32.mrb[0].mxu0
  %v7728 = vadd.f32 %v6740, %v7727
  %7729 = vmatprep.mubr.f32.mxu0 0.0
  %7730 = vmatmul.mubr.f32.gmra.mrb[0].mxu0 %v7501
  %v7731 = vpop.f32.mrb[0].mxu0
  %v7732 = vadd.f32 %v6744, %v7731
  %v7733 = vpop.f32.mrb[0].mxu0
  %v7734 = vadd.f32 %v6746, %v7733
  %7735 = vdwg.mxu0
  %7736 = vmatprep.subr.mxu0 %v6180
  %7737 = vmatpush1.msra.mxu0 %v6179
  %7738 = vmatprep.subr.mxu0 %v6187
  %7739 = vmatpush1.msra.mxu0 %v6186
  %7740 = vmatprep.subr.mxu0 %v6194
  %7741 = vmatpush1.msra.mxu0 %v6193
  %7742 = vmatprep.subr.mxu0 %v6201
  %7743 = vmatpush1.msra.mxu0 %v6200
  %7744 = vmatprep.subr.mxu0 %v6208
  %7745 = vmatpush1.msra.mxu0 %v6207
  %7746 = vmatprep.subr.mxu0 %v6215
  %7747 = vmatpush1.msra.mxu0 %v6214
  %7748 = vmatprep.subr.mxu0 %v6222
  %7749 = vmatpush1.msra.mxu0 %v6221
  %7750 = vmatprep.subr.mxu0 %v6229
  %7751 = vmatpush1.msra.mxu0 %v6228
  %7752 = vmatprep.subr.mxu0 %v6236
  %7753 = vmatpush1.msra.mxu0 %v6235
  %7754 = vmatprep.subr.mxu0 %v6243
  %7755 = vmatpush1.msra.mxu0 %v6242
  %7756 = vmatprep.subr.mxu0 %v6250
  %7757 = vmatpush1.msra.mxu0 %v6249
  %7758 = vmatprep.subr.mxu0 %v6257
  %7759 = vmatpush1.msra.mxu0 %v6256
  %7760 = vmatprep.subr.mxu0 %v6264
  %7761 = vmatpush1.msra.mxu0 %v6263
  %7762 = vmatprep.subr.mxu0 %v6271
  %7763 = vmatpush1.msra.mxu0 %v6270
  %7764 = vmatprep.subr.mxu0 0.0
  %7765 = vmatpush1.msra.mxu0 0.0
  %7766 = vmatprep.subr.mxu0 0.0
  %7767 = vmatpush1.msra.mxu0 0.0
  %7768 = vmatprep.subr.mxu0 0.0
  %7769 = vmatpush1.msra.mxu0 0.0
  %7770 = vmatprep.subr.mxu0 0.0
  %7771 = vmatpush1.msra.mxu0 0.0
  %7772 = vmatprep.subr.mxu0 0.0
  %7773 = vmatpush1.msra.mxu0 0.0
  %7774 = vmatprep.subr.mxu0 0.0
  %7775 = vmatpush1.msra.mxu0 0.0
  %7776 = vmatprep.subr.mxu0 0.0
  %7777 = vmatpush1.msra.mxu0 0.0
  %7778 = vmatprep.subr.mxu0 0.0
  %7779 = vmatpush1.msra.mxu0 0.0
  %7780 = vmatprep.subr.mxu0 0.0
  %7781 = vmatpush1.msra.mxu0 0.0
  %7782 = vmatprep.subr.mxu0 0.0
  %7783 = vmatpush1.msra.mxu0 0.0
  %7784 = vmatprep.subr.mxu0 0.0
  %7785 = vmatpush1.msra.mxu0 0.0
  %7786 = vmatprep.subr.mxu0 0.0
  %7787 = vmatpush1.msra.mxu0 0.0
  %7788 = vmatprep.subr.mxu0 0.0
  %7789 = vmatpush1.msra.mxu0 0.0
  %7790 = vmatprep.subr.mxu0 0.0
  %7791 = vmatpush1.msra.mxu0 0.0
  %7792 = vmatprep.subr.mxu0 0.0
  %7793 = vmatpush1.msra.mxu0 0.0
  %7794 = vmatprep.subr.mxu0 0.0
  %7795 = vmatpush1.msra.mxu0 0.0
  %7796 = vmatprep.subr.mxu0 0.0
  %7797 = vmatpush1.msra.mxu0 0.0
  %7798 = vmatprep.subr.mxu0 0.0
  %7799 = vmatpush1.msra.mxu0 0.0
  %7800 = vmatprep.mubr.f32.mxu0 0.0
  %7801 = vmatmul.mubr.f32.gmra.mrb[0].mxu0 %v7420
  %v7802 = vpop.f32.mrb[0].mxu0
  %v7803 = vadd.f32 %v6815, %v7802
  %v7804 = vpop.f32.mrb[0].mxu0
  %v7805 = vadd.f32 %v6817, %v7804
  %7806 = vmatprep.mubr.f32.mxu0 0.0
  %7807 = vmatmul.mubr.f32.gmra.mrb[0].mxu0 %v7423
  %v7808 = vpop.f32.mrb[0].mxu0
  %v7809 = vadd.f32 %v6821, %v7808
  %v7810 = vpop.f32.mrb[0].mxu0
  %v7811 = vadd.f32 %v6823, %v7810
  %7812 = vmatprep.mubr.f32.mxu0 0.0
  %7813 = vmatmul.mubr.f32.gmra.mrb[0].mxu0 %v7426
  %v7814 = vpop.f32.mrb[0].mxu0
  %v7815 = vadd.f32 %v6827, %v7814
  %v7816 = vpop.f32.mrb[0].mxu0
  %v7817 = vadd.f32 %v6829, %v7816
  %7818 = vmatprep.mubr.f32.mxu0 0.0
  %7819 = vmatmul.mubr.f32.gmra.mrb[0].mxu0 %v7429
  %v7820 = vpop.f32.mrb[0].mxu0
  %v7821 = vadd.f32 %v6833, %v7820
  %v7822 = vpop.f32.mrb[0].mxu0
  %v7823 = vadd.f32 %v6835, %v7822
  %7824 = vmatprep.mubr.f32.mxu0 0.0
  %7825 = vmatmul.mubr.f32.gmra.mrb[0].mxu0 %v7432
  %v7826 = vpop.f32.mrb[0].mxu0
  %v7827 = vadd.f32 %v6839, %v7826
  %v7828 = vpop.f32.mrb[0].mxu0
  %v7829 = vadd.f32 %v6841, %v7828
  %7830 = vmatprep.mubr.f32.mxu0 0.0
  %7831 = vmatmul.mubr.f32.gmra.mrb[0].mxu0 %v7435
  %v7832 = vpop.f32.mrb[0].mxu0
  %v7833 = vadd.f32 %v6845, %v7832
  %v7834 = vpop.f32.mrb[0].mxu0
  %v7835 = vadd.f32 %v6847, %v7834
  %7836 = vmatprep.mubr.f32.mxu0 0.0
  %7837 = vmatmul.mubr.f32.gmra.mrb[0].mxu0 %v7438
  %v7838 = vpop.f32.mrb[0].mxu0
  %v7839 = vadd.f32 %v6851, %v7838
  %v7840 = vpop.f32.mrb[0].mxu0
  %v7841 = vadd.f32 %v6853, %v7840
  %7842 = vmatprep.mubr.f32.mxu0 0.0
  %7843 = vmatmul.mubr.f32.gmra.mrb[0].mxu0 %v7441
  %v7844 = vpop.f32.mrb[0].mxu0
  %v7845 = vadd.f32 %v6857, %v7844
  %v7846 = vpop.f32.mrb[0].mxu0
  %v7847 = vadd.f32 %v6859, %v7846
  %7848 = vmatprep.mubr.f32.mxu0 0.0
  %7849 = vmatmul.mubr.f32.gmra.mrb[0].mxu0 %v7444
  %v7850 = vpop.f32.mrb[0].mxu0
  %v7851 = vadd.f32 %v6863, %v7850
  %v7852 = vpop.f32.mrb[0].mxu0
  %v7853 = vadd.f32 %v6865, %v7852
  %7854 = vmatprep.mubr.f32.mxu0 0.0
  %7855 = vmatmul.mubr.f32.gmra.mrb[0].mxu0 %v7447
  %v7856 = vpop.f32.mrb[0].mxu0
  %v7857 = vadd.f32 %v6869, %v7856
  %v7858 = vpop.f32.mrb[0].mxu0
  %v7859 = vadd.f32 %v6871, %v7858
  %7860 = vmatprep.mubr.f32.mxu0 0.0
  %7861 = vmatmul.mubr.f32.gmra.mrb[0].mxu0 %v7450
  %v7862 = vpop.f32.mrb[0].mxu0
  %v7863 = vadd.f32 %v6875, %v7862
  %v7864 = vpop.f32.mrb[0].mxu0
  %v7865 = vadd.f32 %v6877, %v7864
  %7866 = vmatprep.mubr.f32.mxu0 0.0
  %7867 = vmatmul.mubr.f32.gmra.mrb[0].mxu0 %v7453
  %v7868 = vpop.f32.mrb[0].mxu0
  %v7869 = vadd.f32 %v6881, %v7868
  %v7870 = vpop.f32.mrb[0].mxu0
  %v7871 = vadd.f32 %v6883, %v7870
  %7872 = vmatprep.mubr.f32.mxu0 0.0
  %7873 = vmatmul.mubr.f32.gmra.mrb[0].mxu0 %v7456
  %v7874 = vpop.f32.mrb[0].mxu0
  %v7875 = vadd.f32 %v6887, %v7874
  %v7876 = vpop.f32.mrb[0].mxu0
  %v7877 = vadd.f32 %v6889, %v7876
  %7878 = vmatprep.mubr.f32.mxu0 0.0
  %7879 = vmatmul.mubr.f32.gmra.mrb[0].mxu0 %v7459
  %v7880 = vpop.f32.mrb[0].mxu0
  %v7881 = vadd.f32 %v6893, %v7880
  %v7882 = vpop.f32.mrb[0].mxu0
  %v7883 = vadd.f32 %v6895, %v7882
  %7884 = vmatprep.mubr.f32.mxu0 0.0
  %7885 = vmatmul.mubr.f32.gmra.mrb[0].mxu0 %v7462
  %v7886 = vpop.f32.mrb[0].mxu0
  %v7887 = vadd.f32 %v6899, %v7886
  %v7888 = vpop.f32.mrb[0].mxu0
  %v7889 = vadd.f32 %v6901, %v7888
  %7890 = vmatprep.mubr.f32.mxu0 0.0
  %7891 = vmatmul.mubr.f32.gmra.mrb[0].mxu0 %v7465
  %v7892 = vpop.f32.mrb[0].mxu0
  %v7893 = vadd.f32 %v6905, %v7892
  %v7894 = vpop.f32.mrb[0].mxu0
  %v7895 = vadd.f32 %v6907, %v7894
  %7896 = vmatprep.mubr.f32.mxu0 0.0
  %7897 = vmatmul.mubr.f32.gmra.mrb[0].mxu0 %v7468
  %v7898 = vpop.f32.mrb[0].mxu0
  %v7899 = vadd.f32 %v6911, %v7898
  %v7900 = vpop.f32.mrb[0].mxu0
  %v7901 = vadd.f32 %v6913, %v7900
  %7902 = vmatprep.mubr.f32.mxu0 0.0
  %7903 = vmatmul.mubr.f32.gmra.mrb[0].mxu0 %v7471
  %v7904 = vpop.f32.mrb[0].mxu0
  %v7905 = vadd.f32 %v6917, %v7904
  %v7906 = vpop.f32.mrb[0].mxu0
  %v7907 = vadd.f32 %v6919, %v7906
  %7908 = vmatprep.mubr.f32.mxu0 0.0
  %7909 = vmatmul.mubr.f32.gmra.mrb[0].mxu0 %v7474
  %v7910 = vpop.f32.mrb[0].mxu0
  %v7911 = vadd.f32 %v6923, %v7910
  %v7912 = vpop.f32.mrb[0].mxu0
  %v7913 = vadd.f32 %v6925, %v7912
  %7914 = vmatprep.mubr.f32.mxu0 0.0
  %7915 = vmatmul.mubr.f32.gmra.mrb[0].mxu0 %v7477
  %v7916 = vpop.f32.mrb[0].mxu0
  %v7917 = vadd.f32 %v6929, %v7916
  %v7918 = vpop.f32.mrb[0].mxu0
  %v7919 = vadd.f32 %v6931, %v7918
  %7920 = vmatprep.mubr.f32.mxu0 0.0
  %7921 = vmatmul.mubr.f32.gmra.mrb[0].mxu0 %v7480
  %v7922 = vpop.f32.mrb[0].mxu0
  %v7923 = vadd.f32 %v6935, %v7922
  %v7924 = vpop.f32.mrb[0].mxu0
  %v7925 = vadd.f32 %v6937, %v7924
  %7926 = vmatprep.mubr.f32.mxu0 0.0
  %7927 = vmatmul.mubr.f32.gmra.mrb[0].mxu0 %v7483
  %v7928 = vpop.f32.mrb[0].mxu0
  %v7929 = vadd.f32 %v6941, %v7928
  %v7930 = vpop.f32.mrb[0].mxu0
  %v7931 = vadd.f32 %v6943, %v7930
  %7932 = vmatprep.mubr.f32.mxu0 0.0
  %7933 = vmatmul.mubr.f32.gmra.mrb[0].mxu0 %v7486
  %v7934 = vpop.f32.mrb[0].mxu0
  %v7935 = vadd.f32 %v6947, %v7934
  %v7936 = vpop.f32.mrb[0].mxu0
  %v7937 = vadd.f32 %v6949, %v7936
  %7938 = vmatprep.mubr.f32.mxu0 0.0
  %7939 = vmatmul.mubr.f32.gmra.mrb[0].mxu0 %v7489
  %v7940 = vpop.f32.mrb[0].mxu0
  %v7941 = vadd.f32 %v6953, %v7940
  %v7942 = vpop.f32.mrb[0].mxu0
  %v7943 = vadd.f32 %v6955, %v7942
  %7944 = vmatprep.mubr.f32.mxu0 0.0
  %7945 = vmatmul.mubr.f32.gmra.mrb[0].mxu0 %v7492
  %v7946 = vpop.f32.mrb[0].mxu0
  %v7947 = vadd.f32 %v6959, %v7946
  %v7948 = vpop.f32.mrb[0].mxu0
  %v7949 = vadd.f32 %v6961, %v7948
  %7950 = vmatprep.mubr.f32.mxu0 0.0
  %7951 = vmatmul.mubr.f32.gmra.mrb[0].mxu0 %v7495
  %v7952 = vpop.f32.mrb[0].mxu0
  %v7953 = vadd.f32 %v6965, %v7952
  %v7954 = vpop.f32.mrb[0].mxu0
  %v7955 = vadd.f32 %v6967, %v7954
  %7956 = vmatprep.mubr.f32.mxu0 0.0
  %7957 = vmatmul.mubr.f32.gmra.mrb[0].mxu0 %v7498
  %v7958 = vpop.f32.mrb[0].mxu0
  %v7959 = vadd.f32 %v6971, %v7958
  %v7960 = vpop.f32.mrb[0].mxu0
  %v7961 = vadd.f32 %v6973, %v7960
  %7962 = vmatprep.mubr.f32.mxu0 0.0
  %7963 = vmatmul.mubr.f32.gmra.mrb[0].mxu0 %v7501
  %v7964 = vpop.f32.mrb[0].mxu0
  %v7965 = vadd.f32 %v6977, %v7964
  %v7966 = vpop.f32.mrb[0].mxu0
  %v7967 = vadd.f32 %v6979, %v7966
  %7968 = vdwg.mxu0
  %7969 = vmatprep.subr.mxu0 %v6182
  %7970 = vmatpush1.msra.mxu0 %v6181
  %7971 = vmatprep.subr.mxu0 %v6189
  %7972 = vmatpush1.msra.mxu0 %v6188
  %7973 = vmatprep.subr.mxu0 %v6196
  %7974 = vmatpush1.msra.mxu0 %v6195
  %7975 = vmatprep.subr.mxu0 %v6203
  %7976 = vmatpush1.msra.mxu0 %v6202
  %7977 = vmatprep.subr.mxu0 %v6210
  %7978 = vmatpush1.msra.mxu0 %v6209
  %7979 = vmatprep.subr.mxu0 %v6217
  %7980 = vmatpush1.msra.mxu0 %v6216
  %7981 = vmatprep.subr.mxu0 %v6224
  %7982 = vmatpush1.msra.mxu0 %v6223
  %7983 = vmatprep.subr.mxu0 %v6231
  %7984 = vmatpush1.msra.mxu0 %v6230
  %7985 = vmatprep.subr.mxu0 %v6238
  %7986 = vmatpush1.msra.mxu0 %v6237
  %7987 = vmatprep.subr.mxu0 %v6245
  %7988 = vmatpush1.msra.mxu0 %v6244
  %7989 = vmatprep.subr.mxu0 %v6252
  %7990 = vmatpush1.msra.mxu0 %v6251
  %7991 = vmatprep.subr.mxu0 %v6259
  %7992 = vmatpush1.msra.mxu0 %v6258
  %7993 = vmatprep.subr.mxu0 %v6266
  %7994 = vmatpush1.msra.mxu0 %v6265
  %7995 = vmatprep.subr.mxu0 %v6273
  %7996 = vmatpush1.msra.mxu0 %v6272
  %7997 = vmatprep.subr.mxu0 0.0
  %7998 = vmatpush1.msra.mxu0 0.0
  %7999 = vmatprep.subr.mxu0 0.0
  %8000 = vmatpush1.msra.mxu0 0.0
  %8001 = vmatprep.subr.mxu0 0.0
  %8002 = vmatpush1.msra.mxu0 0.0
  %8003 = vmatprep.subr.mxu0 0.0
  %8004 = vmatpush1.msra.mxu0 0.0
  %8005 = vmatprep.subr.mxu0 0.0
  %8006 = vmatpush1.msra.mxu0 0.0
  %8007 = vmatprep.subr.mxu0 0.0
  %8008 = vmatpush1.msra.mxu0 0.0
  %8009 = vmatprep.subr.mxu0 0.0
  %8010 = vmatpush1.msra.mxu0 0.0
  %8011 = vmatprep.subr.mxu0 0.0
  %8012 = vmatpush1.msra.mxu0 0.0
  %8013 = vmatprep.subr.mxu0 0.0
  %8014 = vmatpush1.msra.mxu0 0.0
  %8015 = vmatprep.subr.mxu0 0.0
  %8016 = vmatpush1.msra.mxu0 0.0
  %8017 = vmatprep.subr.mxu0 0.0
  %8018 = vmatpush1.msra.mxu0 0.0
  %8019 = vmatprep.subr.mxu0 0.0
  %8020 = vmatpush1.msra.mxu0 0.0
  %8021 = vmatprep.subr.mxu0 0.0
  %8022 = vmatpush1.msra.mxu0 0.0
  %8023 = vmatprep.subr.mxu0 0.0
  %8024 = vmatpush1.msra.mxu0 0.0
  %8025 = vmatprep.subr.mxu0 0.0
  %8026 = vmatpush1.msra.mxu0 0.0
  %8027 = vmatprep.subr.mxu0 0.0
  %8028 = vmatpush1.msra.mxu0 0.0
  %8029 = vmatprep.subr.mxu0 0.0
  %8030 = vmatpush1.msra.mxu0 0.0
  %8031 = vmatprep.subr.mxu0 0.0
  %8032 = vmatpush1.msra.mxu0 0.0
  %8033 = vmatprep.mubr.f32.mxu0 0.0
  %8034 = vmatmul.mubr.f32.gmra.mrb[0].mxu0 %v7420
  %v8035 = vpop.f32.mrb[0].mxu0
  %v8036 = vadd.f32 %v7048, %v8035
  %v8037 = vpop.f32.mrb[0].mxu0
  %v8038 = vadd.f32 %v7050, %v8037
  %8039 = vmatprep.mubr.f32.mxu0 0.0
  %8040 = vmatmul.mubr.f32.gmra.mrb[0].mxu0 %v7423
  %v8041 = vpop.f32.mrb[0].mxu0
  %v8042 = vadd.f32 %v7054, %v8041
  %v8043 = vpop.f32.mrb[0].mxu0
  %v8044 = vadd.f32 %v7056, %v8043
  %8045 = vmatprep.mubr.f32.mxu0 0.0
  %8046 = vmatmul.mubr.f32.gmra.mrb[0].mxu0 %v7426
  %v8047 = vpop.f32.mrb[0].mxu0
  %v8048 = vadd.f32 %v7060, %v8047
  %v8049 = vpop.f32.mrb[0].mxu0
  %v8050 = vadd.f32 %v7062, %v8049
  %8051 = vmatprep.mubr.f32.mxu0 0.0
  %8052 = vmatmul.mubr.f32.gmra.mrb[0].mxu0 %v7429
  %v8053 = vpop.f32.mrb[0].mxu0
  %v8054 = vadd.f32 %v7066, %v8053
  %v8055 = vpop.f32.mrb[0].mxu0
  %v8056 = vadd.f32 %v7068, %v8055
  %8057 = vmatprep.mubr.f32.mxu0 0.0
  %8058 = vmatmul.mubr.f32.gmra.mrb[0].mxu0 %v7432
  %v8059 = vpop.f32.mrb[0].mxu0
  %v8060 = vadd.f32 %v7072, %v8059
  %v8061 = vpop.f32.mrb[0].mxu0
  %v8062 = vadd.f32 %v7074, %v8061
  %8063 = vmatprep.mubr.f32.mxu0 0.0
  %8064 = vmatmul.mubr.f32.gmra.mrb[0].mxu0 %v7435
  %v8065 = vpop.f32.mrb[0].mxu0
  %v8066 = vadd.f32 %v7078, %v8065
  %v8067 = vpop.f32.mrb[0].mxu0
  %v8068 = vadd.f32 %v7080, %v8067
  %8069 = vmatprep.mubr.f32.mxu0 0.0
  %8070 = vmatmul.mubr.f32.gmra.mrb[0].mxu0 %v7438
  %v8071 = vpop.f32.mrb[0].mxu0
  %v8072 = vadd.f32 %v7084, %v8071
  %v8073 = vpop.f32.mrb[0].mxu0
  %v8074 = vadd.f32 %v7086, %v8073
  %8075 = vmatprep.mubr.f32.mxu0 0.0
  %8076 = vmatmul.mubr.f32.gmra.mrb[0].mxu0 %v7441
  %v8077 = vpop.f32.mrb[0].mxu0
  %v8078 = vadd.f32 %v7090, %v8077
  %v8079 = vpop.f32.mrb[0].mxu0
  %v8080 = vadd.f32 %v7092, %v8079
  %8081 = vmatprep.mubr.f32.mxu0 0.0
  %8082 = vmatmul.mubr.f32.gmra.mrb[0].mxu0 %v7444
  %v8083 = vpop.f32.mrb[0].mxu0
  %v8084 = vadd.f32 %v7096, %v8083
  %v8085 = vpop.f32.mrb[0].mxu0
  %v8086 = vadd.f32 %v7098, %v8085
  %8087 = vmatprep.mubr.f32.mxu0 0.0
  %8088 = vmatmul.mubr.f32.gmra.mrb[0].mxu0 %v7447
  %v8089 = vpop.f32.mrb[0].mxu0
  %v8090 = vadd.f32 %v7102, %v8089
  %v8091 = vpop.f32.mrb[0].mxu0
  %v8092 = vadd.f32 %v7104, %v8091
  %8093 = vmatprep.mubr.f32.mxu0 0.0
  %8094 = vmatmul.mubr.f32.gmra.mrb[0].mxu0 %v7450
  %v8095 = vpop.f32.mrb[0].mxu0
  %v8096 = vadd.f32 %v7108, %v8095
  %v8097 = vpop.f32.mrb[0].mxu0
  %v8098 = vadd.f32 %v7110, %v8097
  %8099 = vmatprep.mubr.f32.mxu0 0.0
  %8100 = vmatmul.mubr.f32.gmra.mrb[0].mxu0 %v7453
  %v8101 = vpop.f32.mrb[0].mxu0
  %v8102 = vadd.f32 %v7114, %v8101
  %v8103 = vpop.f32.mrb[0].mxu0
  %v8104 = vadd.f32 %v7116, %v8103
  %8105 = vmatprep.mubr.f32.mxu0 0.0
  %8106 = vmatmul.mubr.f32.gmra.mrb[0].mxu0 %v7456
  %v8107 = vpop.f32.mrb[0].mxu0
  %v8108 = vadd.f32 %v7120, %v8107
  %v8109 = vpop.f32.mrb[0].mxu0
  %v8110 = vadd.f32 %v7122, %v8109
  %8111 = vmatprep.mubr.f32.mxu0 0.0
  %8112 = vmatmul.mubr.f32.gmra.mrb[0].mxu0 %v7459
  %v8113 = vpop.f32.mrb[0].mxu0
  %v8114 = vadd.f32 %v7126, %v8113
  %v8115 = vpop.f32.mrb[0].mxu0
  %v8116 = vadd.f32 %v7128, %v8115
  %8117 = vmatprep.mubr.f32.mxu0 0.0
  %8118 = vmatmul.mubr.f32.gmra.mrb[0].mxu0 %v7462
  %v8119 = vpop.f32.mrb[0].mxu0
  %v8120 = vadd.f32 %v7132, %v8119
  %v8121 = vpop.f32.mrb[0].mxu0
  %v8122 = vadd.f32 %v7134, %v8121
  %8123 = vmatprep.mubr.f32.mxu0 0.0
  %8124 = vmatmul.mubr.f32.gmra.mrb[0].mxu0 %v7465
  %v8125 = vpop.f32.mrb[0].mxu0
  %v8126 = vadd.f32 %v7138, %v8125
  %v8127 = vpop.f32.mrb[0].mxu0
  %v8128 = vadd.f32 %v7140, %v8127
  %8129 = vmatprep.mubr.f32.mxu0 0.0
  %8130 = vmatmul.mubr.f32.gmra.mrb[0].mxu0 %v7468
  %v8131 = vpop.f32.mrb[0].mxu0
  %v8132 = vadd.f32 %v7144, %v8131
  %v8133 = vpop.f32.mrb[0].mxu0
  %v8134 = vadd.f32 %v7146, %v8133
  %8135 = vmatprep.mubr.f32.mxu0 0.0
  %8136 = vmatmul.mubr.f32.gmra.mrb[0].mxu0 %v7471
  %v8137 = vpop.f32.mrb[0].mxu0
  %v8138 = vadd.f32 %v7150, %v8137
  %v8139 = vpop.f32.mrb[0].mxu0
  %v8140 = vadd.f32 %v7152, %v8139
  %8141 = vmatprep.mubr.f32.mxu0 0.0
  %8142 = vmatmul.mubr.f32.gmra.mrb[0].mxu0 %v7474
  %v8143 = vpop.f32.mrb[0].mxu0
  %v8144 = vadd.f32 %v7156, %v8143
  %v8145 = vpop.f32.mrb[0].mxu0
  %v8146 = vadd.f32 %v7158, %v8145
  %8147 = vmatprep.mubr.f32.mxu0 0.0
  %8148 = vmatmul.mubr.f32.gmra.mrb[0].mxu0 %v7477
  %v8149 = vpop.f32.mrb[0].mxu0
  %v8150 = vadd.f32 %v7162, %v8149
  %v8151 = vpop.f32.mrb[0].mxu0
  %v8152 = vadd.f32 %v7164, %v8151
  %8153 = vmatprep.mubr.f32.mxu0 0.0
  %8154 = vmatmul.mubr.f32.gmra.mrb[0].mxu0 %v7480
  %v8155 = vpop.f32.mrb[0].mxu0
  %v8156 = vadd.f32 %v7168, %v8155
  %v8157 = vpop.f32.mrb[0].mxu0
  %v8158 = vadd.f32 %v7170, %v8157
  %8159 = vmatprep.mubr.f32.mxu0 0.0
  %8160 = vmatmul.mubr.f32.gmra.mrb[0].mxu0 %v7483
  %v8161 = vpop.f32.mrb[0].mxu0
  %v8162 = vadd.f32 %v7174, %v8161
  %v8163 = vpop.f32.mrb[0].mxu0
  %v8164 = vadd.f32 %v7176, %v8163
  %8165 = vmatprep.mubr.f32.mxu0 0.0
  %8166 = vmatmul.mubr.f32.gmra.mrb[0].mxu0 %v7486
  %v8167 = vpop.f32.mrb[0].mxu0
  %v8168 = vadd.f32 %v7180, %v8167
  %v8169 = vpop.f32.mrb[0].mxu0
  %v8170 = vadd.f32 %v7182, %v8169
  %8171 = vmatprep.mubr.f32.mxu0 0.0
  %8172 = vmatmul.mubr.f32.gmra.mrb[0].mxu0 %v7489
  %v8173 = vpop.f32.mrb[0].mxu0
  %v8174 = vadd.f32 %v7186, %v8173
  %v8175 = vpop.f32.mrb[0].mxu0
  %v8176 = vadd.f32 %v7188, %v8175
  %8177 = vmatprep.mubr.f32.mxu0 0.0
  %8178 = vmatmul.mubr.f32.gmra.mrb[0].mxu0 %v7492
  %v8179 = vpop.f32.mrb[0].mxu0
  %v8180 = vadd.f32 %v7192, %v8179
  %v8181 = vpop.f32.mrb[0].mxu0
  %v8182 = vadd.f32 %v7194, %v8181
  %8183 = vmatprep.mubr.f32.mxu0 0.0
  %8184 = vmatmul.mubr.f32.gmra.mrb[0].mxu0 %v7495
  %v8185 = vpop.f32.mrb[0].mxu0
  %v8186 = vadd.f32 %v7198, %v8185
  %v8187 = vpop.f32.mrb[0].mxu0
  %v8188 = vadd.f32 %v7200, %v8187
  %8189 = vmatprep.mubr.f32.mxu0 0.0
  %8190 = vmatmul.mubr.f32.gmra.mrb[0].mxu0 %v7498
  %v8191 = vpop.f32.mrb[0].mxu0
  %v8192 = vadd.f32 %v7204, %v8191
  %v8193 = vpop.f32.mrb[0].mxu0
  %v8194 = vadd.f32 %v7206, %v8193
  %8195 = vmatprep.mubr.f32.mxu0 0.0
  %8196 = vmatmul.mubr.f32.gmra.mrb[0].mxu0 %v7501
  %v8197 = vpop.f32.mrb[0].mxu0
  %v8198 = vadd.f32 %v7210, %v8197
  %v8199 = vpop.f32.mrb[0].mxu0
  %v8200 = vadd.f32 %v7212, %v8199
  %8201 = vdwg.mxu0
  %8202 = vmatprep.subr.mxu0 0.0
  %8203 = vmatpush1.msra.mxu0 %v6183
  %8204 = vmatprep.subr.mxu0 0.0
  %8205 = vmatpush1.msra.mxu0 %v6190
  %8206 = vmatprep.subr.mxu0 0.0
  %8207 = vmatpush1.msra.mxu0 %v6197
  %8208 = vmatprep.subr.mxu0 0.0
  %8209 = vmatpush1.msra.mxu0 %v6204
  %8210 = vmatprep.subr.mxu0 0.0
  %8211 = vmatpush1.msra.mxu0 %v6211
  %8212 = vmatprep.subr.mxu0 0.0
  %8213 = vmatpush1.msra.mxu0 %v6218
  %8214 = vmatprep.subr.mxu0 0.0
  %8215 = vmatpush1.msra.mxu0 %v6225
  %8216 = vmatprep.subr.mxu0 0.0
  %8217 = vmatpush1.msra.mxu0 %v6232
  %8218 = vmatprep.subr.mxu0 0.0
  %8219 = vmatpush1.msra.mxu0 %v6239
  %8220 = vmatprep.subr.mxu0 0.0
  %8221 = vmatpush1.msra.mxu0 %v6246
  %8222 = vmatprep.subr.mxu0 0.0
  %8223 = vmatpush1.msra.mxu0 %v6253
  %8224 = vmatprep.subr.mxu0 0.0
  %8225 = vmatpush1.msra.mxu0 %v6260
  %8226 = vmatprep.subr.mxu0 0.0
  %8227 = vmatpush1.msra.mxu0 %v6267
  %8228 = vmatprep.subr.mxu0 0.0
  %8229 = vmatpush1.msra.mxu0 %v6274
  %8230 = vmatprep.subr.mxu0 0.0
  %8231 = vmatpush1.msra.mxu0 0.0
  %8232 = vmatprep.subr.mxu0 0.0
  %8233 = vmatpush1.msra.mxu0 0.0
  %8234 = vmatprep.subr.mxu0 0.0
  %8235 = vmatpush1.msra.mxu0 0.0
  %8236 = vmatprep.subr.mxu0 0.0
  %8237 = vmatpush1.msra.mxu0 0.0
  %8238 = vmatprep.subr.mxu0 0.0
  %8239 = vmatpush1.msra.mxu0 0.0
  %8240 = vmatprep.subr.mxu0 0.0
  %8241 = vmatpush1.msra.mxu0 0.0
  %8242 = vmatprep.subr.mxu0 0.0
  %8243 = vmatpush1.msra.mxu0 0.0
  %8244 = vmatprep.subr.mxu0 0.0
  %8245 = vmatpush1.msra.mxu0 0.0
  %8246 = vmatprep.subr.mxu0 0.0
  %8247 = vmatpush1.msra.mxu0 0.0
  %8248 = vmatprep.subr.mxu0 0.0
  %8249 = vmatpush1.msra.mxu0 0.0
  %8250 = vmatprep.subr.mxu0 0.0
  %8251 = vmatpush1.msra.mxu0 0.0
  %8252 = vmatprep.subr.mxu0 0.0
  %8253 = vmatpush1.msra.mxu0 0.0
  %8254 = vmatprep.subr.mxu0 0.0
  %8255 = vmatpush1.msra.mxu0 0.0
  %8256 = vmatprep.subr.mxu0 0.0
  %8257 = vmatpush1.msra.mxu0 0.0
  %8258 = vmatprep.subr.mxu0 0.0
  %8259 = vmatpush1.msra.mxu0 0.0
  %8260 = vmatprep.subr.mxu0 0.0
  %8261 = vmatpush1.msra.mxu0 0.0
  %8262 = vmatprep.subr.mxu0 0.0
  %8263 = vmatpush1.msra.mxu0 0.0
  %8264 = vmatprep.subr.mxu0 0.0
  %8265 = vmatpush1.msra.mxu0 0.0
  %8266 = vmatprep.mubr.f32.mxu0 0.0
  %8267 = vmatmul.mubr.f32.gmra.mrb[0].mxu0 %v7420
  %v8268 = vpop.f32.mrb[0].mxu0
  %v8269 = vadd.f32 %v7281, %v8268
  %v8270 = vpop.f32.mrb[0].mxu0
  %8271 = vmatprep.mubr.f32.mxu0 0.0
  %8272 = vmatmul.mubr.f32.gmra.mrb[0].mxu0 %v7423
  %v8273 = vpop.f32.mrb[0].mxu0
  %v8274 = vadd.f32 %v7286, %v8273
  %v8275 = vpop.f32.mrb[0].mxu0
  %8276 = vmatprep.mubr.f32.mxu0 0.0
  %8277 = vmatmul.mubr.f32.gmra.mrb[0].mxu0 %v7426
  %v8278 = vpop.f32.mrb[0].mxu0
  %v8279 = vadd.f32 %v7291, %v8278
  %v8280 = vpop.f32.mrb[0].mxu0
  %8281 = vmatprep.mubr.f32.mxu0 0.0
  %8282 = vmatmul.mubr.f32.gmra.mrb[0].mxu0 %v7429
  %v8283 = vpop.f32.mrb[0].mxu0
  %v8284 = vadd.f32 %v7296, %v8283
  %v8285 = vpop.f32.mrb[0].mxu0
  %8286 = vmatprep.mubr.f32.mxu0 0.0
  %8287 = vmatmul.mubr.f32.gmra.mrb[0].mxu0 %v7432
  %v8288 = vpop.f32.mrb[0].mxu0
  %v8289 = vadd.f32 %v7301, %v8288
  %v8290 = vpop.f32.mrb[0].mxu0
  %8291 = vmatprep.mubr.f32.mxu0 0.0
  %8292 = vmatmul.mubr.f32.gmra.mrb[0].mxu0 %v7435
  %v8293 = vpop.f32.mrb[0].mxu0
  %v8294 = vadd.f32 %v7306, %v8293
  %v8295 = vpop.f32.mrb[0].mxu0
  %8296 = vmatprep.mubr.f32.mxu0 0.0
  %8297 = vmatmul.mubr.f32.gmra.mrb[0].mxu0 %v7438
  %v8298 = vpop.f32.mrb[0].mxu0
  %v8299 = vadd.f32 %v7311, %v8298
  %v8300 = vpop.f32.mrb[0].mxu0
  %8301 = vmatprep.mubr.f32.mxu0 0.0
  %8302 = vmatmul.mubr.f32.gmra.mrb[0].mxu0 %v7441
  %v8303 = vpop.f32.mrb[0].mxu0
  %v8304 = vadd.f32 %v7316, %v8303
  %v8305 = vpop.f32.mrb[0].mxu0
  %8306 = vmatprep.mubr.f32.mxu0 0.0
  %8307 = vmatmul.mubr.f32.gmra.mrb[0].mxu0 %v7444
  %v8308 = vpop.f32.mrb[0].mxu0
  %v8309 = vadd.f32 %v7321, %v8308
  %v8310 = vpop.f32.mrb[0].mxu0
  %8311 = vmatprep.mubr.f32.mxu0 0.0
  %8312 = vmatmul.mubr.f32.gmra.mrb[0].mxu0 %v7447
  %v8313 = vpop.f32.mrb[0].mxu0
  %v8314 = vadd.f32 %v7326, %v8313
  %v8315 = vpop.f32.mrb[0].mxu0
  %8316 = vmatprep.mubr.f32.mxu0 0.0
  %8317 = vmatmul.mubr.f32.gmra.mrb[0].mxu0 %v7450
  %v8318 = vpop.f32.mrb[0].mxu0
  %v8319 = vadd.f32 %v7331, %v8318
  %v8320 = vpop.f32.mrb[0].mxu0
  %8321 = vmatprep.mubr.f32.mxu0 0.0
  %8322 = vmatmul.mubr.f32.gmra.mrb[0].mxu0 %v7453
  %v8323 = vpop.f32.mrb[0].mxu0
  %v8324 = vadd.f32 %v7336, %v8323
  %v8325 = vpop.f32.mrb[0].mxu0
  %8326 = vmatprep.mubr.f32.mxu0 0.0
  %8327 = vmatmul.mubr.f32.gmra.mrb[0].mxu0 %v7456
  %v8328 = vpop.f32.mrb[0].mxu0
  %v8329 = vadd.f32 %v7341, %v8328
  %v8330 = vpop.f32.mrb[0].mxu0
  %8331 = vmatprep.mubr.f32.mxu0 0.0
  %8332 = vmatmul.mubr.f32.gmra.mrb[0].mxu0 %v7459
  %v8333 = vpop.f32.mrb[0].mxu0
  %v8334 = vadd.f32 %v7346, %v8333
  %v8335 = vpop.f32.mrb[0].mxu0
  %8336 = vmatprep.mubr.f32.mxu0 0.0
  %8337 = vmatmul.mubr.f32.gmra.mrb[0].mxu0 %v7462
  %v8338 = vpop.f32.mrb[0].mxu0
  %v8339 = vadd.f32 %v7351, %v8338
  %v8340 = vpop.f32.mrb[0].mxu0
  %8341 = vmatprep.mubr.f32.mxu0 0.0
  %8342 = vmatmul.mubr.f32.gmra.mrb[0].mxu0 %v7465
  %v8343 = vpop.f32.mrb[0].mxu0
  %v8344 = vadd.f32 %v7356, %v8343
  %v8345 = vpop.f32.mrb[0].mxu0
  %8346 = vmatprep.mubr.f32.mxu0 0.0
  %8347 = vmatmul.mubr.f32.gmra.mrb[0].mxu0 %v7468
  %v8348 = vpop.f32.mrb[0].mxu0
  %v8349 = vadd.f32 %v7361, %v8348
  %v8350 = vpop.f32.mrb[0].mxu0
  %8351 = vmatprep.mubr.f32.mxu0 0.0
  %8352 = vmatmul.mubr.f32.gmra.mrb[0].mxu0 %v7471
  %v8353 = vpop.f32.mrb[0].mxu0
  %v8354 = vadd.f32 %v7366, %v8353
  %v8355 = vpop.f32.mrb[0].mxu0
  %8356 = vmatprep.mubr.f32.mxu0 0.0
  %8357 = vmatmul.mubr.f32.gmra.mrb[0].mxu0 %v7474
  %v8358 = vpop.f32.mrb[0].mxu0
  %v8359 = vadd.f32 %v7371, %v8358
  %v8360 = vpop.f32.mrb[0].mxu0
  %8361 = vmatprep.mubr.f32.mxu0 0.0
  %8362 = vmatmul.mubr.f32.gmra.mrb[0].mxu0 %v7477
  %v8363 = vpop.f32.mrb[0].mxu0
  %v8364 = vadd.f32 %v7376, %v8363
  %v8365 = vpop.f32.mrb[0].mxu0
  %8366 = vmatprep.mubr.f32.mxu0 0.0
  %8367 = vmatmul.mubr.f32.gmra.mrb[0].mxu0 %v7480
  %v8368 = vpop.f32.mrb[0].mxu0
  %v8369 = vadd.f32 %v7381, %v8368
  %v8370 = vpop.f32.mrb[0].mxu0
  %8371 = vmatprep.mubr.f32.mxu0 0.0
  %8372 = vmatmul.mubr.f32.gmra.mrb[0].mxu0 %v7483
  %v8373 = vpop.f32.mrb[0].mxu0
  %v8374 = vadd.f32 %v7386, %v8373
  %v8375 = vpop.f32.mrb[0].mxu0
  %8376 = vmatprep.mubr.f32.mxu0 0.0
  %8377 = vmatmul.mubr.f32.gmra.mrb[0].mxu0 %v7486
  %v8378 = vpop.f32.mrb[0].mxu0
  %v8379 = vadd.f32 %v7391, %v8378
  %v8380 = vpop.f32.mrb[0].mxu0
  %8381 = vmatprep.mubr.f32.mxu0 0.0
  %8382 = vmatmul.mubr.f32.gmra.mrb[0].mxu0 %v7489
  %v8383 = vpop.f32.mrb[0].mxu0
  %v8384 = vadd.f32 %v7396, %v8383
  %v8385 = vpop.f32.mrb[0].mxu0
  %8386 = vmatprep.mubr.f32.mxu0 0.0
  %8387 = vmatmul.mubr.f32.gmra.mrb[0].mxu0 %v7492
  %v8388 = vpop.f32.mrb[0].mxu0
  %v8389 = vadd.f32 %v7401, %v8388
  %v8390 = vpop.f32.mrb[0].mxu0
  %8391 = vmatprep.mubr.f32.mxu0 0.0
  %8392 = vmatmul.mubr.f32.gmra.mrb[0].mxu0 %v7495
  %v8393 = vpop.f32.mrb[0].mxu0
  %v8394 = vadd.f32 %v7406, %v8393
  %v8395 = vpop.f32.mrb[0].mxu0
  %8396 = vmatprep.mubr.f32.mxu0 0.0
  %8397 = vmatmul.mubr.f32.gmra.mrb[0].mxu0 %v7498
  %v8398 = vpop.f32.mrb[0].mxu0
  %v8399 = vadd.f32 %v7411, %v8398
  %v8400 = vpop.f32.mrb[0].mxu0
  %8401 = vmatprep.mubr.f32.mxu0 0.0
  %8402 = vmatmul.mubr.f32.gmra.mrb[0].mxu0 %v7501
  %v8403 = vpop.f32.mrb[0].mxu0
  %v8404 = vadd.f32 %v7416, %v8403
  %v8405 = vpop.f32.mrb[0].mxu0
  %8406 = vdwg.mxu0
  %s8407 = scalar_lea.vmem %s3, 448
  %v8408 = vld [vmem:[%s8407] sm:$0xff]
  %v8409 = vld [vmem:[%s8407 + $0x8] sm:$0xff]
  %v8410 = vld [vmem:[%s8407 + $0x10] sm:$0xff]
  %v8411 = vld [vmem:[%s8407 + $0x18] sm:$0xff]
  %v8412 = vld [vmem:[%s8407 + $0x20] sm:$0xff]
  %v8413 = vld [vmem:[%s8407 + $0x28] sm:$0xff]
  %v8414 = vld [vmem:[%s8407 + $0x30] sm:$0xff]
  %v8415 = vld [vmem:[%s8407 + $0x38] sm:$0xff]
  %v8416 = vld [vmem:[%s8407 + $0x40] sm:$0xff]
  %v8417 = vld [vmem:[%s8407 + $0x48] sm:$0xff]
  %v8418 = vld [vmem:[%s8407 + $0x50] sm:$0xff]
  %v8419 = vld [vmem:[%s8407 + $0x58] sm:$0xff]
  %v8420 = vld [vmem:[%s8407 + $0x60] sm:$0xff]
  %v8421 = vld [vmem:[%s8407 + $0x68] sm:$0xff]
  %v8422 = vld [vmem:[%s8407 + $0x70] sm:$0xff]
  %v8423 = vld [vmem:[%s8407 + $0x78] sm:$0xff]
  %v8424 = vld [vmem:[%s8407 + $0x80] sm:$0xff]
  %v8425 = vld [vmem:[%s8407 + $0x88] sm:$0xff]
  %v8426 = vld [vmem:[%s8407 + $0x90] sm:$0xff]
  %v8427 = vld [vmem:[%s8407 + $0x98] sm:$0xff]
  %v8428 = vld [vmem:[%s8407 + $0xa0] sm:$0xff]
  %v8429 = vld [vmem:[%s8407 + $0xa8] sm:$0xff]
  %v8430 = vld [vmem:[%s8407 + $0xb0] sm:$0xff]
  %v8431 = vld [vmem:[%s8407 + $0xb8] sm:$0xff]
  %v8432 = vld [vmem:[%s8407 + $0xc0] sm:$0xff]
  %v8433 = vld [vmem:[%s8407 + $0xc8] sm:$0xff]
  %v8434 = vld [vmem:[%s8407 + $0xd0] sm:$0xff]
  %v8435 = vld [vmem:[%s8407 + $0xd8] sm:$0xff]
  %v8437 = vsel %vm6430, %v8408, 0
  %v8440 = vsel %vm6430, %v8409, 0
  %v8443 = vsel %vm6430, %v8410, 0
  %v8446 = vsel %vm6430, %v8411, 0
  %v8449 = vsel %vm6430, %v8412, 0
  %v8452 = vsel %vm6430, %v8413, 0
  %v8455 = vsel %vm6430, %v8414, 0
  %v8458 = vsel %vm6430, %v8415, 0
  %v8461 = vsel %vm6430, %v8416, 0
  %v8464 = vsel %vm6430, %v8417, 0
  %v8467 = vsel %vm6430, %v8418, 0
  %v8470 = vsel %vm6430, %v8419, 0
  %v8473 = vsel %vm6430, %v8420, 0
  %v8476 = vsel %vm6430, %v8421, 0
  %v8479 = vsel %vm6430, %v8422, 0
  %v8482 = vsel %vm6430, %v8423, 0
  %v8485 = vsel %vm6430, %v8424, 0
  %v8488 = vsel %vm6430, %v8425, 0
  %v8491 = vsel %vm6430, %v8426, 0
  %v8494 = vsel %vm6430, %v8427, 0
  %v8497 = vsel %vm6430, %v8428, 0
  %v8500 = vsel %vm6430, %v8429, 0
  %v8503 = vsel %vm6430, %v8430, 0
  %v8506 = vsel %vm6430, %v8431, 0
  %v8509 = vsel %vm6430, %v8432, 0
  %v8512 = vsel %vm6430, %v8433, 0
  %v8515 = vsel %vm6430, %v8434, 0
  %v8518 = vsel %vm6430, %v8435, 0
  %8520 = vmatprep.subr.mxu0 %v6276
  %8521 = vmatpush1.msra.mxu0 %v6275
  %8522 = vmatprep.subr.mxu0 %v6283
  %8523 = vmatpush1.msra.mxu0 %v6282
  %8524 = vmatprep.subr.mxu0 %v6290
  %8525 = vmatpush1.msra.mxu0 %v6289
  %8526 = vmatprep.subr.mxu0 %v6297
  %8527 = vmatpush1.msra.mxu0 %v6296
  %8528 = vmatprep.subr.mxu0 %v6304
  %8529 = vmatpush1.msra.mxu0 %v6303
  %8530 = vmatprep.subr.mxu0 %v6311
  %8531 = vmatpush1.msra.mxu0 %v6310
  %8532 = vmatprep.subr.mxu0 %v6318
  %8533 = vmatpush1.msra.mxu0 %v6317
  %8534 = vmatprep.subr.mxu0 %v6325
  %8535 = vmatpush1.msra.mxu0 %v6324
  %8536 = vmatprep.subr.mxu0 %v6332
  %8537 = vmatpush1.msra.mxu0 %v6331
  %8538 = vmatprep.subr.mxu0 %v6339
  %8539 = vmatpush1.msra.mxu0 %v6338
  %8540 = vmatprep.subr.mxu0 %v6346
  %8541 = vmatpush1.msra.mxu0 %v6345
  %8542 = vmatprep.subr.mxu0 %v6353
  %8543 = vmatpush1.msra.mxu0 %v6352
  %8544 = vmatprep.subr.mxu0 %v6360
  %8545 = vmatpush1.msra.mxu0 %v6359
  %8546 = vmatprep.subr.mxu0 %v6367
  %8547 = vmatpush1.msra.mxu0 %v6366
  %8548 = vmatprep.subr.mxu0 0.0
  %8549 = vmatpush1.msra.mxu0 0.0
  %8550 = vmatprep.subr.mxu0 0.0
  %8551 = vmatpush1.msra.mxu0 0.0
  %8552 = vmatprep.subr.mxu0 0.0
  %8553 = vmatpush1.msra.mxu0 0.0
  %8554 = vmatprep.subr.mxu0 0.0
  %8555 = vmatpush1.msra.mxu0 0.0
  %8556 = vmatprep.subr.mxu0 0.0
  %8557 = vmatpush1.msra.mxu0 0.0
  %8558 = vmatprep.subr.mxu0 0.0
  %8559 = vmatpush1.msra.mxu0 0.0
  %8560 = vmatprep.subr.mxu0 0.0
  %8561 = vmatpush1.msra.mxu0 0.0
  %8562 = vmatprep.subr.mxu0 0.0
  %8563 = vmatpush1.msra.mxu0 0.0
  %8564 = vmatprep.subr.mxu0 0.0
  %8565 = vmatpush1.msra.mxu0 0.0
  %8566 = vmatprep.subr.mxu0 0.0
  %8567 = vmatpush1.msra.mxu0 0.0
  %8568 = vmatprep.subr.mxu0 0.0
  %8569 = vmatpush1.msra.mxu0 0.0
  %8570 = vmatprep.subr.mxu0 0.0
  %8571 = vmatpush1.msra.mxu0 0.0
  %8572 = vmatprep.subr.mxu0 0.0
  %8573 = vmatpush1.msra.mxu0 0.0
  %8574 = vmatprep.subr.mxu0 0.0
  %8575 = vmatpush1.msra.mxu0 0.0
  %8576 = vmatprep.subr.mxu0 0.0
  %8577 = vmatpush1.msra.mxu0 0.0
  %8578 = vmatprep.subr.mxu0 0.0
  %8579 = vmatpush1.msra.mxu0 0.0
  %8580 = vmatprep.subr.mxu0 0.0
  %8581 = vmatpush1.msra.mxu0 0.0
  %8582 = vmatprep.subr.mxu0 0.0
  %8583 = vmatpush1.msra.mxu0 0.0
  %8584 = vmatprep.mubr.f32.mxu0 0.0
  %8585 = vmatmul.mubr.f32.gmra.mrb[0].mxu0 %v8437
  %v8586 = vpop.f32.mrb[0].mxu0
  %v8587 = vadd.f32 0.0, %v8586
  %v8588 = vpop.f32.mrb[0].mxu0
  %v8589 = vadd.f32 0.0, %v8588
  %8590 = vmatprep.mubr.f32.mxu0 0.0
  %8591 = vmatmul.mubr.f32.gmra.mrb[0].mxu0 %v8440
  %v8592 = vpop.f32.mrb[0].mxu0
  %v8593 = vadd.f32 0.0, %v8592
  %v8594 = vpop.f32.mrb[0].mxu0
  %v8595 = vadd.f32 0.0, %v8594
  %8596 = vmatprep.mubr.f32.mxu0 0.0
  %8597 = vmatmul.mubr.f32.gmra.mrb[0].mxu0 %v8443
  %v8598 = vpop.f32.mrb[0].mxu0
  %v8599 = vadd.f32 0.0, %v8598
  %v8600 = vpop.f32.mrb[0].mxu0
  %v8601 = vadd.f32 0.0, %v8600
  %8602 = vmatprep.mubr.f32.mxu0 0.0
  %8603 = vmatmul.mubr.f32.gmra.mrb[0].mxu0 %v8446
  %v8604 = vpop.f32.mrb[0].mxu0
  %v8605 = vadd.f32 0.0, %v8604
  %v8606 = vpop.f32.mrb[0].mxu0
  %v8607 = vadd.f32 0.0, %v8606
  %8608 = vmatprep.mubr.f32.mxu0 0.0
  %8609 = vmatmul.mubr.f32.gmra.mrb[0].mxu0 %v8449
  %v8610 = vpop.f32.mrb[0].mxu0
  %v8611 = vadd.f32 0.0, %v8610
  %v8612 = vpop.f32.mrb[0].mxu0
  %v8613 = vadd.f32 0.0, %v8612
  %8614 = vmatprep.mubr.f32.mxu0 0.0
  %8615 = vmatmul.mubr.f32.gmra.mrb[0].mxu0 %v8452
  %v8616 = vpop.f32.mrb[0].mxu0
  %v8617 = vadd.f32 0.0, %v8616
  %v8618 = vpop.f32.mrb[0].mxu0
  %v8619 = vadd.f32 0.0, %v8618
  %8620 = vmatprep.mubr.f32.mxu0 0.0
  %8621 = vmatmul.mubr.f32.gmra.mrb[0].mxu0 %v8455
  %v8622 = vpop.f32.mrb[0].mxu0
  %v8623 = vadd.f32 0.0, %v8622
  %v8624 = vpop.f32.mrb[0].mxu0
  %v8625 = vadd.f32 0.0, %v8624
  %8626 = vmatprep.mubr.f32.mxu0 0.0
  %8627 = vmatmul.mubr.f32.gmra.mrb[0].mxu0 %v8458
  %v8628 = vpop.f32.mrb[0].mxu0
  %v8629 = vadd.f32 0.0, %v8628
  %v8630 = vpop.f32.mrb[0].mxu0
  %v8631 = vadd.f32 0.0, %v8630
  %8632 = vmatprep.mubr.f32.mxu0 0.0
  %8633 = vmatmul.mubr.f32.gmra.mrb[0].mxu0 %v8461
  %v8634 = vpop.f32.mrb[0].mxu0
  %v8635 = vadd.f32 0.0, %v8634
  %v8636 = vpop.f32.mrb[0].mxu0
  %v8637 = vadd.f32 0.0, %v8636
  %8638 = vmatprep.mubr.f32.mxu0 0.0
  %8639 = vmatmul.mubr.f32.gmra.mrb[0].mxu0 %v8464
  %v8640 = vpop.f32.mrb[0].mxu0
  %v8641 = vadd.f32 0.0, %v8640
  %v8642 = vpop.f32.mrb[0].mxu0
  %v8643 = vadd.f32 0.0, %v8642
  %8644 = vmatprep.mubr.f32.mxu0 0.0
  %8645 = vmatmul.mubr.f32.gmra.mrb[0].mxu0 %v8467
  %v8646 = vpop.f32.mrb[0].mxu0
  %v8647 = vadd.f32 0.0, %v8646
  %v8648 = vpop.f32.mrb[0].mxu0
  %v8649 = vadd.f32 0.0, %v8648
  %8650 = vmatprep.mubr.f32.mxu0 0.0
  %8651 = vmatmul.mubr.f32.gmra.mrb[0].mxu0 %v8470
  %v8652 = vpop.f32.mrb[0].mxu0
  %v8653 = vadd.f32 0.0, %v8652
  %v8654 = vpop.f32.mrb[0].mxu0
  %v8655 = vadd.f32 0.0, %v8654
  %8656 = vmatprep.mubr.f32.mxu0 0.0
  %8657 = vmatmul.mubr.f32.gmra.mrb[0].mxu0 %v8473
  %v8658 = vpop.f32.mrb[0].mxu0
  %v8659 = vadd.f32 0.0, %v8658
  %v8660 = vpop.f32.mrb[0].mxu0
  %v8661 = vadd.f32 0.0, %v8660
  %8662 = vmatprep.mubr.f32.mxu0 0.0
  %8663 = vmatmul.mubr.f32.gmra.mrb[0].mxu0 %v8476
  %v8664 = vpop.f32.mrb[0].mxu0
  %v8665 = vadd.f32 0.0, %v8664
  %v8666 = vpop.f32.mrb[0].mxu0
  %v8667 = vadd.f32 0.0, %v8666
  %8668 = vmatprep.mubr.f32.mxu0 0.0
  %8669 = vmatmul.mubr.f32.gmra.mrb[0].mxu0 %v8479
  %v8670 = vpop.f32.mrb[0].mxu0
  %v8671 = vadd.f32 0.0, %v8670
  %v8672 = vpop.f32.mrb[0].mxu0
  %v8673 = vadd.f32 0.0, %v8672
  %8674 = vmatprep.mubr.f32.mxu0 0.0
  %8675 = vmatmul.mubr.f32.gmra.mrb[0].mxu0 %v8482
  %v8676 = vpop.f32.mrb[0].mxu0
  %v8677 = vadd.f32 0.0, %v8676
  %v8678 = vpop.f32.mrb[0].mxu0
  %v8679 = vadd.f32 0.0, %v8678
  %8680 = vmatprep.mubr.f32.mxu0 0.0
  %8681 = vmatmul.mubr.f32.gmra.mrb[0].mxu0 %v8485
  %v8682 = vpop.f32.mrb[0].mxu0
  %v8683 = vadd.f32 0.0, %v8682
  %v8684 = vpop.f32.mrb[0].mxu0
  %v8685 = vadd.f32 0.0, %v8684
  %8686 = vmatprep.mubr.f32.mxu0 0.0
  %8687 = vmatmul.mubr.f32.gmra.mrb[0].mxu0 %v8488
  %v8688 = vpop.f32.mrb[0].mxu0
  %v8689 = vadd.f32 0.0, %v8688
  %v8690 = vpop.f32.mrb[0].mxu0
  %v8691 = vadd.f32 0.0, %v8690
  %8692 = vmatprep.mubr.f32.mxu0 0.0
  %8693 = vmatmul.mubr.f32.gmra.mrb[0].mxu0 %v8491
  %v8694 = vpop.f32.mrb[0].mxu0
  %v8695 = vadd.f32 0.0, %v8694
  %v8696 = vpop.f32.mrb[0].mxu0
  %v8697 = vadd.f32 0.0, %v8696
  %8698 = vmatprep.mubr.f32.mxu0 0.0
  %8699 = vmatmul.mubr.f32.gmra.mrb[0].mxu0 %v8494
  %v8700 = vpop.f32.mrb[0].mxu0
  %v8701 = vadd.f32 0.0, %v8700
  %v8702 = vpop.f32.mrb[0].mxu0
  %v8703 = vadd.f32 0.0, %v8702
  %8704 = vmatprep.mubr.f32.mxu0 0.0
  %8705 = vmatmul.mubr.f32.gmra.mrb[0].mxu0 %v8497
  %v8706 = vpop.f32.mrb[0].mxu0
  %v8707 = vadd.f32 0.0, %v8706
  %v8708 = vpop.f32.mrb[0].mxu0
  %v8709 = vadd.f32 0.0, %v8708
  %8710 = vmatprep.mubr.f32.mxu0 0.0
  %8711 = vmatmul.mubr.f32.gmra.mrb[0].mxu0 %v8500
  %v8712 = vpop.f32.mrb[0].mxu0
  %v8713 = vadd.f32 0.0, %v8712
  %v8714 = vpop.f32.mrb[0].mxu0
  %v8715 = vadd.f32 0.0, %v8714
  %8716 = vmatprep.mubr.f32.mxu0 0.0
  %8717 = vmatmul.mubr.f32.gmra.mrb[0].mxu0 %v8503
  %v8718 = vpop.f32.mrb[0].mxu0
  %v8719 = vadd.f32 0.0, %v8718
  %v8720 = vpop.f32.mrb[0].mxu0
  %v8721 = vadd.f32 0.0, %v8720
  %8722 = vmatprep.mubr.f32.mxu0 0.0
  %8723 = vmatmul.mubr.f32.gmra.mrb[0].mxu0 %v8506
  %v8724 = vpop.f32.mrb[0].mxu0
  %v8725 = vadd.f32 0.0, %v8724
  %v8726 = vpop.f32.mrb[0].mxu0
  %v8727 = vadd.f32 0.0, %v8726
  %8728 = vmatprep.mubr.f32.mxu0 0.0
  %8729 = vmatmul.mubr.f32.gmra.mrb[0].mxu0 %v8509
  %v8730 = vpop.f32.mrb[0].mxu0
  %v8731 = vadd.f32 0.0, %v8730
  %v8732 = vpop.f32.mrb[0].mxu0
  %v8733 = vadd.f32 0.0, %v8732
  %8734 = vmatprep.mubr.f32.mxu0 0.0
  %8735 = vmatmul.mubr.f32.gmra.mrb[0].mxu0 %v8512
  %v8736 = vpop.f32.mrb[0].mxu0
  %v8737 = vadd.f32 0.0, %v8736
  %v8738 = vpop.f32.mrb[0].mxu0
  %v8739 = vadd.f32 0.0, %v8738
  %8740 = vmatprep.mubr.f32.mxu0 0.0
  %8741 = vmatmul.mubr.f32.gmra.mrb[0].mxu0 %v8515
  %v8742 = vpop.f32.mrb[0].mxu0
  %v8743 = vadd.f32 0.0, %v8742
  %v8744 = vpop.f32.mrb[0].mxu0
  %v8745 = vadd.f32 0.0, %v8744
  %8746 = vmatprep.mubr.f32.mxu0 0.0
  %8747 = vmatmul.mubr.f32.gmra.mrb[0].mxu0 %v8518
  %v8748 = vpop.f32.mrb[0].mxu0
  %v8749 = vadd.f32 0.0, %v8748
  %v8750 = vpop.f32.mrb[0].mxu0
  %v8751 = vadd.f32 0.0, %v8750
  %8752 = vdwg.mxu0
  %8753 = vmatprep.subr.mxu0 %v6278
  %8754 = vmatpush1.msra.mxu0 %v6277
  %8755 = vmatprep.subr.mxu0 %v6285
  %8756 = vmatpush1.msra.mxu0 %v6284
  %8757 = vmatprep.subr.mxu0 %v6292
  %8758 = vmatpush1.msra.mxu0 %v6291
  %8759 = vmatprep.subr.mxu0 %v6299
  %8760 = vmatpush1.msra.mxu0 %v6298
  %8761 = vmatprep.subr.mxu0 %v6306
  %8762 = vmatpush1.msra.mxu0 %v6305
  %8763 = vmatprep.subr.mxu0 %v6313
  %8764 = vmatpush1.msra.mxu0 %v6312
  %8765 = vmatprep.subr.mxu0 %v6320
  %8766 = vmatpush1.msra.mxu0 %v6319
  %8767 = vmatprep.subr.mxu0 %v6327
  %8768 = vmatpush1.msra.mxu0 %v6326
  %8769 = vmatprep.subr.mxu0 %v6334
  %8770 = vmatpush1.msra.mxu0 %v6333
  %8771 = vmatprep.subr.mxu0 %v6341
  %8772 = vmatpush1.msra.mxu0 %v6340
  %8773 = vmatprep.subr.mxu0 %v6348
  %8774 = vmatpush1.msra.mxu0 %v6347
  %8775 = vmatprep.subr.mxu0 %v6355
  %8776 = vmatpush1.msra.mxu0 %v6354
  %8777 = vmatprep.subr.mxu0 %v6362
  %8778 = vmatpush1.msra.mxu0 %v6361
  %8779 = vmatprep.subr.mxu0 %v6369
  %8780 = vmatpush1.msra.mxu0 %v6368
  %8781 = vmatprep.subr.mxu0 0.0
  %8782 = vmatpush1.msra.mxu0 0.0
  %8783 = vmatprep.subr.mxu0 0.0
  %8784 = vmatpush1.msra.mxu0 0.0
  %8785 = vmatprep.subr.mxu0 0.0
  %8786 = vmatpush1.msra.mxu0 0.0
  %8787 = vmatprep.subr.mxu0 0.0
  %8788 = vmatpush1.msra.mxu0 0.0
  %8789 = vmatprep.subr.mxu0 0.0
  %8790 = vmatpush1.msra.mxu0 0.0
  %8791 = vmatprep.subr.mxu0 0.0
  %8792 = vmatpush1.msra.mxu0 0.0
  %8793 = vmatprep.subr.mxu0 0.0
  %8794 = vmatpush1.msra.mxu0 0.0
  %8795 = vmatprep.subr.mxu0 0.0
  %8796 = vmatpush1.msra.mxu0 0.0
  %8797 = vmatprep.subr.mxu0 0.0
  %8798 = vmatpush1.msra.mxu0 0.0
  %8799 = vmatprep.subr.mxu0 0.0
  %8800 = vmatpush1.msra.mxu0 0.0
  %8801 = vmatprep.subr.mxu0 0.0
  %8802 = vmatpush1.msra.mxu0 0.0
  %8803 = vmatprep.subr.mxu0 0.0
  %8804 = vmatpush1.msra.mxu0 0.0
  %8805 = vmatprep.subr.mxu0 0.0
  %8806 = vmatpush1.msra.mxu0 0.0
  %8807 = vmatprep.subr.mxu0 0.0
  %8808 = vmatpush1.msra.mxu0 0.0
  %8809 = vmatprep.subr.mxu0 0.0
  %8810 = vmatpush1.msra.mxu0 0.0
  %8811 = vmatprep.subr.mxu0 0.0
  %8812 = vmatpush1.msra.mxu0 0.0
  %8813 = vmatprep.subr.mxu0 0.0
  %8814 = vmatpush1.msra.mxu0 0.0
  %8815 = vmatprep.subr.mxu0 0.0
  %8816 = vmatpush1.msra.mxu0 0.0
  %8817 = vmatprep.mubr.f32.mxu0 0.0
  %8818 = vmatmul.mubr.f32.gmra.mrb[0].mxu0 %v8437
  %v8819 = vpop.f32.mrb[0].mxu0
  %v8820 = vadd.f32 0.0, %v8819
  %v8821 = vpop.f32.mrb[0].mxu0
  %v8822 = vadd.f32 0.0, %v8821
  %8823 = vmatprep.mubr.f32.mxu0 0.0
  %8824 = vmatmul.mubr.f32.gmra.mrb[0].mxu0 %v8440
  %v8825 = vpop.f32.mrb[0].mxu0
  %v8826 = vadd.f32 0.0, %v8825
  %v8827 = vpop.f32.mrb[0].mxu0
  %v8828 = vadd.f32 0.0, %v8827
  %8829 = vmatprep.mubr.f32.mxu0 0.0
  %8830 = vmatmul.mubr.f32.gmra.mrb[0].mxu0 %v8443
  %v8831 = vpop.f32.mrb[0].mxu0
  %v8832 = vadd.f32 0.0, %v8831
  %v8833 = vpop.f32.mrb[0].mxu0
  %v8834 = vadd.f32 0.0, %v8833
  %8835 = vmatprep.mubr.f32.mxu0 0.0
  %8836 = vmatmul.mubr.f32.gmra.mrb[0].mxu0 %v8446
  %v8837 = vpop.f32.mrb[0].mxu0
  %v8838 = vadd.f32 0.0, %v8837
  %v8839 = vpop.f32.mrb[0].mxu0
  %v8840 = vadd.f32 0.0, %v8839
  %8841 = vmatprep.mubr.f32.mxu0 0.0
  %8842 = vmatmul.mubr.f32.gmra.mrb[0].mxu0 %v8449
  %v8843 = vpop.f32.mrb[0].mxu0
  %v8844 = vadd.f32 0.0, %v8843
  %v8845 = vpop.f32.mrb[0].mxu0
  %v8846 = vadd.f32 0.0, %v8845
  %8847 = vmatprep.mubr.f32.mxu0 0.0
  %8848 = vmatmul.mubr.f32.gmra.mrb[0].mxu0 %v8452
  %v8849 = vpop.f32.mrb[0].mxu0
  %v8850 = vadd.f32 0.0, %v8849
  %v8851 = vpop.f32.mrb[0].mxu0
  %v8852 = vadd.f32 0.0, %v8851
  %8853 = vmatprep.mubr.f32.mxu0 0.0
  %8854 = vmatmul.mubr.f32.gmra.mrb[0].mxu0 %v8455
  %v8855 = vpop.f32.mrb[0].mxu0
  %v8856 = vadd.f32 0.0, %v8855
  %v8857 = vpop.f32.mrb[0].mxu0
  %v8858 = vadd.f32 0.0, %v8857
  %8859 = vmatprep.mubr.f32.mxu0 0.0
  %8860 = vmatmul.mubr.f32.gmra.mrb[0].mxu0 %v8458
  %v8861 = vpop.f32.mrb[0].mxu0
  %v8862 = vadd.f32 0.0, %v8861
  %v8863 = vpop.f32.mrb[0].mxu0
  %v8864 = vadd.f32 0.0, %v8863
  %8865 = vmatprep.mubr.f32.mxu0 0.0
  %8866 = vmatmul.mubr.f32.gmra.mrb[0].mxu0 %v8461
  %v8867 = vpop.f32.mrb[0].mxu0
  %v8868 = vadd.f32 0.0, %v8867
  %v8869 = vpop.f32.mrb[0].mxu0
  %v8870 = vadd.f32 0.0, %v8869
  %8871 = vmatprep.mubr.f32.mxu0 0.0
  %8872 = vmatmul.mubr.f32.gmra.mrb[0].mxu0 %v8464
  %v8873 = vpop.f32.mrb[0].mxu0
  %v8874 = vadd.f32 0.0, %v8873
  %v8875 = vpop.f32.mrb[0].mxu0
  %v8876 = vadd.f32 0.0, %v8875
  %8877 = vmatprep.mubr.f32.mxu0 0.0
  %8878 = vmatmul.mubr.f32.gmra.mrb[0].mxu0 %v8467
  %v8879 = vpop.f32.mrb[0].mxu0
  %v8880 = vadd.f32 0.0, %v8879
  %v8881 = vpop.f32.mrb[0].mxu0
  %v8882 = vadd.f32 0.0, %v8881
  %8883 = vmatprep.mubr.f32.mxu0 0.0
  %8884 = vmatmul.mubr.f32.gmra.mrb[0].mxu0 %v8470
  %v8885 = vpop.f32.mrb[0].mxu0
  %v8886 = vadd.f32 0.0, %v8885
  %v8887 = vpop.f32.mrb[0].mxu0
  %v8888 = vadd.f32 0.0, %v8887
  %8889 = vmatprep.mubr.f32.mxu0 0.0
  %8890 = vmatmul.mubr.f32.gmra.mrb[0].mxu0 %v8473
  %v8891 = vpop.f32.mrb[0].mxu0
  %v8892 = vadd.f32 0.0, %v8891
  %v8893 = vpop.f32.mrb[0].mxu0
  %v8894 = vadd.f32 0.0, %v8893
  %8895 = vmatprep.mubr.f32.mxu0 0.0
  %8896 = vmatmul.mubr.f32.gmra.mrb[0].mxu0 %v8476
  %v8897 = vpop.f32.mrb[0].mxu0
  %v8898 = vadd.f32 0.0, %v8897
  %v8899 = vpop.f32.mrb[0].mxu0
  %v8900 = vadd.f32 0.0, %v8899
  %8901 = vmatprep.mubr.f32.mxu0 0.0
  %8902 = vmatmul.mubr.f32.gmra.mrb[0].mxu0 %v8479
  %v8903 = vpop.f32.mrb[0].mxu0
  %v8904 = vadd.f32 0.0, %v8903
  %v8905 = vpop.f32.mrb[0].mxu0
  %v8906 = vadd.f32 0.0, %v8905
  %8907 = vmatprep.mubr.f32.mxu0 0.0
  %8908 = vmatmul.mubr.f32.gmra.mrb[0].mxu0 %v8482
  %v8909 = vpop.f32.mrb[0].mxu0
  %v8910 = vadd.f32 0.0, %v8909
  %v8911 = vpop.f32.mrb[0].mxu0
  %v8912 = vadd.f32 0.0, %v8911
  %8913 = vmatprep.mubr.f32.mxu0 0.0
  %8914 = vmatmul.mubr.f32.gmra.mrb[0].mxu0 %v8485
  %v8915 = vpop.f32.mrb[0].mxu0
  %v8916 = vadd.f32 0.0, %v8915
  %v8917 = vpop.f32.mrb[0].mxu0
  %v8918 = vadd.f32 0.0, %v8917
  %8919 = vmatprep.mubr.f32.mxu0 0.0
  %8920 = vmatmul.mubr.f32.gmra.mrb[0].mxu0 %v8488
  %v8921 = vpop.f32.mrb[0].mxu0
  %v8922 = vadd.f32 0.0, %v8921
  %v8923 = vpop.f32.mrb[0].mxu0
  %v8924 = vadd.f32 0.0, %v8923
  %8925 = vmatprep.mubr.f32.mxu0 0.0
  %8926 = vmatmul.mubr.f32.gmra.mrb[0].mxu0 %v8491
  %v8927 = vpop.f32.mrb[0].mxu0
  %v8928 = vadd.f32 0.0, %v8927
  %v8929 = vpop.f32.mrb[0].mxu0
  %v8930 = vadd.f32 0.0, %v8929
  %8931 = vmatprep.mubr.f32.mxu0 0.0
  %8932 = vmatmul.mubr.f32.gmra.mrb[0].mxu0 %v8494
  %v8933 = vpop.f32.mrb[0].mxu0
  %v8934 = vadd.f32 0.0, %v8933
  %v8935 = vpop.f32.mrb[0].mxu0
  %v8936 = vadd.f32 0.0, %v8935
  %8937 = vmatprep.mubr.f32.mxu0 0.0
  %8938 = vmatmul.mubr.f32.gmra.mrb[0].mxu0 %v8497
  %v8939 = vpop.f32.mrb[0].mxu0
  %v8940 = vadd.f32 0.0, %v8939
  %v8941 = vpop.f32.mrb[0].mxu0
  %v8942 = vadd.f32 0.0, %v8941
  %8943 = vmatprep.mubr.f32.mxu0 0.0
  %8944 = vmatmul.mubr.f32.gmra.mrb[0].mxu0 %v8500
  %v8945 = vpop.f32.mrb[0].mxu0
  %v8946 = vadd.f32 0.0, %v8945
  %v8947 = vpop.f32.mrb[0].mxu0
  %v8948 = vadd.f32 0.0, %v8947
  %8949 = vmatprep.mubr.f32.mxu0 0.0
  %8950 = vmatmul.mubr.f32.gmra.mrb[0].mxu0 %v8503
  %v8951 = vpop.f32.mrb[0].mxu0
  %v8952 = vadd.f32 0.0, %v8951
  %v8953 = vpop.f32.mrb[0].mxu0
  %v8954 = vadd.f32 0.0, %v8953
  %8955 = vmatprep.mubr.f32.mxu0 0.0
  %8956 = vmatmul.mubr.f32.gmra.mrb[0].mxu0 %v8506
  %v8957 = vpop.f32.mrb[0].mxu0
  %v8958 = vadd.f32 0.0, %v8957
  %v8959 = vpop.f32.mrb[0].mxu0
  %v8960 = vadd.f32 0.0, %v8959
  %8961 = vmatprep.mubr.f32.mxu0 0.0
  %8962 = vmatmul.mubr.f32.gmra.mrb[0].mxu0 %v8509
  %v8963 = vpop.f32.mrb[0].mxu0
  %v8964 = vadd.f32 0.0, %v8963
  %v8965 = vpop.f32.mrb[0].mxu0
  %v8966 = vadd.f32 0.0, %v8965
  %8967 = vmatprep.mubr.f32.mxu0 0.0
  %8968 = vmatmul.mubr.f32.gmra.mrb[0].mxu0 %v8512
  %v8969 = vpop.f32.mrb[0].mxu0
  %v8970 = vadd.f32 0.0, %v8969
  %v8971 = vpop.f32.mrb[0].mxu0
  %v8972 = vadd.f32 0.0, %v8971
  %8973 = vmatprep.mubr.f32.mxu0 0.0
  %8974 = vmatmul.mubr.f32.gmra.mrb[0].mxu0 %v8515
  %v8975 = vpop.f32.mrb[0].mxu0
  %v8976 = vadd.f32 0.0, %v8975
  %v8977 = vpop.f32.mrb[0].mxu0
  %v8978 = vadd.f32 0.0, %v8977
  %8979 = vmatprep.mubr.f32.mxu0 0.0
  %8980 = vmatmul.mubr.f32.gmra.mrb[0].mxu0 %v8518
  %v8981 = vpop.f32.mrb[0].mxu0
  %v8982 = vadd.f32 0.0, %v8981
  %v8983 = vpop.f32.mrb[0].mxu0
  %v8984 = vadd.f32 0.0, %v8983
  %8985 = vdwg.mxu0
  %8986 = vmatprep.subr.mxu0 %v6280
  %8987 = vmatpush1.msra.mxu0 %v6279
  %8988 = vmatprep.subr.mxu0 %v6287
  %8989 = vmatpush1.msra.mxu0 %v6286
  %8990 = vmatprep.subr.mxu0 %v6294
  %8991 = vmatpush1.msra.mxu0 %v6293
  %8992 = vmatprep.subr.mxu0 %v6301
  %8993 = vmatpush1.msra.mxu0 %v6300
  %8994 = vmatprep.subr.mxu0 %v6308
  %8995 = vmatpush1.msra.mxu0 %v6307
  %8996 = vmatprep.subr.mxu0 %v6315
  %8997 = vmatpush1.msra.mxu0 %v6314
  %8998 = vmatprep.subr.mxu0 %v6322
  %8999 = vmatpush1.msra.mxu0 %v6321
  %9000 = vmatprep.subr.mxu0 %v6329
  %9001 = vmatpush1.msra.mxu0 %v6328
  %9002 = vmatprep.subr.mxu0 %v6336
  %9003 = vmatpush1.msra.mxu0 %v6335
  %9004 = vmatprep.subr.mxu0 %v6343
  %9005 = vmatpush1.msra.mxu0 %v6342
  %9006 = vmatprep.subr.mxu0 %v6350
  %9007 = vmatpush1.msra.mxu0 %v6349
  %9008 = vmatprep.subr.mxu0 %v6357
  %9009 = vmatpush1.msra.mxu0 %v6356
  %9010 = vmatprep.subr.mxu0 %v6364
  %9011 = vmatpush1.msra.mxu0 %v6363
  %9012 = vmatprep.subr.mxu0 %v6371
  %9013 = vmatpush1.msra.mxu0 %v6370
  %9014 = vmatprep.subr.mxu0 0.0
  %9015 = vmatpush1.msra.mxu0 0.0
  %9016 = vmatprep.subr.mxu0 0.0
  %9017 = vmatpush1.msra.mxu0 0.0
  %9018 = vmatprep.subr.mxu0 0.0
  %9019 = vmatpush1.msra.mxu0 0.0
  %9020 = vmatprep.subr.mxu0 0.0
  %9021 = vmatpush1.msra.mxu0 0.0
  %9022 = vmatprep.subr.mxu0 0.0
  %9023 = vmatpush1.msra.mxu0 0.0
  %9024 = vmatprep.subr.mxu0 0.0
  %9025 = vmatpush1.msra.mxu0 0.0
  %9026 = vmatprep.subr.mxu0 0.0
  %9027 = vmatpush1.msra.mxu0 0.0
  %9028 = vmatprep.subr.mxu0 0.0
  %9029 = vmatpush1.msra.mxu0 0.0
  %9030 = vmatprep.subr.mxu0 0.0
  %9031 = vmatpush1.msra.mxu0 0.0
  %9032 = vmatprep.subr.mxu0 0.0
  %9033 = vmatpush1.msra.mxu0 0.0
  %9034 = vmatprep.subr.mxu0 0.0
  %9035 = vmatpush1.msra.mxu0 0.0
  %9036 = vmatprep.subr.mxu0 0.0
  %9037 = vmatpush1.msra.mxu0 0.0
  %9038 = vmatprep.subr.mxu0 0.0
  %9039 = vmatpush1.msra.mxu0 0.0
  %9040 = vmatprep.subr.mxu0 0.0
  %9041 = vmatpush1.msra.mxu0 0.0
  %9042 = vmatprep.subr.mxu0 0.0
  %9043 = vmatpush1.msra.mxu0 0.0
  %9044 = vmatprep.subr.mxu0 0.0
  %9045 = vmatpush1.msra.mxu0 0.0
  %9046 = vmatprep.subr.mxu0 0.0
  %9047 = vmatpush1.msra.mxu0 0.0
  %9048 = vmatprep.subr.mxu0 0.0
  %9049 = vmatpush1.msra.mxu0 0.0
  %9050 = vmatprep.mubr.f32.mxu0 0.0
  %9051 = vmatmul.mubr.f32.gmra.mrb[0].mxu0 %v8437
  %v9052 = vpop.f32.mrb[0].mxu0
  %v9053 = vadd.f32 0.0, %v9052
  %v9054 = vpop.f32.mrb[0].mxu0
  %v9055 = vadd.f32 0.0, %v9054
  %9056 = vmatprep.mubr.f32.mxu0 0.0
  %9057 = vmatmul.mubr.f32.gmra.mrb[0].mxu0 %v8440
  %v9058 = vpop.f32.mrb[0].mxu0
  %v9059 = vadd.f32 0.0, %v9058
  %v9060 = vpop.f32.mrb[0].mxu0
  %v9061 = vadd.f32 0.0, %v9060
  %9062 = vmatprep.mubr.f32.mxu0 0.0
  %9063 = vmatmul.mubr.f32.gmra.mrb[0].mxu0 %v8443
  %v9064 = vpop.f32.mrb[0].mxu0
  %v9065 = vadd.f32 0.0, %v9064
  %v9066 = vpop.f32.mrb[0].mxu0
  %v9067 = vadd.f32 0.0, %v9066
  %9068 = vmatprep.mubr.f32.mxu0 0.0
  %9069 = vmatmul.mubr.f32.gmra.mrb[0].mxu0 %v8446
  %v9070 = vpop.f32.mrb[0].mxu0
  %v9071 = vadd.f32 0.0, %v9070
  %v9072 = vpop.f32.mrb[0].mxu0
  %v9073 = vadd.f32 0.0, %v9072
  %9074 = vmatprep.mubr.f32.mxu0 0.0
  %9075 = vmatmul.mubr.f32.gmra.mrb[0].mxu0 %v8449
  %v9076 = vpop.f32.mrb[0].mxu0
  %v9077 = vadd.f32 0.0, %v9076
  %v9078 = vpop.f32.mrb[0].mxu0
  %v9079 = vadd.f32 0.0, %v9078
  %9080 = vmatprep.mubr.f32.mxu0 0.0
  %9081 = vmatmul.mubr.f32.gmra.mrb[0].mxu0 %v8452
  %v9082 = vpop.f32.mrb[0].mxu0
  %v9083 = vadd.f32 0.0, %v9082
  %v9084 = vpop.f32.mrb[0].mxu0
  %v9085 = vadd.f32 0.0, %v9084
  %9086 = vmatprep.mubr.f32.mxu0 0.0
  %9087 = vmatmul.mubr.f32.gmra.mrb[0].mxu0 %v8455
  %v9088 = vpop.f32.mrb[0].mxu0
  %v9089 = vadd.f32 0.0, %v9088
  %v9090 = vpop.f32.mrb[0].mxu0
  %v9091 = vadd.f32 0.0, %v9090
  %9092 = vmatprep.mubr.f32.mxu0 0.0
  %9093 = vmatmul.mubr.f32.gmra.mrb[0].mxu0 %v8458
  %v9094 = vpop.f32.mrb[0].mxu0
  %v9095 = vadd.f32 0.0, %v9094
  %v9096 = vpop.f32.mrb[0].mxu0
  %v9097 = vadd.f32 0.0, %v9096
  %9098 = vmatprep.mubr.f32.mxu0 0.0
  %9099 = vmatmul.mubr.f32.gmra.mrb[0].mxu0 %v8461
  %v9100 = vpop.f32.mrb[0].mxu0
  %v9101 = vadd.f32 0.0, %v9100
  %v9102 = vpop.f32.mrb[0].mxu0
  %v9103 = vadd.f32 0.0, %v9102
  %9104 = vmatprep.mubr.f32.mxu0 0.0
  %9105 = vmatmul.mubr.f32.gmra.mrb[0].mxu0 %v8464
  %v9106 = vpop.f32.mrb[0].mxu0
  %v9107 = vadd.f32 0.0, %v9106
  %v9108 = vpop.f32.mrb[0].mxu0
  %v9109 = vadd.f32 0.0, %v9108
  %9110 = vmatprep.mubr.f32.mxu0 0.0
  %9111 = vmatmul.mubr.f32.gmra.mrb[0].mxu0 %v8467
  %v9112 = vpop.f32.mrb[0].mxu0
  %v9113 = vadd.f32 0.0, %v9112
  %v9114 = vpop.f32.mrb[0].mxu0
  %v9115 = vadd.f32 0.0, %v9114
  %9116 = vmatprep.mubr.f32.mxu0 0.0
  %9117 = vmatmul.mubr.f32.gmra.mrb[0].mxu0 %v8470
  %v9118 = vpop.f32.mrb[0].mxu0
  %v9119 = vadd.f32 0.0, %v9118
  %v9120 = vpop.f32.mrb[0].mxu0
  %v9121 = vadd.f32 0.0, %v9120
  %9122 = vmatprep.mubr.f32.mxu0 0.0
  %9123 = vmatmul.mubr.f32.gmra.mrb[0].mxu0 %v8473
  %v9124 = vpop.f32.mrb[0].mxu0
  %v9125 = vadd.f32 0.0, %v9124
  %v9126 = vpop.f32.mrb[0].mxu0
  %v9127 = vadd.f32 0.0, %v9126
  %9128 = vmatprep.mubr.f32.mxu0 0.0
  %9129 = vmatmul.mubr.f32.gmra.mrb[0].mxu0 %v8476
  %v9130 = vpop.f32.mrb[0].mxu0
  %v9131 = vadd.f32 0.0, %v9130
  %v9132 = vpop.f32.mrb[0].mxu0
  %v9133 = vadd.f32 0.0, %v9132
  %9134 = vmatprep.mubr.f32.mxu0 0.0
  %9135 = vmatmul.mubr.f32.gmra.mrb[0].mxu0 %v8479
  %v9136 = vpop.f32.mrb[0].mxu0
  %v9137 = vadd.f32 0.0, %v9136
  %v9138 = vpop.f32.mrb[0].mxu0
  %v9139 = vadd.f32 0.0, %v9138
  %9140 = vmatprep.mubr.f32.mxu0 0.0
  %9141 = vmatmul.mubr.f32.gmra.mrb[0].mxu0 %v8482
  %v9142 = vpop.f32.mrb[0].mxu0
  %v9143 = vadd.f32 0.0, %v9142
  %v9144 = vpop.f32.mrb[0].mxu0
  %v9145 = vadd.f32 0.0, %v9144
  %9146 = vmatprep.mubr.f32.mxu0 0.0
  %9147 = vmatmul.mubr.f32.gmra.mrb[0].mxu0 %v8485
  %v9148 = vpop.f32.mrb[0].mxu0
  %v9149 = vadd.f32 0.0, %v9148
  %v9150 = vpop.f32.mrb[0].mxu0
  %v9151 = vadd.f32 0.0, %v9150
  %9152 = vmatprep.mubr.f32.mxu0 0.0
  %9153 = vmatmul.mubr.f32.gmra.mrb[0].mxu0 %v8488
  %v9154 = vpop.f32.mrb[0].mxu0
  %v9155 = vadd.f32 0.0, %v9154
  %v9156 = vpop.f32.mrb[0].mxu0
  %v9157 = vadd.f32 0.0, %v9156
  %9158 = vmatprep.mubr.f32.mxu0 0.0
  %9159 = vmatmul.mubr.f32.gmra.mrb[0].mxu0 %v8491
  %v9160 = vpop.f32.mrb[0].mxu0
  %v9161 = vadd.f32 0.0, %v9160
  %v9162 = vpop.f32.mrb[0].mxu0
  %v9163 = vadd.f32 0.0, %v9162
  %9164 = vmatprep.mubr.f32.mxu0 0.0
  %9165 = vmatmul.mubr.f32.gmra.mrb[0].mxu0 %v8494
  %v9166 = vpop.f32.mrb[0].mxu0
  %v9167 = vadd.f32 0.0, %v9166
  %v9168 = vpop.f32.mrb[0].mxu0
  %v9169 = vadd.f32 0.0, %v9168
  %9170 = vmatprep.mubr.f32.mxu0 0.0
  %9171 = vmatmul.mubr.f32.gmra.mrb[0].mxu0 %v8497
  %v9172 = vpop.f32.mrb[0].mxu0
  %v9173 = vadd.f32 0.0, %v9172
  %v9174 = vpop.f32.mrb[0].mxu0
  %v9175 = vadd.f32 0.0, %v9174
  %9176 = vmatprep.mubr.f32.mxu0 0.0
  %9177 = vmatmul.mubr.f32.gmra.mrb[0].mxu0 %v8500
  %v9178 = vpop.f32.mrb[0].mxu0
  %v9179 = vadd.f32 0.0, %v9178
  %v9180 = vpop.f32.mrb[0].mxu0
  %v9181 = vadd.f32 0.0, %v9180
  %9182 = vmatprep.mubr.f32.mxu0 0.0
  %9183 = vmatmul.mubr.f32.gmra.mrb[0].mxu0 %v8503
  %v9184 = vpop.f32.mrb[0].mxu0
  %v9185 = vadd.f32 0.0, %v9184
  %v9186 = vpop.f32.mrb[0].mxu0
  %v9187 = vadd.f32 0.0, %v9186
  %9188 = vmatprep.mubr.f32.mxu0 0.0
  %9189 = vmatmul.mubr.f32.gmra.mrb[0].mxu0 %v8506
  %v9190 = vpop.f32.mrb[0].mxu0
  %v9191 = vadd.f32 0.0, %v9190
  %v9192 = vpop.f32.mrb[0].mxu0
  %v9193 = vadd.f32 0.0, %v9192
  %9194 = vmatprep.mubr.f32.mxu0 0.0
  %9195 = vmatmul.mubr.f32.gmra.mrb[0].mxu0 %v8509
  %v9196 = vpop.f32.mrb[0].mxu0
  %v9197 = vadd.f32 0.0, %v9196
  %v9198 = vpop.f32.mrb[0].mxu0
  %v9199 = vadd.f32 0.0, %v9198
  %9200 = vmatprep.mubr.f32.mxu0 0.0
  %9201 = vmatmul.mubr.f32.gmra.mrb[0].mxu0 %v8512
  %v9202 = vpop.f32.mrb[0].mxu0
  %v9203 = vadd.f32 0.0, %v9202
  %v9204 = vpop.f32.mrb[0].mxu0
  %v9205 = vadd.f32 0.0, %v9204
  %9206 = vmatprep.mubr.f32.mxu0 0.0
  %9207 = vmatmul.mubr.f32.gmra.mrb[0].mxu0 %v8515
  %v9208 = vpop.f32.mrb[0].mxu0
  %v9209 = vadd.f32 0.0, %v9208
  %v9210 = vpop.f32.mrb[0].mxu0
  %v9211 = vadd.f32 0.0, %v9210
  %9212 = vmatprep.mubr.f32.mxu0 0.0
  %9213 = vmatmul.mubr.f32.gmra.mrb[0].mxu0 %v8518
  %v9214 = vpop.f32.mrb[0].mxu0
  %v9215 = vadd.f32 0.0, %v9214
  %v9216 = vpop.f32.mrb[0].mxu0
  %v9217 = vadd.f32 0.0, %v9216
  %9218 = vdwg.mxu0
  %9219 = vmatprep.subr.mxu0 0.0
  %9220 = vmatpush1.msra.mxu0 %v6281
  %9221 = vmatprep.subr.mxu0 0.0
  %9222 = vmatpush1.msra.mxu0 %v6288
  %9223 = vmatprep.subr.mxu0 0.0
  %9224 = vmatpush1.msra.mxu0 %v6295
  %9225 = vmatprep.subr.mxu0 0.0
  %9226 = vmatpush1.msra.mxu0 %v6302
  %9227 = vmatprep.subr.mxu0 0.0
  %9228 = vmatpush1.msra.mxu0 %v6309
  %9229 = vmatprep.subr.mxu0 0.0
  %9230 = vmatpush1.msra.mxu0 %v6316
  %9231 = vmatprep.subr.mxu0 0.0
  %9232 = vmatpush1.msra.mxu0 %v6323
  %9233 = vmatprep.subr.mxu0 0.0
  %9234 = vmatpush1.msra.mxu0 %v6330
  %9235 = vmatprep.subr.mxu0 0.0
  %9236 = vmatpush1.msra.mxu0 %v6337
  %9237 = vmatprep.subr.mxu0 0.0
  %9238 = vmatpush1.msra.mxu0 %v6344
  %9239 = vmatprep.subr.mxu0 0.0
  %9240 = vmatpush1.msra.mxu0 %v6351
  %9241 = vmatprep.subr.mxu0 0.0
  %9242 = vmatpush1.msra.mxu0 %v6358
  %9243 = vmatprep.subr.mxu0 0.0
  %9244 = vmatpush1.msra.mxu0 %v6365
  %9245 = vmatprep.subr.mxu0 0.0
  %9246 = vmatpush1.msra.mxu0 %v6372
  %9247 = vmatprep.subr.mxu0 0.0
  %9248 = vmatpush1.msra.mxu0 0.0
  %9249 = vmatprep.subr.mxu0 0.0
  %9250 = vmatpush1.msra.mxu0 0.0
  %9251 = vmatprep.subr.mxu0 0.0
  %9252 = vmatpush1.msra.mxu0 0.0
  %9253 = vmatprep.subr.mxu0 0.0
  %9254 = vmatpush1.msra.mxu0 0.0
  %9255 = vmatprep.subr.mxu0 0.0
  %9256 = vmatpush1.msra.mxu0 0.0
  %9257 = vmatprep.subr.mxu0 0.0
  %9258 = vmatpush1.msra.mxu0 0.0
  %9259 = vmatprep.subr.mxu0 0.0
  %9260 = vmatpush1.msra.mxu0 0.0
  %9261 = vmatprep.subr.mxu0 0.0
  %9262 = vmatpush1.msra.mxu0 0.0
  %9263 = vmatprep.subr.mxu0 0.0
  %9264 = vmatpush1.msra.mxu0 0.0
  %9265 = vmatprep.subr.mxu0 0.0
  %9266 = vmatpush1.msra.mxu0 0.0
  %9267 = vmatprep.subr.mxu0 0.0
  %9268 = vmatpush1.msra.mxu0 0.0
  %9269 = vmatprep.subr.mxu0 0.0
  %9270 = vmatpush1.msra.mxu0 0.0
  %9271 = vmatprep.subr.mxu0 0.0
  %9272 = vmatpush1.msra.mxu0 0.0
  %9273 = vmatprep.subr.mxu0 0.0
  %9274 = vmatpush1.msra.mxu0 0.0
  %9275 = vmatprep.subr.mxu0 0.0
  %9276 = vmatpush1.msra.mxu0 0.0
  %9277 = vmatprep.subr.mxu0 0.0
  %9278 = vmatpush1.msra.mxu0 0.0
  %9279 = vmatprep.subr.mxu0 0.0
  %9280 = vmatpush1.msra.mxu0 0.0
  %9281 = vmatprep.subr.mxu0 0.0
  %9282 = vmatpush1.msra.mxu0 0.0
  %9283 = vmatprep.mubr.f32.mxu0 0.0
  %9284 = vmatmul.mubr.f32.gmra.mrb[0].mxu0 %v8437
  %v9285 = vpop.f32.mrb[0].mxu0
  %v9286 = vadd.f32 0.0, %v9285
  %v9287 = vpop.f32.mrb[0].mxu0
  %9288 = vmatprep.mubr.f32.mxu0 0.0
  %9289 = vmatmul.mubr.f32.gmra.mrb[0].mxu0 %v8440
  %v9290 = vpop.f32.mrb[0].mxu0
  %v9291 = vadd.f32 0.0, %v9290
  %v9292 = vpop.f32.mrb[0].mxu0
  %9293 = vmatprep.mubr.f32.mxu0 0.0
  %9294 = vmatmul.mubr.f32.gmra.mrb[0].mxu0 %v8443
  %v9295 = vpop.f32.mrb[0].mxu0
  %v9296 = vadd.f32 0.0, %v9295
  %v9297 = vpop.f32.mrb[0].mxu0
  %9298 = vmatprep.mubr.f32.mxu0 0.0
  %9299 = vmatmul.mubr.f32.gmra.mrb[0].mxu0 %v8446
  %v9300 = vpop.f32.mrb[0].mxu0
  %v9301 = vadd.f32 0.0, %v9300
  %v9302 = vpop.f32.mrb[0].mxu0
  %9303 = vmatprep.mubr.f32.mxu0 0.0
  %9304 = vmatmul.mubr.f32.gmra.mrb[0].mxu0 %v8449
  %v9305 = vpop.f32.mrb[0].mxu0
  %v9306 = vadd.f32 0.0, %v9305
  %v9307 = vpop.f32.mrb[0].mxu0
  %9308 = vmatprep.mubr.f32.mxu0 0.0
  %9309 = vmatmul.mubr.f32.gmra.mrb[0].mxu0 %v8452
  %v9310 = vpop.f32.mrb[0].mxu0
  %v9311 = vadd.f32 0.0, %v9310
  %v9312 = vpop.f32.mrb[0].mxu0
  %9313 = vmatprep.mubr.f32.mxu0 0.0
  %9314 = vmatmul.mubr.f32.gmra.mrb[0].mxu0 %v8455
  %v9315 = vpop.f32.mrb[0].mxu0
  %v9316 = vadd.f32 0.0, %v9315
  %v9317 = vpop.f32.mrb[0].mxu0
  %9318 = vmatprep.mubr.f32.mxu0 0.0
  %9319 = vmatmul.mubr.f32.gmra.mrb[0].mxu0 %v8458
  %v9320 = vpop.f32.mrb[0].mxu0
  %v9321 = vadd.f32 0.0, %v9320
  %v9322 = vpop.f32.mrb[0].mxu0
  %9323 = vmatprep.mubr.f32.mxu0 0.0
  %9324 = vmatmul.mubr.f32.gmra.mrb[0].mxu0 %v8461
  %v9325 = vpop.f32.mrb[0].mxu0
  %v9326 = vadd.f32 0.0, %v9325
  %v9327 = vpop.f32.mrb[0].mxu0
  %9328 = vmatprep.mubr.f32.mxu0 0.0
  %9329 = vmatmul.mubr.f32.gmra.mrb[0].mxu0 %v8464
  %v9330 = vpop.f32.mrb[0].mxu0
  %v9331 = vadd.f32 0.0, %v9330
  %v9332 = vpop.f32.mrb[0].mxu0
  %9333 = vmatprep.mubr.f32.mxu0 0.0
  %9334 = vmatmul.mubr.f32.gmra.mrb[0].mxu0 %v8467
  %v9335 = vpop.f32.mrb[0].mxu0
  %v9336 = vadd.f32 0.0, %v9335
  %v9337 = vpop.f32.mrb[0].mxu0
  %9338 = vmatprep.mubr.f32.mxu0 0.0
  %9339 = vmatmul.mubr.f32.gmra.mrb[0].mxu0 %v8470
  %v9340 = vpop.f32.mrb[0].mxu0
  %v9341 = vadd.f32 0.0, %v9340
  %v9342 = vpop.f32.mrb[0].mxu0
  %9343 = vmatprep.mubr.f32.mxu0 0.0
  %9344 = vmatmul.mubr.f32.gmra.mrb[0].mxu0 %v8473
  %v9345 = vpop.f32.mrb[0].mxu0
  %v9346 = vadd.f32 0.0, %v9345
  %v9347 = vpop.f32.mrb[0].mxu0
  %9348 = vmatprep.mubr.f32.mxu0 0.0
  %9349 = vmatmul.mubr.f32.gmra.mrb[0].mxu0 %v8476
  %v9350 = vpop.f32.mrb[0].mxu0
  %v9351 = vadd.f32 0.0, %v9350
  %v9352 = vpop.f32.mrb[0].mxu0
  %9353 = vmatprep.mubr.f32.mxu0 0.0
  %9354 = vmatmul.mubr.f32.gmra.mrb[0].mxu0 %v8479
  %v9355 = vpop.f32.mrb[0].mxu0
  %v9356 = vadd.f32 0.0, %v9355
  %v9357 = vpop.f32.mrb[0].mxu0
  %9358 = vmatprep.mubr.f32.mxu0 0.0
  %9359 = vmatmul.mubr.f32.gmra.mrb[0].mxu0 %v8482
  %v9360 = vpop.f32.mrb[0].mxu0
  %v9361 = vadd.f32 0.0, %v9360
  %v9362 = vpop.f32.mrb[0].mxu0
  %9363 = vmatprep.mubr.f32.mxu0 0.0
  %9364 = vmatmul.mubr.f32.gmra.mrb[0].mxu0 %v8485
  %v9365 = vpop.f32.mrb[0].mxu0
  %v9366 = vadd.f32 0.0, %v9365
  %v9367 = vpop.f32.mrb[0].mxu0
  %9368 = vmatprep.mubr.f32.mxu0 0.0
  %9369 = vmatmul.mubr.f32.gmra.mrb[0].mxu0 %v8488
  %v9370 = vpop.f32.mrb[0].mxu0
  %v9371 = vadd.f32 0.0, %v9370
  %v9372 = vpop.f32.mrb[0].mxu0
  %9373 = vmatprep.mubr.f32.mxu0 0.0
  %9374 = vmatmul.mubr.f32.gmra.mrb[0].mxu0 %v8491
  %v9375 = vpop.f32.mrb[0].mxu0
  %v9376 = vadd.f32 0.0, %v9375
  %v9377 = vpop.f32.mrb[0].mxu0
  %9378 = vmatprep.mubr.f32.mxu0 0.0
  %9379 = vmatmul.mubr.f32.gmra.mrb[0].mxu0 %v8494
  %v9380 = vpop.f32.mrb[0].mxu0
  %v9381 = vadd.f32 0.0, %v9380
  %v9382 = vpop.f32.mrb[0].mxu0
  %9383 = vmatprep.mubr.f32.mxu0 0.0
  %9384 = vmatmul.mubr.f32.gmra.mrb[0].mxu0 %v8497
  %v9385 = vpop.f32.mrb[0].mxu0
  %v9386 = vadd.f32 0.0, %v9385
  %v9387 = vpop.f32.mrb[0].mxu0
  %9388 = vmatprep.mubr.f32.mxu0 0.0
  %9389 = vmatmul.mubr.f32.gmra.mrb[0].mxu0 %v8500
  %v9390 = vpop.f32.mrb[0].mxu0
  %v9391 = vadd.f32 0.0, %v9390
  %v9392 = vpop.f32.mrb[0].mxu0
  %9393 = vmatprep.mubr.f32.mxu0 0.0
  %9394 = vmatmul.mubr.f32.gmra.mrb[0].mxu0 %v8503
  %v9395 = vpop.f32.mrb[0].mxu0
  %v9396 = vadd.f32 0.0, %v9395
  %v9397 = vpop.f32.mrb[0].mxu0
  %9398 = vmatprep.mubr.f32.mxu0 0.0
  %9399 = vmatmul.mubr.f32.gmra.mrb[0].mxu0 %v8506
  %v9400 = vpop.f32.mrb[0].mxu0
  %v9401 = vadd.f32 0.0, %v9400
  %v9402 = vpop.f32.mrb[0].mxu0
  %9403 = vmatprep.mubr.f32.mxu0 0.0
  %9404 = vmatmul.mubr.f32.gmra.mrb[0].mxu0 %v8509
  %v9405 = vpop.f32.mrb[0].mxu0
  %v9406 = vadd.f32 0.0, %v9405
  %v9407 = vpop.f32.mrb[0].mxu0
  %9408 = vmatprep.mubr.f32.mxu0 0.0
  %9409 = vmatmul.mubr.f32.gmra.mrb[0].mxu0 %v8512
  %v9410 = vpop.f32.mrb[0].mxu0
  %v9411 = vadd.f32 0.0, %v9410
  %v9412 = vpop.f32.mrb[0].mxu0
  %9413 = vmatprep.mubr.f32.mxu0 0.0
  %9414 = vmatmul.mubr.f32.gmra.mrb[0].mxu0 %v8515
  %v9415 = vpop.f32.mrb[0].mxu0
  %v9416 = vadd.f32 0.0, %v9415
  %v9417 = vpop.f32.mrb[0].mxu0
  %9418 = vmatprep.mubr.f32.mxu0 0.0
  %9419 = vmatmul.mubr.f32.gmra.mrb[0].mxu0 %v8518
  %v9420 = vpop.f32.mrb[0].mxu0
  %v9421 = vadd.f32 0.0, %v9420
  %v9422 = vpop.f32.mrb[0].mxu0
  %9423 = vdwg.mxu0
  %v9424 = vadd.f32 %v7570, %v8587
  %v9425 = vadd.f32 %v7572, %v8589
  %v9426 = vadd.f32 %v7803, %v8820
  %v9427 = vadd.f32 %v7805, %v8822
  %v9428 = vadd.f32 %v8036, %v9053
  %v9429 = vadd.f32 %v8038, %v9055
  %v9430 = vadd.f32 %v8269, %v9286
  %v9431 = vadd.f32 %v7576, %v8593
  %v9432 = vadd.f32 %v7578, %v8595
  %v9433 = vadd.f32 %v7809, %v8826
  %v9434 = vadd.f32 %v7811, %v8828
  %v9435 = vadd.f32 %v8042, %v9059
  %v9436 = vadd.f32 %v8044, %v9061
  %v9437 = vadd.f32 %v8274, %v9291
  %v9438 = vadd.f32 %v7582, %v8599
  %v9439 = vadd.f32 %v7584, %v8601
  %v9440 = vadd.f32 %v7815, %v8832
  %v9441 = vadd.f32 %v7817, %v8834
  %v9442 = vadd.f32 %v8048, %v9065
  %v9443 = vadd.f32 %v8050, %v9067
  %v9444 = vadd.f32 %v8279, %v9296
  %v9445 = vadd.f32 %v7588, %v8605
  %v9446 = vadd.f32 %v7590, %v8607
  %v9447 = vadd.f32 %v7821, %v8838
  %v9448 = vadd.f32 %v7823, %v8840
  %v9449 = vadd.f32 %v8054, %v9071
  %v9450 = vadd.f32 %v8056, %v9073
  %v9451 = vadd.f32 %v8284, %v9301
  %v9452 = vadd.f32 %v7594, %v8611
  %v9453 = vadd.f32 %v7596, %v8613
  %v9454 = vadd.f32 %v7827, %v8844
  %v9455 = vadd.f32 %v7829, %v8846
  %v9456 = vadd.f32 %v8060, %v9077
  %v9457 = vadd.f32 %v8062, %v9079
  %v9458 = vadd.f32 %v8289, %v9306
  %v9459 = vadd.f32 %v7600, %v8617
  %v9460 = vadd.f32 %v7602, %v8619
  %v9461 = vadd.f32 %v7833, %v8850
  %v9462 = vadd.f32 %v7835, %v8852
  %v9463 = vadd.f32 %v8066, %v9083
  %v9464 = vadd.f32 %v8068, %v9085
  %v9465 = vadd.f32 %v8294, %v9311
  %v9466 = vadd.f32 %v7606, %v8623
  %v9467 = vadd.f32 %v7608, %v8625
  %v9468 = vadd.f32 %v7839, %v8856
  %v9469 = vadd.f32 %v7841, %v8858
  %v9470 = vadd.f32 %v8072, %v9089
  %v9471 = vadd.f32 %v8074, %v9091
  %v9472 = vadd.f32 %v8299, %v9316
  %v9473 = vadd.f32 %v7612, %v8629
  %v9474 = vadd.f32 %v7614, %v8631
  %v9475 = vadd.f32 %v7845, %v8862
  %v9476 = vadd.f32 %v7847, %v8864
  %v9477 = vadd.f32 %v8078, %v9095
  %v9478 = vadd.f32 %v8080, %v9097
  %v9479 = vadd.f32 %v8304, %v9321
  %v9480 = vadd.f32 %v7618, %v8635
  %v9481 = vadd.f32 %v7620, %v8637
  %v9482 = vadd.f32 %v7851, %v8868
  %v9483 = vadd.f32 %v7853, %v8870
  %v9484 = vadd.f32 %v8084, %v9101
  %v9485 = vadd.f32 %v8086, %v9103
  %v9486 = vadd.f32 %v8309, %v9326
  %v9487 = vadd.f32 %v7624, %v8641
  %v9488 = vadd.f32 %v7626, %v8643
  %v9489 = vadd.f32 %v7857, %v8874
  %v9490 = vadd.f32 %v7859, %v8876
  %v9491 = vadd.f32 %v8090, %v9107
  %v9492 = vadd.f32 %v8092, %v9109
  %v9493 = vadd.f32 %v8314, %v9331
  %v9494 = vadd.f32 %v7630, %v8647
  %v9495 = vadd.f32 %v7632, %v8649
  %v9496 = vadd.f32 %v7863, %v8880
  %v9497 = vadd.f32 %v7865, %v8882
  %v9498 = vadd.f32 %v8096, %v9113
  %v9499 = vadd.f32 %v8098, %v9115
  %v9500 = vadd.f32 %v8319, %v9336
  %v9501 = vadd.f32 %v7636, %v8653
  %v9502 = vadd.f32 %v7638, %v8655
  %v9503 = vadd.f32 %v7869, %v8886
  %v9504 = vadd.f32 %v7871, %v8888
  %v9505 = vadd.f32 %v8102, %v9119
  %v9506 = vadd.f32 %v8104, %v9121
  %v9507 = vadd.f32 %v8324, %v9341
  %v9508 = vadd.f32 %v7642, %v8659
  %v9509 = vadd.f32 %v7644, %v8661
  %v9510 = vadd.f32 %v7875, %v8892
  %v9511 = vadd.f32 %v7877, %v8894
  %v9512 = vadd.f32 %v8108, %v9125
  %v9513 = vadd.f32 %v8110, %v9127
  %v9514 = vadd.f32 %v8329, %v9346
  %v9515 = vadd.f32 %v7648, %v8665
  %v9516 = vadd.f32 %v7650, %v8667
  %v9517 = vadd.f32 %v7881, %v8898
  %v9518 = vadd.f32 %v7883, %v8900
  %v9519 = vadd.f32 %v8114, %v9131
  %v9520 = vadd.f32 %v8116, %v9133
  %v9521 = vadd.f32 %v8334, %v9351
  %v9522 = vadd.f32 %v7654, %v8671
  %v9523 = vadd.f32 %v7656, %v8673
  %v9524 = vadd.f32 %v7887, %v8904
  %v9525 = vadd.f32 %v7889, %v8906
  %v9526 = vadd.f32 %v8120, %v9137
  %v9527 = vadd.f32 %v8122, %v9139
  %v9528 = vadd.f32 %v8339, %v9356
  %v9529 = vadd.f32 %v7660, %v8677
  %v9530 = vadd.f32 %v7662, %v8679
  %v9531 = vadd.f32 %v7893, %v8910
  %v9532 = vadd.f32 %v7895, %v8912
  %v9533 = vadd.f32 %v8126, %v9143
  %v9534 = vadd.f32 %v8128, %v9145
  %v9535 = vadd.f32 %v8344, %v9361
  %v9536 = vadd.f32 %v7666, %v8683
  %v9537 = vadd.f32 %v7668, %v8685
  %v9538 = vadd.f32 %v7899, %v8916
  %v9539 = vadd.f32 %v7901, %v8918
  %v9540 = vadd.f32 %v8132, %v9149
  %v9541 = vadd.f32 %v8134, %v9151
  %v9542 = vadd.f32 %v8349, %v9366
  %v9543 = vadd.f32 %v7672, %v8689
  %v9544 = vadd.f32 %v7674, %v8691
  %v9545 = vadd.f32 %v7905, %v8922
  %v9546 = vadd.f32 %v7907, %v8924
  %v9547 = vadd.f32 %v8138, %v9155
  %v9548 = vadd.f32 %v8140, %v9157
  %v9549 = vadd.f32 %v8354, %v9371
  %v9550 = vadd.f32 %v7678, %v8695
  %v9551 = vadd.f32 %v7680, %v8697
  %v9552 = vadd.f32 %v7911, %v8928
  %v9553 = vadd.f32 %v7913, %v8930
  %v9554 = vadd.f32 %v8144, %v9161
  %v9555 = vadd.f32 %v8146, %v9163
  %v9556 = vadd.f32 %v8359, %v9376
  %v9557 = vadd.f32 %v7684, %v8701
  %v9558 = vadd.f32 %v7686, %v8703
  %v9559 = vadd.f32 %v7917, %v8934
  %v9560 = vadd.f32 %v7919, %v8936
  %v9561 = vadd.f32 %v8150, %v9167
  %v9562 = vadd.f32 %v8152, %v9169
  %v9563 = vadd.f32 %v8364, %v9381
  %v9564 = vadd.f32 %v7690, %v8707
  %v9565 = vadd.f32 %v7692, %v8709
  %v9566 = vadd.f32 %v7923, %v8940
  %v9567 = vadd.f32 %v7925, %v8942
  %v9568 = vadd.f32 %v8156, %v9173
  %v9569 = vadd.f32 %v8158, %v9175
  %v9570 = vadd.f32 %v8369, %v9386
  %v9571 = vadd.f32 %v7696, %v8713
  %v9572 = vadd.f32 %v7698, %v8715
  %v9573 = vadd.f32 %v7929, %v8946
  %v9574 = vadd.f32 %v7931, %v8948
  %v9575 = vadd.f32 %v8162, %v9179
  %v9576 = vadd.f32 %v8164, %v9181
  %v9577 = vadd.f32 %v8374, %v9391
  %v9578 = vadd.f32 %v7702, %v8719
  %v9579 = vadd.f32 %v7704, %v8721
  %v9580 = vadd.f32 %v7935, %v8952
  %v9581 = vadd.f32 %v7937, %v8954
  %v9582 = vadd.f32 %v8168, %v9185
  %v9583 = vadd.f32 %v8170, %v9187
  %v9584 = vadd.f32 %v8379, %v9396
  %v9585 = vadd.f32 %v7708, %v8725
  %v9586 = vadd.f32 %v7710, %v8727
  %v9587 = vadd.f32 %v7941, %v8958
  %v9588 = vadd.f32 %v7943, %v8960
  %v9589 = vadd.f32 %v8174, %v9191
  %v9590 = vadd.f32 %v8176, %v9193
  %v9591 = vadd.f32 %v8384, %v9401
  %v9592 = vadd.f32 %v7714, %v8731
  %v9593 = vadd.f32 %v7716, %v8733
  %v9594 = vadd.f32 %v7947, %v8964
  %v9595 = vadd.f32 %v7949, %v8966
  %v9596 = vadd.f32 %v8180, %v9197
  %v9597 = vadd.f32 %v8182, %v9199
  %v9598 = vadd.f32 %v8389, %v9406
  %v9599 = vadd.f32 %v7720, %v8737
  %v9600 = vadd.f32 %v7722, %v8739
  %v9601 = vadd.f32 %v7953, %v8970
  %v9602 = vadd.f32 %v7955, %v8972
  %v9603 = vadd.f32 %v8186, %v9203
  %v9604 = vadd.f32 %v8188, %v9205
  %v9605 = vadd.f32 %v8394, %v9411
  %v9606 = vadd.f32 %v7726, %v8743
  %v9607 = vadd.f32 %v7728, %v8745
  %v9608 = vadd.f32 %v7959, %v8976
  %v9609 = vadd.f32 %v7961, %v8978
  %v9610 = vadd.f32 %v8192, %v9209
  %v9611 = vadd.f32 %v8194, %v9211
  %v9612 = vadd.f32 %v8399, %v9416
  %v9613 = vadd.f32 %v7732, %v8749
  %v9614 = vadd.f32 %v7734, %v8751
  %v9615 = vadd.f32 %v7965, %v8982
  %v9616 = vadd.f32 %v7967, %v8984
  %v9617 = vadd.f32 %v8198, %v9215
  %v9618 = vadd.f32 %v8200, %v9217
  %v9619 = vadd.f32 %v8404, %v9421
  %v9620 = vld [vmem:[%s4] sm:$0xff]
  %v9621 = vld [vmem:[%s4 + $0x8] sm:$0xff]
  %v9622 = vld [vmem:[%s4 + $0x10] sm:$0xff]
  %v9623 = vld [vmem:[%s4 + $0x18] sm:$0xff]
  %v9624 = vld [vmem:[%s4 + $0x20] sm:$0xff]
  %v9625 = vld [vmem:[%s4 + $0x28] sm:$0xff]
  %v9626 = vld [vmem:[%s4 + $0x30] sm:$0xff]
  %v9627 = vld [vmem:[%s4 + $0x38] sm:$0xff]
  %v9628 = vld [vmem:[%s4 + $0x40] sm:$0xff]
  %v9629 = vld [vmem:[%s4 + $0x48] sm:$0xff]
  %v9630 = vld [vmem:[%s4 + $0x50] sm:$0xff]
  %v9631 = vld [vmem:[%s4 + $0x58] sm:$0xff]
  %v9632 = vld [vmem:[%s4 + $0x60] sm:$0xff]
  %v9633 = vld [vmem:[%s4 + $0x68] sm:$0xff]
  %v9634 = vld [vmem:[%s4 + $0x70] sm:$0xff]
  %v9635 = vld [vmem:[%s4 + $0x78] sm:$0xff]
  %v9636 = vld [vmem:[%s4 + $0x80] sm:$0xff]
  %v9637 = vld [vmem:[%s4 + $0x88] sm:$0xff]
  %v9638 = vld [vmem:[%s4 + $0x90] sm:$0xff]
  %v9639 = vld [vmem:[%s4 + $0x98] sm:$0xff]
  %v9640 = vld [vmem:[%s4 + $0xa0] sm:$0xff]
  %v9641 = vld [vmem:[%s4 + $0xa8] sm:$0xff]
  %v9642 = vld [vmem:[%s4 + $0xb0] sm:$0xff]
  %v9643 = vld [vmem:[%s4 + $0xb8] sm:$0xff]
  %v9644 = vld [vmem:[%s4 + $0xc0] sm:$0xff]
  %v9645 = vld [vmem:[%s4 + $0xc8] sm:$0xff]
  %v9646 = vld [vmem:[%s4 + $0xd0] sm:$0xff]
  %v9647 = vld [vmem:[%s4 + $0xd8] sm:$0xff]
  %9649 = vset.pattern.permute.xlu0 0
  %9650 = vperm.xlu0 %9649, %v9620
  %v9651 = vpop.permute.xlu0 %9650
  %9654 = vset.pattern.permute.xlu0 0
  %9655 = vperm.xlu0 %9654, %v9621
  %v9656 = vpop.permute.xlu0 %9655
  %9659 = vset.pattern.permute.xlu0 0
  %9660 = vperm.xlu0 %9659, %v9622
  %v9661 = vpop.permute.xlu0 %9660
  %9664 = vset.pattern.permute.xlu0 0
  %9665 = vperm.xlu0 %9664, %v9623
  %v9666 = vpop.permute.xlu0 %9665
  %9669 = vset.pattern.permute.xlu0 0
  %9670 = vperm.xlu0 %9669, %v9624
  %v9671 = vpop.permute.xlu0 %9670
  %9674 = vset.pattern.permute.xlu0 0
  %9675 = vperm.xlu0 %9674, %v9625
  %v9676 = vpop.permute.xlu0 %9675
  %9679 = vset.pattern.permute.xlu0 0
  %9680 = vperm.xlu0 %9679, %v9626
  %v9681 = vpop.permute.xlu0 %9680
  %9684 = vset.pattern.permute.xlu0 0
  %9685 = vperm.xlu0 %9684, %v9627
  %v9686 = vpop.permute.xlu0 %9685
  %9689 = vset.pattern.permute.xlu0 0
  %9690 = vperm.xlu0 %9689, %v9628
  %v9691 = vpop.permute.xlu0 %9690
  %9694 = vset.pattern.permute.xlu0 0
  %9695 = vperm.xlu0 %9694, %v9629
  %v9696 = vpop.permute.xlu0 %9695
  %9699 = vset.pattern.permute.xlu0 0
  %9700 = vperm.xlu0 %9699, %v9630
  %v9701 = vpop.permute.xlu0 %9700
  %9704 = vset.pattern.permute.xlu0 0
  %9705 = vperm.xlu0 %9704, %v9631
  %v9706 = vpop.permute.xlu0 %9705
  %9709 = vset.pattern.permute.xlu0 0
  %9710 = vperm.xlu0 %9709, %v9632
  %v9711 = vpop.permute.xlu0 %9710
  %9714 = vset.pattern.permute.xlu0 0
  %9715 = vperm.xlu0 %9714, %v9633
  %v9716 = vpop.permute.xlu0 %9715
  %9719 = vset.pattern.permute.xlu0 0
  %9720 = vperm.xlu0 %9719, %v9634
  %v9721 = vpop.permute.xlu0 %9720
  %9724 = vset.pattern.permute.xlu0 0
  %9725 = vperm.xlu0 %9724, %v9635
  %v9726 = vpop.permute.xlu0 %9725
  %9729 = vset.pattern.permute.xlu0 0
  %9730 = vperm.xlu0 %9729, %v9636
  %v9731 = vpop.permute.xlu0 %9730
  %9734 = vset.pattern.permute.xlu0 0
  %9735 = vperm.xlu0 %9734, %v9637
  %v9736 = vpop.permute.xlu0 %9735
  %9739 = vset.pattern.permute.xlu0 0
  %9740 = vperm.xlu0 %9739, %v9638
  %v9741 = vpop.permute.xlu0 %9740
  %9744 = vset.pattern.permute.xlu0 0
  %9745 = vperm.xlu0 %9744, %v9639
  %v9746 = vpop.permute.xlu0 %9745
  %9749 = vset.pattern.permute.xlu0 0
  %9750 = vperm.xlu0 %9749, %v9640
  %v9751 = vpop.permute.xlu0 %9750
  %9754 = vset.pattern.permute.xlu0 0
  %9755 = vperm.xlu0 %9754, %v9641
  %v9756 = vpop.permute.xlu0 %9755
  %9759 = vset.pattern.permute.xlu0 0
  %9760 = vperm.xlu0 %9759, %v9642
  %v9761 = vpop.permute.xlu0 %9760
  %9764 = vset.pattern.permute.xlu0 0
  %9765 = vperm.xlu0 %9764, %v9643
  %v9766 = vpop.permute.xlu0 %9765
  %9769 = vset.pattern.permute.xlu0 0
  %9770 = vperm.xlu0 %9769, %v9644
  %v9771 = vpop.permute.xlu0 %9770
  %9774 = vset.pattern.permute.xlu0 0
  %9775 = vperm.xlu0 %9774, %v9645
  %v9776 = vpop.permute.xlu0 %9775
  %9779 = vset.pattern.permute.xlu0 0
  %9780 = vperm.xlu0 %9779, %v9646
  %v9781 = vpop.permute.xlu0 %9780
  %9784 = vset.pattern.permute.xlu0 0
  %9785 = vperm.xlu0 %9784, %v9647
  %v9786 = vpop.permute.xlu0 %9785
  %v9788 = vadd.f32 %v9424, %v9651
  %v9789 = vadd.f32 %v9425, %v9651
  %v9790 = vadd.f32 %v9426, %v9651
  %v9791 = vadd.f32 %v9427, %v9651
  %v9792 = vadd.f32 %v9428, %v9651
  %v9793 = vadd.f32 %v9429, %v9651
  %v9794 = vadd.f32 %v9430, %v9651
  %v9795 = vadd.f32 %v9431, %v9656
  %v9796 = vadd.f32 %v9432, %v9656
  %v9797 = vadd.f32 %v9433, %v9656
  %v9798 = vadd.f32 %v9434, %v9656
  %v9799 = vadd.f32 %v9435, %v9656
  %v9800 = vadd.f32 %v9436, %v9656
  %v9801 = vadd.f32 %v9437, %v9656
  %v9802 = vadd.f32 %v9438, %v9661
  %v9803 = vadd.f32 %v9439, %v9661
  %v9804 = vadd.f32 %v9440, %v9661
  %v9805 = vadd.f32 %v9441, %v9661
  %v9806 = vadd.f32 %v9442, %v9661
  %v9807 = vadd.f32 %v9443, %v9661
  %v9808 = vadd.f32 %v9444, %v9661
  %v9809 = vadd.f32 %v9445, %v9666
  %v9810 = vadd.f32 %v9446, %v9666
  %v9811 = vadd.f32 %v9447, %v9666
  %v9812 = vadd.f32 %v9448, %v9666
  %v9813 = vadd.f32 %v9449, %v9666
  %v9814 = vadd.f32 %v9450, %v9666
  %v9815 = vadd.f32 %v9451, %v9666
  %v9816 = vadd.f32 %v9452, %v9671
  %v9817 = vadd.f32 %v9453, %v9671
  %v9818 = vadd.f32 %v9454, %v9671
  %v9819 = vadd.f32 %v9455, %v9671
  %v9820 = vadd.f32 %v9456, %v9671
  %v9821 = vadd.f32 %v9457, %v9671
  %v9822 = vadd.f32 %v9458, %v9671
  %v9823 = vadd.f32 %v9459, %v9676
  %v9824 = vadd.f32 %v9460, %v9676
  %v9825 = vadd.f32 %v9461, %v9676
  %v9826 = vadd.f32 %v9462, %v9676
  %v9827 = vadd.f32 %v9463, %v9676
  %v9828 = vadd.f32 %v9464, %v9676
  %v9829 = vadd.f32 %v9465, %v9676
  %v9830 = vadd.f32 %v9466, %v9681
  %v9831 = vadd.f32 %v9467, %v9681
  %v9832 = vadd.f32 %v9468, %v9681
  %v9833 = vadd.f32 %v9469, %v9681
  %v9834 = vadd.f32 %v9470, %v9681
  %v9835 = vadd.f32 %v9471, %v9681
  %v9836 = vadd.f32 %v9472, %v9681
  %v9837 = vadd.f32 %v9473, %v9686
  %v9838 = vadd.f32 %v9474, %v9686
  %v9839 = vadd.f32 %v9475, %v9686
  %v9840 = vadd.f32 %v9476, %v9686
  %v9841 = vadd.f32 %v9477, %v9686
  %v9842 = vadd.f32 %v9478, %v9686
  %v9843 = vadd.f32 %v9479, %v9686
  %v9844 = vadd.f32 %v9480, %v9691
  %v9845 = vadd.f32 %v9481, %v9691
  %v9846 = vadd.f32 %v9482, %v9691
  %v9847 = vadd.f32 %v9483, %v9691
  %v9848 = vadd.f32 %v9484, %v9691
  %v9849 = vadd.f32 %v9485, %v9691
  %v9850 = vadd.f32 %v9486, %v9691
  %v9851 = vadd.f32 %v9487, %v9696
  %v9852 = vadd.f32 %v9488, %v9696
  %v9853 = vadd.f32 %v9489, %v9696
  %v9854 = vadd.f32 %v9490, %v9696
  %v9855 = vadd.f32 %v9491, %v9696
  %v9856 = vadd.f32 %v9492, %v9696
  %v9857 = vadd.f32 %v9493, %v9696
  %v9858 = vadd.f32 %v9494, %v9701
  %v9859 = vadd.f32 %v9495, %v9701
  %v9860 = vadd.f32 %v9496, %v9701
  %v9861 = vadd.f32 %v9497, %v9701
  %v9862 = vadd.f32 %v9498, %v9701
  %v9863 = vadd.f32 %v9499, %v9701
  %v9864 = vadd.f32 %v9500, %v9701
  %v9865 = vadd.f32 %v9501, %v9706
  %v9866 = vadd.f32 %v9502, %v9706
  %v9867 = vadd.f32 %v9503, %v9706
  %v9868 = vadd.f32 %v9504, %v9706
  %v9869 = vadd.f32 %v9505, %v9706
  %v9870 = vadd.f32 %v9506, %v9706
  %v9871 = vadd.f32 %v9507, %v9706
  %v9872 = vadd.f32 %v9508, %v9711
  %v9873 = vadd.f32 %v9509, %v9711
  %v9874 = vadd.f32 %v9510, %v9711
  %v9875 = vadd.f32 %v9511, %v9711
  %v9876 = vadd.f32 %v9512, %v9711
  %v9877 = vadd.f32 %v9513, %v9711
  %v9878 = vadd.f32 %v9514, %v9711
  %v9879 = vadd.f32 %v9515, %v9716
  %v9880 = vadd.f32 %v9516, %v9716
  %v9881 = vadd.f32 %v9517, %v9716
  %v9882 = vadd.f32 %v9518, %v9716
  %v9883 = vadd.f32 %v9519, %v9716
  %v9884 = vadd.f32 %v9520, %v9716
  %v9885 = vadd.f32 %v9521, %v9716
  %v9886 = vadd.f32 %v9522, %v9721
  %v9887 = vadd.f32 %v9523, %v9721
  %v9888 = vadd.f32 %v9524, %v9721
  %v9889 = vadd.f32 %v9525, %v9721
  %v9890 = vadd.f32 %v9526, %v9721
  %v9891 = vadd.f32 %v9527, %v9721
  %v9892 = vadd.f32 %v9528, %v9721
  %v9893 = vadd.f32 %v9529, %v9726
  %v9894 = vadd.f32 %v9530, %v9726
  %v9895 = vadd.f32 %v9531, %v9726
  %v9896 = vadd.f32 %v9532, %v9726
  %v9897 = vadd.f32 %v9533, %v9726
  %v9898 = vadd.f32 %v9534, %v9726
  %v9899 = vadd.f32 %v9535, %v9726
  %v9900 = vadd.f32 %v9536, %v9731
  %v9901 = vadd.f32 %v9537, %v9731
  %v9902 = vadd.f32 %v9538, %v9731
  %v9903 = vadd.f32 %v9539, %v9731
  %v9904 = vadd.f32 %v9540, %v9731
  %v9905 = vadd.f32 %v9541, %v9731
  %v9906 = vadd.f32 %v9542, %v9731
  %v9907 = vadd.f32 %v9543, %v9736
  %v9908 = vadd.f32 %v9544, %v9736
  %v9909 = vadd.f32 %v9545, %v9736
  %v9910 = vadd.f32 %v9546, %v9736
  %v9911 = vadd.f32 %v9547, %v9736
  %v9912 = vadd.f32 %v9548, %v9736
  %v9913 = vadd.f32 %v9549, %v9736
  %v9914 = vadd.f32 %v9550, %v9741
  %v9915 = vadd.f32 %v9551, %v9741
  %v9916 = vadd.f32 %v9552, %v9741
  %v9917 = vadd.f32 %v9553, %v9741
  %v9918 = vadd.f32 %v9554, %v9741
  %v9919 = vadd.f32 %v9555, %v9741
  %v9920 = vadd.f32 %v9556, %v9741
  %v9921 = vadd.f32 %v9557, %v9746
  %v9922 = vadd.f32 %v9558, %v9746
  %v9923 = vadd.f32 %v9559, %v9746
  %v9924 = vadd.f32 %v9560, %v9746
  %v9925 = vadd.f32 %v9561, %v9746
  %v9926 = vadd.f32 %v9562, %v9746
  %v9927 = vadd.f32 %v9563, %v9746
  %v9928 = vadd.f32 %v9564, %v9751
  %v9929 = vadd.f32 %v9565, %v9751
  %v9930 = vadd.f32 %v9566, %v9751
  %v9931 = vadd.f32 %v9567, %v9751
  %v9932 = vadd.f32 %v9568, %v9751
  %v9933 = vadd.f32 %v9569, %v9751
  %v9934 = vadd.f32 %v9570, %v9751
  %v9935 = vadd.f32 %v9571, %v9756
  %v9936 = vadd.f32 %v9572, %v9756
  %v9937 = vadd.f32 %v9573, %v9756
  %v9938 = vadd.f32 %v9574, %v9756
  %v9939 = vadd.f32 %v9575, %v9756
  %v9940 = vadd.f32 %v9576, %v9756
  %v9941 = vadd.f32 %v9577, %v9756
  %v9942 = vadd.f32 %v9578, %v9761
  %v9943 = vadd.f32 %v9579, %v9761
  %v9944 = vadd.f32 %v9580, %v9761
  %v9945 = vadd.f32 %v9581, %v9761
  %v9946 = vadd.f32 %v9582, %v9761
  %v9947 = vadd.f32 %v9583, %v9761
  %v9948 = vadd.f32 %v9584, %v9761
  %v9949 = vadd.f32 %v9585, %v9766
  %v9950 = vadd.f32 %v9586, %v9766
  %v9951 = vadd.f32 %v9587, %v9766
  %v9952 = vadd.f32 %v9588, %v9766
  %v9953 = vadd.f32 %v9589, %v9766
  %v9954 = vadd.f32 %v9590, %v9766
  %v9955 = vadd.f32 %v9591, %v9766
  %v9956 = vadd.f32 %v9592, %v9771
  %v9957 = vadd.f32 %v9593, %v9771
  %v9958 = vadd.f32 %v9594, %v9771
  %v9959 = vadd.f32 %v9595, %v9771
  %v9960 = vadd.f32 %v9596, %v9771
  %v9961 = vadd.f32 %v9597, %v9771
  %v9962 = vadd.f32 %v9598, %v9771
  %v9963 = vadd.f32 %v9599, %v9776
  %v9964 = vadd.f32 %v9600, %v9776
  %v9965 = vadd.f32 %v9601, %v9776
  %v9966 = vadd.f32 %v9602, %v9776
  %v9967 = vadd.f32 %v9603, %v9776
  %v9968 = vadd.f32 %v9604, %v9776
  %v9969 = vadd.f32 %v9605, %v9776
  %v9970 = vadd.f32 %v9606, %v9781
  %v9971 = vadd.f32 %v9607, %v9781
  %v9972 = vadd.f32 %v9608, %v9781
  %v9973 = vadd.f32 %v9609, %v9781
  %v9974 = vadd.f32 %v9610, %v9781
  %v9975 = vadd.f32 %v9611, %v9781
  %v9976 = vadd.f32 %v9612, %v9781
  %v9977 = vadd.f32 %v9613, %v9786
  %v9978 = vadd.f32 %v9614, %v9786
  %v9979 = vadd.f32 %v9615, %v9786
  %v9980 = vadd.f32 %v9616, %v9786
  %v9981 = vadd.f32 %v9617, %v9786
  %v9982 = vadd.f32 %v9618, %v9786
  %v9983 = vadd.f32 %v9619, %v9786
  %v9984 = vmax.f32 %v9788, 0.0
  %v9985 = vmax.f32 %v9789, 0.0
  %v9986 = vmax.f32 %v9790, 0.0
  %v9987 = vmax.f32 %v9791, 0.0
  %v9988 = vmax.f32 %v9792, 0.0
  %v9989 = vmax.f32 %v9793, 0.0
  %v9990 = vmax.f32 %v9794, 0.0
  %v9991 = vmax.f32 %v9795, 0.0
  %v9992 = vmax.f32 %v9796, 0.0
  %v9993 = vmax.f32 %v9797, 0.0
  %v9994 = vmax.f32 %v9798, 0.0
  %v9995 = vmax.f32 %v9799, 0.0
  %v9996 = vmax.f32 %v9800, 0.0
  %v9997 = vmax.f32 %v9801, 0.0
  %v9998 = vmax.f32 %v9802, 0.0
  %v9999 = vmax.f32 %v9803, 0.0
  %v10000 = vmax.f32 %v9804, 0.0
  %v10001 = vmax.f32 %v9805, 0.0
  %v10002 = vmax.f32 %v9806, 0.0
  %v10003 = vmax.f32 %v9807, 0.0
  %v10004 = vmax.f32 %v9808, 0.0
  %v10005 = vmax.f32 %v9809, 0.0
  %v10006 = vmax.f32 %v9810, 0.0
  %v10007 = vmax.f32 %v9811, 0.0
  %v10008 = vmax.f32 %v9812, 0.0
  %v10009 = vmax.f32 %v9813, 0.0
  %v10010 = vmax.f32 %v9814, 0.0
  %v10011 = vmax.f32 %v9815, 0.0
  %v10012 = vmax.f32 %v9816, 0.0
  %v10013 = vmax.f32 %v9817, 0.0
  %v10014 = vmax.f32 %v9818, 0.0
  %v10015 = vmax.f32 %v9819, 0.0
  %v10016 = vmax.f32 %v9820, 0.0
  %v10017 = vmax.f32 %v9821, 0.0
  %v10018 = vmax.f32 %v9822, 0.0
  %v10019 = vmax.f32 %v9823, 0.0
  %v10020 = vmax.f32 %v9824, 0.0
  %v10021 = vmax.f32 %v9825, 0.0
  %v10022 = vmax.f32 %v9826, 0.0
  %v10023 = vmax.f32 %v9827, 0.0
  %v10024 = vmax.f32 %v9828, 0.0
  %v10025 = vmax.f32 %v9829, 0.0
  %v10026 = vmax.f32 %v9830, 0.0
  %v10027 = vmax.f32 %v9831, 0.0
  %v10028 = vmax.f32 %v9832, 0.0
  %v10029 = vmax.f32 %v9833, 0.0
  %v10030 = vmax.f32 %v9834, 0.0
  %v10031 = vmax.f32 %v9835, 0.0
  %v10032 = vmax.f32 %v9836, 0.0
  %v10033 = vmax.f32 %v9837, 0.0
  %v10034 = vmax.f32 %v9838, 0.0
  %v10035 = vmax.f32 %v9839, 0.0
  %v10036 = vmax.f32 %v9840, 0.0
  %v10037 = vmax.f32 %v9841, 0.0
  %v10038 = vmax.f32 %v9842, 0.0
  %v10039 = vmax.f32 %v9843, 0.0
  %v10040 = vmax.f32 %v9844, 0.0
  %v10041 = vmax.f32 %v9845, 0.0
  %v10042 = vmax.f32 %v9846, 0.0
  %v10043 = vmax.f32 %v9847, 0.0
  %v10044 = vmax.f32 %v9848, 0.0
  %v10045 = vmax.f32 %v9849, 0.0
  %v10046 = vmax.f32 %v9850, 0.0
  %v10047 = vmax.f32 %v9851, 0.0
  %v10048 = vmax.f32 %v9852, 0.0
  %v10049 = vmax.f32 %v9853, 0.0
  %v10050 = vmax.f32 %v9854, 0.0
  %v10051 = vmax.f32 %v9855, 0.0
  %v10052 = vmax.f32 %v9856, 0.0
  %v10053 = vmax.f32 %v9857, 0.0
  %v10054 = vmax.f32 %v9858, 0.0
  %v10055 = vmax.f32 %v9859, 0.0
  %v10056 = vmax.f32 %v9860, 0.0
  %v10057 = vmax.f32 %v9861, 0.0
  %v10058 = vmax.f32 %v9862, 0.0
  %v10059 = vmax.f32 %v9863, 0.0
  %v10060 = vmax.f32 %v9864, 0.0
  %v10061 = vmax.f32 %v9865, 0.0
  %v10062 = vmax.f32 %v9866, 0.0
  %v10063 = vmax.f32 %v9867, 0.0
  %v10064 = vmax.f32 %v9868, 0.0
  %v10065 = vmax.f32 %v9869, 0.0
  %v10066 = vmax.f32 %v9870, 0.0
  %v10067 = vmax.f32 %v9871, 0.0
  %v10068 = vmax.f32 %v9872, 0.0
  %v10069 = vmax.f32 %v9873, 0.0
  %v10070 = vmax.f32 %v9874, 0.0
  %v10071 = vmax.f32 %v9875, 0.0
  %v10072 = vmax.f32 %v9876, 0.0
  %v10073 = vmax.f32 %v9877, 0.0
  %v10074 = vmax.f32 %v9878, 0.0
  %v10075 = vmax.f32 %v9879, 0.0
  %v10076 = vmax.f32 %v9880, 0.0
  %v10077 = vmax.f32 %v9881, 0.0
  %v10078 = vmax.f32 %v9882, 0.0
  %v10079 = vmax.f32 %v9883, 0.0
  %v10080 = vmax.f32 %v9884, 0.0
  %v10081 = vmax.f32 %v9885, 0.0
  %v10082 = vmax.f32 %v9886, 0.0
  %v10083 = vmax.f32 %v9887, 0.0
  %v10084 = vmax.f32 %v9888, 0.0
  %v10085 = vmax.f32 %v9889, 0.0
  %v10086 = vmax.f32 %v9890, 0.0
  %v10087 = vmax.f32 %v9891, 0.0
  %v10088 = vmax.f32 %v9892, 0.0
  %v10089 = vmax.f32 %v9893, 0.0
  %v10090 = vmax.f32 %v9894, 0.0
  %v10091 = vmax.f32 %v9895, 0.0
  %v10092 = vmax.f32 %v9896, 0.0
  %v10093 = vmax.f32 %v9897, 0.0
  %v10094 = vmax.f32 %v9898, 0.0
  %v10095 = vmax.f32 %v9899, 0.0
  %v10096 = vmax.f32 %v9900, 0.0
  %v10097 = vmax.f32 %v9901, 0.0
  %v10098 = vmax.f32 %v9902, 0.0
  %v10099 = vmax.f32 %v9903, 0.0
  %v10100 = vmax.f32 %v9904, 0.0
  %v10101 = vmax.f32 %v9905, 0.0
  %v10102 = vmax.f32 %v9906, 0.0
  %v10103 = vmax.f32 %v9907, 0.0
  %v10104 = vmax.f32 %v9908, 0.0
  %v10105 = vmax.f32 %v9909, 0.0
  %v10106 = vmax.f32 %v9910, 0.0
  %v10107 = vmax.f32 %v9911, 0.0
  %v10108 = vmax.f32 %v9912, 0.0
  %v10109 = vmax.f32 %v9913, 0.0
  %v10110 = vmax.f32 %v9914, 0.0
  %v10111 = vmax.f32 %v9915, 0.0
  %v10112 = vmax.f32 %v9916, 0.0
  %v10113 = vmax.f32 %v9917, 0.0
  %v10114 = vmax.f32 %v9918, 0.0
  %v10115 = vmax.f32 %v9919, 0.0
  %v10116 = vmax.f32 %v9920, 0.0
  %v10117 = vmax.f32 %v9921, 0.0
  %v10118 = vmax.f32 %v9922, 0.0
  %v10119 = vmax.f32 %v9923, 0.0
  %v10120 = vmax.f32 %v9924, 0.0
  %v10121 = vmax.f32 %v9925, 0.0
  %v10122 = vmax.f32 %v9926, 0.0
  %v10123 = vmax.f32 %v9927, 0.0
  %v10124 = vmax.f32 %v9928, 0.0
  %v10125 = vmax.f32 %v9929, 0.0
  %v10126 = vmax.f32 %v9930, 0.0
  %v10127 = vmax.f32 %v9931, 0.0
  %v10128 = vmax.f32 %v9932, 0.0
  %v10129 = vmax.f32 %v9933, 0.0
  %v10130 = vmax.f32 %v9934, 0.0
  %v10131 = vmax.f32 %v9935, 0.0
  %v10132 = vmax.f32 %v9936, 0.0
  %v10133 = vmax.f32 %v9937, 0.0
  %v10134 = vmax.f32 %v9938, 0.0
  %v10135 = vmax.f32 %v9939, 0.0
  %v10136 = vmax.f32 %v9940, 0.0
  %v10137 = vmax.f32 %v9941, 0.0
  %v10138 = vmax.f32 %v9942, 0.0
  %v10139 = vmax.f32 %v9943, 0.0
  %v10140 = vmax.f32 %v9944, 0.0
  %v10141 = vmax.f32 %v9945, 0.0
  %v10142 = vmax.f32 %v9946, 0.0
  %v10143 = vmax.f32 %v9947, 0.0
  %v10144 = vmax.f32 %v9948, 0.0
  %v10145 = vmax.f32 %v9949, 0.0
  %v10146 = vmax.f32 %v9950, 0.0
  %v10147 = vmax.f32 %v9951, 0.0
  %v10148 = vmax.f32 %v9952, 0.0
  %v10149 = vmax.f32 %v9953, 0.0
  %v10150 = vmax.f32 %v9954, 0.0
  %v10151 = vmax.f32 %v9955, 0.0
  %v10152 = vmax.f32 %v9956, 0.0
  %v10153 = vmax.f32 %v9957, 0.0
  %v10154 = vmax.f32 %v9958, 0.0
  %v10155 = vmax.f32 %v9959, 0.0
  %v10156 = vmax.f32 %v9960, 0.0
  %v10157 = vmax.f32 %v9961, 0.0
  %v10158 = vmax.f32 %v9962, 0.0
  %v10159 = vmax.f32 %v9963, 0.0
  %v10160 = vmax.f32 %v9964, 0.0
  %v10161 = vmax.f32 %v9965, 0.0
  %v10162 = vmax.f32 %v9966, 0.0
  %v10163 = vmax.f32 %v9967, 0.0
  %v10164 = vmax.f32 %v9968, 0.0
  %v10165 = vmax.f32 %v9969, 0.0
  %v10166 = vmax.f32 %v9970, 0.0
  %v10167 = vmax.f32 %v9971, 0.0
  %v10168 = vmax.f32 %v9972, 0.0
  %v10169 = vmax.f32 %v9973, 0.0
  %v10170 = vmax.f32 %v9974, 0.0
  %v10171 = vmax.f32 %v9975, 0.0
  %v10172 = vmax.f32 %v9976, 0.0
  %v10173 = vmax.f32 %v9977, 0.0
  %v10174 = vmax.f32 %v9978, 0.0
  %v10175 = vmax.f32 %v9979, 0.0
  %v10176 = vmax.f32 %v9980, 0.0
  %v10177 = vmax.f32 %v9981, 0.0
  %v10178 = vmax.f32 %v9982, 0.0
  %v10179 = vmax.f32 %v9983, 0.0
  %v10180 = vrot.slane %v9984, 1
  %v10181 = vrot.slane %v9985, 1
  %v10182 = vrot.slane %v9986, 1
  %v10183 = vrot.slane %v9987, 1
  %v10184 = vrot.slane %v9988, 1
  %v10185 = vrot.slane %v9989, 1
  %v10186 = vrot.slane %v9990, 1
  %v10187 = vrot.slane %v9991, 1
  %v10188 = vrot.slane %v9992, 1
  %v10189 = vrot.slane %v9993, 1
  %v10190 = vrot.slane %v9994, 1
  %v10191 = vrot.slane %v9995, 1
  %v10192 = vrot.slane %v9996, 1
  %v10193 = vrot.slane %v9997, 1
  %v10194 = vrot.slane %v9998, 1
  %v10195 = vrot.slane %v9999, 1
  %v10196 = vrot.slane %v10000, 1
  %v10197 = vrot.slane %v10001, 1
  %v10198 = vrot.slane %v10002, 1
  %v10199 = vrot.slane %v10003, 1
  %v10200 = vrot.slane %v10004, 1
  %v10201 = vrot.slane %v10005, 1
  %v10202 = vrot.slane %v10006, 1
  %v10203 = vrot.slane %v10007, 1
  %v10204 = vrot.slane %v10008, 1
  %v10205 = vrot.slane %v10009, 1
  %v10206 = vrot.slane %v10010, 1
  %v10207 = vrot.slane %v10011, 1
  %v10208 = vrot.slane %v10012, 1
  %v10209 = vrot.slane %v10013, 1
  %v10210 = vrot.slane %v10014, 1
  %v10211 = vrot.slane %v10015, 1
  %v10212 = vrot.slane %v10016, 1
  %v10213 = vrot.slane %v10017, 1
  %v10214 = vrot.slane %v10018, 1
  %v10215 = vrot.slane %v10019, 1
  %v10216 = vrot.slane %v10020, 1
  %v10217 = vrot.slane %v10021, 1
  %v10218 = vrot.slane %v10022, 1
  %v10219 = vrot.slane %v10023, 1
  %v10220 = vrot.slane %v10024, 1
  %v10221 = vrot.slane %v10025, 1
  %v10222 = vrot.slane %v10026, 1
  %v10223 = vrot.slane %v10027, 1
  %v10224 = vrot.slane %v10028, 1
  %v10225 = vrot.slane %v10029, 1
  %v10226 = vrot.slane %v10030, 1
  %v10227 = vrot.slane %v10031, 1
  %v10228 = vrot.slane %v10032, 1
  %v10229 = vrot.slane %v10033, 1
  %v10230 = vrot.slane %v10034, 1
  %v10231 = vrot.slane %v10035, 1
  %v10232 = vrot.slane %v10036, 1
  %v10233 = vrot.slane %v10037, 1
  %v10234 = vrot.slane %v10038, 1
  %v10235 = vrot.slane %v10039, 1
  %v10236 = vrot.slane %v10040, 1
  %v10237 = vrot.slane %v10041, 1
  %v10238 = vrot.slane %v10042, 1
  %v10239 = vrot.slane %v10043, 1
  %v10240 = vrot.slane %v10044, 1
  %v10241 = vrot.slane %v10045, 1
  %v10242 = vrot.slane %v10046, 1
  %v10243 = vrot.slane %v10047, 1
  %v10244 = vrot.slane %v10048, 1
  %v10245 = vrot.slane %v10049, 1
  %v10246 = vrot.slane %v10050, 1
  %v10247 = vrot.slane %v10051, 1
  %v10248 = vrot.slane %v10052, 1
  %v10249 = vrot.slane %v10053, 1
  %v10250 = vrot.slane %v10054, 1
  %v10251 = vrot.slane %v10055, 1
  %v10252 = vrot.slane %v10056, 1
  %v10253 = vrot.slane %v10057, 1
  %v10254 = vrot.slane %v10058, 1
  %v10255 = vrot.slane %v10059, 1
  %v10256 = vrot.slane %v10060, 1
  %v10257 = vrot.slane %v10061, 1
  %v10258 = vrot.slane %v10062, 1
  %v10259 = vrot.slane %v10063, 1
  %v10260 = vrot.slane %v10064, 1
  %v10261 = vrot.slane %v10065, 1
  %v10262 = vrot.slane %v10066, 1
  %v10263 = vrot.slane %v10067, 1
  %v10264 = vrot.slane %v10068, 1
  %v10265 = vrot.slane %v10069, 1
  %v10266 = vrot.slane %v10070, 1
  %v10267 = vrot.slane %v10071, 1
  %v10268 = vrot.slane %v10072, 1
  %v10269 = vrot.slane %v10073, 1
  %v10270 = vrot.slane %v10074, 1
  %v10271 = vrot.slane %v10075, 1
  %v10272 = vrot.slane %v10076, 1
  %v10273 = vrot.slane %v10077, 1
  %v10274 = vrot.slane %v10078, 1
  %v10275 = vrot.slane %v10079, 1
  %v10276 = vrot.slane %v10080, 1
  %v10277 = vrot.slane %v10081, 1
  %v10278 = vrot.slane %v10082, 1
  %v10279 = vrot.slane %v10083, 1
  %v10280 = vrot.slane %v10084, 1
  %v10281 = vrot.slane %v10085, 1
  %v10282 = vrot.slane %v10086, 1
  %v10283 = vrot.slane %v10087, 1
  %v10284 = vrot.slane %v10088, 1
  %v10285 = vrot.slane %v10089, 1
  %v10286 = vrot.slane %v10090, 1
  %v10287 = vrot.slane %v10091, 1
  %v10288 = vrot.slane %v10092, 1
  %v10289 = vrot.slane %v10093, 1
  %v10290 = vrot.slane %v10094, 1
  %v10291 = vrot.slane %v10095, 1
  %v10292 = vrot.slane %v10096, 1
  %v10293 = vrot.slane %v10097, 1
  %v10294 = vrot.slane %v10098, 1
  %v10295 = vrot.slane %v10099, 1
  %v10296 = vrot.slane %v10100, 1
  %v10297 = vrot.slane %v10101, 1
  %v10298 = vrot.slane %v10102, 1
  %v10299 = vrot.slane %v10103, 1
  %v10300 = vrot.slane %v10104, 1
  %v10301 = vrot.slane %v10105, 1
  %v10302 = vrot.slane %v10106, 1
  %v10303 = vrot.slane %v10107, 1
  %v10304 = vrot.slane %v10108, 1
  %v10305 = vrot.slane %v10109, 1
  %v10306 = vrot.slane %v10110, 1
  %v10307 = vrot.slane %v10111, 1
  %v10308 = vrot.slane %v10112, 1
  %v10309 = vrot.slane %v10113, 1
  %v10310 = vrot.slane %v10114, 1
  %v10311 = vrot.slane %v10115, 1
  %v10312 = vrot.slane %v10116, 1
  %v10313 = vrot.slane %v10117, 1
  %v10314 = vrot.slane %v10118, 1
  %v10315 = vrot.slane %v10119, 1
  %v10316 = vrot.slane %v10120, 1
  %v10317 = vrot.slane %v10121, 1
  %v10318 = vrot.slane %v10122, 1
  %v10319 = vrot.slane %v10123, 1
  %v10320 = vrot.slane %v10124, 1
  %v10321 = vrot.slane %v10125, 1
  %v10322 = vrot.slane %v10126, 1
  %v10323 = vrot.slane %v10127, 1
  %v10324 = vrot.slane %v10128, 1
  %v10325 = vrot.slane %v10129, 1
  %v10326 = vrot.slane %v10130, 1
  %v10327 = vrot.slane %v10131, 1
  %v10328 = vrot.slane %v10132, 1
  %v10329 = vrot.slane %v10133, 1
  %v10330 = vrot.slane %v10134, 1
  %v10331 = vrot.slane %v10135, 1
  %v10332 = vrot.slane %v10136, 1
  %v10333 = vrot.slane %v10137, 1
  %v10334 = vrot.slane %v10138, 1
  %v10335 = vrot.slane %v10139, 1
  %v10336 = vrot.slane %v10140, 1
  %v10337 = vrot.slane %v10141, 1
  %v10338 = vrot.slane %v10142, 1
  %v10339 = vrot.slane %v10143, 1
  %v10340 = vrot.slane %v10144, 1
  %v10341 = vrot.slane %v10145, 1
  %v10342 = vrot.slane %v10146, 1
  %v10343 = vrot.slane %v10147, 1
  %v10344 = vrot.slane %v10148, 1
  %v10345 = vrot.slane %v10149, 1
  %v10346 = vrot.slane %v10150, 1
  %v10347 = vrot.slane %v10151, 1
  %v10348 = vrot.slane %v10152, 1
  %v10349 = vrot.slane %v10153, 1
  %v10350 = vrot.slane %v10154, 1
  %v10351 = vrot.slane %v10155, 1
  %v10352 = vrot.slane %v10156, 1
  %v10353 = vrot.slane %v10157, 1
  %v10354 = vrot.slane %v10158, 1
  %v10355 = vrot.slane %v10159, 1
  %v10356 = vrot.slane %v10160, 1
  %v10357 = vrot.slane %v10161, 1
  %v10358 = vrot.slane %v10162, 1
  %v10359 = vrot.slane %v10163, 1
  %v10360 = vrot.slane %v10164, 1
  %v10361 = vrot.slane %v10165, 1
  %v10362 = vrot.slane %v10166, 1
  %v10363 = vrot.slane %v10167, 1
  %v10364 = vrot.slane %v10168, 1
  %v10365 = vrot.slane %v10169, 1
  %v10366 = vrot.slane %v10170, 1
  %v10367 = vrot.slane %v10171, 1
  %v10368 = vrot.slane %v10172, 1
  %v10369 = vrot.slane %v10173, 1
  %v10370 = vrot.slane %v10174, 1
  %v10371 = vrot.slane %v10175, 1
  %v10372 = vrot.slane %v10176, 1
  %v10373 = vrot.slane %v10177, 1
  %v10374 = vrot.slane %v10178, 1
  %v10375 = vrot.slane %v10179, 1
  %v10376 = vsel %vm4430, %v10362, %v10369
  %v10377 = vsel %vm4430, %v10363, %v10370
  %v10378 = vsel %vm4430, %v10364, %v10371
  %v10379 = vsel %vm4430, %v10365, %v10372
  %v10380 = vsel %vm4430, %v10366, %v10373
  %v10381 = vsel %vm4430, %v10367, %v10374
  %v10382 = vsel %vm4430, %v10368, %v10375
  %v10383 = vsel %vm4430, %v10355, %v10362
  %v10384 = vsel %vm4430, %v10356, %v10363
  %v10385 = vsel %vm4430, %v10357, %v10364
  %v10386 = vsel %vm4430, %v10358, %v10365
  %v10387 = vsel %vm4430, %v10359, %v10366
  %v10388 = vsel %vm4430, %v10360, %v10367
  %v10389 = vsel %vm4430, %v10361, %v10368
  %v10390 = vsel %vm4430, %v10348, %v10355
  %v10391 = vsel %vm4430, %v10349, %v10356
  %v10392 = vsel %vm4430, %v10350, %v10357
  %v10393 = vsel %vm4430, %v10351, %v10358
  %v10394 = vsel %vm4430, %v10352, %v10359
  %v10395 = vsel %vm4430, %v10353, %v10360
  %v10396 = vsel %vm4430, %v10354, %v10361
  %v10397 = vsel %vm4430, %v10341, %v10348
  %v10398 = vsel %vm4430, %v10342, %v10349
  %v10399 = vsel %vm4430, %v10343, %v10350
  %v10400 = vsel %vm4430, %v10344, %v10351
  %v10401 = vsel %vm4430, %v10345, %v10352
  %v10402 = vsel %vm4430, %v10346, %v10353
  %v10403 = vsel %vm4430, %v10347, %v10354
  %v10404 = vsel %vm4430, %v10334, %v10341
  %v10405 = vsel %vm4430, %v10335, %v10342
  %v10406 = vsel %vm4430, %v10336, %v10343
  %v10407 = vsel %vm4430, %v10337, %v10344
  %v10408 = vsel %vm4430, %v10338, %v10345
  %v10409 = vsel %vm4430, %v10339, %v10346
  %v10410 = vsel %vm4430, %v10340, %v10347
  %v10411 = vsel %vm4430, %v10327, %v10334
  %v10412 = vsel %vm4430, %v10328, %v10335
  %v10413 = vsel %vm4430, %v10329, %v10336
  %v10414 = vsel %vm4430, %v10330, %v10337
  %v10415 = vsel %vm4430, %v10331, %v10338
  %v10416 = vsel %vm4430, %v10332, %v10339
  %v10417 = vsel %vm4430, %v10333, %v10340
  %v10418 = vsel %vm4430, %v10320, %v10327
  %v10419 = vsel %vm4430, %v10321, %v10328
  %v10420 = vsel %vm4430, %v10322, %v10329
  %v10421 = vsel %vm4430, %v10323, %v10330
  %v10422 = vsel %vm4430, %v10324, %v10331
  %v10423 = vsel %vm4430, %v10325, %v10332
  %v10424 = vsel %vm4430, %v10326, %v10333
  %v10425 = vsel %vm4430, %v10313, %v10320
  %v10426 = vsel %vm4430, %v10314, %v10321
  %v10427 = vsel %vm4430, %v10315, %v10322
  %v10428 = vsel %vm4430, %v10316, %v10323
  %v10429 = vsel %vm4430, %v10317, %v10324
  %v10430 = vsel %vm4430, %v10318, %v10325
  %v10431 = vsel %vm4430, %v10319, %v10326
  %v10432 = vsel %vm4430, %v10306, %v10313
  %v10433 = vsel %vm4430, %v10307, %v10314
  %v10434 = vsel %vm4430, %v10308, %v10315
  %v10435 = vsel %vm4430, %v10309, %v10316
  %v10436 = vsel %vm4430, %v10310, %v10317
  %v10437 = vsel %vm4430, %v10311, %v10318
  %v10438 = vsel %vm4430, %v10312, %v10319
  %v10439 = vsel %vm4430, %v10299, %v10306
  %v10440 = vsel %vm4430, %v10300, %v10307
  %v10441 = vsel %vm4430, %v10301, %v10308
  %v10442 = vsel %vm4430, %v10302, %v10309
  %v10443 = vsel %vm4430, %v10303, %v10310
  %v10444 = vsel %vm4430, %v10304, %v10311
  %v10445 = vsel %vm4430, %v10305, %v10312
  %v10446 = vsel %vm4430, %v10292, %v10299
  %v10447 = vsel %vm4430, %v10293, %v10300
  %v10448 = vsel %vm4430, %v10294, %v10301
  %v10449 = vsel %vm4430, %v10295, %v10302
  %v10450 = vsel %vm4430, %v10296, %v10303
  %v10451 = vsel %vm4430, %v10297, %v10304
  %v10452 = vsel %vm4430, %v10298, %v10305
  %v10453 = vsel %vm4430, %v10285, %v10292
  %v10454 = vsel %vm4430, %v10286, %v10293
  %v10455 = vsel %vm4430, %v10287, %v10294
  %v10456 = vsel %vm4430, %v10288, %v10295
  %v10457 = vsel %vm4430, %v10289, %v10296
  %v10458 = vsel %vm4430, %v10290, %v10297
  %v10459 = vsel %vm4430, %v10291, %v10298
  %v10460 = vsel %vm4430, %v10278, %v10285
  %v10461 = vsel %vm4430, %v10279, %v10286
  %v10462 = vsel %vm4430, %v10280, %v10287
  %v10463 = vsel %vm4430, %v10281, %v10288
  %v10464 = vsel %vm4430, %v10282, %v10289
  %v10465 = vsel %vm4430, %v10283, %v10290
  %v10466 = vsel %vm4430, %v10284, %v10291
  %v10467 = vsel %vm4430, %v10271, %v10278
  %v10468 = vsel %vm4430, %v10272, %v10279
  %v10469 = vsel %vm4430, %v10273, %v10280
  %v10470 = vsel %vm4430, %v10274, %v10281
  %v10471 = vsel %vm4430, %v10275, %v10282
  %v10472 = vsel %vm4430, %v10276, %v10283
  %v10473 = vsel %vm4430, %v10277, %v10284
  %v10474 = vsel %vm4430, %v10264, %v10271
  %v10475 = vsel %vm4430, %v10265, %v10272
  %v10476 = vsel %vm4430, %v10266, %v10273
  %v10477 = vsel %vm4430, %v10267, %v10274
  %v10478 = vsel %vm4430, %v10268, %v10275
  %v10479 = vsel %vm4430, %v10269, %v10276
  %v10480 = vsel %vm4430, %v10270, %v10277
  %v10481 = vsel %vm4430, %v10257, %v10264
  %v10482 = vsel %vm4430, %v10258, %v10265
  %v10483 = vsel %vm4430, %v10259, %v10266
  %v10484 = vsel %vm4430, %v10260, %v10267
  %v10485 = vsel %vm4430, %v10261, %v10268
  %v10486 = vsel %vm4430, %v10262, %v10269
  %v10487 = vsel %vm4430, %v10263, %v10270
  %v10488 = vsel %vm4430, %v10250, %v10257
  %v10489 = vsel %vm4430, %v10251, %v10258
  %v10490 = vsel %vm4430, %v10252, %v10259
  %v10491 = vsel %vm4430, %v10253, %v10260
  %v10492 = vsel %vm4430, %v10254, %v10261
  %v10493 = vsel %vm4430, %v10255, %v10262
  %v10494 = vsel %vm4430, %v10256, %v10263
  %v10495 = vsel %vm4430, %v10243, %v10250
  %v10496 = vsel %vm4430, %v10244, %v10251
  %v10497 = vsel %vm4430, %v10245, %v10252
  %v10498 = vsel %vm4430, %v10246, %v10253
  %v10499 = vsel %vm4430, %v10247, %v10254
  %v10500 = vsel %vm4430, %v10248, %v10255
  %v10501 = vsel %vm4430, %v10249, %v10256
  %v10502 = vsel %vm4430, %v10236, %v10243
  %v10503 = vsel %vm4430, %v10237, %v10244
  %v10504 = vsel %vm4430, %v10238, %v10245
  %v10505 = vsel %vm4430, %v10239, %v10246
  %v10506 = vsel %vm4430, %v10240, %v10247
  %v10507 = vsel %vm4430, %v10241, %v10248
  %v10508 = vsel %vm4430, %v10242, %v10249
  %v10509 = vsel %vm4430, %v10229, %v10236
  %v10510 = vsel %vm4430, %v10230, %v10237
  %v10511 = vsel %vm4430, %v10231, %v10238
  %v10512 = vsel %vm4430, %v10232, %v10239
  %v10513 = vsel %vm4430, %v10233, %v10240
  %v10514 = vsel %vm4430, %v10234, %v10241
  %v10515 = vsel %vm4430, %v10235, %v10242
  %v10516 = vsel %vm4430, %v10222, %v10229
  %v10517 = vsel %vm4430, %v10223, %v10230
  %v10518 = vsel %vm4430, %v10224, %v10231
  %v10519 = vsel %vm4430, %v10225, %v10232
  %v10520 = vsel %vm4430, %v10226, %v10233
  %v10521 = vsel %vm4430, %v10227, %v10234
  %v10522 = vsel %vm4430, %v10228, %v10235
  %v10523 = vsel %vm4430, %v10215, %v10222
  %v10524 = vsel %vm4430, %v10216, %v10223
  %v10525 = vsel %vm4430, %v10217, %v10224
  %v10526 = vsel %vm4430, %v10218, %v10225
  %v10527 = vsel %vm4430, %v10219, %v10226
  %v10528 = vsel %vm4430, %v10220, %v10227
  %v10529 = vsel %vm4430, %v10221, %v10228
  %v10530 = vsel %vm4430, %v10208, %v10215
  %v10531 = vsel %vm4430, %v10209, %v10216
  %v10532 = vsel %vm4430, %v10210, %v10217
  %v10533 = vsel %vm4430, %v10211, %v10218
  %v10534 = vsel %vm4430, %v10212, %v10219
  %v10535 = vsel %vm4430, %v10213, %v10220
  %v10536 = vsel %vm4430, %v10214, %v10221
  %v10537 = vsel %vm4430, %v10201, %v10208
  %v10538 = vsel %vm4430, %v10202, %v10209
  %v10539 = vsel %vm4430, %v10203, %v10210
  %v10540 = vsel %vm4430, %v10204, %v10211
  %v10541 = vsel %vm4430, %v10205, %v10212
  %v10542 = vsel %vm4430, %v10206, %v10213
  %v10543 = vsel %vm4430, %v10207, %v10214
  %v10544 = vsel %vm4430, %v10194, %v10201
  %v10545 = vsel %vm4430, %v10195, %v10202
  %v10546 = vsel %vm4430, %v10196, %v10203
  %v10547 = vsel %vm4430, %v10197, %v10204
  %v10548 = vsel %vm4430, %v10198, %v10205
  %v10549 = vsel %vm4430, %v10199, %v10206
  %v10550 = vsel %vm4430, %v10200, %v10207
  %v10551 = vsel %vm4430, %v10187, %v10194
  %v10552 = vsel %vm4430, %v10188, %v10195
  %v10553 = vsel %vm4430, %v10189, %v10196
  %v10554 = vsel %vm4430, %v10190, %v10197
  %v10555 = vsel %vm4430, %v10191, %v10198
  %v10556 = vsel %vm4430, %v10192, %v10199
  %v10557 = vsel %vm4430, %v10193, %v10200
  %v10558 = vsel %vm4430, %v10180, %v10187
  %v10559 = vsel %vm4430, %v10181, %v10188
  %v10560 = vsel %vm4430, %v10182, %v10189
  %v10561 = vsel %vm4430, %v10183, %v10190
  %v10562 = vsel %vm4430, %v10184, %v10191
  %v10563 = vsel %vm4430, %v10185, %v10192
  %v10564 = vsel %vm4430, %v10186, %v10193
  %v10565 = vsel %vm4430, %v10369, %v10180
  %v10566 = vsel %vm4430, %v10370, %v10181
  %v10567 = vsel %vm4430, %v10371, %v10182
  %v10568 = vsel %vm4430, %v10372, %v10183
  %v10569 = vsel %vm4430, %v10373, %v10184
  %v10570 = vsel %vm4430, %v10374, %v10185
  %v10571 = vsel %vm4430, %v10375, %v10186
  %v10572 = vmax.f32 %v9984, %v10558
  %v10573 = vmax.f32 %v9985, %v10559
  %v10574 = vmax.f32 %v9986, %v10560
  %v10575 = vmax.f32 %v9987, %v10561
  %v10576 = vmax.f32 %v9988, %v10562
  %v10577 = vmax.f32 %v9989, %v10563
  %v10578 = vmax.f32 %v9990, %v10564
  %v10579 = vmax.f32 %v9991, %v10551
  %v10580 = vmax.f32 %v9992, %v10552
  %v10581 = vmax.f32 %v9993, %v10553
  %v10582 = vmax.f32 %v9994, %v10554
  %v10583 = vmax.f32 %v9995, %v10555
  %v10584 = vmax.f32 %v9996, %v10556
  %v10585 = vmax.f32 %v9997, %v10557
  %v10586 = vmax.f32 %v9998, %v10544
  %v10587 = vmax.f32 %v9999, %v10545
  %v10588 = vmax.f32 %v10000, %v10546
  %v10589 = vmax.f32 %v10001, %v10547
  %v10590 = vmax.f32 %v10002, %v10548
  %v10591 = vmax.f32 %v10003, %v10549
  %v10592 = vmax.f32 %v10004, %v10550
  %v10593 = vmax.f32 %v10005, %v10537
  %v10594 = vmax.f32 %v10006, %v10538
  %v10595 = vmax.f32 %v10007, %v10539
  %v10596 = vmax.f32 %v10008, %v10540
  %v10597 = vmax.f32 %v10009, %v10541
  %v10598 = vmax.f32 %v10010, %v10542
  %v10599 = vmax.f32 %v10011, %v10543
  %v10600 = vmax.f32 %v10012, %v10530
  %v10601 = vmax.f32 %v10013, %v10531
  %v10602 = vmax.f32 %v10014, %v10532
  %v10603 = vmax.f32 %v10015, %v10533
  %v10604 = vmax.f32 %v10016, %v10534
  %v10605 = vmax.f32 %v10017, %v10535
  %v10606 = vmax.f32 %v10018, %v10536
  %v10607 = vmax.f32 %v10019, %v10523
  %v10608 = vmax.f32 %v10020, %v10524
  %v10609 = vmax.f32 %v10021, %v10525
  %v10610 = vmax.f32 %v10022, %v10526
  %v10611 = vmax.f32 %v10023, %v10527
  %v10612 = vmax.f32 %v10024, %v10528
  %v10613 = vmax.f32 %v10025, %v10529
  %v10614 = vmax.f32 %v10026, %v10516
  %v10615 = vmax.f32 %v10027, %v10517
  %v10616 = vmax.f32 %v10028, %v10518
  %v10617 = vmax.f32 %v10029, %v10519
  %v10618 = vmax.f32 %v10030, %v10520
  %v10619 = vmax.f32 %v10031, %v10521
  %v10620 = vmax.f32 %v10032, %v10522
  %v10621 = vmax.f32 %v10033, %v10509
  %v10622 = vmax.f32 %v10034, %v10510
  %v10623 = vmax.f32 %v10035, %v10511
  %v10624 = vmax.f32 %v10036, %v10512
  %v10625 = vmax.f32 %v10037, %v10513
  %v10626 = vmax.f32 %v10038, %v10514
  %v10627 = vmax.f32 %v10039, %v10515
  %v10628 = vmax.f32 %v10040, %v10502
  %v10629 = vmax.f32 %v10041, %v10503
  %v10630 = vmax.f32 %v10042, %v10504
  %v10631 = vmax.f32 %v10043, %v10505
  %v10632 = vmax.f32 %v10044, %v10506
  %v10633 = vmax.f32 %v10045, %v10507
  %v10634 = vmax.f32 %v10046, %v10508
  %v10635 = vmax.f32 %v10047, %v10495
  %v10636 = vmax.f32 %v10048, %v10496
  %v10637 = vmax.f32 %v10049, %v10497
  %v10638 = vmax.f32 %v10050, %v10498
  %v10639 = vmax.f32 %v10051, %v10499
  %v10640 = vmax.f32 %v10052, %v10500
  %v10641 = vmax.f32 %v10053, %v10501
  %v10642 = vmax.f32 %v10054, %v10488
  %v10643 = vmax.f32 %v10055, %v10489
  %v10644 = vmax.f32 %v10056, %v10490
  %v10645 = vmax.f32 %v10057, %v10491
  %v10646 = vmax.f32 %v10058, %v10492
  %v10647 = vmax.f32 %v10059, %v10493
  %v10648 = vmax.f32 %v10060, %v10494
  %v10649 = vmax.f32 %v10061, %v10481
  %v10650 = vmax.f32 %v10062, %v10482
  %v10651 = vmax.f32 %v10063, %v10483
  %v10652 = vmax.f32 %v10064, %v10484
  %v10653 = vmax.f32 %v10065, %v10485
  %v10654 = vmax.f32 %v10066, %v10486
  %v10655 = vmax.f32 %v10067, %v10487
  %v10656 = vmax.f32 %v10068, %v10474
  %v10657 = vmax.f32 %v10069, %v10475
  %v10658 = vmax.f32 %v10070, %v10476
  %v10659 = vmax.f32 %v10071, %v10477
  %v10660 = vmax.f32 %v10072, %v10478
  %v10661 = vmax.f32 %v10073, %v10479
  %v10662 = vmax.f32 %v10074, %v10480
  %v10663 = vmax.f32 %v10075, %v10467
  %v10664 = vmax.f32 %v10076, %v10468
  %v10665 = vmax.f32 %v10077, %v10469
  %v10666 = vmax.f32 %v10078, %v10470
  %v10667 = vmax.f32 %v10079, %v10471
  %v10668 = vmax.f32 %v10080, %v10472
  %v10669 = vmax.f32 %v10081, %v10473
  %v10670 = vmax.f32 %v10082, %v10460
  %v10671 = vmax.f32 %v10083, %v10461
  %v10672 = vmax.f32 %v10084, %v10462
  %v10673 = vmax.f32 %v10085, %v10463
  %v10674 = vmax.f32 %v10086, %v10464
  %v10675 = vmax.f32 %v10087, %v10465
  %v10676 = vmax.f32 %v10088, %v10466
  %v10677 = vmax.f32 %v10089, %v10453
  %v10678 = vmax.f32 %v10090, %v10454
  %v10679 = vmax.f32 %v10091, %v10455
  %v10680 = vmax.f32 %v10092, %v10456
  %v10681 = vmax.f32 %v10093, %v10457
  %v10682 = vmax.f32 %v10094, %v10458
  %v10683 = vmax.f32 %v10095, %v10459
  %v10684 = vmax.f32 %v10096, %v10446
  %v10685 = vmax.f32 %v10097, %v10447
  %v10686 = vmax.f32 %v10098, %v10448
  %v10687 = vmax.f32 %v10099, %v10449
  %v10688 = vmax.f32 %v10100, %v10450
  %v10689 = vmax.f32 %v10101, %v10451
  %v10690 = vmax.f32 %v10102, %v10452
  %v10691 = vmax.f32 %v10103, %v10439
  %v10692 = vmax.f32 %v10104, %v10440
  %v10693 = vmax.f32 %v10105, %v10441
  %v10694 = vmax.f32 %v10106, %v10442
  %v10695 = vmax.f32 %v10107, %v10443
  %v10696 = vmax.f32 %v10108, %v10444
  %v10697 = vmax.f32 %v10109, %v10445
  %v10698 = vmax.f32 %v10110, %v10432
  %v10699 = vmax.f32 %v10111, %v10433
  %v10700 = vmax.f32 %v10112, %v10434
  %v10701 = vmax.f32 %v10113, %v10435
  %v10702 = vmax.f32 %v10114, %v10436
  %v10703 = vmax.f32 %v10115, %v10437
  %v10704 = vmax.f32 %v10116, %v10438
  %v10705 = vmax.f32 %v10117, %v10425
  %v10706 = vmax.f32 %v10118, %v10426
  %v10707 = vmax.f32 %v10119, %v10427
  %v10708 = vmax.f32 %v10120, %v10428
  %v10709 = vmax.f32 %v10121, %v10429
  %v10710 = vmax.f32 %v10122, %v10430
  %v10711 = vmax.f32 %v10123, %v10431
  %v10712 = vmax.f32 %v10124, %v10418
  %v10713 = vmax.f32 %v10125, %v10419
  %v10714 = vmax.f32 %v10126, %v10420
  %v10715 = vmax.f32 %v10127, %v10421
  %v10716 = vmax.f32 %v10128, %v10422
  %v10717 = vmax.f32 %v10129, %v10423
  %v10718 = vmax.f32 %v10130, %v10424
  %v10719 = vmax.f32 %v10131, %v10411
  %v10720 = vmax.f32 %v10132, %v10412
  %v10721 = vmax.f32 %v10133, %v10413
  %v10722 = vmax.f32 %v10134, %v10414
  %v10723 = vmax.f32 %v10135, %v10415
  %v10724 = vmax.f32 %v10136, %v10416
  %v10725 = vmax.f32 %v10137, %v10417
  %v10726 = vmax.f32 %v10138, %v10404
  %v10727 = vmax.f32 %v10139, %v10405
  %v10728 = vmax.f32 %v10140, %v10406
  %v10729 = vmax.f32 %v10141, %v10407
  %v10730 = vmax.f32 %v10142, %v10408
  %v10731 = vmax.f32 %v10143, %v10409
  %v10732 = vmax.f32 %v10144, %v10410
  %v10733 = vmax.f32 %v10145, %v10397
  %v10734 = vmax.f32 %v10146, %v10398
  %v10735 = vmax.f32 %v10147, %v10399
  %v10736 = vmax.f32 %v10148, %v10400
  %v10737 = vmax.f32 %v10149, %v10401
  %v10738 = vmax.f32 %v10150, %v10402
  %v10739 = vmax.f32 %v10151, %v10403
  %v10740 = vmax.f32 %v10152, %v10390
  %v10741 = vmax.f32 %v10153, %v10391
  %v10742 = vmax.f32 %v10154, %v10392
  %v10743 = vmax.f32 %v10155, %v10393
  %v10744 = vmax.f32 %v10156, %v10394
  %v10745 = vmax.f32 %v10157, %v10395
  %v10746 = vmax.f32 %v10158, %v10396
  %v10747 = vmax.f32 %v10159, %v10383
  %v10748 = vmax.f32 %v10160, %v10384
  %v10749 = vmax.f32 %v10161, %v10385
  %v10750 = vmax.f32 %v10162, %v10386
  %v10751 = vmax.f32 %v10163, %v10387
  %v10752 = vmax.f32 %v10164, %v10388
  %v10753 = vmax.f32 %v10165, %v10389
  %v10754 = vmax.f32 %v10166, %v10376
  %v10755 = vmax.f32 %v10167, %v10377
  %v10756 = vmax.f32 %v10168, %v10378
  %v10757 = vmax.f32 %v10169, %v10379
  %v10758 = vmax.f32 %v10170, %v10380
  %v10759 = vmax.f32 %v10171, %v10381
  %v10760 = vmax.f32 %v10172, %v10382
  %v10761 = vmax.f32 %v10173, %v10565
  %v10762 = vmax.f32 %v10174, %v10566
  %v10763 = vmax.f32 %v10175, %v10567
  %v10764 = vmax.f32 %v10176, %v10568
  %v10765 = vmax.f32 %v10177, %v10569
  %v10766 = vmax.f32 %v10178, %v10570
  %v10767 = vmax.f32 %v10179, %v10571
  %10768 = vrot.lane.b32.xlu0 %v10572, 64
  %v10769 = vpop.permute.xlu0 %10768
  %10770 = vrot.lane.b32.xlu0 %v10579, 64
  %v10771 = vpop.permute.xlu0 %10770
  %10772 = vrot.lane.b32.xlu0 %v10586, 64
  %v10773 = vpop.permute.xlu0 %10772
  %10774 = vrot.lane.b32.xlu0 %v10593, 64
  %v10775 = vpop.permute.xlu0 %10774
  %10776 = vrot.lane.b32.xlu0 %v10600, 64
  %v10777 = vpop.permute.xlu0 %10776
  %10778 = vrot.lane.b32.xlu0 %v10607, 64
  %v10779 = vpop.permute.xlu0 %10778
  %10780 = vrot.lane.b32.xlu0 %v10614, 64
  %v10781 = vpop.permute.xlu0 %10780
  %10782 = vrot.lane.b32.xlu0 %v10621, 64
  %v10783 = vpop.permute.xlu0 %10782
  %10784 = vrot.lane.b32.xlu0 %v10628, 64
  %v10785 = vpop.permute.xlu0 %10784
  %10786 = vrot.lane.b32.xlu0 %v10635, 64
  %v10787 = vpop.permute.xlu0 %10786
  %10788 = vrot.lane.b32.xlu0 %v10642, 64
  %v10789 = vpop.permute.xlu0 %10788
  %10790 = vrot.lane.b32.xlu0 %v10649, 64
  %v10791 = vpop.permute.xlu0 %10790
  %10792 = vrot.lane.b32.xlu0 %v10656, 64
  %v10793 = vpop.permute.xlu0 %10792
  %10794 = vrot.lane.b32.xlu0 %v10663, 64
  %v10795 = vpop.permute.xlu0 %10794
  %10796 = vrot.lane.b32.xlu0 %v10670, 64
  %v10797 = vpop.permute.xlu0 %10796
  %10798 = vrot.lane.b32.xlu0 %v10677, 64
  %v10799 = vpop.permute.xlu0 %10798
  %10800 = vrot.lane.b32.xlu0 %v10684, 64
  %v10801 = vpop.permute.xlu0 %10800
  %10802 = vrot.lane.b32.xlu0 %v10691, 64
  %v10803 = vpop.permute.xlu0 %10802
  %10804 = vrot.lane.b32.xlu0 %v10698, 64
  %v10805 = vpop.permute.xlu0 %10804
  %10806 = vrot.lane.b32.xlu0 %v10705, 64
  %v10807 = vpop.permute.xlu0 %10806
  %10808 = vrot.lane.b32.xlu0 %v10712, 64
  %v10809 = vpop.permute.xlu0 %10808
  %10810 = vrot.lane.b32.xlu0 %v10719, 64
  %v10811 = vpop.permute.xlu0 %10810
  %10812 = vrot.lane.b32.xlu0 %v10726, 64
  %v10813 = vpop.permute.xlu0 %10812
  %10814 = vrot.lane.b32.xlu0 %v10733, 64
  %v10815 = vpop.permute.xlu0 %10814
  %10816 = vrot.lane.b32.xlu0 %v10740, 64
  %v10817 = vpop.permute.xlu0 %10816
  %10818 = vrot.lane.b32.xlu0 %v10747, 64
  %v10819 = vpop.permute.xlu0 %10818
  %10820 = vrot.lane.b32.xlu0 %v10754, 64
  %v10821 = vpop.permute.xlu0 %10820
  %10822 = vrot.lane.b32.xlu0 %v10761, 64
  %v10823 = vpop.permute.xlu0 %10822
  %10824 = vrot.lane.b32.xlu0 %v10573, 64
  %v10825 = vpop.permute.xlu0 %10824
  %10826 = vrot.lane.b32.xlu0 %v10580, 64
  %v10827 = vpop.permute.xlu0 %10826
  %10828 = vrot.lane.b32.xlu0 %v10587, 64
  %v10829 = vpop.permute.xlu0 %10828
  %10830 = vrot.lane.b32.xlu0 %v10594, 64
  %v10831 = vpop.permute.xlu0 %10830
  %10832 = vrot.lane.b32.xlu0 %v10601, 64
  %v10833 = vpop.permute.xlu0 %10832
  %10834 = vrot.lane.b32.xlu0 %v10608, 64
  %v10835 = vpop.permute.xlu0 %10834
  %10836 = vrot.lane.b32.xlu0 %v10615, 64
  %v10837 = vpop.permute.xlu0 %10836
  %10838 = vrot.lane.b32.xlu0 %v10622, 64
  %v10839 = vpop.permute.xlu0 %10838
  %10840 = vrot.lane.b32.xlu0 %v10629, 64
  %v10841 = vpop.permute.xlu0 %10840
  %10842 = vrot.lane.b32.xlu0 %v10636, 64
  %v10843 = vpop.permute.xlu0 %10842
  %10844 = vrot.lane.b32.xlu0 %v10643, 64
  %v10845 = vpop.permute.xlu0 %10844
  %10846 = vrot.lane.b32.xlu0 %v10650, 64
  %v10847 = vpop.permute.xlu0 %10846
  %10848 = vrot.lane.b32.xlu0 %v10657, 64
  %v10849 = vpop.permute.xlu0 %10848
  %10850 = vrot.lane.b32.xlu0 %v10664, 64
  %v10851 = vpop.permute.xlu0 %10850
  %10852 = vrot.lane.b32.xlu0 %v10671, 64
  %v10853 = vpop.permute.xlu0 %10852
  %10854 = vrot.lane.b32.xlu0 %v10678, 64
  %v10855 = vpop.permute.xlu0 %10854
  %10856 = vrot.lane.b32.xlu0 %v10685, 64
  %v10857 = vpop.permute.xlu0 %10856
  %10858 = vrot.lane.b32.xlu0 %v10692, 64
  %v10859 = vpop.permute.xlu0 %10858
  %10860 = vrot.lane.b32.xlu0 %v10699, 64
  %v10861 = vpop.permute.xlu0 %10860
  %10862 = vrot.lane.b32.xlu0 %v10706, 64
  %v10863 = vpop.permute.xlu0 %10862
  %10864 = vrot.lane.b32.xlu0 %v10713, 64
  %v10865 = vpop.permute.xlu0 %10864
  %10866 = vrot.lane.b32.xlu0 %v10720, 64
  %v10867 = vpop.permute.xlu0 %10866
  %10868 = vrot.lane.b32.xlu0 %v10727, 64
  %v10869 = vpop.permute.xlu0 %10868
  %10870 = vrot.lane.b32.xlu0 %v10734, 64
  %v10871 = vpop.permute.xlu0 %10870
  %10872 = vrot.lane.b32.xlu0 %v10741, 64
  %v10873 = vpop.permute.xlu0 %10872
  %10874 = vrot.lane.b32.xlu0 %v10748, 64
  %v10875 = vpop.permute.xlu0 %10874
  %10876 = vrot.lane.b32.xlu0 %v10755, 64
  %v10877 = vpop.permute.xlu0 %10876
  %10878 = vrot.lane.b32.xlu0 %v10762, 64
  %v10879 = vpop.permute.xlu0 %10878
  %10880 = vrot.lane.b32.xlu0 %v10574, 64
  %v10881 = vpop.permute.xlu0 %10880
  %10882 = vrot.lane.b32.xlu0 %v10581, 64
  %v10883 = vpop.permute.xlu0 %10882
  %10884 = vrot.lane.b32.xlu0 %v10588, 64
  %v10885 = vpop.permute.xlu0 %10884
  %10886 = vrot.lane.b32.xlu0 %v10595, 64
  %v10887 = vpop.permute.xlu0 %10886
  %10888 = vrot.lane.b32.xlu0 %v10602, 64
  %v10889 = vpop.permute.xlu0 %10888
  %10890 = vrot.lane.b32.xlu0 %v10609, 64
  %v10891 = vpop.permute.xlu0 %10890
  %10892 = vrot.lane.b32.xlu0 %v10616, 64
  %v10893 = vpop.permute.xlu0 %10892
  %10894 = vrot.lane.b32.xlu0 %v10623, 64
  %v10895 = vpop.permute.xlu0 %10894
  %10896 = vrot.lane.b32.xlu0 %v10630, 64
  %v10897 = vpop.permute.xlu0 %10896
  %10898 = vrot.lane.b32.xlu0 %v10637, 64
  %v10899 = vpop.permute.xlu0 %10898
  %10900 = vrot.lane.b32.xlu0 %v10644, 64
  %v10901 = vpop.permute.xlu0 %10900
  %10902 = vrot.lane.b32.xlu0 %v10651, 64
  %v10903 = vpop.permute.xlu0 %10902
  %10904 = vrot.lane.b32.xlu0 %v10658, 64
  %v10905 = vpop.permute.xlu0 %10904
  %10906 = vrot.lane.b32.xlu0 %v10665, 64
  %v10907 = vpop.permute.xlu0 %10906
  %10908 = vrot.lane.b32.xlu0 %v10672, 64
  %v10909 = vpop.permute.xlu0 %10908
  %10910 = vrot.lane.b32.xlu0 %v10679, 64
  %v10911 = vpop.permute.xlu0 %10910
  %10912 = vrot.lane.b32.xlu0 %v10686, 64
  %v10913 = vpop.permute.xlu0 %10912
  %10914 = vrot.lane.b32.xlu0 %v10693, 64
  %v10915 = vpop.permute.xlu0 %10914
  %10916 = vrot.lane.b32.xlu0 %v10700, 64
  %v10917 = vpop.permute.xlu0 %10916
  %10918 = vrot.lane.b32.xlu0 %v10707, 64
  %v10919 = vpop.permute.xlu0 %10918
  %10920 = vrot.lane.b32.xlu0 %v10714, 64
  %v10921 = vpop.permute.xlu0 %10920
  %10922 = vrot.lane.b32.xlu0 %v10721, 64
  %v10923 = vpop.permute.xlu0 %10922
  %10924 = vrot.lane.b32.xlu0 %v10728, 64
  %v10925 = vpop.permute.xlu0 %10924
  %10926 = vrot.lane.b32.xlu0 %v10735, 64
  %v10927 = vpop.permute.xlu0 %10926
  %10928 = vrot.lane.b32.xlu0 %v10742, 64
  %v10929 = vpop.permute.xlu0 %10928
  %10930 = vrot.lane.b32.xlu0 %v10749, 64
  %v10931 = vpop.permute.xlu0 %10930
  %10932 = vrot.lane.b32.xlu0 %v10756, 64
  %v10933 = vpop.permute.xlu0 %10932
  %10934 = vrot.lane.b32.xlu0 %v10763, 64
  %v10935 = vpop.permute.xlu0 %10934
  %10936 = vrot.lane.b32.xlu0 %v10575, 64
  %v10937 = vpop.permute.xlu0 %10936
  %10938 = vrot.lane.b32.xlu0 %v10582, 64
  %v10939 = vpop.permute.xlu0 %10938
  %10940 = vrot.lane.b32.xlu0 %v10589, 64
  %v10941 = vpop.permute.xlu0 %10940
  %10942 = vrot.lane.b32.xlu0 %v10596, 64
  %v10943 = vpop.permute.xlu0 %10942
  %10944 = vrot.lane.b32.xlu0 %v10603, 64
  %v10945 = vpop.permute.xlu0 %10944
  %10946 = vrot.lane.b32.xlu0 %v10610, 64
  %v10947 = vpop.permute.xlu0 %10946
  %10948 = vrot.lane.b32.xlu0 %v10617, 64
  %v10949 = vpop.permute.xlu0 %10948
  %10950 = vrot.lane.b32.xlu0 %v10624, 64
  %v10951 = vpop.permute.xlu0 %10950
  %10952 = vrot.lane.b32.xlu0 %v10631, 64
  %v10953 = vpop.permute.xlu0 %10952
  %10954 = vrot.lane.b32.xlu0 %v10638, 64
  %v10955 = vpop.permute.xlu0 %10954
  %10956 = vrot.lane.b32.xlu0 %v10645, 64
  %v10957 = vpop.permute.xlu0 %10956
  %10958 = vrot.lane.b32.xlu0 %v10652, 64
  %v10959 = vpop.permute.xlu0 %10958
  %10960 = vrot.lane.b32.xlu0 %v10659, 64
  %v10961 = vpop.permute.xlu0 %10960
  %10962 = vrot.lane.b32.xlu0 %v10666, 64
  %v10963 = vpop.permute.xlu0 %10962
  %10964 = vrot.lane.b32.xlu0 %v10673, 64
  %v10965 = vpop.permute.xlu0 %10964
  %10966 = vrot.lane.b32.xlu0 %v10680, 64
  %v10967 = vpop.permute.xlu0 %10966
  %10968 = vrot.lane.b32.xlu0 %v10687, 64
  %v10969 = vpop.permute.xlu0 %10968
  %10970 = vrot.lane.b32.xlu0 %v10694, 64
  %v10971 = vpop.permute.xlu0 %10970
  %10972 = vrot.lane.b32.xlu0 %v10701, 64
  %v10973 = vpop.permute.xlu0 %10972
  %10974 = vrot.lane.b32.xlu0 %v10708, 64
  %v10975 = vpop.permute.xlu0 %10974
  %10976 = vrot.lane.b32.xlu0 %v10715, 64
  %v10977 = vpop.permute.xlu0 %10976
  %10978 = vrot.lane.b32.xlu0 %v10722, 64
  %v10979 = vpop.permute.xlu0 %10978
  %10980 = vrot.lane.b32.xlu0 %v10729, 64
  %v10981 = vpop.permute.xlu0 %10980
  %10982 = vrot.lane.b32.xlu0 %v10736, 64
  %v10983 = vpop.permute.xlu0 %10982
  %10984 = vrot.lane.b32.xlu0 %v10743, 64
  %v10985 = vpop.permute.xlu0 %10984
  %10986 = vrot.lane.b32.xlu0 %v10750, 64
  %v10987 = vpop.permute.xlu0 %10986
  %10988 = vrot.lane.b32.xlu0 %v10757, 64
  %v10989 = vpop.permute.xlu0 %10988
  %10990 = vrot.lane.b32.xlu0 %v10764, 64
  %v10991 = vpop.permute.xlu0 %10990
  %10992 = vrot.lane.b32.xlu0 %v10576, 64
  %v10993 = vpop.permute.xlu0 %10992
  %10994 = vrot.lane.b32.xlu0 %v10583, 64
  %v10995 = vpop.permute.xlu0 %10994
  %10996 = vrot.lane.b32.xlu0 %v10590, 64
  %v10997 = vpop.permute.xlu0 %10996
  %10998 = vrot.lane.b32.xlu0 %v10597, 64
  %v10999 = vpop.permute.xlu0 %10998
  %11000 = vrot.lane.b32.xlu0 %v10604, 64
  %v11001 = vpop.permute.xlu0 %11000
  %11002 = vrot.lane.b32.xlu0 %v10611, 64
  %v11003 = vpop.permute.xlu0 %11002
  %11004 = vrot.lane.b32.xlu0 %v10618, 64
  %v11005 = vpop.permute.xlu0 %11004
  %11006 = vrot.lane.b32.xlu0 %v10625, 64
  %v11007 = vpop.permute.xlu0 %11006
  %11008 = vrot.lane.b32.xlu0 %v10632, 64
  %v11009 = vpop.permute.xlu0 %11008
  %11010 = vrot.lane.b32.xlu0 %v10639, 64
  %v11011 = vpop.permute.xlu0 %11010
  %11012 = vrot.lane.b32.xlu0 %v10646, 64
  %v11013 = vpop.permute.xlu0 %11012
  %11014 = vrot.lane.b32.xlu0 %v10653, 64
  %v11015 = vpop.permute.xlu0 %11014
  %11016 = vrot.lane.b32.xlu0 %v10660, 64
  %v11017 = vpop.permute.xlu0 %11016
  %11018 = vrot.lane.b32.xlu0 %v10667, 64
  %v11019 = vpop.permute.xlu0 %11018
  %11020 = vrot.lane.b32.xlu0 %v10674, 64
  %v11021 = vpop.permute.xlu0 %11020
  %11022 = vrot.lane.b32.xlu0 %v10681, 64
  %v11023 = vpop.permute.xlu0 %11022
  %11024 = vrot.lane.b32.xlu0 %v10688, 64
  %v11025 = vpop.permute.xlu0 %11024
  %11026 = vrot.lane.b32.xlu0 %v10695, 64
  %v11027 = vpop.permute.xlu0 %11026
  %11028 = vrot.lane.b32.xlu0 %v10702, 64
  %v11029 = vpop.permute.xlu0 %11028
  %11030 = vrot.lane.b32.xlu0 %v10709, 64
  %v11031 = vpop.permute.xlu0 %11030
  %11032 = vrot.lane.b32.xlu0 %v10716, 64
  %v11033 = vpop.permute.xlu0 %11032
  %11034 = vrot.lane.b32.xlu0 %v10723, 64
  %v11035 = vpop.permute.xlu0 %11034
  %11036 = vrot.lane.b32.xlu0 %v10730, 64
  %v11037 = vpop.permute.xlu0 %11036
  %11038 = vrot.lane.b32.xlu0 %v10737, 64
  %v11039 = vpop.permute.xlu0 %11038
  %11040 = vrot.lane.b32.xlu0 %v10744, 64
  %v11041 = vpop.permute.xlu0 %11040
  %11042 = vrot.lane.b32.xlu0 %v10751, 64
  %v11043 = vpop.permute.xlu0 %11042
  %11044 = vrot.lane.b32.xlu0 %v10758, 64
  %v11045 = vpop.permute.xlu0 %11044
  %11046 = vrot.lane.b32.xlu0 %v10765, 64
  %v11047 = vpop.permute.xlu0 %11046
  %11048 = vrot.lane.b32.xlu0 %v10577, 64
  %v11049 = vpop.permute.xlu0 %11048
  %11050 = vrot.lane.b32.xlu0 %v10584, 64
  %v11051 = vpop.permute.xlu0 %11050
  %11052 = vrot.lane.b32.xlu0 %v10591, 64
  %v11053 = vpop.permute.xlu0 %11052
  %11054 = vrot.lane.b32.xlu0 %v10598, 64
  %v11055 = vpop.permute.xlu0 %11054
  %11056 = vrot.lane.b32.xlu0 %v10605, 64
  %v11057 = vpop.permute.xlu0 %11056
  %11058 = vrot.lane.b32.xlu0 %v10612, 64
  %v11059 = vpop.permute.xlu0 %11058
  %11060 = vrot.lane.b32.xlu0 %v10619, 64
  %v11061 = vpop.permute.xlu0 %11060
  %11062 = vrot.lane.b32.xlu0 %v10626, 64
  %v11063 = vpop.permute.xlu0 %11062
  %11064 = vrot.lane.b32.xlu0 %v10633, 64
  %v11065 = vpop.permute.xlu0 %11064
  %11066 = vrot.lane.b32.xlu0 %v10640, 64
  %v11067 = vpop.permute.xlu0 %11066
  %11068 = vrot.lane.b32.xlu0 %v10647, 64
  %v11069 = vpop.permute.xlu0 %11068
  %11070 = vrot.lane.b32.xlu0 %v10654, 64
  %v11071 = vpop.permute.xlu0 %11070
  %11072 = vrot.lane.b32.xlu0 %v10661, 64
  %v11073 = vpop.permute.xlu0 %11072
  %11074 = vrot.lane.b32.xlu0 %v10668, 64
  %v11075 = vpop.permute.xlu0 %11074
  %11076 = vrot.lane.b32.xlu0 %v10675, 64
  %v11077 = vpop.permute.xlu0 %11076
  %11078 = vrot.lane.b32.xlu0 %v10682, 64
  %v11079 = vpop.permute.xlu0 %11078
  %11080 = vrot.lane.b32.xlu0 %v10689, 64
  %v11081 = vpop.permute.xlu0 %11080
  %11082 = vrot.lane.b32.xlu0 %v10696, 64
  %v11083 = vpop.permute.xlu0 %11082
  %11084 = vrot.lane.b32.xlu0 %v10703, 64
  %v11085 = vpop.permute.xlu0 %11084
  %11086 = vrot.lane.b32.xlu0 %v10710, 64
  %v11087 = vpop.permute.xlu0 %11086
  %11088 = vrot.lane.b32.xlu0 %v10717, 64
  %v11089 = vpop.permute.xlu0 %11088
  %11090 = vrot.lane.b32.xlu0 %v10724, 64
  %v11091 = vpop.permute.xlu0 %11090
  %11092 = vrot.lane.b32.xlu0 %v10731, 64
  %v11093 = vpop.permute.xlu0 %11092
  %11094 = vrot.lane.b32.xlu0 %v10738, 64
  %v11095 = vpop.permute.xlu0 %11094
  %11096 = vrot.lane.b32.xlu0 %v10745, 64
  %v11097 = vpop.permute.xlu0 %11096
  %11098 = vrot.lane.b32.xlu0 %v10752, 64
  %v11099 = vpop.permute.xlu0 %11098
  %11100 = vrot.lane.b32.xlu0 %v10759, 64
  %v11101 = vpop.permute.xlu0 %11100
  %11102 = vrot.lane.b32.xlu0 %v10766, 64
  %v11103 = vpop.permute.xlu0 %11102
  %11104 = vrot.lane.b32.xlu0 %v10578, 64
  %v11105 = vpop.permute.xlu0 %11104
  %11106 = vrot.lane.b32.xlu0 %v10585, 64
  %v11107 = vpop.permute.xlu0 %11106
  %11108 = vrot.lane.b32.xlu0 %v10592, 64
  %v11109 = vpop.permute.xlu0 %11108
  %11110 = vrot.lane.b32.xlu0 %v10599, 64
  %v11111 = vpop.permute.xlu0 %11110
  %11112 = vrot.lane.b32.xlu0 %v10606, 64
  %v11113 = vpop.permute.xlu0 %11112
  %11114 = vrot.lane.b32.xlu0 %v10613, 64
  %v11115 = vpop.permute.xlu0 %11114
  %11116 = vrot.lane.b32.xlu0 %v10620, 64
  %v11117 = vpop.permute.xlu0 %11116
  %11118 = vrot.lane.b32.xlu0 %v10627, 64
  %v11119 = vpop.permute.xlu0 %11118
  %11120 = vrot.lane.b32.xlu0 %v10634, 64
  %v11121 = vpop.permute.xlu0 %11120
  %11122 = vrot.lane.b32.xlu0 %v10641, 64
  %v11123 = vpop.permute.xlu0 %11122
  %11124 = vrot.lane.b32.xlu0 %v10648, 64
  %v11125 = vpop.permute.xlu0 %11124
  %11126 = vrot.lane.b32.xlu0 %v10655, 64
  %v11127 = vpop.permute.xlu0 %11126
  %11128 = vrot.lane.b32.xlu0 %v10662, 64
  %v11129 = vpop.permute.xlu0 %11128
  %11130 = vrot.lane.b32.xlu0 %v10669, 64
  %v11131 = vpop.permute.xlu0 %11130
  %11132 = vrot.lane.b32.xlu0 %v10676, 64
  %v11133 = vpop.permute.xlu0 %11132
  %11134 = vrot.lane.b32.xlu0 %v10683, 64
  %v11135 = vpop.permute.xlu0 %11134
  %11136 = vrot.lane.b32.xlu0 %v10690, 64
  %v11137 = vpop.permute.xlu0 %11136
  %11138 = vrot.lane.b32.xlu0 %v10697, 64
  %v11139 = vpop.permute.xlu0 %11138
  %11140 = vrot.lane.b32.xlu0 %v10704, 64
  %v11141 = vpop.permute.xlu0 %11140
  %11142 = vrot.lane.b32.xlu0 %v10711, 64
  %v11143 = vpop.permute.xlu0 %11142
  %11144 = vrot.lane.b32.xlu0 %v10718, 64
  %v11145 = vpop.permute.xlu0 %11144
  %11146 = vrot.lane.b32.xlu0 %v10725, 64
  %v11147 = vpop.permute.xlu0 %11146
  %11148 = vrot.lane.b32.xlu0 %v10732, 64
  %v11149 = vpop.permute.xlu0 %11148
  %11150 = vrot.lane.b32.xlu0 %v10739, 64
  %v11151 = vpop.permute.xlu0 %11150
  %11152 = vrot.lane.b32.xlu0 %v10746, 64
  %v11153 = vpop.permute.xlu0 %11152
  %11154 = vrot.lane.b32.xlu0 %v10753, 64
  %v11155 = vpop.permute.xlu0 %11154
  %11156 = vrot.lane.b32.xlu0 %v10760, 64
  %v11157 = vpop.permute.xlu0 %11156
  %11158 = vrot.lane.b32.xlu0 %v10767, 64
  %v11159 = vpop.permute.xlu0 %11158
  %v11160 = vsel %vm6078, %v11049, %v11105
  %v11161 = vsel %vm6078, %v11051, %v11107
  %v11162 = vsel %vm6078, %v11053, %v11109
  %v11163 = vsel %vm6078, %v11055, %v11111
  %v11164 = vsel %vm6078, %v11057, %v11113
  %v11165 = vsel %vm6078, %v11059, %v11115
  %v11166 = vsel %vm6078, %v11061, %v11117
  %v11167 = vsel %vm6078, %v11063, %v11119
  %v11168 = vsel %vm6078, %v11065, %v11121
  %v11169 = vsel %vm6078, %v11067, %v11123
  %v11170 = vsel %vm6078, %v11069, %v11125
  %v11171 = vsel %vm6078, %v11071, %v11127
  %v11172 = vsel %vm6078, %v11073, %v11129
  %v11173 = vsel %vm6078, %v11075, %v11131
  %v11174 = vsel %vm6078, %v11077, %v11133
  %v11175 = vsel %vm6078, %v11079, %v11135
  %v11176 = vsel %vm6078, %v11081, %v11137
  %v11177 = vsel %vm6078, %v11083, %v11139
  %v11178 = vsel %vm6078, %v11085, %v11141
  %v11179 = vsel %vm6078, %v11087, %v11143
  %v11180 = vsel %vm6078, %v11089, %v11145
  %v11181 = vsel %vm6078, %v11091, %v11147
  %v11182 = vsel %vm6078, %v11093, %v11149
  %v11183 = vsel %vm6078, %v11095, %v11151
  %v11184 = vsel %vm6078, %v11097, %v11153
  %v11185 = vsel %vm6078, %v11099, %v11155
  %v11186 = vsel %vm6078, %v11101, %v11157
  %v11187 = vsel %vm6078, %v11103, %v11159
  %v11188 = vsel %vm6078, %v10993, %v11049
  %v11189 = vsel %vm6078, %v10995, %v11051
  %v11190 = vsel %vm6078, %v10997, %v11053
  %v11191 = vsel %vm6078, %v10999, %v11055
  %v11192 = vsel %vm6078, %v11001, %v11057
  %v11193 = vsel %vm6078, %v11003, %v11059
  %v11194 = vsel %vm6078, %v11005, %v11061
  %v11195 = vsel %vm6078, %v11007, %v11063
  %v11196 = vsel %vm6078, %v11009, %v11065
  %v11197 = vsel %vm6078, %v11011, %v11067
  %v11198 = vsel %vm6078, %v11013, %v11069
  %v11199 = vsel %vm6078, %v11015, %v11071
  %v11200 = vsel %vm6078, %v11017, %v11073
  %v11201 = vsel %vm6078, %v11019, %v11075
  %v11202 = vsel %vm6078, %v11021, %v11077
  %v11203 = vsel %vm6078, %v11023, %v11079
  %v11204 = vsel %vm6078, %v11025, %v11081
  %v11205 = vsel %vm6078, %v11027, %v11083
  %v11206 = vsel %vm6078, %v11029, %v11085
  %v11207 = vsel %vm6078, %v11031, %v11087
  %v11208 = vsel %vm6078, %v11033, %v11089
  %v11209 = vsel %vm6078, %v11035, %v11091
  %v11210 = vsel %vm6078, %v11037, %v11093
  %v11211 = vsel %vm6078, %v11039, %v11095
  %v11212 = vsel %vm6078, %v11041, %v11097
  %v11213 = vsel %vm6078, %v11043, %v11099
  %v11214 = vsel %vm6078, %v11045, %v11101
  %v11215 = vsel %vm6078, %v11047, %v11103
  %v11216 = vsel %vm6078, %v10937, %v10993
  %v11217 = vsel %vm6078, %v10939, %v10995
  %v11218 = vsel %vm6078, %v10941, %v10997
  %v11219 = vsel %vm6078, %v10943, %v10999
  %v11220 = vsel %vm6078, %v10945, %v11001
  %v11221 = vsel %vm6078, %v10947, %v11003
  %v11222 = vsel %vm6078, %v10949, %v11005
  %v11223 = vsel %vm6078, %v10951, %v11007
  %v11224 = vsel %vm6078, %v10953, %v11009
  %v11225 = vsel %vm6078, %v10955, %v11011
  %v11226 = vsel %vm6078, %v10957, %v11013
  %v11227 = vsel %vm6078, %v10959, %v11015
  %v11228 = vsel %vm6078, %v10961, %v11017
  %v11229 = vsel %vm6078, %v10963, %v11019
  %v11230 = vsel %vm6078, %v10965, %v11021
  %v11231 = vsel %vm6078, %v10967, %v11023
  %v11232 = vsel %vm6078, %v10969, %v11025
  %v11233 = vsel %vm6078, %v10971, %v11027
  %v11234 = vsel %vm6078, %v10973, %v11029
  %v11235 = vsel %vm6078, %v10975, %v11031
  %v11236 = vsel %vm6078, %v10977, %v11033
  %v11237 = vsel %vm6078, %v10979, %v11035
  %v11238 = vsel %vm6078, %v10981, %v11037
  %v11239 = vsel %vm6078, %v10983, %v11039
  %v11240 = vsel %vm6078, %v10985, %v11041
  %v11241 = vsel %vm6078, %v10987, %v11043
  %v11242 = vsel %vm6078, %v10989, %v11045
  %v11243 = vsel %vm6078, %v10991, %v11047
  %v11244 = vsel %vm6078, %v10881, %v10937
  %v11245 = vsel %vm6078, %v10883, %v10939
  %v11246 = vsel %vm6078, %v10885, %v10941
  %v11247 = vsel %vm6078, %v10887, %v10943
  %v11248 = vsel %vm6078, %v10889, %v10945
  %v11249 = vsel %vm6078, %v10891, %v10947
  %v11250 = vsel %vm6078, %v10893, %v10949
  %v11251 = vsel %vm6078, %v10895, %v10951
  %v11252 = vsel %vm6078, %v10897, %v10953
  %v11253 = vsel %vm6078, %v10899, %v10955
  %v11254 = vsel %vm6078, %v10901, %v10957
  %v11255 = vsel %vm6078, %v10903, %v10959
  %v11256 = vsel %vm6078, %v10905, %v10961
  %v11257 = vsel %vm6078, %v10907, %v10963
  %v11258 = vsel %vm6078, %v10909, %v10965
  %v11259 = vsel %vm6078, %v10911, %v10967
  %v11260 = vsel %vm6078, %v10913, %v10969
  %v11261 = vsel %vm6078, %v10915, %v10971
  %v11262 = vsel %vm6078, %v10917, %v10973
  %v11263 = vsel %vm6078, %v10919, %v10975
  %v11264 = vsel %vm6078, %v10921, %v10977
  %v11265 = vsel %vm6078, %v10923, %v10979
  %v11266 = vsel %vm6078, %v10925, %v10981
  %v11267 = vsel %vm6078, %v10927, %v10983
  %v11268 = vsel %vm6078, %v10929, %v10985
  %v11269 = vsel %vm6078, %v10931, %v10987
  %v11270 = vsel %vm6078, %v10933, %v10989
  %v11271 = vsel %vm6078, %v10935, %v10991
  %v11272 = vsel %vm6078, %v10825, %v10881
  %v11273 = vsel %vm6078, %v10827, %v10883
  %v11274 = vsel %vm6078, %v10829, %v10885
  %v11275 = vsel %vm6078, %v10831, %v10887
  %v11276 = vsel %vm6078, %v10833, %v10889
  %v11277 = vsel %vm6078, %v10835, %v10891
  %v11278 = vsel %vm6078, %v10837, %v10893
  %v11279 = vsel %vm6078, %v10839, %v10895
  %v11280 = vsel %vm6078, %v10841, %v10897
  %v11281 = vsel %vm6078, %v10843, %v10899
  %v11282 = vsel %vm6078, %v10845, %v10901
  %v11283 = vsel %vm6078, %v10847, %v10903
  %v11284 = vsel %vm6078, %v10849, %v10905
  %v11285 = vsel %vm6078, %v10851, %v10907
  %v11286 = vsel %vm6078, %v10853, %v10909
  %v11287 = vsel %vm6078, %v10855, %v10911
  %v11288 = vsel %vm6078, %v10857, %v10913
  %v11289 = vsel %vm6078, %v10859, %v10915
  %v11290 = vsel %vm6078, %v10861, %v10917
  %v11291 = vsel %vm6078, %v10863, %v10919
  %v11292 = vsel %vm6078, %v10865, %v10921
  %v11293 = vsel %vm6078, %v10867, %v10923
  %v11294 = vsel %vm6078, %v10869, %v10925
  %v11295 = vsel %vm6078, %v10871, %v10927
  %v11296 = vsel %vm6078, %v10873, %v10929
  %v11297 = vsel %vm6078, %v10875, %v10931
  %v11298 = vsel %vm6078, %v10877, %v10933
  %v11299 = vsel %vm6078, %v10879, %v10935
  %v11300 = vsel %vm6078, %v10769, %v10825
  %v11301 = vsel %vm6078, %v10771, %v10827
  %v11302 = vsel %vm6078, %v10773, %v10829
  %v11303 = vsel %vm6078, %v10775, %v10831
  %v11304 = vsel %vm6078, %v10777, %v10833
  %v11305 = vsel %vm6078, %v10779, %v10835
  %v11306 = vsel %vm6078, %v10781, %v10837
  %v11307 = vsel %vm6078, %v10783, %v10839
  %v11308 = vsel %vm6078, %v10785, %v10841
  %v11309 = vsel %vm6078, %v10787, %v10843
  %v11310 = vsel %vm6078, %v10789, %v10845
  %v11311 = vsel %vm6078, %v10791, %v10847
  %v11312 = vsel %vm6078, %v10793, %v10849
  %v11313 = vsel %vm6078, %v10795, %v10851
  %v11314 = vsel %vm6078, %v10797, %v10853
  %v11315 = vsel %vm6078, %v10799, %v10855
  %v11316 = vsel %vm6078, %v10801, %v10857
  %v11317 = vsel %vm6078, %v10803, %v10859
  %v11318 = vsel %vm6078, %v10805, %v10861
  %v11319 = vsel %vm6078, %v10807, %v10863
  %v11320 = vsel %vm6078, %v10809, %v10865
  %v11321 = vsel %vm6078, %v10811, %v10867
  %v11322 = vsel %vm6078, %v10813, %v10869
  %v11323 = vsel %vm6078, %v10815, %v10871
  %v11324 = vsel %vm6078, %v10817, %v10873
  %v11325 = vsel %vm6078, %v10819, %v10875
  %v11326 = vsel %vm6078, %v10821, %v10877
  %v11327 = vsel %vm6078, %v10823, %v10879
  %v11328 = vsel %vm6078, %v11105, %v10769
  %v11329 = vsel %vm6078, %v11107, %v10771
  %v11330 = vsel %vm6078, %v11109, %v10773
  %v11331 = vsel %vm6078, %v11111, %v10775
  %v11332 = vsel %vm6078, %v11113, %v10777
  %v11333 = vsel %vm6078, %v11115, %v10779
  %v11334 = vsel %vm6078, %v11117, %v10781
  %v11335 = vsel %vm6078, %v11119, %v10783
  %v11336 = vsel %vm6078, %v11121, %v10785
  %v11337 = vsel %vm6078, %v11123, %v10787
  %v11338 = vsel %vm6078, %v11125, %v10789
  %v11339 = vsel %vm6078, %v11127, %v10791
  %v11340 = vsel %vm6078, %v11129, %v10793
  %v11341 = vsel %vm6078, %v11131, %v10795
  %v11342 = vsel %vm6078, %v11133, %v10797
  %v11343 = vsel %vm6078, %v11135, %v10799
  %v11344 = vsel %vm6078, %v11137, %v10801
  %v11345 = vsel %vm6078, %v11139, %v10803
  %v11346 = vsel %vm6078, %v11141, %v10805
  %v11347 = vsel %vm6078, %v11143, %v10807
  %v11348 = vsel %vm6078, %v11145, %v10809
  %v11349 = vsel %vm6078, %v11147, %v10811
  %v11350 = vsel %vm6078, %v11149, %v10813
  %v11351 = vsel %vm6078, %v11151, %v10815
  %v11352 = vsel %vm6078, %v11153, %v10817
  %v11353 = vsel %vm6078, %v11155, %v10819
  %v11354 = vsel %vm6078, %v11157, %v10821
  %v11355 = vsel %vm6078, %v11159, %v10823
  %v11356 = vmax.f32 %v10572, %v11300
  %v11357 = vmax.f32 %v10573, %v11272
  %v11358 = vmax.f32 %v10574, %v11244
  %v11359 = vmax.f32 %v10575, %v11216
  %v11360 = vmax.f32 %v10576, %v11188
  %v11361 = vmax.f32 %v10577, %v11160
  %v11362 = vmax.f32 %v10578, %v11328
  %v11363 = vmax.f32 %v10579, %v11301
  %v11364 = vmax.f32 %v10580, %v11273
  %v11365 = vmax.f32 %v10581, %v11245
  %v11366 = vmax.f32 %v10582, %v11217
  %v11367 = vmax.f32 %v10583, %v11189
  %v11368 = vmax.f32 %v10584, %v11161
  %v11369 = vmax.f32 %v10585, %v11329
  %v11370 = vmax.f32 %v10586, %v11302
  %v11371 = vmax.f32 %v10587, %v11274
  %v11372 = vmax.f32 %v10588, %v11246
  %v11373 = vmax.f32 %v10589, %v11218
  %v11374 = vmax.f32 %v10590, %v11190
  %v11375 = vmax.f32 %v10591, %v11162
  %v11376 = vmax.f32 %v10592, %v11330
  %v11377 = vmax.f32 %v10593, %v11303
  %v11378 = vmax.f32 %v10594, %v11275
  %v11379 = vmax.f32 %v10595, %v11247
  %v11380 = vmax.f32 %v10596, %v11219
  %v11381 = vmax.f32 %v10597, %v11191
  %v11382 = vmax.f32 %v10598, %v11163
  %v11383 = vmax.f32 %v10599, %v11331
  %v11384 = vmax.f32 %v10600, %v11304
  %v11385 = vmax.f32 %v10601, %v11276
  %v11386 = vmax.f32 %v10602, %v11248
  %v11387 = vmax.f32 %v10603, %v11220
  %v11388 = vmax.f32 %v10604, %v11192
  %v11389 = vmax.f32 %v10605, %v11164
  %v11390 = vmax.f32 %v10606, %v11332
  %v11391 = vmax.f32 %v10607, %v11305
  %v11392 = vmax.f32 %v10608, %v11277
  %v11393 = vmax.f32 %v10609, %v11249
  %v11394 = vmax.f32 %v10610, %v11221
  %v11395 = vmax.f32 %v10611, %v11193
  %v11396 = vmax.f32 %v10612, %v11165
  %v11397 = vmax.f32 %v10613, %v11333
  %v11398 = vmax.f32 %v10614, %v11306
  %v11399 = vmax.f32 %v10615, %v11278
  %v11400 = vmax.f32 %v10616, %v11250
  %v11401 = vmax.f32 %v10617, %v11222
  %v11402 = vmax.f32 %v10618, %v11194
  %v11403 = vmax.f32 %v10619, %v11166
  %v11404 = vmax.f32 %v10620, %v11334
  %v11405 = vmax.f32 %v10621, %v11307
  %v11406 = vmax.f32 %v10622, %v11279
  %v11407 = vmax.f32 %v10623, %v11251
  %v11408 = vmax.f32 %v10624, %v11223
  %v11409 = vmax.f32 %v10625, %v11195
  %v11410 = vmax.f32 %v10626, %v11167
  %v11411 = vmax.f32 %v10627, %v11335
  %v11412 = vmax.f32 %v10628, %v11308
  %v11413 = vmax.f32 %v10629, %v11280
  %v11414 = vmax.f32 %v10630, %v11252
  %v11415 = vmax.f32 %v10631, %v11224
  %v11416 = vmax.f32 %v10632, %v11196
  %v11417 = vmax.f32 %v10633, %v11168
  %v11418 = vmax.f32 %v10634, %v11336
  %v11419 = vmax.f32 %v10635, %v11309
  %v11420 = vmax.f32 %v10636, %v11281
  %v11421 = vmax.f32 %v10637, %v11253
  %v11422 = vmax.f32 %v10638, %v11225
  %v11423 = vmax.f32 %v10639, %v11197
  %v11424 = vmax.f32 %v10640, %v11169
  %v11425 = vmax.f32 %v10641, %v11337
  %v11426 = vmax.f32 %v10642, %v11310
  %v11427 = vmax.f32 %v10643, %v11282
  %v11428 = vmax.f32 %v10644, %v11254
  %v11429 = vmax.f32 %v10645, %v11226
  %v11430 = vmax.f32 %v10646, %v11198
  %v11431 = vmax.f32 %v10647, %v11170
  %v11432 = vmax.f32 %v10648, %v11338
  %v11433 = vmax.f32 %v10649, %v11311
  %v11434 = vmax.f32 %v10650, %v11283
  %v11435 = vmax.f32 %v10651, %v11255
  %v11436 = vmax.f32 %v10652, %v11227
  %v11437 = vmax.f32 %v10653, %v11199
  %v11438 = vmax.f32 %v10654, %v11171
  %v11439 = vmax.f32 %v10655, %v11339
  %v11440 = vmax.f32 %v10656, %v11312
  %v11441 = vmax.f32 %v10657, %v11284
  %v11442 = vmax.f32 %v10658, %v11256
  %v11443 = vmax.f32 %v10659, %v11228
  %v11444 = vmax.f32 %v10660, %v11200
  %v11445 = vmax.f32 %v10661, %v11172
  %v11446 = vmax.f32 %v10662, %v11340
  %v11447 = vmax.f32 %v10663, %v11313
  %v11448 = vmax.f32 %v10664, %v11285
  %v11449 = vmax.f32 %v10665, %v11257
  %v11450 = vmax.f32 %v10666, %v11229
  %v11451 = vmax.f32 %v10667, %v11201
  %v11452 = vmax.f32 %v10668, %v11173
  %v11453 = vmax.f32 %v10669, %v11341
  %v11454 = vmax.f32 %v10670, %v11314
  %v11455 = vmax.f32 %v10671, %v11286
  %v11456 = vmax.f32 %v10672, %v11258
  %v11457 = vmax.f32 %v10673, %v11230
  %v11458 = vmax.f32 %v10674, %v11202
  %v11459 = vmax.f32 %v10675, %v11174
  %v11460 = vmax.f32 %v10676, %v11342
  %v11461 = vmax.f32 %v10677, %v11315
  %v11462 = vmax.f32 %v10678, %v11287
  %v11463 = vmax.f32 %v10679, %v11259
  %v11464 = vmax.f32 %v10680, %v11231
  %v11465 = vmax.f32 %v10681, %v11203
  %v11466 = vmax.f32 %v10682, %v11175
  %v11467 = vmax.f32 %v10683, %v11343
  %v11468 = vmax.f32 %v10684, %v11316
  %v11469 = vmax.f32 %v10685, %v11288
  %v11470 = vmax.f32 %v10686, %v11260
  %v11471 = vmax.f32 %v10687, %v11232
  %v11472 = vmax.f32 %v10688, %v11204
  %v11473 = vmax.f32 %v10689, %v11176
  %v11474 = vmax.f32 %v10690, %v11344
  %v11475 = vmax.f32 %v10691, %v11317
  %v11476 = vmax.f32 %v10692, %v11289
  %v11477 = vmax.f32 %v10693, %v11261
  %v11478 = vmax.f32 %v10694, %v11233
  %v11479 = vmax.f32 %v10695, %v11205
  %v11480 = vmax.f32 %v10696, %v11177
  %v11481 = vmax.f32 %v10697, %v11345
  %v11482 = vmax.f32 %v10698, %v11318
  %v11483 = vmax.f32 %v10699, %v11290
  %v11484 = vmax.f32 %v10700, %v11262
  %v11485 = vmax.f32 %v10701, %v11234
  %v11486 = vmax.f32 %v10702, %v11206
  %v11487 = vmax.f32 %v10703, %v11178
  %v11488 = vmax.f32 %v10704, %v11346
  %v11489 = vmax.f32 %v10705, %v11319
  %v11490 = vmax.f32 %v10706, %v11291
  %v11491 = vmax.f32 %v10707, %v11263
  %v11492 = vmax.f32 %v10708, %v11235
  %v11493 = vmax.f32 %v10709, %v11207
  %v11494 = vmax.f32 %v10710, %v11179
  %v11495 = vmax.f32 %v10711, %v11347
  %v11496 = vmax.f32 %v10712, %v11320
  %v11497 = vmax.f32 %v10713, %v11292
  %v11498 = vmax.f32 %v10714, %v11264
  %v11499 = vmax.f32 %v10715, %v11236
  %v11500 = vmax.f32 %v10716, %v11208
  %v11501 = vmax.f32 %v10717, %v11180
  %v11502 = vmax.f32 %v10718, %v11348
  %v11503 = vmax.f32 %v10719, %v11321
  %v11504 = vmax.f32 %v10720, %v11293
  %v11505 = vmax.f32 %v10721, %v11265
  %v11506 = vmax.f32 %v10722, %v11237
  %v11507 = vmax.f32 %v10723, %v11209
  %v11508 = vmax.f32 %v10724, %v11181
  %v11509 = vmax.f32 %v10725, %v11349
  %v11510 = vmax.f32 %v10726, %v11322
  %v11511 = vmax.f32 %v10727, %v11294
  %v11512 = vmax.f32 %v10728, %v11266
  %v11513 = vmax.f32 %v10729, %v11238
  %v11514 = vmax.f32 %v10730, %v11210
  %v11515 = vmax.f32 %v10731, %v11182
  %v11516 = vmax.f32 %v10732, %v11350
  %v11517 = vmax.f32 %v10733, %v11323
  %v11518 = vmax.f32 %v10734, %v11295
  %v11519 = vmax.f32 %v10735, %v11267
  %v11520 = vmax.f32 %v10736, %v11239
  %v11521 = vmax.f32 %v10737, %v11211
  %v11522 = vmax.f32 %v10738, %v11183
  %v11523 = vmax.f32 %v10739, %v11351
  %v11524 = vmax.f32 %v10740, %v11324
  %v11525 = vmax.f32 %v10741, %v11296
  %v11526 = vmax.f32 %v10742, %v11268
  %v11527 = vmax.f32 %v10743, %v11240
  %v11528 = vmax.f32 %v10744, %v11212
  %v11529 = vmax.f32 %v10745, %v11184
  %v11530 = vmax.f32 %v10746, %v11352
  %v11531 = vmax.f32 %v10747, %v11325
  %v11532 = vmax.f32 %v10748, %v11297
  %v11533 = vmax.f32 %v10749, %v11269
  %v11534 = vmax.f32 %v10750, %v11241
  %v11535 = vmax.f32 %v10751, %v11213
  %v11536 = vmax.f32 %v10752, %v11185
  %v11537 = vmax.f32 %v10753, %v11353
  %v11538 = vmax.f32 %v10754, %v11326
  %v11539 = vmax.f32 %v10755, %v11298
  %v11540 = vmax.f32 %v10756, %v11270
  %v11541 = vmax.f32 %v10757, %v11242
  %v11542 = vmax.f32 %v10758, %v11214
  %v11543 = vmax.f32 %v10759, %v11186
  %v11544 = vmax.f32 %v10760, %v11354
  %v11545 = vmax.f32 %v10761, %v11327
  %v11546 = vmax.f32 %v10762, %v11299
  %v11547 = vmax.f32 %v10763, %v11271
  %v11548 = vmax.f32 %v10764, %v11243
  %v11549 = vmax.f32 %v10765, %v11215
  %v11550 = vmax.f32 %v10766, %v11187
  %v11551 = vmax.f32 %v10767, %v11355
  %v11552 = vld [vmem:[%s6] sm:$0xff]
  %v11553 = vld [vmem:[%s6 + $0x8] sm:$0xff]
  %v11554 = vld [vmem:[%s6 + $0x10] sm:$0x3]
  %v11555 = vld [vmem:[%s6 + $0x18] sm:$0x3]
  %s11556 = scalar_lea.vmem %s6, 32
  %v11557 = vld [vmem:[%s11556] sm:$0xff]
  %v11558 = vld [vmem:[%s11556 + $0x8] sm:$0xff]
  %v11559 = vld [vmem:[%s11556 + $0x10] sm:$0x3]
  %v11560 = vld [vmem:[%s11556 + $0x18] sm:$0x3]
  %v11562 = vsel %vm4823, %v11558, 0
  %v11565 = vsel %vm4823, %v11560, 0
  %11567 = vmatprep.subr.mxu0 0.0
  %11568 = vmatpush1.msra.mxu0 %v11357
  %11569 = vmatprep.subr.mxu0 0.0
  %11570 = vmatpush1.msra.mxu0 %v11364
  %11571 = vmatprep.subr.mxu0 0.0
  %11572 = vmatpush1.msra.mxu0 %v11371
  %11573 = vmatprep.subr.mxu0 0.0
  %11574 = vmatpush1.msra.mxu0 %v11378
  %11575 = vmatprep.subr.mxu0 0.0
  %11576 = vmatpush1.msra.mxu0 %v11385
  %11577 = vmatprep.subr.mxu0 0.0
  %11578 = vmatpush1.msra.mxu0 %v11392
  %11579 = vmatprep.subr.mxu0 0.0
  %11580 = vmatpush1.msra.mxu0 %v11399
  %11581 = vmatprep.subr.mxu0 0.0
  %11582 = vmatpush1.msra.mxu0 %v11406
  %11583 = vmatprep.subr.mxu0 0.0
  %11584 = vmatpush1.msra.mxu0 %v11413
  %11585 = vmatprep.subr.mxu0 0.0
  %11586 = vmatpush1.msra.mxu0 %v11420
  %11587 = vmatprep.subr.mxu0 0.0
  %11588 = vmatpush1.msra.mxu0 %v11427
  %11589 = vmatprep.subr.mxu0 0.0
  %11590 = vmatpush1.msra.mxu0 %v11434
  %11591 = vmatprep.subr.mxu0 0.0
  %11592 = vmatpush1.msra.mxu0 %v11441
  %11593 = vmatprep.subr.mxu0 0.0
  %11594 = vmatpush1.msra.mxu0 %v11448
  %11595 = vmatprep.subr.mxu0 0.0
  %11596 = vmatpush1.msra.mxu0 %v11455
  %11597 = vmatprep.subr.mxu0 0.0
  %11598 = vmatpush1.msra.mxu0 %v11462
  %11599 = vmatprep.subr.mxu0 0.0
  %11600 = vmatpush1.msra.mxu0 %v11469
  %11601 = vmatprep.subr.mxu0 0.0
  %11602 = vmatpush1.msra.mxu0 %v11476
  %11603 = vmatprep.subr.mxu0 0.0
  %11604 = vmatpush1.msra.mxu0 %v11483
  %11605 = vmatprep.subr.mxu0 0.0
  %11606 = vmatpush1.msra.mxu0 %v11490
  %11607 = vmatprep.subr.mxu0 0.0
  %11608 = vmatpush1.msra.mxu0 %v11497
  %11609 = vmatprep.subr.mxu0 0.0
  %11610 = vmatpush1.msra.mxu0 %v11504
  %11611 = vmatprep.subr.mxu0 0.0
  %11612 = vmatpush1.msra.mxu0 %v11511
  %11613 = vmatprep.subr.mxu0 0.0
  %11614 = vmatpush1.msra.mxu0 %v11518
  %11615 = vmatprep.subr.mxu0 0.0
  %11616 = vmatpush1.msra.mxu0 %v11525
  %11617 = vmatprep.subr.mxu0 0.0
  %11618 = vmatpush1.msra.mxu0 %v11532
  %11619 = vmatprep.subr.mxu0 0.0
  %11620 = vmatpush1.msra.mxu0 %v11539
  %11621 = vmatprep.subr.mxu0 0.0
  %11622 = vmatpush1.msra.mxu0 %v11546
  %11623 = vmatprep.subr.mxu0 0.0
  %11624 = vmatpush1.msra.mxu0 0.0
  %11625 = vmatprep.subr.mxu0 0.0
  %11626 = vmatpush1.msra.mxu0 0.0
  %11627 = vmatprep.subr.mxu0 0.0
  %11628 = vmatpush1.msra.mxu0 0.0
  %11629 = vmatprep.subr.mxu0 0.0
  %11630 = vmatpush1.msra.mxu0 0.0
  %11631 = vmatprep.mubr.f32.mxu0 %v11562
  %11632 = vmatmul.mubr.f32.gmra.mrb[0].mxu0 %v11557
  %v11633 = vpop.f32.mrb[0].mxu0
  %v11634 = vadd.f32 0.0, %v11633
  %v11635 = vpop.f32.mrb[0].mxu0
  %11636 = vmatprep.mubr.f32.mxu0 %v11565
  %11637 = vmatmul.mubr.f32.gmra.mrb[0].mxu0 %v11559
  %v11638 = vpop.f32.mrb[0].mxu0
  %v11639 = vadd.f32 0.0, %v11638
  %v11640 = vpop.f32.mrb[0].mxu0
  %11641 = vdwg.mxu0
  %v11643 = vsel %vm4823, %v11553, 0
  %v11646 = vsel %vm4823, %v11555, 0
  %11648 = vmatprep.subr.mxu0 0.0
  %11649 = vmatpush1.msra.mxu0 %v11356
  %11650 = vmatprep.subr.mxu0 0.0
  %11651 = vmatpush1.msra.mxu0 %v11363
  %11652 = vmatprep.subr.mxu0 0.0
  %11653 = vmatpush1.msra.mxu0 %v11370
  %11654 = vmatprep.subr.mxu0 0.0
  %11655 = vmatpush1.msra.mxu0 %v11377
  %11656 = vmatprep.subr.mxu0 0.0
  %11657 = vmatpush1.msra.mxu0 %v11384
  %11658 = vmatprep.subr.mxu0 0.0
  %11659 = vmatpush1.msra.mxu0 %v11391
  %11660 = vmatprep.subr.mxu0 0.0
  %11661 = vmatpush1.msra.mxu0 %v11398
  %11662 = vmatprep.subr.mxu0 0.0
  %11663 = vmatpush1.msra.mxu0 %v11405
  %11664 = vmatprep.subr.mxu0 0.0
  %11665 = vmatpush1.msra.mxu0 %v11412
  %11666 = vmatprep.subr.mxu0 0.0
  %11667 = vmatpush1.msra.mxu0 %v11419
  %11668 = vmatprep.subr.mxu0 0.0
  %11669 = vmatpush1.msra.mxu0 %v11426
  %11670 = vmatprep.subr.mxu0 0.0
  %11671 = vmatpush1.msra.mxu0 %v11433
  %11672 = vmatprep.subr.mxu0 0.0
  %11673 = vmatpush1.msra.mxu0 %v11440
  %11674 = vmatprep.subr.mxu0 0.0
  %11675 = vmatpush1.msra.mxu0 %v11447
  %11676 = vmatprep.subr.mxu0 0.0
  %11677 = vmatpush1.msra.mxu0 %v11454
  %11678 = vmatprep.subr.mxu0 0.0
  %11679 = vmatpush1.msra.mxu0 %v11461
  %11680 = vmatprep.subr.mxu0 0.0
  %11681 = vmatpush1.msra.mxu0 %v11468
  %11682 = vmatprep.subr.mxu0 0.0
  %11683 = vmatpush1.msra.mxu0 %v11475
  %11684 = vmatprep.subr.mxu0 0.0
  %11685 = vmatpush1.msra.mxu0 %v11482
  %11686 = vmatprep.subr.mxu0 0.0
  %11687 = vmatpush1.msra.mxu0 %v11489
  %11688 = vmatprep.subr.mxu0 0.0
  %11689 = vmatpush1.msra.mxu0 %v11496
  %11690 = vmatprep.subr.mxu0 0.0
  %11691 = vmatpush1.msra.mxu0 %v11503
  %11692 = vmatprep.subr.mxu0 0.0
  %11693 = vmatpush1.msra.mxu0 %v11510
  %11694 = vmatprep.subr.mxu0 0.0
  %11695 = vmatpush1.msra.mxu0 %v11517
  %11696 = vmatprep.subr.mxu0 0.0
  %11697 = vmatpush1.msra.mxu0 %v11524
  %11698 = vmatprep.subr.mxu0 0.0
  %11699 = vmatpush1.msra.mxu0 %v11531
  %11700 = vmatprep.subr.mxu0 0.0
  %11701 = vmatpush1.msra.mxu0 %v11538
  %11702 = vmatprep.subr.mxu0 0.0
  %11703 = vmatpush1.msra.mxu0 %v11545
  %11704 = vmatprep.subr.mxu0 0.0
  %11705 = vmatpush1.msra.mxu0 0.0
  %11706 = vmatprep.subr.mxu0 0.0
  %11707 = vmatpush1.msra.mxu0 0.0
  %11708 = vmatprep.subr.mxu0 0.0
  %11709 = vmatpush1.msra.mxu0 0.0
  %11710 = vmatprep.subr.mxu0 0.0
  %11711 = vmatpush1.msra.mxu0 0.0
  %11712 = vmatprep.mubr.f32.mxu0 %v11643
  %11713 = vmatmul.mubr.f32.gmra.mrb[0].mxu0 %v11552
  %v11714 = vpop.f32.mrb[0].mxu0
  %v11715 = vadd.f32 %v11634, %v11714
  %v11716 = vpop.f32.mrb[0].mxu0
  %11717 = vmatprep.mubr.f32.mxu0 %v11646
  %11718 = vmatmul.mubr.f32.gmra.mrb[0].mxu0 %v11554
  %v11719 = vpop.f32.mrb[0].mxu0
  %v11720 = vadd.f32 %v11639, %v11719
  %v11721 = vpop.f32.mrb[0].mxu0
  %11722 = vdwg.mxu0
  %s11723 = scalar_lea.vmem %s6, 64
  %v11724 = vld [vmem:[%s11723] sm:$0xff]
  %v11725 = vld [vmem:[%s11723 + $0x8] sm:$0xff]
  %v11726 = vld [vmem:[%s11723 + $0x10] sm:$0x3]
  %v11727 = vld [vmem:[%s11723 + $0x18] sm:$0x3]
  %v11729 = vsel %vm4823, %v11725, 0
  %v11732 = vsel %vm4823, %v11727, 0
  %11734 = vmatprep.subr.mxu0 0.0
  %11735 = vmatpush1.msra.mxu0 %v11358
  %11736 = vmatprep.subr.mxu0 0.0
  %11737 = vmatpush1.msra.mxu0 %v11365
  %11738 = vmatprep.subr.mxu0 0.0
  %11739 = vmatpush1.msra.mxu0 %v11372
  %11740 = vmatprep.subr.mxu0 0.0
  %11741 = vmatpush1.msra.mxu0 %v11379
  %11742 = vmatprep.subr.mxu0 0.0
  %11743 = vmatpush1.msra.mxu0 %v11386
  %11744 = vmatprep.subr.mxu0 0.0
  %11745 = vmatpush1.msra.mxu0 %v11393
  %11746 = vmatprep.subr.mxu0 0.0
  %11747 = vmatpush1.msra.mxu0 %v11400
  %11748 = vmatprep.subr.mxu0 0.0
  %11749 = vmatpush1.msra.mxu0 %v11407
  %11750 = vmatprep.subr.mxu0 0.0
  %11751 = vmatpush1.msra.mxu0 %v11414
  %11752 = vmatprep.subr.mxu0 0.0
  %11753 = vmatpush1.msra.mxu0 %v11421
  %11754 = vmatprep.subr.mxu0 0.0
  %11755 = vmatpush1.msra.mxu0 %v11428
  %11756 = vmatprep.subr.mxu0 0.0
  %11757 = vmatpush1.msra.mxu0 %v11435
  %11758 = vmatprep.subr.mxu0 0.0
  %11759 = vmatpush1.msra.mxu0 %v11442
  %11760 = vmatprep.subr.mxu0 0.0
  %11761 = vmatpush1.msra.mxu0 %v11449
  %11762 = vmatprep.subr.mxu0 0.0
  %11763 = vmatpush1.msra.mxu0 %v11456
  %11764 = vmatprep.subr.mxu0 0.0
  %11765 = vmatpush1.msra.mxu0 %v11463
  %11766 = vmatprep.subr.mxu0 0.0
  %11767 = vmatpush1.msra.mxu0 %v11470
  %11768 = vmatprep.subr.mxu0 0.0
  %11769 = vmatpush1.msra.mxu0 %v11477
  %11770 = vmatprep.subr.mxu0 0.0
  %11771 = vmatpush1.msra.mxu0 %v11484
  %11772 = vmatprep.subr.mxu0 0.0
  %11773 = vmatpush1.msra.mxu0 %v11491
  %11774 = vmatprep.subr.mxu0 0.0
  %11775 = vmatpush1.msra.mxu0 %v11498
  %11776 = vmatprep.subr.mxu0 0.0
  %11777 = vmatpush1.msra.mxu0 %v11505
  %11778 = vmatprep.subr.mxu0 0.0
  %11779 = vmatpush1.msra.mxu0 %v11512
  %11780 = vmatprep.subr.mxu0 0.0
  %11781 = vmatpush1.msra.mxu0 %v11519
  %11782 = vmatprep.subr.mxu0 0.0
  %11783 = vmatpush1.msra.mxu0 %v11526
  %11784 = vmatprep.subr.mxu0 0.0
  %11785 = vmatpush1.msra.mxu0 %v11533
  %11786 = vmatprep.subr.mxu0 0.0
  %11787 = vmatpush1.msra.mxu0 %v11540
  %11788 = vmatprep.subr.mxu0 0.0
  %11789 = vmatpush1.msra.mxu0 %v11547
  %11790 = vmatprep.subr.mxu0 0.0
  %11791 = vmatpush1.msra.mxu0 0.0
  %11792 = vmatprep.subr.mxu0 0.0
  %11793 = vmatpush1.msra.mxu0 0.0
  %11794 = vmatprep.subr.mxu0 0.0
  %11795 = vmatpush1.msra.mxu0 0.0
  %11796 = vmatprep.subr.mxu0 0.0
  %11797 = vmatpush1.msra.mxu0 0.0
  %11798 = vmatprep.mubr.f32.mxu0 %v11729
  %11799 = vmatmul.mubr.f32.gmra.mrb[0].mxu0 %v11724
  %v11800 = vpop.f32.mrb[0].mxu0
  %v11801 = vadd.f32 0.0, %v11800
  %v11802 = vpop.f32.mrb[0].mxu0
  %11803 = vmatprep.mubr.f32.mxu0 %v11732
  %11804 = vmatmul.mubr.f32.gmra.mrb[0].mxu0 %v11726
  %v11805 = vpop.f32.mrb[0].mxu0
  %v11806 = vadd.f32 0.0, %v11805
  %v11807 = vpop.f32.mrb[0].mxu0
  %11808 = vdwg.mxu0
  %v11809 = vadd.f32 %v11715, %v11801
  %v11810 = vadd.f32 %v11720, %v11806
  %s11811 = scalar_lea.vmem %s6, 96
  %v11812 = vld [vmem:[%s11811] sm:$0xff]
  %v11813 = vld [vmem:[%s11811 + $0x8] sm:$0xff]
  %v11814 = vld [vmem:[%s11811 + $0x10] sm:$0x3]
  %v11815 = vld [vmem:[%s11811 + $0x18] sm:$0x3]
  %v11817 = vsel %vm4823, %v11813, 0
  %v11820 = vsel %vm4823, %v11815, 0
  %11822 = vmatprep.subr.mxu0 0.0
  %11823 = vmatpush1.msra.mxu0 %v11359
  %11824 = vmatprep.subr.mxu0 0.0
  %11825 = vmatpush1.msra.mxu0 %v11366
  %11826 = vmatprep.subr.mxu0 0.0
  %11827 = vmatpush1.msra.mxu0 %v11373
  %11828 = vmatprep.subr.mxu0 0.0
  %11829 = vmatpush1.msra.mxu0 %v11380
  %11830 = vmatprep.subr.mxu0 0.0
  %11831 = vmatpush1.msra.mxu0 %v11387
  %11832 = vmatprep.subr.mxu0 0.0
  %11833 = vmatpush1.msra.mxu0 %v11394
  %11834 = vmatprep.subr.mxu0 0.0
  %11835 = vmatpush1.msra.mxu0 %v11401
  %11836 = vmatprep.subr.mxu0 0.0
  %11837 = vmatpush1.msra.mxu0 %v11408
  %11838 = vmatprep.subr.mxu0 0.0
  %11839 = vmatpush1.msra.mxu0 %v11415
  %11840 = vmatprep.subr.mxu0 0.0
  %11841 = vmatpush1.msra.mxu0 %v11422
  %11842 = vmatprep.subr.mxu0 0.0
  %11843 = vmatpush1.msra.mxu0 %v11429
  %11844 = vmatprep.subr.mxu0 0.0
  %11845 = vmatpush1.msra.mxu0 %v11436
  %11846 = vmatprep.subr.mxu0 0.0
  %11847 = vmatpush1.msra.mxu0 %v11443
  %11848 = vmatprep.subr.mxu0 0.0
  %11849 = vmatpush1.msra.mxu0 %v11450
  %11850 = vmatprep.subr.mxu0 0.0
  %11851 = vmatpush1.msra.mxu0 %v11457
  %11852 = vmatprep.subr.mxu0 0.0
  %11853 = vmatpush1.msra.mxu0 %v11464
  %11854 = vmatprep.subr.mxu0 0.0
  %11855 = vmatpush1.msra.mxu0 %v11471
  %11856 = vmatprep.subr.mxu0 0.0
  %11857 = vmatpush1.msra.mxu0 %v11478
  %11858 = vmatprep.subr.mxu0 0.0
  %11859 = vmatpush1.msra.mxu0 %v11485
  %11860 = vmatprep.subr.mxu0 0.0
  %11861 = vmatpush1.msra.mxu0 %v11492
  %11862 = vmatprep.subr.mxu0 0.0
  %11863 = vmatpush1.msra.mxu0 %v11499
  %11864 = vmatprep.subr.mxu0 0.0
  %11865 = vmatpush1.msra.mxu0 %v11506
  %11866 = vmatprep.subr.mxu0 0.0
  %11867 = vmatpush1.msra.mxu0 %v11513
  %11868 = vmatprep.subr.mxu0 0.0
  %11869 = vmatpush1.msra.mxu0 %v11520
  %11870 = vmatprep.subr.mxu0 0.0
  %11871 = vmatpush1.msra.mxu0 %v11527
  %11872 = vmatprep.subr.mxu0 0.0
  %11873 = vmatpush1.msra.mxu0 %v11534
  %11874 = vmatprep.subr.mxu0 0.0
  %11875 = vmatpush1.msra.mxu0 %v11541
  %11876 = vmatprep.subr.mxu0 0.0
  %11877 = vmatpush1.msra.mxu0 %v11548
  %11878 = vmatprep.subr.mxu0 0.0
  %11879 = vmatpush1.msra.mxu0 0.0
  %11880 = vmatprep.subr.mxu0 0.0
  %11881 = vmatpush1.msra.mxu0 0.0
  %11882 = vmatprep.subr.mxu0 0.0
  %11883 = vmatpush1.msra.mxu0 0.0
  %11884 = vmatprep.subr.mxu0 0.0
  %11885 = vmatpush1.msra.mxu0 0.0
  %11886 = vmatprep.mubr.f32.mxu0 %v11817
  %11887 = vmatmul.mubr.f32.gmra.mrb[0].mxu0 %v11812
  %v11888 = vpop.f32.mrb[0].mxu0
  %v11889 = vadd.f32 0.0, %v11888
  %v11890 = vpop.f32.mrb[0].mxu0
  %11891 = vmatprep.mubr.f32.mxu0 %v11820
  %11892 = vmatmul.mubr.f32.gmra.mrb[0].mxu0 %v11814
  %v11893 = vpop.f32.mrb[0].mxu0
  %v11894 = vadd.f32 0.0, %v11893
  %v11895 = vpop.f32.mrb[0].mxu0
  %11896 = vdwg.mxu0
  %v11897 = vadd.f32 %v11809, %v11889
  %v11898 = vadd.f32 %v11810, %v11894
  %s11899 = scalar_lea.vmem %s6, 128
  %v11900 = vld [vmem:[%s11899] sm:$0xff]
  %v11901 = vld [vmem:[%s11899 + $0x8] sm:$0xff]
  %v11902 = vld [vmem:[%s11899 + $0x10] sm:$0x3]
  %v11903 = vld [vmem:[%s11899 + $0x18] sm:$0x3]
  %v11905 = vsel %vm4823, %v11901, 0
  %v11908 = vsel %vm4823, %v11903, 0
  %11910 = vmatprep.subr.mxu0 0.0
  %11911 = vmatpush1.msra.mxu0 %v11360
  %11912 = vmatprep.subr.mxu0 0.0
  %11913 = vmatpush1.msra.mxu0 %v11367
  %11914 = vmatprep.subr.mxu0 0.0
  %11915 = vmatpush1.msra.mxu0 %v11374
  %11916 = vmatprep.subr.mxu0 0.0
  %11917 = vmatpush1.msra.mxu0 %v11381
  %11918 = vmatprep.subr.mxu0 0.0
  %11919 = vmatpush1.msra.mxu0 %v11388
  %11920 = vmatprep.subr.mxu0 0.0
  %11921 = vmatpush1.msra.mxu0 %v11395
  %11922 = vmatprep.subr.mxu0 0.0
  %11923 = vmatpush1.msra.mxu0 %v11402
  %11924 = vmatprep.subr.mxu0 0.0
  %11925 = vmatpush1.msra.mxu0 %v11409
  %11926 = vmatprep.subr.mxu0 0.0
  %11927 = vmatpush1.msra.mxu0 %v11416
  %11928 = vmatprep.subr.mxu0 0.0
  %11929 = vmatpush1.msra.mxu0 %v11423
  %11930 = vmatprep.subr.mxu0 0.0
  %11931 = vmatpush1.msra.mxu0 %v11430
  %11932 = vmatprep.subr.mxu0 0.0
  %11933 = vmatpush1.msra.mxu0 %v11437
  %11934 = vmatprep.subr.mxu0 0.0
  %11935 = vmatpush1.msra.mxu0 %v11444
  %11936 = vmatprep.subr.mxu0 0.0
  %11937 = vmatpush1.msra.mxu0 %v11451
  %11938 = vmatprep.subr.mxu0 0.0
  %11939 = vmatpush1.msra.mxu0 %v11458
  %11940 = vmatprep.subr.mxu0 0.0
  %11941 = vmatpush1.msra.mxu0 %v11465
  %11942 = vmatprep.subr.mxu0 0.0
  %11943 = vmatpush1.msra.mxu0 %v11472
  %11944 = vmatprep.subr.mxu0 0.0
  %11945 = vmatpush1.msra.mxu0 %v11479
  %11946 = vmatprep.subr.mxu0 0.0
  %11947 = vmatpush1.msra.mxu0 %v11486
  %11948 = vmatprep.subr.mxu0 0.0
  %11949 = vmatpush1.msra.mxu0 %v11493
  %11950 = vmatprep.subr.mxu0 0.0
  %11951 = vmatpush1.msra.mxu0 %v11500
  %11952 = vmatprep.subr.mxu0 0.0
  %11953 = vmatpush1.msra.mxu0 %v11507
  %11954 = vmatprep.subr.mxu0 0.0
  %11955 = vmatpush1.msra.mxu0 %v11514
  %11956 = vmatprep.subr.mxu0 0.0
  %11957 = vmatpush1.msra.mxu0 %v11521
  %11958 = vmatprep.subr.mxu0 0.0
  %11959 = vmatpush1.msra.mxu0 %v11528
  %11960 = vmatprep.subr.mxu0 0.0
  %11961 = vmatpush1.msra.mxu0 %v11535
  %11962 = vmatprep.subr.mxu0 0.0
  %11963 = vmatpush1.msra.mxu0 %v11542
  %11964 = vmatprep.subr.mxu0 0.0
  %11965 = vmatpush1.msra.mxu0 %v11549
  %11966 = vmatprep.subr.mxu0 0.0
  %11967 = vmatpush1.msra.mxu0 0.0
  %11968 = vmatprep.subr.mxu0 0.0
  %11969 = vmatpush1.msra.mxu0 0.0
  %11970 = vmatprep.subr.mxu0 0.0
  %11971 = vmatpush1.msra.mxu0 0.0
  %11972 = vmatprep.subr.mxu0 0.0
  %11973 = vmatpush1.msra.mxu0 0.0
  %11974 = vmatprep.mubr.f32.mxu0 %v11905
  %11975 = vmatmul.mubr.f32.gmra.mrb[0].mxu0 %v11900
  %v11976 = vpop.f32.mrb[0].mxu0
  %v11977 = vadd.f32 0.0, %v11976
  %v11978 = vpop.f32.mrb[0].mxu0
  %11979 = vmatprep.mubr.f32.mxu0 %v11908
  %11980 = vmatmul.mubr.f32.gmra.mrb[0].mxu0 %v11902
  %v11981 = vpop.f32.mrb[0].mxu0
  %v11982 = vadd.f32 0.0, %v11981
  %v11983 = vpop.f32.mrb[0].mxu0
  %11984 = vdwg.mxu0
  %v11985 = vadd.f32 %v11897, %v11977
  %v11986 = vadd.f32 %v11898, %v11982
  %s11987 = scalar_lea.vmem %s6, 160
  %v11988 = vld [vmem:[%s11987] sm:$0xff]
  %v11989 = vld [vmem:[%s11987 + $0x8] sm:$0xff]
  %v11990 = vld [vmem:[%s11987 + $0x10] sm:$0x3]
  %v11991 = vld [vmem:[%s11987 + $0x18] sm:$0x3]
  %v11993 = vsel %vm4823, %v11989, 0
  %v11996 = vsel %vm4823, %v11991, 0
  %11998 = vmatprep.subr.mxu0 0.0
  %11999 = vmatpush1.msra.mxu0 %v11361
  %12000 = vmatprep.subr.mxu0 0.0
  %12001 = vmatpush1.msra.mxu0 %v11368
  %12002 = vmatprep.subr.mxu0 0.0
  %12003 = vmatpush1.msra.mxu0 %v11375
  %12004 = vmatprep.subr.mxu0 0.0
  %12005 = vmatpush1.msra.mxu0 %v11382
  %12006 = vmatprep.subr.mxu0 0.0
  %12007 = vmatpush1.msra.mxu0 %v11389
  %12008 = vmatprep.subr.mxu0 0.0
  %12009 = vmatpush1.msra.mxu0 %v11396
  %12010 = vmatprep.subr.mxu0 0.0
  %12011 = vmatpush1.msra.mxu0 %v11403
  %12012 = vmatprep.subr.mxu0 0.0
  %12013 = vmatpush1.msra.mxu0 %v11410
  %12014 = vmatprep.subr.mxu0 0.0
  %12015 = vmatpush1.msra.mxu0 %v11417
  %12016 = vmatprep.subr.mxu0 0.0
  %12017 = vmatpush1.msra.mxu0 %v11424
  %12018 = vmatprep.subr.mxu0 0.0
  %12019 = vmatpush1.msra.mxu0 %v11431
  %12020 = vmatprep.subr.mxu0 0.0
  %12021 = vmatpush1.msra.mxu0 %v11438
  %12022 = vmatprep.subr.mxu0 0.0
  %12023 = vmatpush1.msra.mxu0 %v11445
  %12024 = vmatprep.subr.mxu0 0.0
  %12025 = vmatpush1.msra.mxu0 %v11452
  %12026 = vmatprep.subr.mxu0 0.0
  %12027 = vmatpush1.msra.mxu0 %v11459
  %12028 = vmatprep.subr.mxu0 0.0
  %12029 = vmatpush1.msra.mxu0 %v11466
  %12030 = vmatprep.subr.mxu0 0.0
  %12031 = vmatpush1.msra.mxu0 %v11473
  %12032 = vmatprep.subr.mxu0 0.0
  %12033 = vmatpush1.msra.mxu0 %v11480
  %12034 = vmatprep.subr.mxu0 0.0
  %12035 = vmatpush1.msra.mxu0 %v11487
  %12036 = vmatprep.subr.mxu0 0.0
  %12037 = vmatpush1.msra.mxu0 %v11494
  %12038 = vmatprep.subr.mxu0 0.0
  %12039 = vmatpush1.msra.mxu0 %v11501
  %12040 = vmatprep.subr.mxu0 0.0
  %12041 = vmatpush1.msra.mxu0 %v11508
  %12042 = vmatprep.subr.mxu0 0.0
  %12043 = vmatpush1.msra.mxu0 %v11515
  %12044 = vmatprep.subr.mxu0 0.0
  %12045 = vmatpush1.msra.mxu0 %v11522
  %12046 = vmatprep.subr.mxu0 0.0
  %12047 = vmatpush1.msra.mxu0 %v11529
  %12048 = vmatprep.subr.mxu0 0.0
  %12049 = vmatpush1.msra.mxu0 %v11536
  %12050 = vmatprep.subr.mxu0 0.0
  %12051 = vmatpush1.msra.mxu0 %v11543
  %12052 = vmatprep.subr.mxu0 0.0
  %12053 = vmatpush1.msra.mxu0 %v11550
  %12054 = vmatprep.subr.mxu0 0.0
  %12055 = vmatpush1.msra.mxu0 0.0
  %12056 = vmatprep.subr.mxu0 0.0
  %12057 = vmatpush1.msra.mxu0 0.0
  %12058 = vmatprep.subr.mxu0 0.0
  %12059 = vmatpush1.msra.mxu0 0.0
  %12060 = vmatprep.subr.mxu0 0.0
  %12061 = vmatpush1.msra.mxu0 0.0
  %12062 = vmatprep.mubr.f32.mxu0 %v11993
  %12063 = vmatmul.mubr.f32.gmra.mrb[0].mxu0 %v11988
  %v12064 = vpop.f32.mrb[0].mxu0
  %v12065 = vadd.f32 0.0, %v12064
  %v12066 = vpop.f32.mrb[0].mxu0
  %12067 = vmatprep.mubr.f32.mxu0 %v11996
  %12068 = vmatmul.mubr.f32.gmra.mrb[0].mxu0 %v11990
  %v12069 = vpop.f32.mrb[0].mxu0
  %v12070 = vadd.f32 0.0, %v12069
  %v12071 = vpop.f32.mrb[0].mxu0
  %12072 = vdwg.mxu0
  %v12073 = vadd.f32 %v11985, %v12065
  %v12074 = vadd.f32 %v11986, %v12070
  %s12075 = scalar_lea.vmem %s6, 192
  %v12076 = vld [vmem:[%s12075] sm:$0xff]
  %v12077 = vld [vmem:[%s12075 + $0x8] sm:$0xff]
  %v12078 = vld [vmem:[%s12075 + $0x10] sm:$0x3]
  %v12079 = vld [vmem:[%s12075 + $0x18] sm:$0x3]
  %v12081 = vsel %vm4823, %v12077, 0
  %v12084 = vsel %vm4823, %v12079, 0
  %12086 = vmatprep.subr.mxu0 0.0
  %12087 = vmatpush1.msra.mxu0 %v11362
  %12088 = vmatprep.subr.mxu0 0.0
  %12089 = vmatpush1.msra.mxu0 %v11369
  %12090 = vmatprep.subr.mxu0 0.0
  %12091 = vmatpush1.msra.mxu0 %v11376
  %12092 = vmatprep.subr.mxu0 0.0
  %12093 = vmatpush1.msra.mxu0 %v11383
  %12094 = vmatprep.subr.mxu0 0.0
  %12095 = vmatpush1.msra.mxu0 %v11390
  %12096 = vmatprep.subr.mxu0 0.0
  %12097 = vmatpush1.msra.mxu0 %v11397
  %12098 = vmatprep.subr.mxu0 0.0
  %12099 = vmatpush1.msra.mxu0 %v11404
  %12100 = vmatprep.subr.mxu0 0.0
  %12101 = vmatpush1.msra.mxu0 %v11411
  %12102 = vmatprep.subr.mxu0 0.0
  %12103 = vmatpush1.msra.mxu0 %v11418
  %12104 = vmatprep.subr.mxu0 0.0
  %12105 = vmatpush1.msra.mxu0 %v11425
  %12106 = vmatprep.subr.mxu0 0.0
  %12107 = vmatpush1.msra.mxu0 %v11432
  %12108 = vmatprep.subr.mxu0 0.0
  %12109 = vmatpush1.msra.mxu0 %v11439
  %12110 = vmatprep.subr.mxu0 0.0
  %12111 = vmatpush1.msra.mxu0 %v11446
  %12112 = vmatprep.subr.mxu0 0.0
  %12113 = vmatpush1.msra.mxu0 %v11453
  %12114 = vmatprep.subr.mxu0 0.0
  %12115 = vmatpush1.msra.mxu0 %v11460
  %12116 = vmatprep.subr.mxu0 0.0
  %12117 = vmatpush1.msra.mxu0 %v11467
  %12118 = vmatprep.subr.mxu0 0.0
  %12119 = vmatpush1.msra.mxu0 %v11474
  %12120 = vmatprep.subr.mxu0 0.0
  %12121 = vmatpush1.msra.mxu0 %v11481
  %12122 = vmatprep.subr.mxu0 0.0
  %12123 = vmatpush1.msra.mxu0 %v11488
  %12124 = vmatprep.subr.mxu0 0.0
  %12125 = vmatpush1.msra.mxu0 %v11495
  %12126 = vmatprep.subr.mxu0 0.0
  %12127 = vmatpush1.msra.mxu0 %v11502
  %12128 = vmatprep.subr.mxu0 0.0
  %12129 = vmatpush1.msra.mxu0 %v11509
  %12130 = vmatprep.subr.mxu0 0.0
  %12131 = vmatpush1.msra.mxu0 %v11516
  %12132 = vmatprep.subr.mxu0 0.0
  %12133 = vmatpush1.msra.mxu0 %v11523
  %12134 = vmatprep.subr.mxu0 0.0
  %12135 = vmatpush1.msra.mxu0 %v11530
  %12136 = vmatprep.subr.mxu0 0.0
  %12137 = vmatpush1.msra.mxu0 %v11537
  %12138 = vmatprep.subr.mxu0 0.0
  %12139 = vmatpush1.msra.mxu0 %v11544
  %12140 = vmatprep.subr.mxu0 0.0
  %12141 = vmatpush1.msra.mxu0 %v11551
  %12142 = vmatprep.subr.mxu0 0.0
  %12143 = vmatpush1.msra.mxu0 0.0
  %12144 = vmatprep.subr.mxu0 0.0
  %12145 = vmatpush1.msra.mxu0 0.0
  %12146 = vmatprep.subr.mxu0 0.0
  %12147 = vmatpush1.msra.mxu0 0.0
  %12148 = vmatprep.subr.mxu0 0.0
  %12149 = vmatpush1.msra.mxu0 0.0
  %12150 = vmatprep.mubr.f32.mxu0 %v12081
  %12151 = vmatmul.mubr.f32.gmra.mrb[0].mxu0 %v12076
  %v12152 = vpop.f32.mrb[0].mxu0
  %v12153 = vadd.f32 0.0, %v12152
  %v12154 = vpop.f32.mrb[0].mxu0
  %12155 = vmatprep.mubr.f32.mxu0 %v12084
  %12156 = vmatmul.mubr.f32.gmra.mrb[0].mxu0 %v12078
  %v12157 = vpop.f32.mrb[0].mxu0
  %v12158 = vadd.f32 0.0, %v12157
  %v12159 = vpop.f32.mrb[0].mxu0
  %12160 = vdwg.mxu0
  %v12161 = vadd.f32 %v12073, %v12153
  %v12162 = vadd.f32 %v12074, %v12158
  %v12163 = vld [vmem:[%s7] sm:$0xff]
  %v12164 = vld [vmem:[%s7 + $0x8] sm:$0x3]
  %12166 = vset.pattern.permute.xlu0 0
  %12167 = vperm.xlu0 %12166, %v12163
  %v12168 = vpop.permute.xlu0 %12167
  %12171 = vset.pattern.permute.xlu0 0
  %12172 = vperm.xlu0 %12171, %v12164
  %v12173 = vpop.permute.xlu0 %12172
  %v12175 = vadd.f32 %v12161, %v12168
  %v12176 = vadd.f32 %v12162, %v12173
  %vm12177 = vcmask 261120
  %12178 = vst.msk [vmem:[%s8] sm:$0xff] %vm12177, %v12175
  %vm12179 = vcmask 254976
  %12180 = vst.msk [vmem:[%s8 + $0x8] sm:$0x3] %vm12179, %v12176
  // Predicated region
  $region34: #{model_forward.1} parent=0 // pred_check
    _
  $region35: #{model_forward.1} parent=0 // pred_check_branch
    %12182 = sbr.rel (0) target = $region37
  $region36: #{model_forward.1} parent=0 // pred_region
    _
  $region37: #{model_forward.1} parent=0 // pred_fallthru
    _
  // Predicated region
  $region38: #{model_forward.1} parent=0 // pred_check
    _
  $region39: #{model_forward.1} parent=0 // pred_check_branch
    %12184 = sbr.rel (0) target = $region41
  $region40: #{model_forward.1} parent=0 // pred_region
    _
  $region41: #{model_forward.1} parent=0 // pred_fallthru
    _

</llo_original>
